<compile_context>
chip_gen: v7x
topology: tpu7x:2x2x1
jax: 0.10.0
libtpu: 0.0.40
codegen_flags: <defaults>
</compile_context>

<pallas_src>
import jax
import jax.numpy as jnp
from jax import lax
from jax.experimental import pallas as pl
from jax.experimental.pallas import tpu as pltpu

# ----------------------------- configuration --------------------------------
BATCH = 2
MODALITY_DIMS = [20, 12, 24]
NUM_MODALITIES = len(MODALITY_DIMS)
ENC_EMBED = 32
LAT_SHARED = 32
LAT_SPEC = 32
EMBED = LAT_SHARED
NUM_CLASSES = 5
NUM_HEADS = 4
HEAD_DIM = EMBED // NUM_HEADS
NUM_TOKENS = NUM_MODALITIES
NUM_POOL_EXPERTS = 1 + 3 + 5          # full_shared + combination + specific
NUM_FMOE_EXPERTS = 7
TOP_K = 2
HIDDEN_TIMES = 2
FMOE_HIDDEN = EMBED * HIDDEN_TIMES    # 64
NUM_LAYERS = 2

DIN_TOTAL = sum(MODALITY_DIMS)        # 56
ENC_CAT = NUM_MODALITIES * ENC_EMBED  # 96
LAT_CAT = NUM_MODALITIES * LAT_SHARED # 96
POOL_CAT = NUM_POOL_EXPERTS * EMBED   # 288
FMOE_CAT = NUM_FMOE_EXPERTS * FMOE_HIDDEN  # 448


# ------------------------------ fused kernel ---------------------------------
def _mm_disentangled_kernel(
    # activations / noise
    x_ref, mask_ref, eps_enc_ref, eps_moe_ref,
    # encoders (block-diag over modalities, shared+specific heads fused)
    wproj_ref, bproj_ref, wfeat_ref, bfeat_ref,
    wfc_ref, bfc_ref, wmulv_ref, bmulv_ref,
    # shared fusion linear
    wfus_ref, bfus_ref,
    # gating (full|comb|spec concatenated)
    wgate_ref, bgate_ref,
    # MoE expert pool (9 experts, lane-concatenated / block-diag)
    wpool1_ref, bpool1_ref, wpoolmv_ref, bpoolmv_ref,
    # token attention value path (precomposed)
    wtok_ref, btok_ref,
    # transformer layers (stacked along leading dim = NUM_LAYERS)
    ln1g_ref, ln1b_ref, wq_ref, wkv_ref, wpr_ref, bpr_ref,
    ln2g_ref, ln2b_ref, etok_ref,
    w1_ref, b1_ref, w2_ref, b2_ref, w3_ref, b3m_ref, expand_ref,
    # classifier
    wcls_ref, bcls_ref,
    # outputs
    zs_ref, zp_ref, mulv_ref, logits_ref):

  def mm(a, b):
    return jnp.dot(a, b, preferred_element_type=jnp.float32)

  # ---- disentangled modal encoders (all modalities in one block-diag pass) ----
  x = x_ref[...]                                                    # (B, 56)
  xe = mm(x, wproj_ref[...]) + bproj_ref[...]                       # (B, 96)
  feats = jnp.maximum(mm(xe, wfeat_ref[...]) + bfeat_ref[...], 0.0) # (B, 96)
  h = jnp.maximum(mm(feats, wfc_ref[...]) + bfc_ref[...], 0.0)      # (B, 192)
  mulv = mm(h, wmulv_ref[...]) + bmulv_ref[...]                     # (B, 384)
  mu_s = mulv[:, 0:LAT_CAT]
  lv_s = mulv[:, LAT_CAT:2 * LAT_CAT]
  mu_p = mulv[:, 2 * LAT_CAT:3 * LAT_CAT]
  lv_p = mulv[:, 3 * LAT_CAT:4 * LAT_CAT]
  eps = eps_enc_ref[...]                                            # (B, 192)
  z_s = mu_s + eps[:, :LAT_CAT] * jnp.exp(0.5 * lv_s)
  z_p = mu_p + eps[:, LAT_CAT:] * jnp.exp(0.5 * lv_p)
  zs_ref[...] = z_s
  zp_ref[...] = z_p

  # ---- shared fusion linear ----
  fused = mm(z_s, wfus_ref[...]) + bfus_ref[...]                    # (B, 32)

  # ---- gating networks: one matmul + segmented softmax ----
  glog = mm(fused, wgate_ref[...]) + bgate_ref[...]                 # (B, 9)

  def seg_softmax(a):
    m = jnp.max(a, axis=-1, keepdims=True)
    e = jnp.exp(a - m)
    return e * pl.reciprocal(jnp.sum(e, axis=-1, keepdims=True), approx=True)

  g_full = jnp.ones_like(glog[:, 0:1])          # softmax over 1 logit == 1
  g_comb = seg_softmax(glog[:, 1:4])
  g_spec = seg_softmax(glog[:, 4:9])
  mask_mean = jnp.mean(mask_ref[...], axis=-1, keepdims=True)
  g_comb = g_comb * (1.0 - mask_mean)
  gate_cols = ([g_full]
               + [g_comb[:, i:i + 1] for i in range(3)]
               + [g_spec[:, i:i + 1] for i in range(5)])

  # ---- MoE expert pool + product of experts ----
  hp = jnp.maximum(mm(fused, wpool1_ref[...]) + bpool1_ref[...], 0.0)   # (B,288)
  mv = mm(hp, wpoolmv_ref[...]) + bpoolmv_ref[...]                      # (B,576)
  psum = jnp.zeros_like(fused)
  mpsum = jnp.zeros_like(fused)
  for e in range(NUM_POOL_EXPERTS):
    mu_e = mv[:, e * EMBED:(e + 1) * EMBED]
    lv_e = mv[:, POOL_CAT + e * EMBED:POOL_CAT + (e + 1) * EMBED]
    prec = pl.reciprocal(jnp.exp(lv_e) + 1e-8, approx=True)
    psum = psum + prec                               # precisions unweighted (ref)
    mpsum = mpsum + (mu_e * gate_cols[e]) * prec     # gate weights on mu only
  inv_p = pl.reciprocal(psum, approx=True)
  moe_mu = mpsum * inv_p
  moe_lv = jnp.log(inv_p + 1e-8)
  mulv_ref[...] = jnp.concatenate([moe_mu, moe_lv], axis=-1)        # (B, 64)
  z = moe_mu + eps_moe_ref[...] * jnp.exp(0.5 * moe_lv)

  # ---- LearnableTokenAttention value path (3 linears precomposed) ----
  seq = mm(z, wtok_ref[...]) + btok_ref[...]                        # (B, 32)

  # ---- transformer encoder: pre-norm attention + sparse-MoE MLP x 2 ----
  scale = float(HEAD_DIM) ** -0.5
  for l in range(NUM_LAYERS):
    # pre-norm self-attention + residual
    mean1 = jnp.mean(seq, axis=-1, keepdims=True)
    var1 = jnp.mean((seq - mean1) ** 2, axis=-1, keepdims=True)
    xn = (seq - mean1) * lax.rsqrt(var1 + 1e-5) * ln1g_ref[l] + ln1b_ref[l]
    q = mm(xn, wq_ref[l])                                           # bias=False
    kv = mm(xn, wkv_ref[l])                                         # bias=False
    k = kv[:, :EMBED]
    v = kv[:, EMBED:]
    heads = []
    for hh in range(NUM_HEADS):
      sl = slice(hh * HEAD_DIM, (hh + 1) * HEAD_DIM)
      qh, kh, vh = q[:, sl], k[:, sl], v[:, sl]
      s = lax.dot_general(qh, kh, (((1,), (1,)), ((), ())),
                          preferred_element_type=jnp.float32) * scale
      s = s - jnp.max(s, axis=-1, keepdims=True)
      p = jnp.exp(s)
      p = p * pl.reciprocal(jnp.sum(p, axis=-1, keepdims=True), approx=True)
      heads.append(mm(p, vh))
    attn = jnp.concatenate(heads, axis=-1)
    seq = seq + mm(attn, wpr_ref[l]) + bpr_ref[l]

    # LN2 + expert-token scores + top-2 routing (in-kernel) + MoE MLP + residual
    mean2 = jnp.mean(seq, axis=-1, keepdims=True)
    var2 = jnp.mean((seq - mean2) ** 2, axis=-1, keepdims=True)
    xn2 = (seq - mean2) * lax.rsqrt(var2 + 1e-5) * ln2g_ref[l] + ln2b_ref[l]
    scores = mm(xn2, etok_ref[l])                                   # (B, 7)
    idxf = lax.broadcasted_iota(jnp.int32, scores.shape, 1).astype(jnp.float32)
    big = float(NUM_FMOE_EXPERTS)
    m1 = jnp.max(scores, axis=-1, keepdims=True)
    arg1 = jnp.min(jnp.where(scores >= m1, idxf, big), axis=-1, keepdims=True)
    sel1 = (idxf == arg1)
    scores2 = jnp.where(sel1, -jnp.inf, scores)
    m2 = jnp.max(scores2, axis=-1, keepdims=True)
    arg2 = jnp.min(jnp.where(scores2 >= m2, idxf, big), axis=-1, keepdims=True)
    sel2 = (idxf == arg2)
    coeff = (sel1.astype(jnp.float32) + sel2.astype(jnp.float32)) / float(TOP_K)

    # TODO(synk): PyTorch nn.GELU defaults to exact erf; tanh approx used here.
    h1 = jax.nn.gelu(mm(xn2, w1_ref[l]) + b1_ref[l])                # (B, 448)
    h2 = jax.nn.gelu(mm(h1, w2_ref[l]) + b2_ref[l])                 # (B, 448)
    coeff_exp = mm(coeff, expand_ref[...])                          # (B, 448)
    seq = seq + mm(h2 * coeff_exp, w3_ref[l]) + mm(coeff, b3m_ref[l])

  # ---- classifier ----
  logits_ref[...] = mm(seq, wcls_ref[...]) + bcls_ref[...]


# ----------------------------- parameter init --------------------------------
def _dense(key, fan_in, fan_out):
  kw, kb = jax.random.split(key)
  lim = 1.0 / float(fan_in) ** 0.5
  w = jax.random.uniform(kw, (fan_in, fan_out), jnp.float32, -lim, lim)
  b = jax.random.uniform(kb, (fan_out,), jnp.float32, -lim, lim)
  return w, b


def _block_diag(mats):
  rows = sum(m.shape[0] for m in mats)
  cols = sum(m.shape[1] for m in mats)
  out = jnp.zeros((rows, cols), jnp.float32)
  r = c = 0
  for m in mats:
    out = out.at[r:r + m.shape[0], c:c + m.shape[1]].set(m)
    r += m.shape[0]
    c += m.shape[1]
  return out


def init_params(key):
  keys = iter(jax.random.split(key, 512))
  nk = lambda: next(keys)
  p = {}

  # ---- per-modality encoders -> block-diagonal slabs ----
  proj_w, proj_b, feat_w, feat_b = [], [], [], []
  sfc_w, sfc_b, smu_w, smu_b, slv_w, slv_b = [], [], [], [], [], []
  pfc_w, pfc_b, pmu_w, pmu_b, plv_w, plv_b = [], [], [], [], [], []
  for dim in MODALITY_DIMS:
    w, b = _dense(nk(), dim, ENC_EMBED); proj_w.append(w); proj_b.append(b)
    w, b = _dense(nk(), ENC_EMBED, ENC_EMBED); feat_w.append(w); feat_b.append(b)
    w, b = _dense(nk(), ENC_EMBED, ENC_EMBED); sfc_w.append(w); sfc_b.append(b)
    w, b = _dense(nk(), ENC_EMBED, LAT_SHARED); smu_w.append(w); smu_b.append(b)
    w, b = _dense(nk(), ENC_EMBED, LAT_SHARED); slv_w.append(w); slv_b.append(b)
    w, b = _dense(nk(), ENC_EMBED, ENC_EMBED); pfc_w.append(w); pfc_b.append(b)
    w, b = _dense(nk(), ENC_EMBED, LAT_SPEC); pmu_w.append(w); pmu_b.append(b)
    w, b = _dense(nk(), ENC_EMBED, LAT_SPEC); plv_w.append(w); plv_b.append(b)

  p["wproj"] = _block_diag(proj_w)                                   # (56, 96)
  p["bproj"] = jnp.concatenate(proj_b).reshape(1, -1)
  p["wfeat"] = _block_diag(feat_w)                                   # (96, 96)
  p["bfeat"] = jnp.concatenate(feat_b).reshape(1, -1)
  p["wfc"] = jnp.concatenate([_block_diag(sfc_w), _block_diag(pfc_w)], axis=1)
  p["bfc"] = jnp.concatenate(sfc_b + pfc_b).reshape(1, -1)           # (1, 192)
  zeros_blk = jnp.zeros((ENC_CAT, 2 * LAT_CAT), jnp.float32)
  top = jnp.concatenate([_block_diag(smu_w), _block_diag(slv_w), zeros_blk], axis=1)
  bot = jnp.concatenate([zeros_blk, _block_diag(pmu_w), _block_diag(plv_w)], axis=1)
  p["wmulv"] = jnp.concatenate([top, bot], axis=0)                   # (192, 384)
  p["bmulv"] = jnp.concatenate(smu_b + slv_b + pmu_b + plv_b).reshape(1, -1)

  # ---- shared fusion linear ----
  w, b = _dense(nk(), LAT_CAT, EMBED)
  p["wfus"], p["bfus"] = w, b.reshape(1, -1)

  # ---- gating networks (concatenated) ----
  gfw, gfb = _dense(nk(), EMBED, 1)
  gcw, gcb = _dense(nk(), EMBED, 3)
  gsw, gsb = _dense(nk(), EMBED, 5)
  p["wgate"] = jnp.concatenate([gfw, gcw, gsw], axis=1)              # (32, 9)
  p["bgate"] = jnp.concatenate([gfb, gcb, gsb]).reshape(1, -1)

  # ---- MoE expert pool (9 experts) ----
  pw1, pb1, pwm, pbm, pwl, pbl = [], [], [], [], [], []
  for _ in range(NUM_POOL_EXPERTS):
    w, b = _dense(nk(), EMBED, EMBED); pw1.append(w); pb1.append(b)
    w, b = _dense(nk(), EMBED, EMBED); pwm.append(w); pbm.append(b)
    w, b = _dense(nk(), EMBED, EMBED); pwl.append(w); pbl.append(b)
  p["wpool1"] = jnp.concatenate(pw1, axis=1)                         # (32, 288)
  p["bpool1"] = jnp.concatenate(pb1).reshape(1, -1)
  p["wpoolmv"] = jnp.concatenate([_block_diag(pwm), _block_diag(pwl)], axis=1)
  p["bpoolmv"] = jnp.concatenate(pbm + pbl).reshape(1, -1)           # (1, 576)

  # ---- LearnableTokenAttention value path (q/k cancel since src len == 1) ----
  vp_w, vp_b = _dense(nk(), EMBED, EMBED)     # value_proj
  vi_w, vi_b = _dense(nk(), EMBED, EMBED)     # MHA v in_proj
  vo_w, vo_b = _dense(nk(), EMBED, EMBED)     # MHA out_proj
  p["wtok"] = vp_w @ vi_w @ vo_w
  p["btok"] = ((vp_b @ vi_w + vi_b) @ vo_w + vo_b).reshape(1, -1)

  # ---- transformer layers (stacked along leading dim) ----
  ln1g, ln1b, ln2g, ln2b = [], [], [], []
  wq, wkv, wpr, bpr, etok = [], [], [], [], []
  w1l, b1l, w2l, b2l, w3l, b3l = [], [], [], [], [], []
  for _ in range(NUM_LAYERS):
    ln1g.append(jnp.ones((1, EMBED), jnp.float32))
    ln1b.append(jnp.zeros((1, EMBED), jnp.float32))
    ln2g.append(jnp.ones((1, EMBED), jnp.float32))
    ln2b.append(jnp.zeros((1, EMBED), jnp.float32))
    w, _ = _dense(nk(), EMBED, EMBED); wq.append(w)                  # bias=False
    w, _ = _dense(nk(), EMBED, 2 * EMBED); wkv.append(w)             # bias=False
    w, b = _dense(nk(), EMBED, EMBED); wpr.append(w); bpr.append(b.reshape(1, -1))
    etok.append(jax.random.normal(nk(), (EMBED, NUM_FMOE_EXPERTS), jnp.float32))
    e1w, e1b, e2w, e2b, e3w, e3b = [], [], [], [], [], []
    for _ in range(NUM_FMOE_EXPERTS):
      w, b = _dense(nk(), EMBED, FMOE_HIDDEN); e1w.append(w); e1b.append(b)
      w, b = _dense(nk(), FMOE_HIDDEN, FMOE_HIDDEN); e2w.append(w); e2b.append(b)
      w, b = _dense(nk(), FMOE_HIDDEN, EMBED); e3w.append(w); e3b.append(b)
    w1l.append(jnp.concatenate(e1w, axis=1))                         # (32, 448)
    b1l.append(jnp.concatenate(e1b).reshape(1, -1))
    w2l.append(_block_diag(e2w))                                     # (448, 448)
    b2l.append(jnp.concatenate(e2b).reshape(1, -1))
    w3l.append(jnp.concatenate(e3w, axis=0))                         # (448, 32)
    b3l.append(jnp.stack(e3b))                                       # (7, 32)
  p["ln1g"], p["ln1b"] = jnp.stack(ln1g), jnp.stack(ln1b)
  p["ln2g"], p["ln2b"] = jnp.stack(ln2g), jnp.stack(ln2b)
  p["wq"], p["wkv"] = jnp.stack(wq), jnp.stack(wkv)
  p["wpr"], p["bpr"] = jnp.stack(wpr), jnp.stack(bpr)
  p["etok"] = jnp.stack(etok)
  p["w1"], p["b1"] = jnp.stack(w1l), jnp.stack(b1l)
  p["w2"], p["b2"] = jnp.stack(w2l), jnp.stack(b2l)
  p["w3"], p["b3m"] = jnp.stack(w3l), jnp.stack(b3l)

  # routing-coefficient expansion matrix: row e has ones on expert e's 64 lanes
  eye = jnp.eye(NUM_FMOE_EXPERTS, dtype=jnp.float32)
  p["expand"] = jnp.repeat(eye, FMOE_HIDDEN, axis=1)                 # (7, 448)

  # ---- classifier ----
  w, b = _dense(nk(), EMBED, NUM_CLASSES)
  p["wcls"], p["bcls"] = w, b.reshape(1, -1)
  return p


# ------------------------------- forward pass --------------------------------
def _full_spec(a):
  nd = a.ndim
  return pl.BlockSpec(a.shape, lambda i, _nd=nd: (0,) * _nd)


def mm_disentangled_forward(params, inputs, rng):
  B = inputs[0].shape[0]
  k1, k2 = jax.random.split(rng)
  eps_enc = jax.random.normal(k1, (B, 2 * LAT_CAT), jnp.float32)
  eps_moe = jax.random.normal(k2, (B, EMBED), jnp.float32)
  x_all = jnp.concatenate(inputs, axis=1)                            # (B, 56)
  mask = jnp.ones((B, NUM_MODALITIES), jnp.float32)

  args = [
      x_all, mask, eps_enc, eps_moe,
      params["wproj"], params["bproj"], params["wfeat"], params["bfeat"],
      params["wfc"], params["bfc"], params["wmulv"], params["bmulv"],
      params["wfus"], params["bfus"], params["wgate"], params["bgate"],
      params["wpool1"], params["bpool1"], params["wpoolmv"], params["bpoolmv"],
      params["wtok"], params["btok"],
      params["ln1g"], params["ln1b"], params["wq"], params["wkv"],
      params["wpr"], params["bpr"], params["ln2g"], params["ln2b"],
      params["etok"], params["w1"], params["b1"], params["w2"], params["b2"],
      params["w3"], params["b3m"], params["expand"],
      params["wcls"], params["bcls"],
  ]
  out_shapes = (
      jax.ShapeDtypeStruct((B, LAT_CAT), jnp.float32),      # z_shared (3x32)
      jax.ShapeDtypeStruct((B, LAT_CAT), jnp.float32),      # z_specific (3x32)
      jax.ShapeDtypeStruct((B, 2 * EMBED), jnp.float32),    # moe mu | logvar
      jax.ShapeDtypeStruct((B, NUM_CLASSES), jnp.float32),  # logits
  )
  zs, zp, mulv, logits = pl.pallas_call(
      _mm_disentangled_kernel,
      out_shape=out_shapes,
      grid=(1,),
      in_specs=[_full_spec(a) for a in args],
      out_specs=tuple(
          pl.BlockSpec(s.shape, lambda i, _nd=len(s.shape): (0,) * _nd)
          for s in out_shapes),
      compiler_params=pltpu.CompilerParams(dimension_semantics=("arbitrary",)),
  )(*args)

  shared_list = [zs[:, i * LAT_SHARED:(i + 1) * LAT_SHARED]
                 for i in range(NUM_MODALITIES)]
  specific_list = [zp[:, i * LAT_SPEC:(i + 1) * LAT_SPEC]
                   for i in range(NUM_MODALITIES)]
  moe_mu = mulv[:, :EMBED]
  moe_logvar = mulv[:, EMBED:]
  attn_weights = jnp.ones((B, NUM_TOKENS, 1), jnp.float32)   # src len 1 => all 1
  return logits, (shared_list, specific_list), moe_mu, moe_logvar, attn_weights


# ---------------------------------- main --------------------------------------
if __name__ == "__main__":
  key = jax.random.PRNGKey(0)
  pkey, dkey, nkey = jax.random.split(key, 3)
  params = init_params(pkey)
  dkeys = jax.random.split(dkey, NUM_MODALITIES)
  inputs = [jax.random.normal(k, (BATCH, d), jnp.float32)
            for k, d in zip(dkeys, MODALITY_DIMS)]

  fwd = jax.jit(mm_disentangled_forward)
  out = fwd(params, inputs, nkey)
  logits, (shared_list, specific_list), moe_mu, moe_logvar, attn_w = out
  jax.block_until_ready(logits)

  assert logits.shape == (BATCH, NUM_CLASSES)
  assert moe_mu.shape == (BATCH, EMBED) and moe_logvar.shape == (BATCH, EMBED)
  assert len(shared_list) == NUM_MODALITIES and len(specific_list) == NUM_MODALITIES
  assert shared_list[0].shape == (BATCH, LAT_SHARED)
  assert attn_w.shape == (BATCH, NUM_TOKENS, 1)
  assert bool(jnp.all(jnp.isfinite(logits)))
  print("KERNEL_OK")
</pallas_src>

<mosaic_0001>
module attributes {stable_mosaic.version = 11 : i64} {
  func.func @_mm_disentangled_kernel(%arg0: i32, %arg1: memref<2x56xf32, #tpu.memory_space<vmem>>, %arg2: memref<2x3xf32, #tpu.memory_space<vmem>>, %arg3: memref<2x192xf32, #tpu.memory_space<vmem>>, %arg4: memref<2x32xf32, #tpu.memory_space<vmem>>, %arg5: memref<56x96xf32, #tpu.memory_space<vmem>>, %arg6: memref<1x96xf32, #tpu.memory_space<vmem>>, %arg7: memref<96x96xf32, #tpu.memory_space<vmem>>, %arg8: memref<1x96xf32, #tpu.memory_space<vmem>>, %arg9: memref<96x192xf32, #tpu.memory_space<vmem>>, %arg10: memref<1x192xf32, #tpu.memory_space<vmem>>, %arg11: memref<192x384xf32, #tpu.memory_space<vmem>>, %arg12: memref<1x384xf32, #tpu.memory_space<vmem>>, %arg13: memref<96x32xf32, #tpu.memory_space<vmem>>, %arg14: memref<1x32xf32, #tpu.memory_space<vmem>>, %arg15: memref<32x9xf32, #tpu.memory_space<vmem>>, %arg16: memref<1x9xf32, #tpu.memory_space<vmem>>, %arg17: memref<32x288xf32, #tpu.memory_space<vmem>>, %arg18: memref<1x288xf32, #tpu.memory_space<vmem>>, %arg19: memref<288x576xf32, #tpu.memory_space<vmem>>, %arg20: memref<1x576xf32, #tpu.memory_space<vmem>>, %arg21: memref<32x32xf32, #tpu.memory_space<vmem>>, %arg22: memref<1x32xf32, #tpu.memory_space<vmem>>, %arg23: memref<2x1x32xf32, #tpu.memory_space<vmem>>, %arg24: memref<2x1x32xf32, #tpu.memory_space<vmem>>, %arg25: memref<2x32x32xf32, #tpu.memory_space<vmem>>, %arg26: memref<2x32x64xf32, #tpu.memory_space<vmem>>, %arg27: memref<2x32x32xf32, #tpu.memory_space<vmem>>, %arg28: memref<2x1x32xf32, #tpu.memory_space<vmem>>, %arg29: memref<2x1x32xf32, #tpu.memory_space<vmem>>, %arg30: memref<2x1x32xf32, #tpu.memory_space<vmem>>, %arg31: memref<2x32x7xf32, #tpu.memory_space<vmem>>, %arg32: memref<2x32x448xf32, #tpu.memory_space<vmem>>, %arg33: memref<2x1x448xf32, #tpu.memory_space<vmem>>, %arg34: memref<2x448x448xf32, #tpu.memory_space<vmem>>, %arg35: memref<2x1x448xf32, #tpu.memory_space<vmem>>, %arg36: memref<2x448x32xf32, #tpu.memory_space<vmem>>, %arg37: memref<2x7x32xf32, #tpu.memory_space<vmem>>, %arg38: memref<7x448xf32, #tpu.memory_space<vmem>>, %arg39: memref<32x5xf32, #tpu.memory_space<vmem>>, %arg40: memref<1x5xf32, #tpu.memory_space<vmem>>, %arg41: memref<2x96xf32, #tpu.memory_space<vmem>>, %arg42: memref<2x96xf32, #tpu.memory_space<vmem>>, %arg43: memref<2x64xf32, #tpu.memory_space<vmem>>, %arg44: memref<2x5xf32, #tpu.memory_space<vmem>>) attributes {dimension_semantics = [#tpu.dimension_semantics<arbitrary>], iteration_bounds = array<i64: 1>, scalar_prefetch = 0 : i64, scratch_operands = 0 : i64, tpu.core_type = #tpu.core_type<tc>, window_params = [{pipeline_mode = #tpu.pipeline_mode<synchronous>, transform_indices = @transform_0, window_bounds = array<i64: 2, 56>}, {pipeline_mode = #tpu.pipeline_mode<synchronous>, transform_indices = @transform_1, window_bounds = array<i64: 2, 3>}, {pipeline_mode = #tpu.pipeline_mode<synchronous>, transform_indices = @transform_2, window_bounds = array<i64: 2, 192>}, {pipeline_mode = #tpu.pipeline_mode<synchronous>, transform_indices = @transform_3, window_bounds = array<i64: 2, 32>}, {pipeline_mode = #tpu.pipeline_mode<synchronous>, transform_indices = @transform_4, window_bounds = array<i64: 56, 96>}, {pipeline_mode = #tpu.pipeline_mode<synchronous>, transform_indices = @transform_5, window_bounds = array<i64: 1, 96>}, {pipeline_mode = #tpu.pipeline_mode<synchronous>, transform_indices = @transform_6, window_bounds = array<i64: 96, 96>}, {pipeline_mode = #tpu.pipeline_mode<synchronous>, transform_indices = @transform_7, window_bounds = array<i64: 1, 96>}, {pipeline_mode = #tpu.pipeline_mode<synchronous>, transform_indices = @transform_8, window_bounds = array<i64: 96, 192>}, {pipeline_mode = #tpu.pipeline_mode<synchronous>, transform_indices = @transform_9, window_bounds = array<i64: 1, 192>}, {pipeline_mode = #tpu.pipeline_mode<synchronous>, transform_indices = @transform_10, window_bounds = array<i64: 192, 384>}, {pipeline_mode = #tpu.pipeline_mode<synchronous>, transform_indices = @transform_11, window_bounds = array<i64: 1, 384>}, {pipeline_mode = #tpu.pipeline_mode<synchronous>, transform_indices = @transform_12, window_bounds = array<i64: 96, 32>}, {pipeline_mode = #tpu.pipeline_mode<synchronous>, transform_indices = @transform_13, window_bounds = array<i64: 1, 32>}, {pipeline_mode = #tpu.pipeline_mode<synchronous>, transform_indices = @transform_14, window_bounds = array<i64: 32, 9>}, {pipeline_mode = #tpu.pipeline_mode<synchronous>, transform_indices = @transform_15, window_bounds = array<i64: 1, 9>}, {pipeline_mode = #tpu.pipeline_mode<synchronous>, transform_indices = @transform_16, window_bounds = array<i64: 32, 288>}, {pipeline_mode = #tpu.pipeline_mode<synchronous>, transform_indices = @transform_17, window_bounds = array<i64: 1, 288>}, {pipeline_mode = #tpu.pipeline_mode<synchronous>, transform_indices = @transform_18, window_bounds = array<i64: 288, 576>}, {pipeline_mode = #tpu.pipeline_mode<synchronous>, transform_indices = @transform_19, window_bounds = array<i64: 1, 576>}, {pipeline_mode = #tpu.pipeline_mode<synchronous>, transform_indices = @transform_20, window_bounds = array<i64: 32, 32>}, {pipeline_mode = #tpu.pipeline_mode<synchronous>, transform_indices = @transform_21, window_bounds = array<i64: 1, 32>}, {pipeline_mode = #tpu.pipeline_mode<synchronous>, transform_indices = @transform_22, window_bounds = array<i64: 2, 1, 32>}, {pipeline_mode = #tpu.pipeline_mode<synchronous>, transform_indices = @transform_23, window_bounds = array<i64: 2, 1, 32>}, {pipeline_mode = #tpu.pipeline_mode<synchronous>, transform_indices = @transform_24, window_bounds = array<i64: 2, 32, 32>}, {pipeline_mode = #tpu.pipeline_mode<synchronous>, transform_indices = @transform_25, window_bounds = array<i64: 2, 32, 64>}, {pipeline_mode = #tpu.pipeline_mode<synchronous>, transform_indices = @transform_26, window_bounds = array<i64: 2, 32, 32>}, {pipeline_mode = #tpu.pipeline_mode<synchronous>, transform_indices = @transform_27, window_bounds = array<i64: 2, 1, 32>}, {pipeline_mode = #tpu.pipeline_mode<synchronous>, transform_indices = @transform_28, window_bounds = array<i64: 2, 1, 32>}, {pipeline_mode = #tpu.pipeline_mode<synchronous>, transform_indices = @transform_29, window_bounds = array<i64: 2, 1, 32>}, {pipeline_mode = #tpu.pipeline_mode<synchronous>, transform_indices = @transform_30, window_bounds = array<i64: 2, 32, 7>}, {pipeline_mode = #tpu.pipeline_mode<synchronous>, transform_indices = @transform_31, window_bounds = array<i64: 2, 32, 448>}, {pipeline_mode = #tpu.pipeline_mode<synchronous>, transform_indices = @transform_32, window_bounds = array<i64: 2, 1, 448>}, {pipeline_mode = #tpu.pipeline_mode<synchronous>, transform_indices = @transform_33, window_bounds = array<i64: 2, 448, 448>}, {pipeline_mode = #tpu.pipeline_mode<synchronous>, transform_indices = @transform_34, window_bounds = array<i64: 2, 1, 448>}, {pipeline_mode = #tpu.pipeline_mode<synchronous>, transform_indices = @transform_35, window_bounds = array<i64: 2, 448, 32>}, {pipeline_mode = #tpu.pipeline_mode<synchronous>, transform_indices = @transform_36, window_bounds = array<i64: 2, 7, 32>}, {pipeline_mode = #tpu.pipeline_mode<synchronous>, transform_indices = @transform_37, window_bounds = array<i64: 7, 448>}, {pipeline_mode = #tpu.pipeline_mode<synchronous>, transform_indices = @transform_38, window_bounds = array<i64: 32, 5>}, {pipeline_mode = #tpu.pipeline_mode<synchronous>, transform_indices = @transform_39, window_bounds = array<i64: 1, 5>}, {pipeline_mode = #tpu.pipeline_mode<synchronous>, transform_indices = @transform_40, window_bounds = array<i64: 2, 96>}, {pipeline_mode = #tpu.pipeline_mode<synchronous>, transform_indices = @transform_41, window_bounds = array<i64: 2, 96>}, {pipeline_mode = #tpu.pipeline_mode<synchronous>, transform_indices = @transform_42, window_bounds = array<i64: 2, 64>}, {pipeline_mode = #tpu.pipeline_mode<synchronous>, transform_indices = @transform_43, window_bounds = array<i64: 2, 5>}]} {
    %c0 = arith.constant 0 : index
    %c0_0 = arith.constant 0 : index
    %0 = vector.load %arg1[%c0, %c0_0] : memref<2x56xf32, #tpu.memory_space<vmem>>, vector<2x56xf32>
    %c0_1 = arith.constant 0 : index
    %c0_2 = arith.constant 0 : index
    %1 = vector.load %arg5[%c0_1, %c0_2] : memref<56x96xf32, #tpu.memory_space<vmem>>, vector<56x96xf32>
    %cst = arith.constant dense<0.000000e+00> : vector<2x96xf32>
    %2 = tpu.matmul %0, %1, %cst {dimension_numbers = #tpu.dot_dimension_numbers<[1], [0], [0], [1], [0, 0, 1, 1], [], []>} : vector<2x56xf32>, vector<56x96xf32>, vector<2x96xf32> -> vector<2x96xf32>
    %c0_3 = arith.constant 0 : index
    %c0_4 = arith.constant 0 : index
    %3 = vector.load %arg6[%c0_3, %c0_4] : memref<1x96xf32, #tpu.memory_space<vmem>>, vector<1x96xf32>
    %4 = vector.broadcast %3 : vector<1x96xf32> to vector<2x96xf32>
    %5 = arith.addf %2, %4 : vector<2x96xf32>
    %c0_5 = arith.constant 0 : index
    %c0_6 = arith.constant 0 : index
    %6 = vector.load %arg7[%c0_5, %c0_6] : memref<96x96xf32, #tpu.memory_space<vmem>>, vector<96x96xf32>
    %cst_7 = arith.constant dense<0.000000e+00> : vector<2x96xf32>
    %7 = tpu.matmul %5, %6, %cst_7 {dimension_numbers = #tpu.dot_dimension_numbers<[1], [0], [0], [1], [0, 0, 1, 1], [], []>} : vector<2x96xf32>, vector<96x96xf32>, vector<2x96xf32> -> vector<2x96xf32>
    %c0_8 = arith.constant 0 : index
    %c0_9 = arith.constant 0 : index
    %8 = vector.load %arg8[%c0_8, %c0_9] : memref<1x96xf32, #tpu.memory_space<vmem>>, vector<1x96xf32>
    %9 = vector.broadcast %8 : vector<1x96xf32> to vector<2x96xf32>
    %10 = arith.addf %7, %9 : vector<2x96xf32>
    %cst_10 = arith.constant 0.000000e+00 : f32
    %11 = vector.broadcast %cst_10 : f32 to vector<2x96xf32>
    %12 = arith.maximumf %10, %11 : vector<2x96xf32>
    %c0_11 = arith.constant 0 : index
    %c0_12 = arith.constant 0 : index
    %13 = vector.load %arg9[%c0_11, %c0_12] : memref<96x192xf32, #tpu.memory_space<vmem>>, vector<96x192xf32>
    %cst_13 = arith.constant dense<0.000000e+00> : vector<2x192xf32>
    %14 = tpu.matmul %12, %13, %cst_13 {dimension_numbers = #tpu.dot_dimension_numbers<[1], [0], [0], [1], [0, 0, 1, 1], [], []>} : vector<2x96xf32>, vector<96x192xf32>, vector<2x192xf32> -> vector<2x192xf32>
    %c0_14 = arith.constant 0 : index
    %c0_15 = arith.constant 0 : index
    %15 = vector.load %arg10[%c0_14, %c0_15] : memref<1x192xf32, #tpu.memory_space<vmem>>, vector<1x192xf32>
    %16 = vector.broadcast %15 : vector<1x192xf32> to vector<2x192xf32>
    %17 = arith.addf %14, %16 : vector<2x192xf32>
    %cst_16 = arith.constant 0.000000e+00 : f32
    %18 = vector.broadcast %cst_16 : f32 to vector<2x192xf32>
    %19 = arith.maximumf %17, %18 : vector<2x192xf32>
    %c0_17 = arith.constant 0 : index
    %c0_18 = arith.constant 0 : index
    %20 = vector.load %arg11[%c0_17, %c0_18] : memref<192x384xf32, #tpu.memory_space<vmem>>, vector<192x384xf32>
    %cst_19 = arith.constant dense<0.000000e+00> : vector<2x384xf32>
    %21 = tpu.matmul %19, %20, %cst_19 {dimension_numbers = #tpu.dot_dimension_numbers<[1], [0], [0], [1], [0, 0, 1, 1], [], []>} : vector<2x192xf32>, vector<192x384xf32>, vector<2x384xf32> -> vector<2x384xf32>
    %c0_20 = arith.constant 0 : index
    %c0_21 = arith.constant 0 : index
    %22 = vector.load %arg12[%c0_20, %c0_21] : memref<1x384xf32, #tpu.memory_space<vmem>>, vector<1x384xf32>
    %23 = vector.broadcast %22 : vector<1x384xf32> to vector<2x384xf32>
    %24 = arith.addf %21, %23 : vector<2x384xf32>
    %25 = vector.extract_strided_slice %24 {offsets = [0, 0], sizes = [2, 96], strides = [1, 1]} : vector<2x384xf32> to vector<2x96xf32>
    %26 = vector.extract_strided_slice %24 {offsets = [0, 96], sizes = [2, 96], strides = [1, 1]} : vector<2x384xf32> to vector<2x96xf32>
    %27 = vector.extract_strided_slice %24 {offsets = [0, 192], sizes = [2, 96], strides = [1, 1]} : vector<2x384xf32> to vector<2x96xf32>
    %28 = vector.extract_strided_slice %24 {offsets = [0, 288], sizes = [2, 96], strides = [1, 1]} : vector<2x384xf32> to vector<2x96xf32>
    %c0_22 = arith.constant 0 : index
    %c0_23 = arith.constant 0 : index
    %29 = vector.load %arg3[%c0_22, %c0_23] : memref<2x192xf32, #tpu.memory_space<vmem>>, vector<2x192xf32>
    %30 = vector.extract_strided_slice %29 {offsets = [0, 0], sizes = [2, 96], strides = [1, 1]} : vector<2x192xf32> to vector<2x96xf32>
    %cst_24 = arith.constant 5.000000e-01 : f32
    %31 = vector.broadcast %cst_24 : f32 to vector<2x96xf32>
    %32 = arith.mulf %31, %26 : vector<2x96xf32>
    %33 = math.exp %32 : vector<2x96xf32>
    %34 = arith.mulf %30, %33 : vector<2x96xf32>
    %35 = arith.addf %25, %34 : vector<2x96xf32>
    %36 = vector.extract_strided_slice %29 {offsets = [0, 96], sizes = [2, 96], strides = [1, 1]} : vector<2x192xf32> to vector<2x96xf32>
    %cst_25 = arith.constant 5.000000e-01 : f32
    %37 = vector.broadcast %cst_25 : f32 to vector<2x96xf32>
    %38 = arith.mulf %37, %28 : vector<2x96xf32>
    %39 = math.exp %38 : vector<2x96xf32>
    %40 = arith.mulf %36, %39 : vector<2x96xf32>
    %41 = arith.addf %27, %40 : vector<2x96xf32>
    %c0_26 = arith.constant 0 : index
    %c0_27 = arith.constant 0 : index
    %42 = vector.load %arg41[%c0_26, %c0_27] : memref<2x96xf32, #tpu.memory_space<vmem>>, vector<2x96xf32>
    tpu.vector_store %arg41[%c0_26, %c0_27], %35 {strides = array<i32>} : memref<2x96xf32, #tpu.memory_space<vmem>>, vector<2x96xf32>,
    %c0_28 = arith.constant 0 : index
    %c0_29 = arith.constant 0 : index
    %43 = vector.load %arg42[%c0_28, %c0_29] : memref<2x96xf32, #tpu.memory_space<vmem>>, vector<2x96xf32>
    tpu.vector_store %arg42[%c0_28, %c0_29], %41 {strides = array<i32>} : memref<2x96xf32, #tpu.memory_space<vmem>>, vector<2x96xf32>,
    %c0_30 = arith.constant 0 : index
    %c0_31 = arith.constant 0 : index
    %44 = vector.load %arg13[%c0_30, %c0_31] : memref<96x32xf32, #tpu.memory_space<vmem>>, vector<96x32xf32>
    %cst_32 = arith.constant dense<0.000000e+00> : vector<2x32xf32>
    %45 = tpu.matmul %35, %44, %cst_32 {dimension_numbers = #tpu.dot_dimension_numbers<[1], [0], [0], [1], [0, 0, 1, 1], [], []>} : vector<2x96xf32>, vector<96x32xf32>, vector<2x32xf32> -> vector<2x32xf32>
    %c0_33 = arith.constant 0 : index
    %c0_34 = arith.constant 0 : index
    %46 = vector.load %arg14[%c0_33, %c0_34] : memref<1x32xf32, #tpu.memory_space<vmem>>, vector<1x32xf32>
    %47 = vector.broadcast %46 : vector<1x32xf32> to vector<2x32xf32>
    %48 = arith.addf %45, %47 : vector<2x32xf32>
    %c0_35 = arith.constant 0 : index
    %c0_36 = arith.constant 0 : index
    %49 = vector.load %arg15[%c0_35, %c0_36] : memref<32x9xf32, #tpu.memory_space<vmem>>, vector<32x9xf32>
    %cst_37 = arith.constant dense<0.000000e+00> : vector<2x9xf32>
    %50 = tpu.matmul %48, %49, %cst_37 {dimension_numbers = #tpu.dot_dimension_numbers<[1], [0], [0], [1], [0, 0, 1, 1], [], []>} : vector<2x32xf32>, vector<32x9xf32>, vector<2x9xf32> -> vector<2x9xf32>
    %c0_38 = arith.constant 0 : index
    %c0_39 = arith.constant 0 : index
    %51 = vector.load %arg16[%c0_38, %c0_39] : memref<1x9xf32, #tpu.memory_space<vmem>>, vector<1x9xf32>
    %52 = vector.broadcast %51 : vector<1x9xf32> to vector<2x9xf32>
    %53 = arith.addf %50, %52 : vector<2x9xf32>
    %cst_40 = arith.constant 1.000000e+00 : f32
    %54 = vector.broadcast %cst_40 : f32 to vector<2x1xf32>
    %55 = vector.extract_strided_slice %53 {offsets = [0, 1], sizes = [2, 3], strides = [1, 1]} : vector<2x9xf32> to vector<2x3xf32>
    %cst_41 = arith.constant dense<0xFF800000> : vector<2xf32>
    %56 = vector.multi_reduction <maximumf>, %55, %cst_41 [1] : vector<2x3xf32> to vector<2xf32>
    %57 = vector.shape_cast %56 : vector<2xf32> to vector<2x1xf32>
    %58 = vector.broadcast %57 : vector<2x1xf32> to vector<2x3xf32>
    %59 = arith.subf %55, %58 : vector<2x3xf32>
    %60 = math.exp %59 : vector<2x3xf32>
    %cst_42 = arith.constant dense<0.000000e+00> : vector<2xf32>
    %61 = vector.multi_reduction <add>, %60, %cst_42 [1] : vector<2x3xf32> to vector<2xf32>
    %62 = vector.shape_cast %61 : vector<2xf32> to vector<2x1xf32>
    %63 = tpu.reciprocal %62 {approx = true} : vector<2x1xf32> -> vector<2x1xf32>
    %64 = vector.broadcast %63 : vector<2x1xf32> to vector<2x3xf32>
    %65 = arith.mulf %60, %64 : vector<2x3xf32>
    %66 = vector.extract_strided_slice %53 {offsets = [0, 4], sizes = [2, 5], strides = [1, 1]} : vector<2x9xf32> to vector<2x5xf32>
    %cst_43 = arith.constant dense<0xFF800000> : vector<2xf32>
    %67 = vector.multi_reduction <maximumf>, %66, %cst_43 [1] : vector<2x5xf32> to vector<2xf32>
    %68 = vector.shape_cast %67 : vector<2xf32> to vector<2x1xf32>
    %69 = vector.broadcast %68 : vector<2x1xf32> to vector<2x5xf32>
    %70 = arith.subf %66, %69 : vector<2x5xf32>
    %71 = math.exp %70 : vector<2x5xf32>
    %cst_44 = arith.constant dense<0.000000e+00> : vector<2xf32>
    %72 = vector.multi_reduction <add>, %71, %cst_44 [1] : vector<2x5xf32> to vector<2xf32>
    %73 = vector.shape_cast %72 : vector<2xf32> to vector<2x1xf32>
    %74 = tpu.reciprocal %73 {approx = true} : vector<2x1xf32> -> vector<2x1xf32>
    %75 = vector.broadcast %74 : vector<2x1xf32> to vector<2x5xf32>
    %76 = arith.mulf %71, %75 : vector<2x5xf32>
    %c0_45 = arith.constant 0 : index
    %c0_46 = arith.constant 0 : index
    %77 = vector.load %arg2[%c0_45, %c0_46] : memref<2x3xf32, #tpu.memory_space<vmem>>, vector<2x3xf32>
    %cst_47 = arith.constant dense<0.000000e+00> : vector<2xf32>
    %78 = vector.multi_reduction <add>, %77, %cst_47 [1] : vector<2x3xf32> to vector<2xf32>
    %79 = vector.shape_cast %78 : vector<2xf32> to vector<2x1xf32>
    %cst_48 = arith.constant 3.000000e+00 : f32
    %80 = vector.broadcast %cst_48 : f32 to vector<2x1xf32>
    %81 = arith.divf %79, %80 : vector<2x1xf32>
    %cst_49 = arith.constant 1.000000e+00 : f32
    %82 = vector.broadcast %cst_49 : f32 to vector<2x1xf32>
    %83 = arith.subf %82, %81 : vector<2x1xf32>
    %84 = vector.broadcast %83 : vector<2x1xf32> to vector<2x3xf32>
    %85 = arith.mulf %65, %84 : vector<2x3xf32>
    %86 = vector.extract_strided_slice %85 {offsets = [0, 0], sizes = [2, 1], strides = [1, 1]} : vector<2x3xf32> to vector<2x1xf32>
    %87 = vector.extract_strided_slice %85 {offsets = [0, 1], sizes = [2, 1], strides = [1, 1]} : vector<2x3xf32> to vector<2x1xf32>
    %88 = vector.extract_strided_slice %85 {offsets = [0, 2], sizes = [2, 1], strides = [1, 1]} : vector<2x3xf32> to vector<2x1xf32>
    %89 = vector.extract_strided_slice %76 {offsets = [0, 0], sizes = [2, 1], strides = [1, 1]} : vector<2x5xf32> to vector<2x1xf32>
    %90 = vector.extract_strided_slice %76 {offsets = [0, 1], sizes = [2, 1], strides = [1, 1]} : vector<2x5xf32> to vector<2x1xf32>
    %91 = vector.extract_strided_slice %76 {offsets = [0, 2], sizes = [2, 1], strides = [1, 1]} : vector<2x5xf32> to vector<2x1xf32>
    %92 = vector.extract_strided_slice %76 {offsets = [0, 3], sizes = [2, 1], strides = [1, 1]} : vector<2x5xf32> to vector<2x1xf32>
    %93 = vector.extract_strided_slice %76 {offsets = [0, 4], sizes = [2, 1], strides = [1, 1]} : vector<2x5xf32> to vector<2x1xf32>
    %c0_50 = arith.constant 0 : index
    %c0_51 = arith.constant 0 : index
    %94 = vector.load %arg17[%c0_50, %c0_51] : memref<32x288xf32, #tpu.memory_space<vmem>>, vector<32x288xf32>
    %cst_52 = arith.constant dense<0.000000e+00> : vector<2x288xf32>
    %95 = tpu.matmul %48, %94, %cst_52 {dimension_numbers = #tpu.dot_dimension_numbers<[1], [0], [0], [1], [0, 0, 1, 1], [], []>} : vector<2x32xf32>, vector<32x288xf32>, vector<2x288xf32> -> vector<2x288xf32>
    %c0_53 = arith.constant 0 : index
    %c0_54 = arith.constant 0 : index
    %96 = vector.load %arg18[%c0_53, %c0_54] : memref<1x288xf32, #tpu.memory_space<vmem>>, vector<1x288xf32>
    %97 = vector.broadcast %96 : vector<1x288xf32> to vector<2x288xf32>
    %98 = arith.addf %95, %97 : vector<2x288xf32>
    %cst_55 = arith.constant 0.000000e+00 : f32
    %99 = vector.broadcast %cst_55 : f32 to vector<2x288xf32>
    %100 = arith.maximumf %98, %99 : vector<2x288xf32>
    %c0_56 = arith.constant 0 : index
    %c0_57 = arith.constant 0 : index
    %101 = vector.load %arg19[%c0_56, %c0_57] : memref<288x576xf32, #tpu.memory_space<vmem>>, vector<288x576xf32>
    %cst_58 = arith.constant dense<0.000000e+00> : vector<2x576xf32>
    %102 = tpu.matmul %100, %101, %cst_58 {dimension_numbers = #tpu.dot_dimension_numbers<[1], [0], [0], [1], [0, 0, 1, 1], [], []>} : vector<2x288xf32>, vector<288x576xf32>, vector<2x576xf32> -> vector<2x576xf32>
    %c0_59 = arith.constant 0 : index
    %c0_60 = arith.constant 0 : index
    %103 = vector.load %arg20[%c0_59, %c0_60] : memref<1x576xf32, #tpu.memory_space<vmem>>, vector<1x576xf32>
    %104 = vector.broadcast %103 : vector<1x576xf32> to vector<2x576xf32>
    %105 = arith.addf %102, %104 : vector<2x576xf32>
    %cst_61 = arith.constant 0.000000e+00 : f32
    %106 = vector.broadcast %cst_61 : f32 to vector<2x32xf32>
    %cst_62 = arith.constant 0.000000e+00 : f32
    %107 = vector.broadcast %cst_62 : f32 to vector<2x32xf32>
    %108 = vector.extract_strided_slice %105 {offsets = [0, 0], sizes = [2, 32], strides = [1, 1]} : vector<2x576xf32> to vector<2x32xf32>
    %109 = vector.extract_strided_slice %105 {offsets = [0, 288], sizes = [2, 32], strides = [1, 1]} : vector<2x576xf32> to vector<2x32xf32>
    %110 = math.exp %109 : vector<2x32xf32>
    %cst_63 = arith.constant 9.99999993E-9 : f32
    %111 = vector.broadcast %cst_63 : f32 to vector<2x32xf32>
    %112 = arith.addf %110, %111 : vector<2x32xf32>
    %113 = tpu.reciprocal %112 {approx = true} : vector<2x32xf32> -> vector<2x32xf32>
    %114 = arith.addf %106, %113 : vector<2x32xf32>
    %115 = vector.broadcast %54 : vector<2x1xf32> to vector<2x32xf32>
    %116 = arith.mulf %108, %115 : vector<2x32xf32>
    %117 = arith.mulf %116, %113 : vector<2x32xf32>
    %118 = arith.addf %107, %117 : vector<2x32xf32>
    %119 = vector.extract_strided_slice %105 {offsets = [0, 32], sizes = [2, 32], strides = [1, 1]} : vector<2x576xf32> to vector<2x32xf32>
    %120 = vector.extract_strided_slice %105 {offsets = [0, 320], sizes = [2, 32], strides = [1, 1]} : vector<2x576xf32> to vector<2x32xf32>
    %121 = math.exp %120 : vector<2x32xf32>
    %cst_64 = arith.constant 9.99999993E-9 : f32
    %122 = vector.broadcast %cst_64 : f32 to vector<2x32xf32>
    %123 = arith.addf %121, %122 : vector<2x32xf32>
    %124 = tpu.reciprocal %123 {approx = true} : vector<2x32xf32> -> vector<2x32xf32>
    %125 = arith.addf %114, %124 : vector<2x32xf32>
    %126 = vector.broadcast %86 : vector<2x1xf32> to vector<2x32xf32>
    %127 = arith.mulf %119, %126 : vector<2x32xf32>
    %128 = arith.mulf %127, %124 : vector<2x32xf32>
    %129 = arith.addf %118, %128 : vector<2x32xf32>
    %130 = vector.extract_strided_slice %105 {offsets = [0, 64], sizes = [2, 32], strides = [1, 1]} : vector<2x576xf32> to vector<2x32xf32>
    %131 = vector.extract_strided_slice %105 {offsets = [0, 352], sizes = [2, 32], strides = [1, 1]} : vector<2x576xf32> to vector<2x32xf32>
    %132 = math.exp %131 : vector<2x32xf32>
    %cst_65 = arith.constant 9.99999993E-9 : f32
    %133 = vector.broadcast %cst_65 : f32 to vector<2x32xf32>
    %134 = arith.addf %132, %133 : vector<2x32xf32>
    %135 = tpu.reciprocal %134 {approx = true} : vector<2x32xf32> -> vector<2x32xf32>
    %136 = arith.addf %125, %135 : vector<2x32xf32>
    %137 = vector.broadcast %87 : vector<2x1xf32> to vector<2x32xf32>
    %138 = arith.mulf %130, %137 : vector<2x32xf32>
    %139 = arith.mulf %138, %135 : vector<2x32xf32>
    %140 = arith.addf %129, %139 : vector<2x32xf32>
    %141 = vector.extract_strided_slice %105 {offsets = [0, 96], sizes = [2, 32], strides = [1, 1]} : vector<2x576xf32> to vector<2x32xf32>
    %142 = vector.extract_strided_slice %105 {offsets = [0, 384], sizes = [2, 32], strides = [1, 1]} : vector<2x576xf32> to vector<2x32xf32>
    %143 = math.exp %142 : vector<2x32xf32>
    %cst_66 = arith.constant 9.99999993E-9 : f32
    %144 = vector.broadcast %cst_66 : f32 to vector<2x32xf32>
    %145 = arith.addf %143, %144 : vector<2x32xf32>
    %146 = tpu.reciprocal %145 {approx = true} : vector<2x32xf32> -> vector<2x32xf32>
    %147 = arith.addf %136, %146 : vector<2x32xf32>
    %148 = vector.broadcast %88 : vector<2x1xf32> to vector<2x32xf32>
    %149 = arith.mulf %141, %148 : vector<2x32xf32>
    %150 = arith.mulf %149, %146 : vector<2x32xf32>
    %151 = arith.addf %140, %150 : vector<2x32xf32>
    %152 = vector.extract_strided_slice %105 {offsets = [0, 128], sizes = [2, 32], strides = [1, 1]} : vector<2x576xf32> to vector<2x32xf32>
    %153 = vector.extract_strided_slice %105 {offsets = [0, 416], sizes = [2, 32], strides = [1, 1]} : vector<2x576xf32> to vector<2x32xf32>
    %154 = math.exp %153 : vector<2x32xf32>
    %cst_67 = arith.constant 9.99999993E-9 : f32
    %155 = vector.broadcast %cst_67 : f32 to vector<2x32xf32>
    %156 = arith.addf %154, %155 : vector<2x32xf32>
    %157 = tpu.reciprocal %156 {approx = true} : vector<2x32xf32> -> vector<2x32xf32>
    %158 = arith.addf %147, %157 : vector<2x32xf32>
    %159 = vector.broadcast %89 : vector<2x1xf32> to vector<2x32xf32>
    %160 = arith.mulf %152, %159 : vector<2x32xf32>
    %161 = arith.mulf %160, %157 : vector<2x32xf32>
    %162 = arith.addf %151, %161 : vector<2x32xf32>
    %163 = vector.extract_strided_slice %105 {offsets = [0, 160], sizes = [2, 32], strides = [1, 1]} : vector<2x576xf32> to vector<2x32xf32>
    %164 = vector.extract_strided_slice %105 {offsets = [0, 448], sizes = [2, 32], strides = [1, 1]} : vector<2x576xf32> to vector<2x32xf32>
    %165 = math.exp %164 : vector<2x32xf32>
    %cst_68 = arith.constant 9.99999993E-9 : f32
    %166 = vector.broadcast %cst_68 : f32 to vector<2x32xf32>
    %167 = arith.addf %165, %166 : vector<2x32xf32>
    %168 = tpu.reciprocal %167 {approx = true} : vector<2x32xf32> -> vector<2x32xf32>
    %169 = arith.addf %158, %168 : vector<2x32xf32>
    %170 = vector.broadcast %90 : vector<2x1xf32> to vector<2x32xf32>
    %171 = arith.mulf %163, %170 : vector<2x32xf32>
    %172 = arith.mulf %171, %168 : vector<2x32xf32>
    %173 = arith.addf %162, %172 : vector<2x32xf32>
    %174 = vector.extract_strided_slice %105 {offsets = [0, 192], sizes = [2, 32], strides = [1, 1]} : vector<2x576xf32> to vector<2x32xf32>
    %175 = vector.extract_strided_slice %105 {offsets = [0, 480], sizes = [2, 32], strides = [1, 1]} : vector<2x576xf32> to vector<2x32xf32>
    %176 = math.exp %175 : vector<2x32xf32>
    %cst_69 = arith.constant 9.99999993E-9 : f32
    %177 = vector.broadcast %cst_69 : f32 to vector<2x32xf32>
    %178 = arith.addf %176, %177 : vector<2x32xf32>
    %179 = tpu.reciprocal %178 {approx = true} : vector<2x32xf32> -> vector<2x32xf32>
    %180 = arith.addf %169, %179 : vector<2x32xf32>
    %181 = vector.broadcast %91 : vector<2x1xf32> to vector<2x32xf32>
    %182 = arith.mulf %174, %181 : vector<2x32xf32>
    %183 = arith.mulf %182, %179 : vector<2x32xf32>
    %184 = arith.addf %173, %183 : vector<2x32xf32>
    %185 = vector.extract_strided_slice %105 {offsets = [0, 224], sizes = [2, 32], strides = [1, 1]} : vector<2x576xf32> to vector<2x32xf32>
    %186 = vector.extract_strided_slice %105 {offsets = [0, 512], sizes = [2, 32], strides = [1, 1]} : vector<2x576xf32> to vector<2x32xf32>
    %187 = math.exp %186 : vector<2x32xf32>
    %cst_70 = arith.constant 9.99999993E-9 : f32
    %188 = vector.broadcast %cst_70 : f32 to vector<2x32xf32>
    %189 = arith.addf %187, %188 : vector<2x32xf32>
    %190 = tpu.reciprocal %189 {approx = true} : vector<2x32xf32> -> vector<2x32xf32>
    %191 = arith.addf %180, %190 : vector<2x32xf32>
    %192 = vector.broadcast %92 : vector<2x1xf32> to vector<2x32xf32>
    %193 = arith.mulf %185, %192 : vector<2x32xf32>
    %194 = arith.mulf %193, %190 : vector<2x32xf32>
    %195 = arith.addf %184, %194 : vector<2x32xf32>
    %196 = vector.extract_strided_slice %105 {offsets = [0, 256], sizes = [2, 32], strides = [1, 1]} : vector<2x576xf32> to vector<2x32xf32>
    %197 = vector.extract_strided_slice %105 {offsets = [0, 544], sizes = [2, 32], strides = [1, 1]} : vector<2x576xf32> to vector<2x32xf32>
    %198 = math.exp %197 : vector<2x32xf32>
    %cst_71 = arith.constant 9.99999993E-9 : f32
    %199 = vector.broadcast %cst_71 : f32 to vector<2x32xf32>
    %200 = arith.addf %198, %199 : vector<2x32xf32>
    %201 = tpu.reciprocal %200 {approx = true} : vector<2x32xf32> -> vector<2x32xf32>
    %202 = arith.addf %191, %201 : vector<2x32xf32>
    %203 = vector.broadcast %93 : vector<2x1xf32> to vector<2x32xf32>
    %204 = arith.mulf %196, %203 : vector<2x32xf32>
    %205 = arith.mulf %204, %201 : vector<2x32xf32>
    %206 = arith.addf %195, %205 : vector<2x32xf32>
    %207 = tpu.reciprocal %202 {approx = true} : vector<2x32xf32> -> vector<2x32xf32>
    %208 = arith.mulf %206, %207 : vector<2x32xf32>
    %cst_72 = arith.constant 9.99999993E-9 : f32
    %209 = vector.broadcast %cst_72 : f32 to vector<2x32xf32>
    %210 = arith.addf %207, %209 : vector<2x32xf32>
    %211 = math.log %210 : vector<2x32xf32>
    %212 = tpu.concatenate %208, %211 in 1 : vector<2x32xf32>, vector<2x32xf32> -> vector<2x64xf32>
    %c0_73 = arith.constant 0 : index
    %c0_74 = arith.constant 0 : index
    %213 = vector.load %arg43[%c0_73, %c0_74] : memref<2x64xf32, #tpu.memory_space<vmem>>, vector<2x64xf32>
    tpu.vector_store %arg43[%c0_73, %c0_74], %212 {strides = array<i32>} : memref<2x64xf32, #tpu.memory_space<vmem>>, vector<2x64xf32>,
    %c0_75 = arith.constant 0 : index
    %c0_76 = arith.constant 0 : index
    %214 = vector.load %arg4[%c0_75, %c0_76] : memref<2x32xf32, #tpu.memory_space<vmem>>, vector<2x32xf32>
    %cst_77 = arith.constant 5.000000e-01 : f32
    %215 = vector.broadcast %cst_77 : f32 to vector<2x32xf32>
    %216 = arith.mulf %215, %211 : vector<2x32xf32>
    %217 = math.exp %216 : vector<2x32xf32>
    %218 = arith.mulf %214, %217 : vector<2x32xf32>
    %219 = arith.addf %208, %218 : vector<2x32xf32>
    %c0_78 = arith.constant 0 : index
    %c0_79 = arith.constant 0 : index
    %220 = vector.load %arg21[%c0_78, %c0_79] : memref<32x32xf32, #tpu.memory_space<vmem>>, vector<32x32xf32>
    %cst_80 = arith.constant dense<0.000000e+00> : vector<2x32xf32>
    %221 = tpu.matmul %219, %220, %cst_80 {dimension_numbers = #tpu.dot_dimension_numbers<[1], [0], [0], [1], [0, 0, 1, 1], [], []>} : vector<2x32xf32>, vector<32x32xf32>, vector<2x32xf32> -> vector<2x32xf32>
    %c0_81 = arith.constant 0 : index
    %c0_82 = arith.constant 0 : index
    %222 = vector.load %arg22[%c0_81, %c0_82] : memref<1x32xf32, #tpu.memory_space<vmem>>, vector<1x32xf32>
    %223 = vector.broadcast %222 : vector<1x32xf32> to vector<2x32xf32>
    %224 = arith.addf %221, %223 : vector<2x32xf32>
    %cst_83 = arith.constant dense<0.000000e+00> : vector<2xf32>
    %225 = vector.multi_reduction <add>, %224, %cst_83 [1] : vector<2x32xf32> to vector<2xf32>
    %226 = vector.shape_cast %225 : vector<2xf32> to vector<2x1xf32>
    %cst_84 = arith.constant 3.200000e+01 : f32
    %227 = vector.broadcast %cst_84 : f32 to vector<2x1xf32>
    %228 = arith.divf %226, %227 : vector<2x1xf32>
    %229 = vector.broadcast %228 : vector<2x1xf32> to vector<2x32xf32>
    %230 = arith.subf %224, %229 : vector<2x32xf32>
    %231 = arith.mulf %230, %230 : vector<2x32xf32>
    %cst_85 = arith.constant dense<0.000000e+00> : vector<2xf32>
    %232 = vector.multi_reduction <add>, %231, %cst_85 [1] : vector<2x32xf32> to vector<2xf32>
    %233 = vector.shape_cast %232 : vector<2xf32> to vector<2x1xf32>
    %cst_86 = arith.constant 3.200000e+01 : f32
    %234 = vector.broadcast %cst_86 : f32 to vector<2x1xf32>
    %235 = arith.divf %233, %234 : vector<2x1xf32>
    %236 = vector.broadcast %228 : vector<2x1xf32> to vector<2x32xf32>
    %237 = arith.subf %224, %236 : vector<2x32xf32>
    %cst_87 = arith.constant 9.99999974E-6 : f32
    %238 = vector.broadcast %cst_87 : f32 to vector<2x1xf32>
    %239 = arith.addf %235, %238 : vector<2x1xf32>
    %240 = math.rsqrt %239 : vector<2x1xf32>
    %241 = vector.broadcast %240 : vector<2x1xf32> to vector<2x32xf32>
    %242 = arith.mulf %237, %241 : vector<2x32xf32>
    %c0_88 = arith.constant 0 : index
    %c0_89 = arith.constant 0 : index
    %c0_90 = arith.constant 0 : index
    %243 = vector.load %arg23[%c0_88, %c0_89, %c0_90] : memref<2x1x32xf32, #tpu.memory_space<vmem>>, vector<1x1x32xf32>
    %244 = vector.shape_cast %243 : vector<1x1x32xf32> to vector<1x32xf32>
    %245 = vector.broadcast %244 : vector<1x32xf32> to vector<2x32xf32>
    %246 = arith.mulf %242, %245 : vector<2x32xf32>
    %c0_91 = arith.constant 0 : index
    %c0_92 = arith.constant 0 : index
    %c0_93 = arith.constant 0 : index
    %247 = vector.load %arg24[%c0_91, %c0_92, %c0_93] : memref<2x1x32xf32, #tpu.memory_space<vmem>>, vector<1x1x32xf32>
    %248 = vector.shape_cast %247 : vector<1x1x32xf32> to vector<1x32xf32>
    %249 = vector.broadcast %248 : vector<1x32xf32> to vector<2x32xf32>
    %250 = arith.addf %246, %249 : vector<2x32xf32>
    %c0_94 = arith.constant 0 : index
    %c0_95 = arith.constant 0 : index
    %c0_96 = arith.constant 0 : index
    %251 = vector.load %arg25[%c0_94, %c0_95, %c0_96] : memref<2x32x32xf32, #tpu.memory_space<vmem>>, vector<1x32x32xf32>
    %252 = vector.shape_cast %251 : vector<1x32x32xf32> to vector<32x32xf32>
    %cst_97 = arith.constant dense<0.000000e+00> : vector<2x32xf32>
    %253 = tpu.matmul %250, %252, %cst_97 {dimension_numbers = #tpu.dot_dimension_numbers<[1], [0], [0], [1], [0, 0, 1, 1], [], []>} : vector<2x32xf32>, vector<32x32xf32>, vector<2x32xf32> -> vector<2x32xf32>
    %c0_98 = arith.constant 0 : index
    %c0_99 = arith.constant 0 : index
    %c0_100 = arith.constant 0 : index
    %254 = vector.load %arg26[%c0_98, %c0_99, %c0_100] : memref<2x32x64xf32, #tpu.memory_space<vmem>>, vector<1x32x64xf32>
    %255 = vector.shape_cast %254 : vector<1x32x64xf32> to vector<32x64xf32>
    %cst_101 = arith.constant dense<0.000000e+00> : vector<2x64xf32>
    %256 = tpu.matmul %250, %255, %cst_101 {dimension_numbers = #tpu.dot_dimension_numbers<[1], [0], [0], [1], [0, 0, 1, 1], [], []>} : vector<2x32xf32>, vector<32x64xf32>, vector<2x64xf32> -> vector<2x64xf32>
    %257 = vector.extract_strided_slice %256 {offsets = [0, 0], sizes = [2, 32], strides = [1, 1]} : vector<2x64xf32> to vector<2x32xf32>
    %258 = vector.extract_strided_slice %256 {offsets = [0, 32], sizes = [2, 32], strides = [1, 1]} : vector<2x64xf32> to vector<2x32xf32>
    %259 = vector.extract_strided_slice %253 {offsets = [0, 0], sizes = [2, 8], strides = [1, 1]} : vector<2x32xf32> to vector<2x8xf32>
    %260 = vector.extract_strided_slice %257 {offsets = [0, 0], sizes = [2, 8], strides = [1, 1]} : vector<2x32xf32> to vector<2x8xf32>
    %261 = vector.extract_strided_slice %258 {offsets = [0, 0], sizes = [2, 8], strides = [1, 1]} : vector<2x32xf32> to vector<2x8xf32>
    %cst_102 = arith.constant dense<0.000000e+00> : vector<2x2xf32>
    %262 = tpu.matmul %259, %260, %cst_102 {dimension_numbers = #tpu.dot_dimension_numbers<[1], [1], [0], [0], [0, 0, 1, 0], [], []>} : vector<2x8xf32>, vector<2x8xf32>, vector<2x2xf32> -> vector<2x2xf32>
    %cst_103 = arith.constant 0.353553385 : f32
    %263 = vector.broadcast %cst_103 : f32 to vector<2x2xf32>
    %264 = arith.mulf %262, %263 : vector<2x2xf32>
    %cst_104 = arith.constant dense<0xFF800000> : vector<2xf32>
    %265 = vector.multi_reduction <maximumf>, %264, %cst_104 [1] : vector<2x2xf32> to vector<2xf32>
    %266 = vector.shape_cast %265 : vector<2xf32> to vector<2x1xf32>
    %267 = vector.broadcast %266 : vector<2x1xf32> to vector<2x2xf32>
    %268 = arith.subf %264, %267 : vector<2x2xf32>
    %269 = math.exp %268 : vector<2x2xf32>
    %cst_105 = arith.constant dense<0.000000e+00> : vector<2xf32>
    %270 = vector.multi_reduction <add>, %269, %cst_105 [1] : vector<2x2xf32> to vector<2xf32>
    %271 = vector.shape_cast %270 : vector<2xf32> to vector<2x1xf32>
    %272 = tpu.reciprocal %271 {approx = true} : vector<2x1xf32> -> vector<2x1xf32>
    %273 = vector.broadcast %272 : vector<2x1xf32> to vector<2x2xf32>
    %274 = arith.mulf %269, %273 : vector<2x2xf32>
    %cst_106 = arith.constant dense<0.000000e+00> : vector<2x8xf32>
    %275 = tpu.matmul %274, %261, %cst_106 {dimension_numbers = #tpu.dot_dimension_numbers<[1], [0], [0], [1], [0, 0, 1, 1], [], []>} : vector<2x2xf32>, vector<2x8xf32>, vector<2x8xf32> -> vector<2x8xf32>
    %276 = vector.extract_strided_slice %253 {offsets = [0, 8], sizes = [2, 8], strides = [1, 1]} : vector<2x32xf32> to vector<2x8xf32>
    %277 = vector.extract_strided_slice %257 {offsets = [0, 8], sizes = [2, 8], strides = [1, 1]} : vector<2x32xf32> to vector<2x8xf32>
    %278 = vector.extract_strided_slice %258 {offsets = [0, 8], sizes = [2, 8], strides = [1, 1]} : vector<2x32xf32> to vector<2x8xf32>
    %cst_107 = arith.constant dense<0.000000e+00> : vector<2x2xf32>
    %279 = tpu.matmul %276, %277, %cst_107 {dimension_numbers = #tpu.dot_dimension_numbers<[1], [1], [0], [0], [0, 0, 1, 0], [], []>} : vector<2x8xf32>, vector<2x8xf32>, vector<2x2xf32> -> vector<2x2xf32>
    %cst_108 = arith.constant 0.353553385 : f32
    %280 = vector.broadcast %cst_108 : f32 to vector<2x2xf32>
    %281 = arith.mulf %279, %280 : vector<2x2xf32>
    %cst_109 = arith.constant dense<0xFF800000> : vector<2xf32>
    %282 = vector.multi_reduction <maximumf>, %281, %cst_109 [1] : vector<2x2xf32> to vector<2xf32>
    %283 = vector.shape_cast %282 : vector<2xf32> to vector<2x1xf32>
    %284 = vector.broadcast %283 : vector<2x1xf32> to vector<2x2xf32>
    %285 = arith.subf %281, %284 : vector<2x2xf32>
    %286 = math.exp %285 : vector<2x2xf32>
    %cst_110 = arith.constant dense<0.000000e+00> : vector<2xf32>
    %287 = vector.multi_reduction <add>, %286, %cst_110 [1] : vector<2x2xf32> to vector<2xf32>
    %288 = vector.shape_cast %287 : vector<2xf32> to vector<2x1xf32>
    %289 = tpu.reciprocal %288 {approx = true} : vector<2x1xf32> -> vector<2x1xf32>
    %290 = vector.broadcast %289 : vector<2x1xf32> to vector<2x2xf32>
    %291 = arith.mulf %286, %290 : vector<2x2xf32>
    %cst_111 = arith.constant dense<0.000000e+00> : vector<2x8xf32>
    %292 = tpu.matmul %291, %278, %cst_111 {dimension_numbers = #tpu.dot_dimension_numbers<[1], [0], [0], [1], [0, 0, 1, 1], [], []>} : vector<2x2xf32>, vector<2x8xf32>, vector<2x8xf32> -> vector<2x8xf32>
    %293 = vector.extract_strided_slice %253 {offsets = [0, 16], sizes = [2, 8], strides = [1, 1]} : vector<2x32xf32> to vector<2x8xf32>
    %294 = vector.extract_strided_slice %257 {offsets = [0, 16], sizes = [2, 8], strides = [1, 1]} : vector<2x32xf32> to vector<2x8xf32>
    %295 = vector.extract_strided_slice %258 {offsets = [0, 16], sizes = [2, 8], strides = [1, 1]} : vector<2x32xf32> to vector<2x8xf32>
    %cst_112 = arith.constant dense<0.000000e+00> : vector<2x2xf32>
    %296 = tpu.matmul %293, %294, %cst_112 {dimension_numbers = #tpu.dot_dimension_numbers<[1], [1], [0], [0], [0, 0, 1, 0], [], []>} : vector<2x8xf32>, vector<2x8xf32>, vector<2x2xf32> -> vector<2x2xf32>
    %cst_113 = arith.constant 0.353553385 : f32
    %297 = vector.broadcast %cst_113 : f32 to vector<2x2xf32>
    %298 = arith.mulf %296, %297 : vector<2x2xf32>
    %cst_114 = arith.constant dense<0xFF800000> : vector<2xf32>
    %299 = vector.multi_reduction <maximumf>, %298, %cst_114 [1] : vector<2x2xf32> to vector<2xf32>
    %300 = vector.shape_cast %299 : vector<2xf32> to vector<2x1xf32>
    %301 = vector.broadcast %300 : vector<2x1xf32> to vector<2x2xf32>
    %302 = arith.subf %298, %301 : vector<2x2xf32>
    %303 = math.exp %302 : vector<2x2xf32>
    %cst_115 = arith.constant dense<0.000000e+00> : vector<2xf32>
    %304 = vector.multi_reduction <add>, %303, %cst_115 [1] : vector<2x2xf32> to vector<2xf32>
    %305 = vector.shape_cast %304 : vector<2xf32> to vector<2x1xf32>
    %306 = tpu.reciprocal %305 {approx = true} : vector<2x1xf32> -> vector<2x1xf32>
    %307 = vector.broadcast %306 : vector<2x1xf32> to vector<2x2xf32>
    %308 = arith.mulf %303, %307 : vector<2x2xf32>
    %cst_116 = arith.constant dense<0.000000e+00> : vector<2x8xf32>
    %309 = tpu.matmul %308, %295, %cst_116 {dimension_numbers = #tpu.dot_dimension_numbers<[1], [0], [0], [1], [0, 0, 1, 1], [], []>} : vector<2x2xf32>, vector<2x8xf32>, vector<2x8xf32> -> vector<2x8xf32>
    %310 = vector.extract_strided_slice %253 {offsets = [0, 24], sizes = [2, 8], strides = [1, 1]} : vector<2x32xf32> to vector<2x8xf32>
    %311 = vector.extract_strided_slice %257 {offsets = [0, 24], sizes = [2, 8], strides = [1, 1]} : vector<2x32xf32> to vector<2x8xf32>
    %312 = vector.extract_strided_slice %258 {offsets = [0, 24], sizes = [2, 8], strides = [1, 1]} : vector<2x32xf32> to vector<2x8xf32>
    %cst_117 = arith.constant dense<0.000000e+00> : vector<2x2xf32>
    %313 = tpu.matmul %310, %311, %cst_117 {dimension_numbers = #tpu.dot_dimension_numbers<[1], [1], [0], [0], [0, 0, 1, 0], [], []>} : vector<2x8xf32>, vector<2x8xf32>, vector<2x2xf32> -> vector<2x2xf32>
    %cst_118 = arith.constant 0.353553385 : f32
    %314 = vector.broadcast %cst_118 : f32 to vector<2x2xf32>
    %315 = arith.mulf %313, %314 : vector<2x2xf32>
    %cst_119 = arith.constant dense<0xFF800000> : vector<2xf32>
    %316 = vector.multi_reduction <maximumf>, %315, %cst_119 [1] : vector<2x2xf32> to vector<2xf32>
    %317 = vector.shape_cast %316 : vector<2xf32> to vector<2x1xf32>
    %318 = vector.broadcast %317 : vector<2x1xf32> to vector<2x2xf32>
    %319 = arith.subf %315, %318 : vector<2x2xf32>
    %320 = math.exp %319 : vector<2x2xf32>
    %cst_120 = arith.constant dense<0.000000e+00> : vector<2xf32>
    %321 = vector.multi_reduction <add>, %320, %cst_120 [1] : vector<2x2xf32> to vector<2xf32>
    %322 = vector.shape_cast %321 : vector<2xf32> to vector<2x1xf32>
    %323 = tpu.reciprocal %322 {approx = true} : vector<2x1xf32> -> vector<2x1xf32>
    %324 = vector.broadcast %323 : vector<2x1xf32> to vector<2x2xf32>
    %325 = arith.mulf %320, %324 : vector<2x2xf32>
    %cst_121 = arith.constant dense<0.000000e+00> : vector<2x8xf32>
    %326 = tpu.matmul %325, %312, %cst_121 {dimension_numbers = #tpu.dot_dimension_numbers<[1], [0], [0], [1], [0, 0, 1, 1], [], []>} : vector<2x2xf32>, vector<2x8xf32>, vector<2x8xf32> -> vector<2x8xf32>
    %327 = tpu.concatenate %275, %292, %309, %326 in 1 : vector<2x8xf32>, vector<2x8xf32>, vector<2x8xf32>, vector<2x8xf32> -> vector<2x32xf32>
    %c0_122 = arith.constant 0 : index
    %c0_123 = arith.constant 0 : index
    %c0_124 = arith.constant 0 : index
    %328 = vector.load %arg27[%c0_122, %c0_123, %c0_124] : memref<2x32x32xf32, #tpu.memory_space<vmem>>, vector<1x32x32xf32>
    %329 = vector.shape_cast %328 : vector<1x32x32xf32> to vector<32x32xf32>
    %cst_125 = arith.constant dense<0.000000e+00> : vector<2x32xf32>
    %330 = tpu.matmul %327, %329, %cst_125 {dimension_numbers = #tpu.dot_dimension_numbers<[1], [0], [0], [1], [0, 0, 1, 1], [], []>} : vector<2x32xf32>, vector<32x32xf32>, vector<2x32xf32> -> vector<2x32xf32>
    %331 = arith.addf %224, %330 : vector<2x32xf32>
    %c0_126 = arith.constant 0 : index
    %c0_127 = arith.constant 0 : index
    %c0_128 = arith.constant 0 : index
    %332 = vector.load %arg28[%c0_126, %c0_127, %c0_128] : memref<2x1x32xf32, #tpu.memory_space<vmem>>, vector<1x1x32xf32>
    %333 = vector.shape_cast %332 : vector<1x1x32xf32> to vector<1x32xf32>
    %334 = vector.broadcast %333 : vector<1x32xf32> to vector<2x32xf32>
    %335 = arith.addf %331, %334 : vector<2x32xf32>
    %cst_129 = arith.constant dense<0.000000e+00> : vector<2xf32>
    %336 = vector.multi_reduction <add>, %335, %cst_129 [1] : vector<2x32xf32> to vector<2xf32>
    %337 = vector.shape_cast %336 : vector<2xf32> to vector<2x1xf32>
    %cst_130 = arith.constant 3.200000e+01 : f32
    %338 = vector.broadcast %cst_130 : f32 to vector<2x1xf32>
    %339 = arith.divf %337, %338 : vector<2x1xf32>
    %340 = vector.broadcast %339 : vector<2x1xf32> to vector<2x32xf32>
    %341 = arith.subf %335, %340 : vector<2x32xf32>
    %342 = arith.mulf %341, %341 : vector<2x32xf32>
    %cst_131 = arith.constant dense<0.000000e+00> : vector<2xf32>
    %343 = vector.multi_reduction <add>, %342, %cst_131 [1] : vector<2x32xf32> to vector<2xf32>
    %344 = vector.shape_cast %343 : vector<2xf32> to vector<2x1xf32>
    %cst_132 = arith.constant 3.200000e+01 : f32
    %345 = vector.broadcast %cst_132 : f32 to vector<2x1xf32>
    %346 = arith.divf %344, %345 : vector<2x1xf32>
    %347 = vector.broadcast %339 : vector<2x1xf32> to vector<2x32xf32>
    %348 = arith.subf %335, %347 : vector<2x32xf32>
    %cst_133 = arith.constant 9.99999974E-6 : f32
    %349 = vector.broadcast %cst_133 : f32 to vector<2x1xf32>
    %350 = arith.addf %346, %349 : vector<2x1xf32>
    %351 = math.rsqrt %350 : vector<2x1xf32>
    %352 = vector.broadcast %351 : vector<2x1xf32> to vector<2x32xf32>
    %353 = arith.mulf %348, %352 : vector<2x32xf32>
    %c0_134 = arith.constant 0 : index
    %c0_135 = arith.constant 0 : index
    %c0_136 = arith.constant 0 : index
    %354 = vector.load %arg29[%c0_134, %c0_135, %c0_136] : memref<2x1x32xf32, #tpu.memory_space<vmem>>, vector<1x1x32xf32>
    %355 = vector.shape_cast %354 : vector<1x1x32xf32> to vector<1x32xf32>
    %356 = vector.broadcast %355 : vector<1x32xf32> to vector<2x32xf32>
    %357 = arith.mulf %353, %356 : vector<2x32xf32>
    %c0_137 = arith.constant 0 : index
    %c0_138 = arith.constant 0 : index
    %c0_139 = arith.constant 0 : index
    %358 = vector.load %arg30[%c0_137, %c0_138, %c0_139] : memref<2x1x32xf32, #tpu.memory_space<vmem>>, vector<1x1x32xf32>
    %359 = vector.shape_cast %358 : vector<1x1x32xf32> to vector<1x32xf32>
    %360 = vector.broadcast %359 : vector<1x32xf32> to vector<2x32xf32>
    %361 = arith.addf %357, %360 : vector<2x32xf32>
    %c0_140 = arith.constant 0 : index
    %c0_141 = arith.constant 0 : index
    %c0_142 = arith.constant 0 : index
    %362 = vector.load %arg31[%c0_140, %c0_141, %c0_142] : memref<2x32x7xf32, #tpu.memory_space<vmem>>, vector<1x32x7xf32>
    %363 = vector.shape_cast %362 : vector<1x32x7xf32> to vector<32x7xf32>
    %cst_143 = arith.constant dense<0.000000e+00> : vector<2x7xf32>
    %364 = tpu.matmul %361, %363, %cst_143 {dimension_numbers = #tpu.dot_dimension_numbers<[1], [0], [0], [1], [0, 0, 1, 1], [], []>} : vector<2x32xf32>, vector<32x7xf32>, vector<2x7xf32> -> vector<2x7xf32>
    %365 = tpu.iota {dimensions = array<i32: 1>} : vector<2x7xi32>
    %366 = arith.sitofp %365 : vector<2x7xi32> to vector<2x7xf32>
    %cst_144 = arith.constant dense<0xFF800000> : vector<2xf32>
    %367 = vector.multi_reduction <maximumf>, %364, %cst_144 [1] : vector<2x7xf32> to vector<2xf32>
    %368 = vector.shape_cast %367 : vector<2xf32> to vector<2x1xf32>
    %369 = vector.broadcast %368 : vector<2x1xf32> to vector<2x7xf32>
    %370 = arith.cmpf oge, %364, %369 : vector<2x7xf32>
    %cst_145 = arith.constant 7.000000e+00 : f32
    %371 = vector.broadcast %cst_145 : f32 to vector<2x7xf32>
    %372 = arith.select %370, %366, %371 : vector<2x7xi1>, vector<2x7xf32>
    %cst_146 = arith.constant dense<0x7F800000> : vector<2xf32>
    %373 = vector.multi_reduction <minimumf>, %372, %cst_146 [1] : vector<2x7xf32> to vector<2xf32>
    %374 = vector.shape_cast %373 : vector<2xf32> to vector<2x1xf32>
    %375 = vector.broadcast %374 : vector<2x1xf32> to vector<2x7xf32>
    %376 = arith.cmpf oeq, %366, %375 : vector<2x7xf32>
    %cst_147 = arith.constant 0xFF800000 : f32
    %377 = vector.broadcast %cst_147 : f32 to vector<2x7xf32>
    %378 = arith.select %376, %377, %364 : vector<2x7xi1>, vector<2x7xf32>
    %cst_148 = arith.constant dense<0xFF800000> : vector<2xf32>
    %379 = vector.multi_reduction <maximumf>, %378, %cst_148 [1] : vector<2x7xf32> to vector<2xf32>
    %380 = vector.shape_cast %379 : vector<2xf32> to vector<2x1xf32>
    %381 = vector.broadcast %380 : vector<2x1xf32> to vector<2x7xf32>
    %382 = arith.cmpf oge, %378, %381 : vector<2x7xf32>
    %cst_149 = arith.constant 7.000000e+00 : f32
    %383 = vector.broadcast %cst_149 : f32 to vector<2x7xf32>
    %384 = arith.select %382, %366, %383 : vector<2x7xi1>, vector<2x7xf32>
    %cst_150 = arith.constant dense<0x7F800000> : vector<2xf32>
    %385 = vector.multi_reduction <minimumf>, %384, %cst_150 [1] : vector<2x7xf32> to vector<2xf32>
    %386 = vector.shape_cast %385 : vector<2xf32> to vector<2x1xf32>
    %387 = vector.broadcast %386 : vector<2x1xf32> to vector<2x7xf32>
    %388 = arith.cmpf oeq, %366, %387 : vector<2x7xf32>
    %389 = arith.extui %376 : vector<2x7xi1> to vector<2x7xi32>
    %390 = arith.sitofp %389 : vector<2x7xi32> to vector<2x7xf32>
    %391 = arith.extui %388 : vector<2x7xi1> to vector<2x7xi32>
    %392 = arith.sitofp %391 : vector<2x7xi32> to vector<2x7xf32>
    %393 = arith.addf %390, %392 : vector<2x7xf32>
    %cst_151 = arith.constant 2.000000e+00 : f32
    %394 = vector.broadcast %cst_151 : f32 to vector<2x7xf32>
    %395 = arith.divf %393, %394 : vector<2x7xf32>
    %c0_152 = arith.constant 0 : index
    %c0_153 = arith.constant 0 : index
    %c0_154 = arith.constant 0 : index
    %396 = vector.load %arg32[%c0_152, %c0_153, %c0_154] : memref<2x32x448xf32, #tpu.memory_space<vmem>>, vector<1x32x448xf32>
    %397 = vector.shape_cast %396 : vector<1x32x448xf32> to vector<32x448xf32>
    %cst_155 = arith.constant dense<0.000000e+00> : vector<2x448xf32>
    %398 = tpu.matmul %361, %397, %cst_155 {dimension_numbers = #tpu.dot_dimension_numbers<[1], [0], [0], [1], [0, 0, 1, 1], [], []>} : vector<2x32xf32>, vector<32x448xf32>, vector<2x448xf32> -> vector<2x448xf32>
    %c0_156 = arith.constant 0 : index
    %c0_157 = arith.constant 0 : index
    %c0_158 = arith.constant 0 : index
    %399 = vector.load %arg33[%c0_156, %c0_157, %c0_158] : memref<2x1x448xf32, #tpu.memory_space<vmem>>, vector<1x1x448xf32>
    %400 = vector.shape_cast %399 : vector<1x1x448xf32> to vector<1x448xf32>
    %401 = vector.broadcast %400 : vector<1x448xf32> to vector<2x448xf32>
    %402 = arith.addf %398, %401 : vector<2x448xf32>
    %403 = arith.mulf %402, %402 : vector<2x448xf32>
    %404 = arith.mulf %402, %403 : vector<2x448xf32>
    %cst_159 = arith.constant 4.471500e-02 : f32
    %405 = vector.broadcast %cst_159 : f32 to vector<2x448xf32>
    %406 = arith.mulf %405, %404 : vector<2x448xf32>
    %407 = arith.addf %402, %406 : vector<2x448xf32>
    %cst_160 = arith.constant 0.797884583 : f32
    %408 = vector.broadcast %cst_160 : f32 to vector<2x448xf32>
    %409 = arith.mulf %408, %407 : vector<2x448xf32>
    %410 = math.tanh %409 : vector<2x448xf32>
    %cst_161 = arith.constant 1.000000e+00 : f32
    %411 = vector.broadcast %cst_161 : f32 to vector<2x448xf32>
    %412 = arith.addf %411, %410 : vector<2x448xf32>
    %cst_162 = arith.constant 5.000000e-01 : f32
    %413 = vector.broadcast %cst_162 : f32 to vector<2x448xf32>
    %414 = arith.mulf %413, %412 : vector<2x448xf32>
    %415 = arith.mulf %402, %414 : vector<2x448xf32>
    %c0_163 = arith.constant 0 : index
    %c0_164 = arith.constant 0 : index
    %c0_165 = arith.constant 0 : index
    %416 = vector.load %arg34[%c0_163, %c0_164, %c0_165] : memref<2x448x448xf32, #tpu.memory_space<vmem>>, vector<1x448x448xf32>
    %417 = vector.shape_cast %416 : vector<1x448x448xf32> to vector<448x448xf32>
    %cst_166 = arith.constant dense<0.000000e+00> : vector<2x448xf32>
    %418 = tpu.matmul %415, %417, %cst_166 {dimension_numbers = #tpu.dot_dimension_numbers<[1], [0], [0], [1], [0, 0, 1, 1], [], []>} : vector<2x448xf32>, vector<448x448xf32>, vector<2x448xf32> -> vector<2x448xf32>
    %c0_167 = arith.constant 0 : index
    %c0_168 = arith.constant 0 : index
    %c0_169 = arith.constant 0 : index
    %419 = vector.load %arg35[%c0_167, %c0_168, %c0_169] : memref<2x1x448xf32, #tpu.memory_space<vmem>>, vector<1x1x448xf32>
    %420 = vector.shape_cast %419 : vector<1x1x448xf32> to vector<1x448xf32>
    %421 = vector.broadcast %420 : vector<1x448xf32> to vector<2x448xf32>
    %422 = arith.addf %418, %421 : vector<2x448xf32>
    %423 = arith.mulf %422, %422 : vector<2x448xf32>
    %424 = arith.mulf %422, %423 : vector<2x448xf32>
    %cst_170 = arith.constant 4.471500e-02 : f32
    %425 = vector.broadcast %cst_170 : f32 to vector<2x448xf32>
    %426 = arith.mulf %425, %424 : vector<2x448xf32>
    %427 = arith.addf %422, %426 : vector<2x448xf32>
    %cst_171 = arith.constant 0.797884583 : f32
    %428 = vector.broadcast %cst_171 : f32 to vector<2x448xf32>
    %429 = arith.mulf %428, %427 : vector<2x448xf32>
    %430 = math.tanh %429 : vector<2x448xf32>
    %cst_172 = arith.constant 1.000000e+00 : f32
    %431 = vector.broadcast %cst_172 : f32 to vector<2x448xf32>
    %432 = arith.addf %431, %430 : vector<2x448xf32>
    %cst_173 = arith.constant 5.000000e-01 : f32
    %433 = vector.broadcast %cst_173 : f32 to vector<2x448xf32>
    %434 = arith.mulf %433, %432 : vector<2x448xf32>
    %435 = arith.mulf %422, %434 : vector<2x448xf32>
    %c0_174 = arith.constant 0 : index
    %c0_175 = arith.constant 0 : index
    %436 = vector.load %arg38[%c0_174, %c0_175] : memref<7x448xf32, #tpu.memory_space<vmem>>, vector<7x448xf32>
    %cst_176 = arith.constant dense<0.000000e+00> : vector<2x448xf32>
    %437 = tpu.matmul %395, %436, %cst_176 {dimension_numbers = #tpu.dot_dimension_numbers<[1], [0], [0], [1], [0, 0, 1, 1], [], []>} : vector<2x7xf32>, vector<7x448xf32>, vector<2x448xf32> -> vector<2x448xf32>
    %438 = arith.mulf %435, %437 : vector<2x448xf32>
    %c0_177 = arith.constant 0 : index
    %c0_178 = arith.constant 0 : index
    %c0_179 = arith.constant 0 : index
    %439 = vector.load %arg36[%c0_177, %c0_178, %c0_179] : memref<2x448x32xf32, #tpu.memory_space<vmem>>, vector<1x448x32xf32>
    %440 = vector.shape_cast %439 : vector<1x448x32xf32> to vector<448x32xf32>
    %cst_180 = arith.constant dense<0.000000e+00> : vector<2x32xf32>
    %441 = tpu.matmul %438, %440, %cst_180 {dimension_numbers = #tpu.dot_dimension_numbers<[1], [0], [0], [1], [0, 0, 1, 1], [], []>} : vector<2x448xf32>, vector<448x32xf32>, vector<2x32xf32> -> vector<2x32xf32>
    %442 = arith.addf %335, %441 : vector<2x32xf32>
    %c0_181 = arith.constant 0 : index
    %c0_182 = arith.constant 0 : index
    %c0_183 = arith.constant 0 : index
    %443 = vector.load %arg37[%c0_181, %c0_182, %c0_183] : memref<2x7x32xf32, #tpu.memory_space<vmem>>, vector<1x7x32xf32>
    %444 = vector.shape_cast %443 : vector<1x7x32xf32> to vector<7x32xf32>
    %cst_184 = arith.constant dense<0.000000e+00> : vector<2x32xf32>
    %445 = tpu.matmul %395, %444, %cst_184 {dimension_numbers = #tpu.dot_dimension_numbers<[1], [0], [0], [1], [0, 0, 1, 1], [], []>} : vector<2x7xf32>, vector<7x32xf32>, vector<2x32xf32> -> vector<2x32xf32>
    %446 = arith.addf %442, %445 : vector<2x32xf32>
    %cst_185 = arith.constant dense<0.000000e+00> : vector<2xf32>
    %447 = vector.multi_reduction <add>, %446, %cst_185 [1] : vector<2x32xf32> to vector<2xf32>
    %448 = vector.shape_cast %447 : vector<2xf32> to vector<2x1xf32>
    %cst_186 = arith.constant 3.200000e+01 : f32
    %449 = vector.broadcast %cst_186 : f32 to vector<2x1xf32>
    %450 = arith.divf %448, %449 : vector<2x1xf32>
    %451 = vector.broadcast %450 : vector<2x1xf32> to vector<2x32xf32>
    %452 = arith.subf %446, %451 : vector<2x32xf32>
    %453 = arith.mulf %452, %452 : vector<2x32xf32>
    %cst_187 = arith.constant dense<0.000000e+00> : vector<2xf32>
    %454 = vector.multi_reduction <add>, %453, %cst_187 [1] : vector<2x32xf32> to vector<2xf32>
    %455 = vector.shape_cast %454 : vector<2xf32> to vector<2x1xf32>
    %cst_188 = arith.constant 3.200000e+01 : f32
    %456 = vector.broadcast %cst_188 : f32 to vector<2x1xf32>
    %457 = arith.divf %455, %456 : vector<2x1xf32>
    %458 = vector.broadcast %450 : vector<2x1xf32> to vector<2x32xf32>
    %459 = arith.subf %446, %458 : vector<2x32xf32>
    %cst_189 = arith.constant 9.99999974E-6 : f32
    %460 = vector.broadcast %cst_189 : f32 to vector<2x1xf32>
    %461 = arith.addf %457, %460 : vector<2x1xf32>
    %462 = math.rsqrt %461 : vector<2x1xf32>
    %463 = vector.broadcast %462 : vector<2x1xf32> to vector<2x32xf32>
    %464 = arith.mulf %459, %463 : vector<2x32xf32>
    %c1 = arith.constant 1 : index
    %c0_190 = arith.constant 0 : index
    %c0_191 = arith.constant 0 : index
    %465 = vector.load %arg23[%c1, %c0_190, %c0_191] : memref<2x1x32xf32, #tpu.memory_space<vmem>>, vector<1x1x32xf32>
    %466 = vector.shape_cast %465 : vector<1x1x32xf32> to vector<1x32xf32>
    %467 = vector.broadcast %466 : vector<1x32xf32> to vector<2x32xf32>
    %468 = arith.mulf %464, %467 : vector<2x32xf32>
    %c1_192 = arith.constant 1 : index
    %c0_193 = arith.constant 0 : index
    %c0_194 = arith.constant 0 : index
    %469 = vector.load %arg24[%c1_192, %c0_193, %c0_194] : memref<2x1x32xf32, #tpu.memory_space<vmem>>, vector<1x1x32xf32>
    %470 = vector.shape_cast %469 : vector<1x1x32xf32> to vector<1x32xf32>
    %471 = vector.broadcast %470 : vector<1x32xf32> to vector<2x32xf32>
    %472 = arith.addf %468, %471 : vector<2x32xf32>
    %c1_195 = arith.constant 1 : index
    %c0_196 = arith.constant 0 : index
    %c0_197 = arith.constant 0 : index
    %473 = vector.load %arg25[%c1_195, %c0_196, %c0_197] : memref<2x32x32xf32, #tpu.memory_space<vmem>>, vector<1x32x32xf32>
    %474 = vector.shape_cast %473 : vector<1x32x32xf32> to vector<32x32xf32>
    %cst_198 = arith.constant dense<0.000000e+00> : vector<2x32xf32>
    %475 = tpu.matmul %472, %474, %cst_198 {dimension_numbers = #tpu.dot_dimension_numbers<[1], [0], [0], [1], [0, 0, 1, 1], [], []>} : vector<2x32xf32>, vector<32x32xf32>, vector<2x32xf32> -> vector<2x32xf32>
    %c1_199 = arith.constant 1 : index
    %c0_200 = arith.constant 0 : index
    %c0_201 = arith.constant 0 : index
    %476 = vector.load %arg26[%c1_199, %c0_200, %c0_201] : memref<2x32x64xf32, #tpu.memory_space<vmem>>, vector<1x32x64xf32>
    %477 = vector.shape_cast %476 : vector<1x32x64xf32> to vector<32x64xf32>
    %cst_202 = arith.constant dense<0.000000e+00> : vector<2x64xf32>
    %478 = tpu.matmul %472, %477, %cst_202 {dimension_numbers = #tpu.dot_dimension_numbers<[1], [0], [0], [1], [0, 0, 1, 1], [], []>} : vector<2x32xf32>, vector<32x64xf32>, vector<2x64xf32> -> vector<2x64xf32>
    %479 = vector.extract_strided_slice %478 {offsets = [0, 0], sizes = [2, 32], strides = [1, 1]} : vector<2x64xf32> to vector<2x32xf32>
    %480 = vector.extract_strided_slice %478 {offsets = [0, 32], sizes = [2, 32], strides = [1, 1]} : vector<2x64xf32> to vector<2x32xf32>
    %481 = vector.extract_strided_slice %475 {offsets = [0, 0], sizes = [2, 8], strides = [1, 1]} : vector<2x32xf32> to vector<2x8xf32>
    %482 = vector.extract_strided_slice %479 {offsets = [0, 0], sizes = [2, 8], strides = [1, 1]} : vector<2x32xf32> to vector<2x8xf32>
    %483 = vector.extract_strided_slice %480 {offsets = [0, 0], sizes = [2, 8], strides = [1, 1]} : vector<2x32xf32> to vector<2x8xf32>
    %cst_203 = arith.constant dense<0.000000e+00> : vector<2x2xf32>
    %484 = tpu.matmul %481, %482, %cst_203 {dimension_numbers = #tpu.dot_dimension_numbers<[1], [1], [0], [0], [0, 0, 1, 0], [], []>} : vector<2x8xf32>, vector<2x8xf32>, vector<2x2xf32> -> vector<2x2xf32>
    %cst_204 = arith.constant 0.353553385 : f32
    %485 = vector.broadcast %cst_204 : f32 to vector<2x2xf32>
    %486 = arith.mulf %484, %485 : vector<2x2xf32>
    %cst_205 = arith.constant dense<0xFF800000> : vector<2xf32>
    %487 = vector.multi_reduction <maximumf>, %486, %cst_205 [1] : vector<2x2xf32> to vector<2xf32>
    %488 = vector.shape_cast %487 : vector<2xf32> to vector<2x1xf32>
    %489 = vector.broadcast %488 : vector<2x1xf32> to vector<2x2xf32>
    %490 = arith.subf %486, %489 : vector<2x2xf32>
    %491 = math.exp %490 : vector<2x2xf32>
    %cst_206 = arith.constant dense<0.000000e+00> : vector<2xf32>
    %492 = vector.multi_reduction <add>, %491, %cst_206 [1] : vector<2x2xf32> to vector<2xf32>
    %493 = vector.shape_cast %492 : vector<2xf32> to vector<2x1xf32>
    %494 = tpu.reciprocal %493 {approx = true} : vector<2x1xf32> -> vector<2x1xf32>
    %495 = vector.broadcast %494 : vector<2x1xf32> to vector<2x2xf32>
    %496 = arith.mulf %491, %495 : vector<2x2xf32>
    %cst_207 = arith.constant dense<0.000000e+00> : vector<2x8xf32>
    %497 = tpu.matmul %496, %483, %cst_207 {dimension_numbers = #tpu.dot_dimension_numbers<[1], [0], [0], [1], [0, 0, 1, 1], [], []>} : vector<2x2xf32>, vector<2x8xf32>, vector<2x8xf32> -> vector<2x8xf32>
    %498 = vector.extract_strided_slice %475 {offsets = [0, 8], sizes = [2, 8], strides = [1, 1]} : vector<2x32xf32> to vector<2x8xf32>
    %499 = vector.extract_strided_slice %479 {offsets = [0, 8], sizes = [2, 8], strides = [1, 1]} : vector<2x32xf32> to vector<2x8xf32>
    %500 = vector.extract_strided_slice %480 {offsets = [0, 8], sizes = [2, 8], strides = [1, 1]} : vector<2x32xf32> to vector<2x8xf32>
    %cst_208 = arith.constant dense<0.000000e+00> : vector<2x2xf32>
    %501 = tpu.matmul %498, %499, %cst_208 {dimension_numbers = #tpu.dot_dimension_numbers<[1], [1], [0], [0], [0, 0, 1, 0], [], []>} : vector<2x8xf32>, vector<2x8xf32>, vector<2x2xf32> -> vector<2x2xf32>
    %cst_209 = arith.constant 0.353553385 : f32
    %502 = vector.broadcast %cst_209 : f32 to vector<2x2xf32>
    %503 = arith.mulf %501, %502 : vector<2x2xf32>
    %cst_210 = arith.constant dense<0xFF800000> : vector<2xf32>
    %504 = vector.multi_reduction <maximumf>, %503, %cst_210 [1] : vector<2x2xf32> to vector<2xf32>
    %505 = vector.shape_cast %504 : vector<2xf32> to vector<2x1xf32>
    %506 = vector.broadcast %505 : vector<2x1xf32> to vector<2x2xf32>
    %507 = arith.subf %503, %506 : vector<2x2xf32>
    %508 = math.exp %507 : vector<2x2xf32>
    %cst_211 = arith.constant dense<0.000000e+00> : vector<2xf32>
    %509 = vector.multi_reduction <add>, %508, %cst_211 [1] : vector<2x2xf32> to vector<2xf32>
    %510 = vector.shape_cast %509 : vector<2xf32> to vector<2x1xf32>
    %511 = tpu.reciprocal %510 {approx = true} : vector<2x1xf32> -> vector<2x1xf32>
    %512 = vector.broadcast %511 : vector<2x1xf32> to vector<2x2xf32>
    %513 = arith.mulf %508, %512 : vector<2x2xf32>
    %cst_212 = arith.constant dense<0.000000e+00> : vector<2x8xf32>
    %514 = tpu.matmul %513, %500, %cst_212 {dimension_numbers = #tpu.dot_dimension_numbers<[1], [0], [0], [1], [0, 0, 1, 1], [], []>} : vector<2x2xf32>, vector<2x8xf32>, vector<2x8xf32> -> vector<2x8xf32>
    %515 = vector.extract_strided_slice %475 {offsets = [0, 16], sizes = [2, 8], strides = [1, 1]} : vector<2x32xf32> to vector<2x8xf32>
    %516 = vector.extract_strided_slice %479 {offsets = [0, 16], sizes = [2, 8], strides = [1, 1]} : vector<2x32xf32> to vector<2x8xf32>
    %517 = vector.extract_strided_slice %480 {offsets = [0, 16], sizes = [2, 8], strides = [1, 1]} : vector<2x32xf32> to vector<2x8xf32>
    %cst_213 = arith.constant dense<0.000000e+00> : vector<2x2xf32>
    %518 = tpu.matmul %515, %516, %cst_213 {dimension_numbers = #tpu.dot_dimension_numbers<[1], [1], [0], [0], [0, 0, 1, 0], [], []>} : vector<2x8xf32>, vector<2x8xf32>, vector<2x2xf32> -> vector<2x2xf32>
    %cst_214 = arith.constant 0.353553385 : f32
    %519 = vector.broadcast %cst_214 : f32 to vector<2x2xf32>
    %520 = arith.mulf %518, %519 : vector<2x2xf32>
    %cst_215 = arith.constant dense<0xFF800000> : vector<2xf32>
    %521 = vector.multi_reduction <maximumf>, %520, %cst_215 [1] : vector<2x2xf32> to vector<2xf32>
    %522 = vector.shape_cast %521 : vector<2xf32> to vector<2x1xf32>
    %523 = vector.broadcast %522 : vector<2x1xf32> to vector<2x2xf32>
    %524 = arith.subf %520, %523 : vector<2x2xf32>
    %525 = math.exp %524 : vector<2x2xf32>
    %cst_216 = arith.constant dense<0.000000e+00> : vector<2xf32>
    %526 = vector.multi_reduction <add>, %525, %cst_216 [1] : vector<2x2xf32> to vector<2xf32>
    %527 = vector.shape_cast %526 : vector<2xf32> to vector<2x1xf32>
    %528 = tpu.reciprocal %527 {approx = true} : vector<2x1xf32> -> vector<2x1xf32>
    %529 = vector.broadcast %528 : vector<2x1xf32> to vector<2x2xf32>
    %530 = arith.mulf %525, %529 : vector<2x2xf32>
    %cst_217 = arith.constant dense<0.000000e+00> : vector<2x8xf32>
    %531 = tpu.matmul %530, %517, %cst_217 {dimension_numbers = #tpu.dot_dimension_numbers<[1], [0], [0], [1], [0, 0, 1, 1], [], []>} : vector<2x2xf32>, vector<2x8xf32>, vector<2x8xf32> -> vector<2x8xf32>
    %532 = vector.extract_strided_slice %475 {offsets = [0, 24], sizes = [2, 8], strides = [1, 1]} : vector<2x32xf32> to vector<2x8xf32>
    %533 = vector.extract_strided_slice %479 {offsets = [0, 24], sizes = [2, 8], strides = [1, 1]} : vector<2x32xf32> to vector<2x8xf32>
    %534 = vector.extract_strided_slice %480 {offsets = [0, 24], sizes = [2, 8], strides = [1, 1]} : vector<2x32xf32> to vector<2x8xf32>
    %cst_218 = arith.constant dense<0.000000e+00> : vector<2x2xf32>
    %535 = tpu.matmul %532, %533, %cst_218 {dimension_numbers = #tpu.dot_dimension_numbers<[1], [1], [0], [0], [0, 0, 1, 0], [], []>} : vector<2x8xf32>, vector<2x8xf32>, vector<2x2xf32> -> vector<2x2xf32>
    %cst_219 = arith.constant 0.353553385 : f32
    %536 = vector.broadcast %cst_219 : f32 to vector<2x2xf32>
    %537 = arith.mulf %535, %536 : vector<2x2xf32>
    %cst_220 = arith.constant dense<0xFF800000> : vector<2xf32>
    %538 = vector.multi_reduction <maximumf>, %537, %cst_220 [1] : vector<2x2xf32> to vector<2xf32>
    %539 = vector.shape_cast %538 : vector<2xf32> to vector<2x1xf32>
    %540 = vector.broadcast %539 : vector<2x1xf32> to vector<2x2xf32>
    %541 = arith.subf %537, %540 : vector<2x2xf32>
    %542 = math.exp %541 : vector<2x2xf32>
    %cst_221 = arith.constant dense<0.000000e+00> : vector<2xf32>
    %543 = vector.multi_reduction <add>, %542, %cst_221 [1] : vector<2x2xf32> to vector<2xf32>
    %544 = vector.shape_cast %543 : vector<2xf32> to vector<2x1xf32>
    %545 = tpu.reciprocal %544 {approx = true} : vector<2x1xf32> -> vector<2x1xf32>
    %546 = vector.broadcast %545 : vector<2x1xf32> to vector<2x2xf32>
    %547 = arith.mulf %542, %546 : vector<2x2xf32>
    %cst_222 = arith.constant dense<0.000000e+00> : vector<2x8xf32>
    %548 = tpu.matmul %547, %534, %cst_222 {dimension_numbers = #tpu.dot_dimension_numbers<[1], [0], [0], [1], [0, 0, 1, 1], [], []>} : vector<2x2xf32>, vector<2x8xf32>, vector<2x8xf32> -> vector<2x8xf32>
    %549 = tpu.concatenate %497, %514, %531, %548 in 1 : vector<2x8xf32>, vector<2x8xf32>, vector<2x8xf32>, vector<2x8xf32> -> vector<2x32xf32>
    %c1_223 = arith.constant 1 : index
    %c0_224 = arith.constant 0 : index
    %c0_225 = arith.constant 0 : index
    %550 = vector.load %arg27[%c1_223, %c0_224, %c0_225] : memref<2x32x32xf32, #tpu.memory_space<vmem>>, vector<1x32x32xf32>
    %551 = vector.shape_cast %550 : vector<1x32x32xf32> to vector<32x32xf32>
    %cst_226 = arith.constant dense<0.000000e+00> : vector<2x32xf32>
    %552 = tpu.matmul %549, %551, %cst_226 {dimension_numbers = #tpu.dot_dimension_numbers<[1], [0], [0], [1], [0, 0, 1, 1], [], []>} : vector<2x32xf32>, vector<32x32xf32>, vector<2x32xf32> -> vector<2x32xf32>
    %553 = arith.addf %446, %552 : vector<2x32xf32>
    %c1_227 = arith.constant 1 : index
    %c0_228 = arith.constant 0 : index
    %c0_229 = arith.constant 0 : index
    %554 = vector.load %arg28[%c1_227, %c0_228, %c0_229] : memref<2x1x32xf32, #tpu.memory_space<vmem>>, vector<1x1x32xf32>
    %555 = vector.shape_cast %554 : vector<1x1x32xf32> to vector<1x32xf32>
    %556 = vector.broadcast %555 : vector<1x32xf32> to vector<2x32xf32>
    %557 = arith.addf %553, %556 : vector<2x32xf32>
    %cst_230 = arith.constant dense<0.000000e+00> : vector<2xf32>
    %558 = vector.multi_reduction <add>, %557, %cst_230 [1] : vector<2x32xf32> to vector<2xf32>
    %559 = vector.shape_cast %558 : vector<2xf32> to vector<2x1xf32>
    %cst_231 = arith.constant 3.200000e+01 : f32
    %560 = vector.broadcast %cst_231 : f32 to vector<2x1xf32>
    %561 = arith.divf %559, %560 : vector<2x1xf32>
    %562 = vector.broadcast %561 : vector<2x1xf32> to vector<2x32xf32>
    %563 = arith.subf %557, %562 : vector<2x32xf32>
    %564 = arith.mulf %563, %563 : vector<2x32xf32>
    %cst_232 = arith.constant dense<0.000000e+00> : vector<2xf32>
    %565 = vector.multi_reduction <add>, %564, %cst_232 [1] : vector<2x32xf32> to vector<2xf32>
    %566 = vector.shape_cast %565 : vector<2xf32> to vector<2x1xf32>
    %cst_233 = arith.constant 3.200000e+01 : f32
    %567 = vector.broadcast %cst_233 : f32 to vector<2x1xf32>
    %568 = arith.divf %566, %567 : vector<2x1xf32>
    %569 = vector.broadcast %561 : vector<2x1xf32> to vector<2x32xf32>
    %570 = arith.subf %557, %569 : vector<2x32xf32>
    %cst_234 = arith.constant 9.99999974E-6 : f32
    %571 = vector.broadcast %cst_234 : f32 to vector<2x1xf32>
    %572 = arith.addf %568, %571 : vector<2x1xf32>
    %573 = math.rsqrt %572 : vector<2x1xf32>
    %574 = vector.broadcast %573 : vector<2x1xf32> to vector<2x32xf32>
    %575 = arith.mulf %570, %574 : vector<2x32xf32>
    %c1_235 = arith.constant 1 : index
    %c0_236 = arith.constant 0 : index
    %c0_237 = arith.constant 0 : index
    %576 = vector.load %arg29[%c1_235, %c0_236, %c0_237] : memref<2x1x32xf32, #tpu.memory_space<vmem>>, vector<1x1x32xf32>
    %577 = vector.shape_cast %576 : vector<1x1x32xf32> to vector<1x32xf32>
    %578 = vector.broadcast %577 : vector<1x32xf32> to vector<2x32xf32>
    %579 = arith.mulf %575, %578 : vector<2x32xf32>
    %c1_238 = arith.constant 1 : index
    %c0_239 = arith.constant 0 : index
    %c0_240 = arith.constant 0 : index
    %580 = vector.load %arg30[%c1_238, %c0_239, %c0_240] : memref<2x1x32xf32, #tpu.memory_space<vmem>>, vector<1x1x32xf32>
    %581 = vector.shape_cast %580 : vector<1x1x32xf32> to vector<1x32xf32>
    %582 = vector.broadcast %581 : vector<1x32xf32> to vector<2x32xf32>
    %583 = arith.addf %579, %582 : vector<2x32xf32>
    %c1_241 = arith.constant 1 : index
    %c0_242 = arith.constant 0 : index
    %c0_243 = arith.constant 0 : index
    %584 = vector.load %arg31[%c1_241, %c0_242, %c0_243] : memref<2x32x7xf32, #tpu.memory_space<vmem>>, vector<1x32x7xf32>
    %585 = vector.shape_cast %584 : vector<1x32x7xf32> to vector<32x7xf32>
    %cst_244 = arith.constant dense<0.000000e+00> : vector<2x7xf32>
    %586 = tpu.matmul %583, %585, %cst_244 {dimension_numbers = #tpu.dot_dimension_numbers<[1], [0], [0], [1], [0, 0, 1, 1], [], []>} : vector<2x32xf32>, vector<32x7xf32>, vector<2x7xf32> -> vector<2x7xf32>
    %587 = tpu.iota {dimensions = array<i32: 1>} : vector<2x7xi32>
    %588 = arith.sitofp %587 : vector<2x7xi32> to vector<2x7xf32>
    %cst_245 = arith.constant dense<0xFF800000> : vector<2xf32>
    %589 = vector.multi_reduction <maximumf>, %586, %cst_245 [1] : vector<2x7xf32> to vector<2xf32>
    %590 = vector.shape_cast %589 : vector<2xf32> to vector<2x1xf32>
    %591 = vector.broadcast %590 : vector<2x1xf32> to vector<2x7xf32>
    %592 = arith.cmpf oge, %586, %591 : vector<2x7xf32>
    %cst_246 = arith.constant 7.000000e+00 : f32
    %593 = vector.broadcast %cst_246 : f32 to vector<2x7xf32>
    %594 = arith.select %592, %588, %593 : vector<2x7xi1>, vector<2x7xf32>
    %cst_247 = arith.constant dense<0x7F800000> : vector<2xf32>
    %595 = vector.multi_reduction <minimumf>, %594, %cst_247 [1] : vector<2x7xf32> to vector<2xf32>
    %596 = vector.shape_cast %595 : vector<2xf32> to vector<2x1xf32>
    %597 = vector.broadcast %596 : vector<2x1xf32> to vector<2x7xf32>
    %598 = arith.cmpf oeq, %588, %597 : vector<2x7xf32>
    %cst_248 = arith.constant 0xFF800000 : f32
    %599 = vector.broadcast %cst_248 : f32 to vector<2x7xf32>
    %600 = arith.select %598, %599, %586 : vector<2x7xi1>, vector<2x7xf32>
    %cst_249 = arith.constant dense<0xFF800000> : vector<2xf32>
    %601 = vector.multi_reduction <maximumf>, %600, %cst_249 [1] : vector<2x7xf32> to vector<2xf32>
    %602 = vector.shape_cast %601 : vector<2xf32> to vector<2x1xf32>
    %603 = vector.broadcast %602 : vector<2x1xf32> to vector<2x7xf32>
    %604 = arith.cmpf oge, %600, %603 : vector<2x7xf32>
    %cst_250 = arith.constant 7.000000e+00 : f32
    %605 = vector.broadcast %cst_250 : f32 to vector<2x7xf32>
    %606 = arith.select %604, %588, %605 : vector<2x7xi1>, vector<2x7xf32>
    %cst_251 = arith.constant dense<0x7F800000> : vector<2xf32>
    %607 = vector.multi_reduction <minimumf>, %606, %cst_251 [1] : vector<2x7xf32> to vector<2xf32>
    %608 = vector.shape_cast %607 : vector<2xf32> to vector<2x1xf32>
    %609 = vector.broadcast %608 : vector<2x1xf32> to vector<2x7xf32>
    %610 = arith.cmpf oeq, %588, %609 : vector<2x7xf32>
    %611 = arith.extui %598 : vector<2x7xi1> to vector<2x7xi32>
    %612 = arith.sitofp %611 : vector<2x7xi32> to vector<2x7xf32>
    %613 = arith.extui %610 : vector<2x7xi1> to vector<2x7xi32>
    %614 = arith.sitofp %613 : vector<2x7xi32> to vector<2x7xf32>
    %615 = arith.addf %612, %614 : vector<2x7xf32>
    %cst_252 = arith.constant 2.000000e+00 : f32
    %616 = vector.broadcast %cst_252 : f32 to vector<2x7xf32>
    %617 = arith.divf %615, %616 : vector<2x7xf32>
    %c1_253 = arith.constant 1 : index
    %c0_254 = arith.constant 0 : index
    %c0_255 = arith.constant 0 : index
    %618 = vector.load %arg32[%c1_253, %c0_254, %c0_255] : memref<2x32x448xf32, #tpu.memory_space<vmem>>, vector<1x32x448xf32>
    %619 = vector.shape_cast %618 : vector<1x32x448xf32> to vector<32x448xf32>
    %cst_256 = arith.constant dense<0.000000e+00> : vector<2x448xf32>
    %620 = tpu.matmul %583, %619, %cst_256 {dimension_numbers = #tpu.dot_dimension_numbers<[1], [0], [0], [1], [0, 0, 1, 1], [], []>} : vector<2x32xf32>, vector<32x448xf32>, vector<2x448xf32> -> vector<2x448xf32>
    %c1_257 = arith.constant 1 : index
    %c0_258 = arith.constant 0 : index
    %c0_259 = arith.constant 0 : index
    %621 = vector.load %arg33[%c1_257, %c0_258, %c0_259] : memref<2x1x448xf32, #tpu.memory_space<vmem>>, vector<1x1x448xf32>
    %622 = vector.shape_cast %621 : vector<1x1x448xf32> to vector<1x448xf32>
    %623 = vector.broadcast %622 : vector<1x448xf32> to vector<2x448xf32>
    %624 = arith.addf %620, %623 : vector<2x448xf32>
    %625 = arith.mulf %624, %624 : vector<2x448xf32>
    %626 = arith.mulf %624, %625 : vector<2x448xf32>
    %cst_260 = arith.constant 4.471500e-02 : f32
    %627 = vector.broadcast %cst_260 : f32 to vector<2x448xf32>
    %628 = arith.mulf %627, %626 : vector<2x448xf32>
    %629 = arith.addf %624, %628 : vector<2x448xf32>
    %cst_261 = arith.constant 0.797884583 : f32
    %630 = vector.broadcast %cst_261 : f32 to vector<2x448xf32>
    %631 = arith.mulf %630, %629 : vector<2x448xf32>
    %632 = math.tanh %631 : vector<2x448xf32>
    %cst_262 = arith.constant 1.000000e+00 : f32
    %633 = vector.broadcast %cst_262 : f32 to vector<2x448xf32>
    %634 = arith.addf %633, %632 : vector<2x448xf32>
    %cst_263 = arith.constant 5.000000e-01 : f32
    %635 = vector.broadcast %cst_263 : f32 to vector<2x448xf32>
    %636 = arith.mulf %635, %634 : vector<2x448xf32>
    %637 = arith.mulf %624, %636 : vector<2x448xf32>
    %c1_264 = arith.constant 1 : index
    %c0_265 = arith.constant 0 : index
    %c0_266 = arith.constant 0 : index
    %638 = vector.load %arg34[%c1_264, %c0_265, %c0_266] : memref<2x448x448xf32, #tpu.memory_space<vmem>>, vector<1x448x448xf32>
    %639 = vector.shape_cast %638 : vector<1x448x448xf32> to vector<448x448xf32>
    %cst_267 = arith.constant dense<0.000000e+00> : vector<2x448xf32>
    %640 = tpu.matmul %637, %639, %cst_267 {dimension_numbers = #tpu.dot_dimension_numbers<[1], [0], [0], [1], [0, 0, 1, 1], [], []>} : vector<2x448xf32>, vector<448x448xf32>, vector<2x448xf32> -> vector<2x448xf32>
    %c1_268 = arith.constant 1 : index
    %c0_269 = arith.constant 0 : index
    %c0_270 = arith.constant 0 : index
    %641 = vector.load %arg35[%c1_268, %c0_269, %c0_270] : memref<2x1x448xf32, #tpu.memory_space<vmem>>, vector<1x1x448xf32>
    %642 = vector.shape_cast %641 : vector<1x1x448xf32> to vector<1x448xf32>
    %643 = vector.broadcast %642 : vector<1x448xf32> to vector<2x448xf32>
    %644 = arith.addf %640, %643 : vector<2x448xf32>
    %645 = arith.mulf %644, %644 : vector<2x448xf32>
    %646 = arith.mulf %644, %645 : vector<2x448xf32>
    %cst_271 = arith.constant 4.471500e-02 : f32
    %647 = vector.broadcast %cst_271 : f32 to vector<2x448xf32>
    %648 = arith.mulf %647, %646 : vector<2x448xf32>
    %649 = arith.addf %644, %648 : vector<2x448xf32>
    %cst_272 = arith.constant 0.797884583 : f32
    %650 = vector.broadcast %cst_272 : f32 to vector<2x448xf32>
    %651 = arith.mulf %650, %649 : vector<2x448xf32>
    %652 = math.tanh %651 : vector<2x448xf32>
    %cst_273 = arith.constant 1.000000e+00 : f32
    %653 = vector.broadcast %cst_273 : f32 to vector<2x448xf32>
    %654 = arith.addf %653, %652 : vector<2x448xf32>
    %cst_274 = arith.constant 5.000000e-01 : f32
    %655 = vector.broadcast %cst_274 : f32 to vector<2x448xf32>
    %656 = arith.mulf %655, %654 : vector<2x448xf32>
    %657 = arith.mulf %644, %656 : vector<2x448xf32>
    %c0_275 = arith.constant 0 : index
    %c0_276 = arith.constant 0 : index
    %658 = vector.load %arg38[%c0_275, %c0_276] : memref<7x448xf32, #tpu.memory_space<vmem>>, vector<7x448xf32>
    %cst_277 = arith.constant dense<0.000000e+00> : vector<2x448xf32>
    %659 = tpu.matmul %617, %658, %cst_277 {dimension_numbers = #tpu.dot_dimension_numbers<[1], [0], [0], [1], [0, 0, 1, 1], [], []>} : vector<2x7xf32>, vector<7x448xf32>, vector<2x448xf32> -> vector<2x448xf32>
    %660 = arith.mulf %657, %659 : vector<2x448xf32>
    %c1_278 = arith.constant 1 : index
    %c0_279 = arith.constant 0 : index
    %c0_280 = arith.constant 0 : index
    %661 = vector.load %arg36[%c1_278, %c0_279, %c0_280] : memref<2x448x32xf32, #tpu.memory_space<vmem>>, vector<1x448x32xf32>
    %662 = vector.shape_cast %661 : vector<1x448x32xf32> to vector<448x32xf32>
    %cst_281 = arith.constant dense<0.000000e+00> : vector<2x32xf32>
    %663 = tpu.matmul %660, %662, %cst_281 {dimension_numbers = #tpu.dot_dimension_numbers<[1], [0], [0], [1], [0, 0, 1, 1], [], []>} : vector<2x448xf32>, vector<448x32xf32>, vector<2x32xf32> -> vector<2x32xf32>
    %664 = arith.addf %557, %663 : vector<2x32xf32>
    %c1_282 = arith.constant 1 : index
    %c0_283 = arith.constant 0 : index
    %c0_284 = arith.constant 0 : index
    %665 = vector.load %arg37[%c1_282, %c0_283, %c0_284] : memref<2x7x32xf32, #tpu.memory_space<vmem>>, vector<1x7x32xf32>
    %666 = vector.shape_cast %665 : vector<1x7x32xf32> to vector<7x32xf32>
    %cst_285 = arith.constant dense<0.000000e+00> : vector<2x32xf32>
    %667 = tpu.matmul %617, %666, %cst_285 {dimension_numbers = #tpu.dot_dimension_numbers<[1], [0], [0], [1], [0, 0, 1, 1], [], []>} : vector<2x7xf32>, vector<7x32xf32>, vector<2x32xf32> -> vector<2x32xf32>
    %668 = arith.addf %664, %667 : vector<2x32xf32>
    %c0_286 = arith.constant 0 : index
    %c0_287 = arith.constant 0 : index
    %669 = vector.load %arg39[%c0_286, %c0_287] : memref<32x5xf32, #tpu.memory_space<vmem>>, vector<32x5xf32>
    %cst_288 = arith.constant dense<0.000000e+00> : vector<2x5xf32>
    %670 = tpu.matmul %668, %669, %cst_288 {dimension_numbers = #tpu.dot_dimension_numbers<[1], [0], [0], [1], [0, 0, 1, 1], [], []>} : vector<2x32xf32>, vector<32x5xf32>, vector<2x5xf32> -> vector<2x5xf32>
    %c0_289 = arith.constant 0 : index
    %c0_290 = arith.constant 0 : index
    %671 = vector.load %arg40[%c0_289, %c0_290] : memref<1x5xf32, #tpu.memory_space<vmem>>, vector<1x5xf32>
    %672 = vector.broadcast %671 : vector<1x5xf32> to vector<2x5xf32>
    %673 = arith.addf %670, %672 : vector<2x5xf32>
    %c0_291 = arith.constant 0 : index
    %c0_292 = arith.constant 0 : index
    %674 = vector.load %arg44[%c0_291, %c0_292] : memref<2x5xf32, #tpu.memory_space<vmem>>, vector<2x5xf32>
    tpu.vector_store %arg44[%c0_291, %c0_292], %673 {strides = array<i32>} : memref<2x5xf32, #tpu.memory_space<vmem>>, vector<2x5xf32>,
    return
  }
  func.func @transform_0(%arg0: i32) -> (i32, i32) {
    %c0_i32 = arith.constant 0 : i32
    %c0_i32_0 = arith.constant 0 : i32
    %c0_i32_1 = arith.constant 0 : i32
    return %c0_i32, %c0_i32_0 : i32, i32
  }
  func.func @transform_1(%arg0: i32) -> (i32, i32) {
    %c0_i32 = arith.constant 0 : i32
    %c0_i32_0 = arith.constant 0 : i32
    %c0_i32_1 = arith.constant 0 : i32
    return %c0_i32, %c0_i32_0 : i32, i32
  }
  func.func @transform_2(%arg0: i32) -> (i32, i32) {
    %c0_i32 = arith.constant 0 : i32
    %c0_i32_0 = arith.constant 0 : i32
    %c0_i32_1 = arith.constant 0 : i32
    return %c0_i32, %c0_i32_0 : i32, i32
  }
  func.func @transform_3(%arg0: i32) -> (i32, i32) {
    %c0_i32 = arith.constant 0 : i32
    %c0_i32_0 = arith.constant 0 : i32
    %c0_i32_1 = arith.constant 0 : i32
    return %c0_i32, %c0_i32_0 : i32, i32
  }
  func.func @transform_4(%arg0: i32) -> (i32, i32) {
    %c0_i32 = arith.constant 0 : i32
    %c0_i32_0 = arith.constant 0 : i32
    %c0_i32_1 = arith.constant 0 : i32
    return %c0_i32, %c0_i32_0 : i32, i32
  }
  func.func @transform_5(%arg0: i32) -> (i32, i32) {
    %c0_i32 = arith.constant 0 : i32
    %c0_i32_0 = arith.constant 0 : i32
    %c0_i32_1 = arith.constant 0 : i32
    return %c0_i32, %c0_i32_0 : i32, i32
  }
  func.func @transform_6(%arg0: i32) -> (i32, i32) {
    %c0_i32 = arith.constant 0 : i32
    %c0_i32_0 = arith.constant 0 : i32
    %c0_i32_1 = arith.constant 0 : i32
    return %c0_i32, %c0_i32_0 : i32, i32
  }
  func.func @transform_7(%arg0: i32) -> (i32, i32) {
    %c0_i32 = arith.constant 0 : i32
    %c0_i32_0 = arith.constant 0 : i32
    %c0_i32_1 = arith.constant 0 : i32
    return %c0_i32, %c0_i32_0 : i32, i32
  }
  func.func @transform_8(%arg0: i32) -> (i32, i32) {
    %c0_i32 = arith.constant 0 : i32
    %c0_i32_0 = arith.constant 0 : i32
    %c0_i32_1 = arith.constant 0 : i32
    return %c0_i32, %c0_i32_0 : i32, i32
  }
  func.func @transform_9(%arg0: i32) -> (i32, i32) {
    %c0_i32 = arith.constant 0 : i32
    %c0_i32_0 = arith.constant 0 : i32
    %c0_i32_1 = arith.constant 0 : i32
    return %c0_i32, %c0_i32_0 : i32, i32
  }
  func.func @transform_10(%arg0: i32) -> (i32, i32) {
    %c0_i32 = arith.constant 0 : i32
    %c0_i32_0 = arith.constant 0 : i32
    %c0_i32_1 = arith.constant 0 : i32
    return %c0_i32, %c0_i32_0 : i32, i32
  }
  func.func @transform_11(%arg0: i32) -> (i32, i32) {
    %c0_i32 = arith.constant 0 : i32
    %c0_i32_0 = arith.constant 0 : i32
    %c0_i32_1 = arith.constant 0 : i32
    return %c0_i32, %c0_i32_0 : i32, i32
  }
  func.func @transform_12(%arg0: i32) -> (i32, i32) {
    %c0_i32 = arith.constant 0 : i32
    %c0_i32_0 = arith.constant 0 : i32
    %c0_i32_1 = arith.constant 0 : i32
    return %c0_i32, %c0_i32_0 : i32, i32
  }
  func.func @transform_13(%arg0: i32) -> (i32, i32) {
    %c0_i32 = arith.constant 0 : i32
    %c0_i32_0 = arith.constant 0 : i32
    %c0_i32_1 = arith.constant 0 : i32
    return %c0_i32, %c0_i32_0 : i32, i32
  }
  func.func @transform_14(%arg0: i32) -> (i32, i32) {
    %c0_i32 = arith.constant 0 : i32
    %c0_i32_0 = arith.constant 0 : i32
    %c0_i32_1 = arith.constant 0 : i32
    return %c0_i32, %c0_i32_0 : i32, i32
  }
  func.func @transform_15(%arg0: i32) -> (i32, i32) {
    %c0_i32 = arith.constant 0 : i32
    %c0_i32_0 = arith.constant 0 : i32
    %c0_i32_1 = arith.constant 0 : i32
    return %c0_i32, %c0_i32_0 : i32, i32
  }
  func.func @transform_16(%arg0: i32) -> (i32, i32) {
    %c0_i32 = arith.constant 0 : i32
    %c0_i32_0 = arith.constant 0 : i32
    %c0_i32_1 = arith.constant 0 : i32
    return %c0_i32, %c0_i32_0 : i32, i32
  }
  func.func @transform_17(%arg0: i32) -> (i32, i32) {
    %c0_i32 = arith.constant 0 : i32
    %c0_i32_0 = arith.constant 0 : i32
    %c0_i32_1 = arith.constant 0 : i32
    return %c0_i32, %c0_i32_0 : i32, i32
  }
  func.func @transform_18(%arg0: i32) -> (i32, i32) {
    %c0_i32 = arith.constant 0 : i32
    %c0_i32_0 = arith.constant 0 : i32
    %c0_i32_1 = arith.constant 0 : i32
    return %c0_i32, %c0_i32_0 : i32, i32
  }
  func.func @transform_19(%arg0: i32) -> (i32, i32) {
    %c0_i32 = arith.constant 0 : i32
    %c0_i32_0 = arith.constant 0 : i32
    %c0_i32_1 = arith.constant 0 : i32
    return %c0_i32, %c0_i32_0 : i32, i32
  }
  func.func @transform_20(%arg0: i32) -> (i32, i32) {
    %c0_i32 = arith.constant 0 : i32
    %c0_i32_0 = arith.constant 0 : i32
    %c0_i32_1 = arith.constant 0 : i32
    return %c0_i32, %c0_i32_0 : i32, i32
  }
  func.func @transform_21(%arg0: i32) -> (i32, i32) {
    %c0_i32 = arith.constant 0 : i32
    %c0_i32_0 = arith.constant 0 : i32
    %c0_i32_1 = arith.constant 0 : i32
    return %c0_i32, %c0_i32_0 : i32, i32
  }
  func.func @transform_22(%arg0: i32) -> (i32, i32, i32) {
    %c0_i32 = arith.constant 0 : i32
    %c0_i32_0 = arith.constant 0 : i32
    %c0_i32_1 = arith.constant 0 : i32
    %c0_i32_2 = arith.constant 0 : i32
    return %c0_i32, %c0_i32_0, %c0_i32_1 : i32, i32, i32
  }
  func.func @transform_23(%arg0: i32) -> (i32, i32, i32) {
    %c0_i32 = arith.constant 0 : i32
    %c0_i32_0 = arith.constant 0 : i32
    %c0_i32_1 = arith.constant 0 : i32
    %c0_i32_2 = arith.constant 0 : i32
    return %c0_i32, %c0_i32_0, %c0_i32_1 : i32, i32, i32
  }
  func.func @transform_24(%arg0: i32) -> (i32, i32, i32) {
    %c0_i32 = arith.constant 0 : i32
    %c0_i32_0 = arith.constant 0 : i32
    %c0_i32_1 = arith.constant 0 : i32
    %c0_i32_2 = arith.constant 0 : i32
    return %c0_i32, %c0_i32_0, %c0_i32_1 : i32, i32, i32
  }
  func.func @transform_25(%arg0: i32) -> (i32, i32, i32) {
    %c0_i32 = arith.constant 0 : i32
    %c0_i32_0 = arith.constant 0 : i32
    %c0_i32_1 = arith.constant 0 : i32
    %c0_i32_2 = arith.constant 0 : i32
    return %c0_i32, %c0_i32_0, %c0_i32_1 : i32, i32, i32
  }
  func.func @transform_26(%arg0: i32) -> (i32, i32, i32) {
    %c0_i32 = arith.constant 0 : i32
    %c0_i32_0 = arith.constant 0 : i32
    %c0_i32_1 = arith.constant 0 : i32
    %c0_i32_2 = arith.constant 0 : i32
    return %c0_i32, %c0_i32_0, %c0_i32_1 : i32, i32, i32
  }
  func.func @transform_27(%arg0: i32) -> (i32, i32, i32) {
    %c0_i32 = arith.constant 0 : i32
    %c0_i32_0 = arith.constant 0 : i32
    %c0_i32_1 = arith.constant 0 : i32
    %c0_i32_2 = arith.constant 0 : i32
    return %c0_i32, %c0_i32_0, %c0_i32_1 : i32, i32, i32
  }
  func.func @transform_28(%arg0: i32) -> (i32, i32, i32) {
    %c0_i32 = arith.constant 0 : i32
    %c0_i32_0 = arith.constant 0 : i32
    %c0_i32_1 = arith.constant 0 : i32
    %c0_i32_2 = arith.constant 0 : i32
    return %c0_i32, %c0_i32_0, %c0_i32_1 : i32, i32, i32
  }
  func.func @transform_29(%arg0: i32) -> (i32, i32, i32) {
    %c0_i32 = arith.constant 0 : i32
    %c0_i32_0 = arith.constant 0 : i32
    %c0_i32_1 = arith.constant 0 : i32
    %c0_i32_2 = arith.constant 0 : i32
    return %c0_i32, %c0_i32_0, %c0_i32_1 : i32, i32, i32
  }
  func.func @transform_30(%arg0: i32) -> (i32, i32, i32) {
    %c0_i32 = arith.constant 0 : i32
    %c0_i32_0 = arith.constant 0 : i32
    %c0_i32_1 = arith.constant 0 : i32
    %c0_i32_2 = arith.constant 0 : i32
    return %c0_i32, %c0_i32_0, %c0_i32_1 : i32, i32, i32
  }
  func.func @transform_31(%arg0: i32) -> (i32, i32, i32) {
    %c0_i32 = arith.constant 0 : i32
    %c0_i32_0 = arith.constant 0 : i32
    %c0_i32_1 = arith.constant 0 : i32
    %c0_i32_2 = arith.constant 0 : i32
    return %c0_i32, %c0_i32_0, %c0_i32_1 : i32, i32, i32
  }
  func.func @transform_32(%arg0: i32) -> (i32, i32, i32) {
    %c0_i32 = arith.constant 0 : i32
    %c0_i32_0 = arith.constant 0 : i32
    %c0_i32_1 = arith.constant 0 : i32
    %c0_i32_2 = arith.constant 0 : i32
    return %c0_i32, %c0_i32_0, %c0_i32_1 : i32, i32, i32
  }
  func.func @transform_33(%arg0: i32) -> (i32, i32, i32) {
    %c0_i32 = arith.constant 0 : i32
    %c0_i32_0 = arith.constant 0 : i32
    %c0_i32_1 = arith.constant 0 : i32
    %c0_i32_2 = arith.constant 0 : i32
    return %c0_i32, %c0_i32_0, %c0_i32_1 : i32, i32, i32
  }
  func.func @transform_34(%arg0: i32) -> (i32, i32, i32) {
    %c0_i32 = arith.constant 0 : i32
    %c0_i32_0 = arith.constant 0 : i32
    %c0_i32_1 = arith.constant 0 : i32
    %c0_i32_2 = arith.constant 0 : i32
    return %c0_i32, %c0_i32_0, %c0_i32_1 : i32, i32, i32
  }
  func.func @transform_35(%arg0: i32) -> (i32, i32, i32) {
    %c0_i32 = arith.constant 0 : i32
    %c0_i32_0 = arith.constant 0 : i32
    %c0_i32_1 = arith.constant 0 : i32
    %c0_i32_2 = arith.constant 0 : i32
    return %c0_i32, %c0_i32_0, %c0_i32_1 : i32, i32, i32
  }
  func.func @transform_36(%arg0: i32) -> (i32, i32, i32) {
    %c0_i32 = arith.constant 0 : i32
    %c0_i32_0 = arith.constant 0 : i32
    %c0_i32_1 = arith.constant 0 : i32
    %c0_i32_2 = arith.constant 0 : i32
    return %c0_i32, %c0_i32_0, %c0_i32_1 : i32, i32, i32
  }
  func.func @transform_37(%arg0: i32) -> (i32, i32) {
    %c0_i32 = arith.constant 0 : i32
    %c0_i32_0 = arith.constant 0 : i32
    %c0_i32_1 = arith.constant 0 : i32
    return %c0_i32, %c0_i32_0 : i32, i32
  }
  func.func @transform_38(%arg0: i32) -> (i32, i32) {
    %c0_i32 = arith.constant 0 : i32
    %c0_i32_0 = arith.constant 0 : i32
    %c0_i32_1 = arith.constant 0 : i32
    return %c0_i32, %c0_i32_0 : i32, i32
  }
  func.func @transform_39(%arg0: i32) -> (i32, i32) {
    %c0_i32 = arith.constant 0 : i32
    %c0_i32_0 = arith.constant 0 : i32
    %c0_i32_1 = arith.constant 0 : i32
    return %c0_i32, %c0_i32_0 : i32, i32
  }
  func.func @transform_40(%arg0: i32) -> (i32, i32) {
    %c0_i32 = arith.constant 0 : i32
    %c0_i32_0 = arith.constant 0 : i32
    %c0_i32_1 = arith.constant 0 : i32
    return %c0_i32, %c0_i32_0 : i32, i32
  }
  func.func @transform_41(%arg0: i32) -> (i32, i32) {
    %c0_i32 = arith.constant 0 : i32
    %c0_i32_0 = arith.constant 0 : i32
    %c0_i32_1 = arith.constant 0 : i32
    return %c0_i32, %c0_i32_0 : i32, i32
  }
  func.func @transform_42(%arg0: i32) -> (i32, i32) {
    %c0_i32 = arith.constant 0 : i32
    %c0_i32_0 = arith.constant 0 : i32
    %c0_i32_1 = arith.constant 0 : i32
    return %c0_i32, %c0_i32_0 : i32, i32
  }
  func.func @transform_43(%arg0: i32) -> (i32, i32) {
    %c0_i32 = arith.constant 0 : i32
    %c0_i32_0 = arith.constant 0 : i32
    %c0_i32_1 = arith.constant 0 : i32
    return %c0_i32, %c0_i32_0 : i32, i32
  }
}

</mosaic_0001>

<llo_original>
// kernel: mm_disentangled_forward.3
$region0: #{mm_disentangled_forward.3}
  #allocation0 [shape = 'u32[]', space=smem, size = 0x4, offset = 0x4, fixed_abs, tag = 'smem constant byte address 0x4 - core index']
  #allocation1 [shape = 'u32[144,128]{1,0:T(1,128)}', space=vmem, size = 0x12000, scoped, tag = 'internal scratch']
  %s0 = inlined_call_operand.smem [shape: u32[44], index: -1, kind: input, shape index: {}]
  %s1 = sld [smem:[%s0]]
  %s2 = scalar_lea.smem %s0, 1
  %s3 = sld [smem:[%s2]]
  %s4 = scalar_lea.smem %s0, 2
  %s5 = sld [smem:[%s4]]
  %s6 = scalar_lea.smem %s0, 3
  %s7 = sld [smem:[%s6]]
  %s8 = scalar_lea.smem %s0, 4
  %s9 = sld [smem:[%s8]]
  %s10 = scalar_lea.smem %s0, 5
  %s11 = sld [smem:[%s10]]
  %s12 = scalar_lea.smem %s0, 6
  %s13 = sld [smem:[%s12]]
  %s14 = scalar_lea.smem %s0, 7
  %s15 = sld [smem:[%s14]]
  %s16 = scalar_lea.smem %s0, 8
  %s17 = sld [smem:[%s16]]
  %s18 = scalar_lea.smem %s0, 9
  %s19 = sld [smem:[%s18]]
  %s20 = scalar_lea.smem %s0, 10
  %s21 = sld [smem:[%s20]]
  %s22 = scalar_lea.smem %s0, 11
  %s23 = sld [smem:[%s22]]
  %s24 = scalar_lea.smem %s0, 12
  %s25 = sld [smem:[%s24]]
  %s26 = scalar_lea.smem %s0, 13
  %s27 = sld [smem:[%s26]]
  %s28 = scalar_lea.smem %s0, 14
  %s29 = sld [smem:[%s28]]
  %s30 = scalar_lea.smem %s0, 15
  %s31 = sld [smem:[%s30]]
  %s32 = scalar_lea.smem %s0, 16
  %s33 = sld [smem:[%s32]]
  %s34 = scalar_lea.smem %s0, 17
  %s35 = sld [smem:[%s34]]
  %s36 = scalar_lea.smem %s0, 18
  %s37 = sld [smem:[%s36]]
  %s38 = scalar_lea.smem %s0, 19
  %s39 = sld [smem:[%s38]]
  %s40 = scalar_lea.smem %s0, 20
  %s41 = sld [smem:[%s40]]
  %s42 = scalar_lea.smem %s0, 21
  %s43 = sld [smem:[%s42]]
  %s44 = scalar_lea.smem %s0, 22
  %s45 = sld [smem:[%s44]]
  %s46 = scalar_lea.smem %s0, 23
  %s47 = sld [smem:[%s46]]
  %s48 = scalar_lea.smem %s0, 24
  %s49 = sld [smem:[%s48]]
  %s50 = scalar_lea.smem %s0, 25
  %s51 = sld [smem:[%s50]]
  %s52 = scalar_lea.smem %s0, 26
  %s53 = sld [smem:[%s52]]
  %s54 = scalar_lea.smem %s0, 27
  %s55 = sld [smem:[%s54]]
  %s56 = scalar_lea.smem %s0, 28
  %s57 = sld [smem:[%s56]]
  %s58 = scalar_lea.smem %s0, 29
  %s59 = sld [smem:[%s58]]
  %s60 = scalar_lea.smem %s0, 30
  %s61 = sld [smem:[%s60]]
  %s62 = scalar_lea.smem %s0, 31
  %s63 = sld [smem:[%s62]]
  %s64 = scalar_lea.smem %s0, 32
  %s65 = sld [smem:[%s64]]
  %s66 = scalar_lea.smem %s0, 33
  %s67 = sld [smem:[%s66]]
  %s68 = scalar_lea.smem %s0, 34
  %s69 = sld [smem:[%s68]]
  %s70 = scalar_lea.smem %s0, 35
  %s71 = sld [smem:[%s70]]
  %s72 = scalar_lea.smem %s0, 36
  %s73 = sld [smem:[%s72]]
  %s74 = scalar_lea.smem %s0, 37
  %s75 = sld [smem:[%s74]]
  %s76 = scalar_lea.smem %s0, 38
  %s77 = sld [smem:[%s76]]
  %s78 = scalar_lea.smem %s0, 39
  %s79 = sld [smem:[%s78]]
  %s80 = scalar_lea.smem %s0, 40
  %s81 = sld [smem:[%s80]]
  %s82 = scalar_lea.smem %s0, 41
  %s83 = sld [smem:[%s82]]
  %s84 = scalar_lea.smem %s0, 42
  %s85 = sld [smem:[%s84]]
  %s86 = scalar_lea.smem %s0, 43
  %s87 = sld [smem:[%s86]]
  %88 = xla_tuple %s81, %s83, %s85, %s87
  %s89 = sld [smem:[#allocation0]]
  $region314: #{mm_disentangled_forward.3} parent=0
    _
  %s91 = ssub.s32 1, %s89
  %s92 = scalar_select 0, %s91, %s89
  $region1: #{mm_disentangled_forward.3} parent=0
    #allocation2 [shape = 'u8[28672]{0}', space=vmem, size = 0x7000, scoped, tag = 'input window, operand 4, single buffered']
    #allocation3 [shape = 's32[1]{0}', space=sflag, size = 0x4, scoped, tag = 'scoped memory for mm_disentangled_forward.3']
    #allocation4 [shape = 's32[1]{0}', space=sflag, size = 0x4, scoped, tag = 'scoped memory for mm_disentangled_forward.3']
    #allocation5 [shape = 'u8[512]{0}', space=vmem, size = 0x400, scoped, tag = 'input window, operand 5, single buffered']
    #allocation6 [shape = 's32[1]{0}', space=sflag, size = 0x4, scoped, tag = 'scoped memory for mm_disentangled_forward.3']
    #allocation7 [shape = 'u8[49152]{0}', space=vmem, size = 0xc000, scoped, tag = 'input window, operand 6, single buffered']
    #allocation8 [shape = 'u8[512]{0}', space=vmem, size = 0x400, scoped, tag = 'input window, operand 7, single buffered']
    #allocation9 [shape = 's32[1]{0}', space=sflag, size = 0x4, scoped, tag = 'scoped memory for mm_disentangled_forward.3']
    #allocation10 [shape = 'u8[98304]{0}', space=vmem, size = 0x18000, scoped, tag = 'input window, operand 8, single buffered']
    #allocation11 [shape = 'u8[1024]{0}', space=vmem, size = 0x400, scoped, tag = 'input window, operand 9, single buffered']
    #allocation12 [shape = 's32[1]{0}', space=sflag, size = 0x4, scoped, tag = 'scoped memory for mm_disentangled_forward.3']
    #allocation13 [shape = 'u8[294912]{0}', space=vmem, size = 0x48000, scoped, tag = 'input window, operand 10, single buffered']
    #allocation14 [shape = 'u8[1536]{0}', space=vmem, size = 0x800, scoped, tag = 'input window, operand 11, single buffered']
    #allocation15 [shape = 's32[1]{0}', space=sflag, size = 0x4, scoped, tag = 'scoped memory for mm_disentangled_forward.3']
    #allocation16 [shape = 'u8[512]{0}', space=vmem, size = 0x400, scoped, tag = 'input window, operand 13, single buffered']
    #allocation17 [shape = 'u8[512]{0}', space=vmem, size = 0x400, scoped, tag = 'input window, operand 15, single buffered']
    #allocation18 [shape = 's32[1]{0}', space=sflag, size = 0x4, scoped, tag = 'scoped memory for mm_disentangled_forward.3']
    #allocation19 [shape = 'u8[49152]{0}', space=vmem, size = 0xc000, scoped, tag = 'input window, operand 16, single buffered']
    #allocation20 [shape = 'u8[1536]{0}', space=vmem, size = 0x800, scoped, tag = 'input window, operand 17, single buffered']
    #allocation21 [shape = 's32[1]{0}', space=sflag, size = 0x4, scoped, tag = 'scoped memory for mm_disentangled_forward.3']
    #allocation22 [shape = 'u8[737280]{0}', space=vmem, size = 0xb4000, scoped, tag = 'input window, operand 18, single buffered']
    #allocation23 [shape = 'u8[2560]{0}', space=vmem, size = 0xc00, scoped, tag = 'input window, operand 19, single buffered']
    #allocation24 [shape = 's32[1]{0}', space=sflag, size = 0x4, scoped, tag = 'scoped memory for mm_disentangled_forward.3']
    #allocation25 [shape = 'u8[16384]{0}', space=vmem, size = 0x4000, scoped, tag = 'input window, operand 20, single buffered']
    #allocation26 [shape = 'u8[512]{0}', space=vmem, size = 0x400, scoped, tag = 'input window, operand 21, single buffered']
    #allocation27 [shape = 's32[1]{0}', space=sflag, size = 0x4, scoped, tag = 'scoped memory for mm_disentangled_forward.3']
    #allocation28 [shape = 'u8[1024]{0}', space=vmem, size = 0x400, scoped, tag = 'input window, operand 22, single buffered']
    #allocation29 [shape = 'u8[1024]{0}', space=vmem, size = 0x400, scoped, tag = 'input window, operand 23, single buffered']
    #allocation30 [shape = 's32[1]{0}', space=sflag, size = 0x4, scoped, tag = 'scoped memory for mm_disentangled_forward.3']
    #allocation31 [shape = 'u8[32768]{0}', space=vmem, size = 0x8000, scoped, tag = 'input window, operand 24, single buffered']
    #allocation32 [shape = 'u8[32768]{0}', space=vmem, size = 0x8000, scoped, tag = 'input window, operand 25, single buffered']
    #allocation33 [shape = 's32[1]{0}', space=sflag, size = 0x4, scoped, tag = 'scoped memory for mm_disentangled_forward.3']
    #allocation34 [shape = 'u8[32768]{0}', space=vmem, size = 0x8000, scoped, tag = 'input window, operand 26, single buffered']
    #allocation35 [shape = 'u8[1024]{0}', space=vmem, size = 0x400, scoped, tag = 'input window, operand 27, single buffered']
    #allocation36 [shape = 's32[1]{0}', space=sflag, size = 0x4, scoped, tag = 'scoped memory for mm_disentangled_forward.3']
    #allocation37 [shape = 'u8[1024]{0}', space=vmem, size = 0x400, scoped, tag = 'input window, operand 28, single buffered']
    #allocation38 [shape = 'u8[1024]{0}', space=vmem, size = 0x400, scoped, tag = 'input window, operand 29, single buffered']
    #allocation39 [shape = 's32[1]{0}', space=sflag, size = 0x4, scoped, tag = 'scoped memory for mm_disentangled_forward.3']
    #allocation40 [shape = 'u8[131072]{0}', space=vmem, size = 0x20000, scoped, tag = 'input window, operand 31, single buffered']
    #allocation41 [shape = 'u8[4096]{0}', space=vmem, size = 0x1000, scoped, tag = 'input window, operand 32, single buffered']
    #allocation42 [shape = 's32[1]{0}', space=sflag, size = 0x4, scoped, tag = 'scoped memory for mm_disentangled_forward.3']
    #allocation43 [shape = 'u8[1835008]{0}', space=vmem, size = 0x1c0000, scoped, tag = 'input window, operand 33, single buffered']
    #allocation44 [shape = 'u8[4096]{0}', space=vmem, size = 0x1000, scoped, tag = 'input window, operand 34, single buffered']
    #allocation45 [shape = 's32[1]{0}', space=sflag, size = 0x4, scoped, tag = 'scoped memory for mm_disentangled_forward.3']
    #allocation46 [shape = 'u8[16384]{0}', space=vmem, size = 0x4000, scoped, tag = 'input window, operand 37, single buffered']
    #allocation47 [shape = 'u8[512]{0}', space=vmem, size = 0x400, scoped, tag = 'input window, operand 39, single buffered']
    #allocation48 [shape = 's32[1]{0}', space=sflag, size = 0x4, scoped, tag = 'scoped memory for mm_disentangled_forward.3']
    #allocation49 [shape = 'u8[1024]{0}', space=vmem, size = 0x400, scoped, tag = 'output window, operand 3, single buffered']
    %93 = vsyncpa [#allocation3], 0
    %94 = vsyncpa [#allocation6], 0
    %95 = vsyncpa [#allocation9], 0
    %96 = vsyncpa [#allocation12], 0
    %97 = vsyncpa [#allocation15], 0
    %98 = vsyncpa [#allocation18], 0
    %99 = vsyncpa [#allocation21], 0
    %100 = vsyncpa [#allocation24], 0
    %101 = vsyncpa [#allocation27], 0
    %102 = vsyncpa [#allocation30], 0
    %103 = vsyncpa [#allocation33], 0
    %104 = vsyncpa [#allocation36], 0
    %105 = vsyncpa [#allocation39], 0
    %106 = vsyncpa [#allocation42], 0
    %107 = vsyncpa [#allocation45], 0
    %108 = vsyncpa [#allocation48], 0
    %109 = vsyncpa [#allocation4], 0
    // Predicated region
    $region2: #{mm_disentangled_forward.3} parent=1 // pred_check
      _
    $region3: #{mm_disentangled_forward.3} parent=1 // pred_check_branch
      %111 = sbr.rel (0) target = $region5
    $region4: #{mm_disentangled_forward.3} parent=1 // pred_region
      _
    $region5: #{mm_disentangled_forward.3} parent=1 // pred_fallthru
      _
    // Predicated region
    $region6: #{mm_disentangled_forward.3} parent=1 // pred_check
      _
    $region7: #{mm_disentangled_forward.3} parent=1 // pred_check_branch
      %113 = sbr.rel (0) target = $region9
    $region8: #{mm_disentangled_forward.3} parent=1 // pred_region
      _
    $region9: #{mm_disentangled_forward.3} parent=1 // pred_fallthru
      _
    // Predicated region
    $region10: #{mm_disentangled_forward.3} parent=1 // pred_check
      _
    $region11: #{mm_disentangled_forward.3} parent=1 // pred_check_branch
      %115 = sbr.rel (0) target = $region13
    $region12: #{mm_disentangled_forward.3} parent=1 // pred_region
      _
    $region13: #{mm_disentangled_forward.3} parent=1 // pred_fallthru
      _
    // Predicated region
    $region14: #{mm_disentangled_forward.3} parent=1 // pred_check
      _
    $region15: #{mm_disentangled_forward.3} parent=1 // pred_check_branch
      %117 = sbr.rel (0) target = $region17
    $region16: #{mm_disentangled_forward.3} parent=1 // pred_region
      _
    $region17: #{mm_disentangled_forward.3} parent=1 // pred_fallthru
      _
    // Predicated region
    $region18: #{mm_disentangled_forward.3} parent=1 // pred_check
      _
    $region19: #{mm_disentangled_forward.3} parent=1 // pred_check_branch
      %119 = sbr.rel (0) target = $region21
    $region20: #{mm_disentangled_forward.3} parent=1 // pred_region
      %s121 = ssub.s32 896, 896
      %122 = vsyncadd [#allocation3], %s121
      %s123 = sshll.u32 [#allocation2], 4
      %s124 = int_to_ptr.vmem [resolvable:$true] %s123
      %129 = dma.hbm_to_vmem [thread:$0]  %s9, 896, %s124, [#allocation3], 128, 128, 8
    $region21: #{mm_disentangled_forward.3} parent=1 // pred_fallthru
      _
    // Predicated region
    $region22: #{mm_disentangled_forward.3} parent=1 // pred_check
      _
    $region23: #{mm_disentangled_forward.3} parent=1 // pred_check_branch
      %131 = sbr.rel (0) target = $region25
    $region24: #{mm_disentangled_forward.3} parent=1 // pred_region
      %s133 = ssub.s32 16, 16
      %134 = vsyncadd [#allocation6], %s133
      %s136 = sshll.u32 [#allocation5], 4
      %s137 = int_to_ptr.vmem [resolvable:$true] %s136
      %139 = dma.hbm_to_vmem [thread:$0]  %s11, 16, %s137, [#allocation6]
    $region25: #{mm_disentangled_forward.3} parent=1 // pred_fallthru
      _
    // Predicated region
    $region26: #{mm_disentangled_forward.3} parent=1 // pred_check
      _
    $region27: #{mm_disentangled_forward.3} parent=1 // pred_check_branch
      %141 = sbr.rel (0) target = $region29
    $region28: #{mm_disentangled_forward.3} parent=1 // pred_region
      %s143 = ssub.s32 1536, 1536
      %144 = vsyncadd [#allocation6], %s143
      %s145 = sshll.u32 [#allocation7], 4
      %s146 = int_to_ptr.vmem [resolvable:$true] %s145
      %151 = dma.hbm_to_vmem [thread:$0]  %s13, 1536, %s146, [#allocation6], 128, 128, 8
    $region29: #{mm_disentangled_forward.3} parent=1 // pred_fallthru
      _
    // Predicated region
    $region30: #{mm_disentangled_forward.3} parent=1 // pred_check
      _
    $region31: #{mm_disentangled_forward.3} parent=1 // pred_check_branch
      %153 = sbr.rel (0) target = $region33
    $region32: #{mm_disentangled_forward.3} parent=1 // pred_region
      %s155 = ssub.s32 16, 16
      %156 = vsyncadd [#allocation9], %s155
      %s158 = sshll.u32 [#allocation8], 4
      %s159 = int_to_ptr.vmem [resolvable:$true] %s158
      %161 = dma.hbm_to_vmem [thread:$0]  %s15, 16, %s159, [#allocation9]
    $region33: #{mm_disentangled_forward.3} parent=1 // pred_fallthru
      _
    // Predicated region
    $region34: #{mm_disentangled_forward.3} parent=1 // pred_check
      _
    $region35: #{mm_disentangled_forward.3} parent=1 // pred_check_branch
      %163 = sbr.rel (0) target = $region37
    $region36: #{mm_disentangled_forward.3} parent=1 // pred_region
      %s165 = ssub.s32 3072, 3072
      %166 = vsyncadd [#allocation9], %s165
      %s167 = sshll.u32 [#allocation10], 4
      %s168 = int_to_ptr.vmem [resolvable:$true] %s167
      %173 = dma.hbm_to_vmem [thread:$0]  %s17, 3072, %s168, [#allocation9], 256, 256, 16
    $region37: #{mm_disentangled_forward.3} parent=1 // pred_fallthru
      _
    // Predicated region
    $region38: #{mm_disentangled_forward.3} parent=1 // pred_check
      _
    $region39: #{mm_disentangled_forward.3} parent=1 // pred_check_branch
      %175 = sbr.rel (0) target = $region41
    $region40: #{mm_disentangled_forward.3} parent=1 // pred_region
      %s177 = ssub.s32 32, 32
      %178 = vsyncadd [#allocation12], %s177
      %s180 = sshll.u32 [#allocation11], 4
      %s181 = int_to_ptr.vmem [resolvable:$true] %s180
      %183 = dma.hbm_to_vmem [thread:$0]  %s19, 32, %s181, [#allocation12]
    $region41: #{mm_disentangled_forward.3} parent=1 // pred_fallthru
      _
    // Predicated region
    $region42: #{mm_disentangled_forward.3} parent=1 // pred_check
      _
    $region43: #{mm_disentangled_forward.3} parent=1 // pred_check_branch
      %185 = sbr.rel (0) target = $region45
    $region44: #{mm_disentangled_forward.3} parent=1 // pred_region
      %s187 = ssub.s32 9216, 9216
      %188 = vsyncadd [#allocation12], %s187
      %s189 = sshll.u32 [#allocation13], 4
      %s190 = int_to_ptr.vmem [resolvable:$true] %s189
      %195 = dma.hbm_to_vmem [thread:$0]  %s21, 9216, %s190, [#allocation12], 384, 384, 24
    $region45: #{mm_disentangled_forward.3} parent=1 // pred_fallthru
      _
    // Predicated region
    $region46: #{mm_disentangled_forward.3} parent=1 // pred_check
      _
    $region47: #{mm_disentangled_forward.3} parent=1 // pred_check_branch
      %197 = sbr.rel (0) target = $region49
    $region48: #{mm_disentangled_forward.3} parent=1 // pred_region
      %s199 = ssub.s32 48, 48
      %200 = vsyncadd [#allocation15], %s199
      %s202 = sshll.u32 [#allocation14], 4
      %s203 = int_to_ptr.vmem [resolvable:$true] %s202
      %205 = dma.hbm_to_vmem [thread:$0]  %s23, 48, %s203, [#allocation15]
    $region49: #{mm_disentangled_forward.3} parent=1 // pred_fallthru
      _
    // Predicated region
    $region50: #{mm_disentangled_forward.3} parent=1 // pred_check
      _
    $region51: #{mm_disentangled_forward.3} parent=1 // pred_check_branch
      %207 = sbr.rel (0) target = $region53
    $region52: #{mm_disentangled_forward.3} parent=1 // pred_region
      _
    $region53: #{mm_disentangled_forward.3} parent=1 // pred_fallthru
      _
    // Predicated region
    $region54: #{mm_disentangled_forward.3} parent=1 // pred_check
      _
    $region55: #{mm_disentangled_forward.3} parent=1 // pred_check_branch
      %209 = sbr.rel (0) target = $region57
    $region56: #{mm_disentangled_forward.3} parent=1 // pred_region
      %s211 = ssub.s32 16, 16
      %212 = vsyncadd [#allocation15], %s211
      %s214 = sshll.u32 [#allocation16], 4
      %s215 = int_to_ptr.vmem [resolvable:$true] %s214
      %217 = dma.hbm_to_vmem [thread:$0]  %s27, 16, %s215, [#allocation15]
    $region57: #{mm_disentangled_forward.3} parent=1 // pred_fallthru
      _
    // Predicated region
    $region58: #{mm_disentangled_forward.3} parent=1 // pred_check
      _
    $region59: #{mm_disentangled_forward.3} parent=1 // pred_check_branch
      %219 = sbr.rel (0) target = $region61
    $region60: #{mm_disentangled_forward.3} parent=1 // pred_region
      _
    $region61: #{mm_disentangled_forward.3} parent=1 // pred_fallthru
      _
    // Predicated region
    $region62: #{mm_disentangled_forward.3} parent=1 // pred_check
      _
    $region63: #{mm_disentangled_forward.3} parent=1 // pred_check_branch
      %221 = sbr.rel (0) target = $region65
    $region64: #{mm_disentangled_forward.3} parent=1 // pred_region
      %s223 = ssub.s32 16, 16
      %224 = vsyncadd [#allocation18], %s223
      %s226 = sshll.u32 [#allocation17], 4
      %s227 = int_to_ptr.vmem [resolvable:$true] %s226
      %229 = dma.hbm_to_vmem [thread:$0]  %s31, 16, %s227, [#allocation18]
    $region65: #{mm_disentangled_forward.3} parent=1 // pred_fallthru
      _
    // Predicated region
    $region66: #{mm_disentangled_forward.3} parent=1 // pred_check
      _
    $region67: #{mm_disentangled_forward.3} parent=1 // pred_check_branch
      %231 = sbr.rel (0) target = $region69
    $region68: #{mm_disentangled_forward.3} parent=1 // pred_region
      %s233 = ssub.s32 1536, 1536
      %234 = vsyncadd [#allocation18], %s233
      %s235 = sshll.u32 [#allocation19], 4
      %s236 = int_to_ptr.vmem [resolvable:$true] %s235
      %241 = dma.hbm_to_vmem [thread:$0]  %s33, 1536, %s236, [#allocation18], 384, 384, 24
    $region69: #{mm_disentangled_forward.3} parent=1 // pred_fallthru
      _
    // Predicated region
    $region70: #{mm_disentangled_forward.3} parent=1 // pred_check
      _
    $region71: #{mm_disentangled_forward.3} parent=1 // pred_check_branch
      %243 = sbr.rel (0) target = $region73
    $region72: #{mm_disentangled_forward.3} parent=1 // pred_region
      %s245 = ssub.s32 48, 48
      %246 = vsyncadd [#allocation21], %s245
      %s248 = sshll.u32 [#allocation20], 4
      %s249 = int_to_ptr.vmem [resolvable:$true] %s248
      %251 = dma.hbm_to_vmem [thread:$0]  %s35, 48, %s249, [#allocation21]
    $region73: #{mm_disentangled_forward.3} parent=1 // pred_fallthru
      _
    // Predicated region
    $region74: #{mm_disentangled_forward.3} parent=1 // pred_check
      _
    $region75: #{mm_disentangled_forward.3} parent=1 // pred_check_branch
      %253 = sbr.rel (0) target = $region77
    $region76: #{mm_disentangled_forward.3} parent=1 // pred_region
      %s255 = ssub.s32 23040, 23040
      %256 = vsyncadd [#allocation21], %s255
      %s257 = sshll.u32 [#allocation22], 4
      %s258 = int_to_ptr.vmem [resolvable:$true] %s257
      %263 = dma.hbm_to_vmem [thread:$0]  %s37, 23040, %s258, [#allocation21], 640, 640, 40
    $region77: #{mm_disentangled_forward.3} parent=1 // pred_fallthru
      _
    // Predicated region
    $region78: #{mm_disentangled_forward.3} parent=1 // pred_check
      _
    $region79: #{mm_disentangled_forward.3} parent=1 // pred_check_branch
      %265 = sbr.rel (0) target = $region81
    $region80: #{mm_disentangled_forward.3} parent=1 // pred_region
      %s267 = ssub.s32 80, 80
      %268 = vsyncadd [#allocation24], %s267
      %s270 = sshll.u32 [#allocation23], 4
      %s271 = int_to_ptr.vmem [resolvable:$true] %s270
      %273 = dma.hbm_to_vmem [thread:$0]  %s39, 80, %s271, [#allocation24]
    $region81: #{mm_disentangled_forward.3} parent=1 // pred_fallthru
      _
    // Predicated region
    $region82: #{mm_disentangled_forward.3} parent=1 // pred_check
      _
    $region83: #{mm_disentangled_forward.3} parent=1 // pred_check_branch
      %275 = sbr.rel (0) target = $region85
    $region84: #{mm_disentangled_forward.3} parent=1 // pred_region
      %s277 = ssub.s32 512, 512
      %278 = vsyncadd [#allocation24], %s277
      %s279 = sshll.u32 [#allocation25], 4
      %s280 = int_to_ptr.vmem [resolvable:$true] %s279
      %285 = dma.hbm_to_vmem [thread:$0]  %s41, 512, %s280, [#allocation24], 128, 128, 8
    $region85: #{mm_disentangled_forward.3} parent=1 // pred_fallthru
      _
    // Predicated region
    $region86: #{mm_disentangled_forward.3} parent=1 // pred_check
      _
    $region87: #{mm_disentangled_forward.3} parent=1 // pred_check_branch
      %287 = sbr.rel (0) target = $region89
    $region88: #{mm_disentangled_forward.3} parent=1 // pred_region
      %s289 = ssub.s32 16, 16
      %290 = vsyncadd [#allocation27], %s289
      %s292 = sshll.u32 [#allocation26], 4
      %s293 = int_to_ptr.vmem [resolvable:$true] %s292
      %295 = dma.hbm_to_vmem [thread:$0]  %s43, 16, %s293, [#allocation27]
    $region89: #{mm_disentangled_forward.3} parent=1 // pred_fallthru
      _
    // Predicated region
    $region90: #{mm_disentangled_forward.3} parent=1 // pred_check
      _
    $region91: #{mm_disentangled_forward.3} parent=1 // pred_check_branch
      %297 = sbr.rel (0) target = $region93
    $region92: #{mm_disentangled_forward.3} parent=1 // pred_region
      %s299 = ssub.s32 32, 32
      %300 = vsyncadd [#allocation27], %s299
      %s301 = sshll.u32 [#allocation28], 4
      %s302 = int_to_ptr.vmem [resolvable:$true] %s301
      %307 = dma.hbm_to_vmem [thread:$0]  %s45, 32, %s302, [#allocation27], 16, 16, 1
    $region93: #{mm_disentangled_forward.3} parent=1 // pred_fallthru
      _
    // Predicated region
    $region94: #{mm_disentangled_forward.3} parent=1 // pred_check
      _
    $region95: #{mm_disentangled_forward.3} parent=1 // pred_check_branch
      %309 = sbr.rel (0) target = $region97
    $region96: #{mm_disentangled_forward.3} parent=1 // pred_region
      %s311 = ssub.s32 32, 32
      %312 = vsyncadd [#allocation30], %s311
      %s313 = sshll.u32 [#allocation29], 4
      %s314 = int_to_ptr.vmem [resolvable:$true] %s313
      %319 = dma.hbm_to_vmem [thread:$0]  %s47, 32, %s314, [#allocation30], 16, 16, 1
    $region97: #{mm_disentangled_forward.3} parent=1 // pred_fallthru
      _
    // Predicated region
    $region98: #{mm_disentangled_forward.3} parent=1 // pred_check
      _
    $region99: #{mm_disentangled_forward.3} parent=1 // pred_check_branch
      %321 = sbr.rel (0) target = $region101
    $region100: #{mm_disentangled_forward.3} parent=1 // pred_region
      %s323 = ssub.s32 1024, 1024
      %324 = vsyncadd [#allocation30], %s323
      %s325 = sshll.u32 [#allocation31], 4
      %s326 = int_to_ptr.vmem [resolvable:$true] %s325
      %331 = dma.hbm_to_vmem [thread:$0]  %s49, 1024, %s326, [#allocation30], 128, 128, 8
    $region101: #{mm_disentangled_forward.3} parent=1 // pred_fallthru
      _
    // Predicated region
    $region102: #{mm_disentangled_forward.3} parent=1 // pred_check
      _
    $region103: #{mm_disentangled_forward.3} parent=1 // pred_check_branch
      %333 = sbr.rel (0) target = $region105
    $region104: #{mm_disentangled_forward.3} parent=1 // pred_region
      %s335 = ssub.s32 1024, 1024
      %336 = vsyncadd [#allocation33], %s335
      %s337 = sshll.u32 [#allocation32], 4
      %s338 = int_to_ptr.vmem [resolvable:$true] %s337
      %343 = dma.hbm_to_vmem [thread:$0]  %s51, 1024, %s338, [#allocation33], 128, 128, 8
    $region105: #{mm_disentangled_forward.3} parent=1 // pred_fallthru
      _
    // Predicated region
    $region106: #{mm_disentangled_forward.3} parent=1 // pred_check
      _
    $region107: #{mm_disentangled_forward.3} parent=1 // pred_check_branch
      %345 = sbr.rel (0) target = $region109
    $region108: #{mm_disentangled_forward.3} parent=1 // pred_region
      %s347 = ssub.s32 1024, 1024
      %348 = vsyncadd [#allocation33], %s347
      %s349 = sshll.u32 [#allocation34], 4
      %s350 = int_to_ptr.vmem [resolvable:$true] %s349
      %355 = dma.hbm_to_vmem [thread:$0]  %s53, 1024, %s350, [#allocation33], 128, 128, 8
    $region109: #{mm_disentangled_forward.3} parent=1 // pred_fallthru
      _
    // Predicated region
    $region110: #{mm_disentangled_forward.3} parent=1 // pred_check
      _
    $region111: #{mm_disentangled_forward.3} parent=1 // pred_check_branch
      %357 = sbr.rel (0) target = $region113
    $region112: #{mm_disentangled_forward.3} parent=1 // pred_region
      %s359 = ssub.s32 32, 32
      %360 = vsyncadd [#allocation36], %s359
      %s361 = sshll.u32 [#allocation35], 4
      %s362 = int_to_ptr.vmem [resolvable:$true] %s361
      %367 = dma.hbm_to_vmem [thread:$0]  %s55, 32, %s362, [#allocation36], 16, 16, 1
    $region113: #{mm_disentangled_forward.3} parent=1 // pred_fallthru
      _
    // Predicated region
    $region114: #{mm_disentangled_forward.3} parent=1 // pred_check
      _
    $region115: #{mm_disentangled_forward.3} parent=1 // pred_check_branch
      %369 = sbr.rel (0) target = $region117
    $region116: #{mm_disentangled_forward.3} parent=1 // pred_region
      %s371 = ssub.s32 32, 32
      %372 = vsyncadd [#allocation36], %s371
      %s373 = sshll.u32 [#allocation37], 4
      %s374 = int_to_ptr.vmem [resolvable:$true] %s373
      %379 = dma.hbm_to_vmem [thread:$0]  %s57, 32, %s374, [#allocation36], 16, 16, 1
    $region117: #{mm_disentangled_forward.3} parent=1 // pred_fallthru
      _
    // Predicated region
    $region118: #{mm_disentangled_forward.3} parent=1 // pred_check
      _
    $region119: #{mm_disentangled_forward.3} parent=1 // pred_check_branch
      %381 = sbr.rel (0) target = $region121
    $region120: #{mm_disentangled_forward.3} parent=1 // pred_region
      %s383 = ssub.s32 32, 32
      %384 = vsyncadd [#allocation39], %s383
      %s385 = sshll.u32 [#allocation38], 4
      %s386 = int_to_ptr.vmem [resolvable:$true] %s385
      %391 = dma.hbm_to_vmem [thread:$0]  %s59, 32, %s386, [#allocation39], 16, 16, 1
    $region121: #{mm_disentangled_forward.3} parent=1 // pred_fallthru
      _
    // Predicated region
    $region122: #{mm_disentangled_forward.3} parent=1 // pred_check
      _
    $region123: #{mm_disentangled_forward.3} parent=1 // pred_check_branch
      %393 = sbr.rel (0) target = $region125
    $region124: #{mm_disentangled_forward.3} parent=1 // pred_region
      _
    $region125: #{mm_disentangled_forward.3} parent=1 // pred_fallthru
      _
    // Predicated region
    $region126: #{mm_disentangled_forward.3} parent=1 // pred_check
      _
    $region127: #{mm_disentangled_forward.3} parent=1 // pred_check_branch
      %395 = sbr.rel (0) target = $region129
    $region128: #{mm_disentangled_forward.3} parent=1 // pred_region
      %s397 = ssub.s32 4096, 4096
      %398 = vsyncadd [#allocation39], %s397
      %s399 = sshll.u32 [#allocation40], 4
      %s400 = int_to_ptr.vmem [resolvable:$true] %s399
      %405 = dma.hbm_to_vmem [thread:$0]  %s63, 4096, %s400, [#allocation39], 512, 512, 32
    $region129: #{mm_disentangled_forward.3} parent=1 // pred_fallthru
      _
    // Predicated region
    $region130: #{mm_disentangled_forward.3} parent=1 // pred_check
      _
    $region131: #{mm_disentangled_forward.3} parent=1 // pred_check_branch
      %407 = sbr.rel (0) target = $region133
    $region132: #{mm_disentangled_forward.3} parent=1 // pred_region
      %s409 = ssub.s32 128, 128
      %410 = vsyncadd [#allocation42], %s409
      %s411 = sshll.u32 [#allocation41], 4
      %s412 = int_to_ptr.vmem [resolvable:$true] %s411
      %417 = dma.hbm_to_vmem [thread:$0]  %s65, 128, %s412, [#allocation42], 64, 64, 4
    $region133: #{mm_disentangled_forward.3} parent=1 // pred_fallthru
      _
    // Predicated region
    $region134: #{mm_disentangled_forward.3} parent=1 // pred_check
      _
    $region135: #{mm_disentangled_forward.3} parent=1 // pred_check_branch
      %419 = sbr.rel (0) target = $region137
    $region136: #{mm_disentangled_forward.3} parent=1 // pred_region
      %s421 = ssub.s32 57344, 57344
      %422 = vsyncadd [#allocation42], %s421
      %s423 = sshll.u32 [#allocation43], 4
      %s424 = int_to_ptr.vmem [resolvable:$true] %s423
      %429 = dma.hbm_to_vmem [thread:$0]  %s67, 57344, %s424, [#allocation42], 512, 512, 32
    $region137: #{mm_disentangled_forward.3} parent=1 // pred_fallthru
      _
    // Predicated region
    $region138: #{mm_disentangled_forward.3} parent=1 // pred_check
      _
    $region139: #{mm_disentangled_forward.3} parent=1 // pred_check_branch
      %431 = sbr.rel (0) target = $region141
    $region140: #{mm_disentangled_forward.3} parent=1 // pred_region
      %s433 = ssub.s32 128, 128
      %434 = vsyncadd [#allocation45], %s433
      %s435 = sshll.u32 [#allocation44], 4
      %s436 = int_to_ptr.vmem [resolvable:$true] %s435
      %441 = dma.hbm_to_vmem [thread:$0]  %s69, 128, %s436, [#allocation45], 64, 64, 4
    $region141: #{mm_disentangled_forward.3} parent=1 // pred_fallthru
      _
    // Predicated region
    $region142: #{mm_disentangled_forward.3} parent=1 // pred_check
      _
    $region143: #{mm_disentangled_forward.3} parent=1 // pred_check_branch
      %443 = sbr.rel (0) target = $region145
    $region144: #{mm_disentangled_forward.3} parent=1 // pred_region
      _
    $region145: #{mm_disentangled_forward.3} parent=1 // pred_fallthru
      _
    // Predicated region
    $region146: #{mm_disentangled_forward.3} parent=1 // pred_check
      _
    $region147: #{mm_disentangled_forward.3} parent=1 // pred_check_branch
      %445 = sbr.rel (0) target = $region149
    $region148: #{mm_disentangled_forward.3} parent=1 // pred_region
      _
    $region149: #{mm_disentangled_forward.3} parent=1 // pred_fallthru
      _
    // Predicated region
    $region150: #{mm_disentangled_forward.3} parent=1 // pred_check
      _
    $region151: #{mm_disentangled_forward.3} parent=1 // pred_check_branch
      %447 = sbr.rel (0) target = $region153
    $region152: #{mm_disentangled_forward.3} parent=1 // pred_region
      %s449 = ssub.s32 512, 512
      %450 = vsyncadd [#allocation45], %s449
      %s452 = sshll.u32 [#allocation46], 4
      %s453 = int_to_ptr.vmem [resolvable:$true] %s452
      %455 = dma.hbm_to_vmem [thread:$0]  %s75, 512, %s453, [#allocation45]
    $region153: #{mm_disentangled_forward.3} parent=1 // pred_fallthru
      _
    // Predicated region
    $region154: #{mm_disentangled_forward.3} parent=1 // pred_check
      _
    $region155: #{mm_disentangled_forward.3} parent=1 // pred_check_branch
      %457 = sbr.rel (0) target = $region157
    $region156: #{mm_disentangled_forward.3} parent=1 // pred_region
      _
    $region157: #{mm_disentangled_forward.3} parent=1 // pred_fallthru
      _
    // Predicated region
    $region158: #{mm_disentangled_forward.3} parent=1 // pred_check
      _
    $region159: #{mm_disentangled_forward.3} parent=1 // pred_check_branch
      %459 = sbr.rel (0) target = $region161
    $region160: #{mm_disentangled_forward.3} parent=1 // pred_region
      %s461 = ssub.s32 16, 16
      %462 = vsyncadd [#allocation48], %s461
      %s464 = sshll.u32 [#allocation47], 4
      %s465 = int_to_ptr.vmem [resolvable:$true] %s464
      %467 = dma.hbm_to_vmem [thread:$0]  %s79, 16, %s465, [#allocation48]
    $region161: #{mm_disentangled_forward.3} parent=1 // pred_fallthru
      _
    // Predicated region
    $region162: #{mm_disentangled_forward.3} parent=1 // pred_check
      _
    $region163: #{mm_disentangled_forward.3} parent=1 // pred_check_branch
      %469 = sbr.rel (0) target = $region165
    $region164: #{mm_disentangled_forward.3} parent=1 // pred_region
      %470 = dma.done [#allocation3], 896
    $region165: #{mm_disentangled_forward.3} parent=1 // pred_fallthru
      _
    // Predicated region
    $region166: #{mm_disentangled_forward.3} parent=1 // pred_check
      _
    $region167: #{mm_disentangled_forward.3} parent=1 // pred_check_branch
      %472 = sbr.rel (0) target = $region169
    $region168: #{mm_disentangled_forward.3} parent=1 // pred_region
      %473 = dma.done [#allocation6], 16
    $region169: #{mm_disentangled_forward.3} parent=1 // pred_fallthru
      _
    // Predicated region
    $region170: #{mm_disentangled_forward.3} parent=1 // pred_check
      _
    $region171: #{mm_disentangled_forward.3} parent=1 // pred_check_branch
      %475 = sbr.rel (0) target = $region173
    $region172: #{mm_disentangled_forward.3} parent=1 // pred_region
      %476 = dma.done [#allocation6], 1536
    $region173: #{mm_disentangled_forward.3} parent=1 // pred_fallthru
      _
    // Predicated region
    $region174: #{mm_disentangled_forward.3} parent=1 // pred_check
      _
    $region175: #{mm_disentangled_forward.3} parent=1 // pred_check_branch
      %478 = sbr.rel (0) target = $region177
    $region176: #{mm_disentangled_forward.3} parent=1 // pred_region
      %479 = dma.done [#allocation9], 16
    $region177: #{mm_disentangled_forward.3} parent=1 // pred_fallthru
      _
    // Predicated region
    $region178: #{mm_disentangled_forward.3} parent=1 // pred_check
      _
    $region179: #{mm_disentangled_forward.3} parent=1 // pred_check_branch
      %481 = sbr.rel (0) target = $region181
    $region180: #{mm_disentangled_forward.3} parent=1 // pred_region
      %482 = dma.done [#allocation9], 3072
    $region181: #{mm_disentangled_forward.3} parent=1 // pred_fallthru
      _
    // Predicated region
    $region182: #{mm_disentangled_forward.3} parent=1 // pred_check
      _
    $region183: #{mm_disentangled_forward.3} parent=1 // pred_check_branch
      %484 = sbr.rel (0) target = $region185
    $region184: #{mm_disentangled_forward.3} parent=1 // pred_region
      %485 = dma.done [#allocation12], 32
    $region185: #{mm_disentangled_forward.3} parent=1 // pred_fallthru
      _
    // Predicated region
    $region186: #{mm_disentangled_forward.3} parent=1 // pred_check
      _
    $region187: #{mm_disentangled_forward.3} parent=1 // pred_check_branch
      %487 = sbr.rel (0) target = $region189
    $region188: #{mm_disentangled_forward.3} parent=1 // pred_region
      %488 = dma.done [#allocation12], 9216
    $region189: #{mm_disentangled_forward.3} parent=1 // pred_fallthru
      _
    // Predicated region
    $region190: #{mm_disentangled_forward.3} parent=1 // pred_check
      _
    $region191: #{mm_disentangled_forward.3} parent=1 // pred_check_branch
      %490 = sbr.rel (0) target = $region193
    $region192: #{mm_disentangled_forward.3} parent=1 // pred_region
      %491 = dma.done [#allocation15], 48
    $region193: #{mm_disentangled_forward.3} parent=1 // pred_fallthru
      _
    // Predicated region
    $region194: #{mm_disentangled_forward.3} parent=1 // pred_check
      _
    $region195: #{mm_disentangled_forward.3} parent=1 // pred_check_branch
      %493 = sbr.rel (0) target = $region197
    $region196: #{mm_disentangled_forward.3} parent=1 // pred_region
      %494 = dma.done [#allocation15], 16
    $region197: #{mm_disentangled_forward.3} parent=1 // pred_fallthru
      _
    // Predicated region
    $region198: #{mm_disentangled_forward.3} parent=1 // pred_check
      _
    $region199: #{mm_disentangled_forward.3} parent=1 // pred_check_branch
      %496 = sbr.rel (0) target = $region201
    $region200: #{mm_disentangled_forward.3} parent=1 // pred_region
      %497 = dma.done [#allocation18], 16
    $region201: #{mm_disentangled_forward.3} parent=1 // pred_fallthru
      _
    // Predicated region
    $region202: #{mm_disentangled_forward.3} parent=1 // pred_check
      _
    $region203: #{mm_disentangled_forward.3} parent=1 // pred_check_branch
      %499 = sbr.rel (0) target = $region205
    $region204: #{mm_disentangled_forward.3} parent=1 // pred_region
      %500 = dma.done [#allocation18], 1536
    $region205: #{mm_disentangled_forward.3} parent=1 // pred_fallthru
      _
    // Predicated region
    $region206: #{mm_disentangled_forward.3} parent=1 // pred_check
      _
    $region207: #{mm_disentangled_forward.3} parent=1 // pred_check_branch
      %502 = sbr.rel (0) target = $region209
    $region208: #{mm_disentangled_forward.3} parent=1 // pred_region
      %503 = dma.done [#allocation21], 48
    $region209: #{mm_disentangled_forward.3} parent=1 // pred_fallthru
      _
    // Predicated region
    $region210: #{mm_disentangled_forward.3} parent=1 // pred_check
      _
    $region211: #{mm_disentangled_forward.3} parent=1 // pred_check_branch
      %505 = sbr.rel (0) target = $region213
    $region212: #{mm_disentangled_forward.3} parent=1 // pred_region
      %506 = dma.done [#allocation21], 23040
    $region213: #{mm_disentangled_forward.3} parent=1 // pred_fallthru
      _
    // Predicated region
    $region214: #{mm_disentangled_forward.3} parent=1 // pred_check
      _
    $region215: #{mm_disentangled_forward.3} parent=1 // pred_check_branch
      %508 = sbr.rel (0) target = $region217
    $region216: #{mm_disentangled_forward.3} parent=1 // pred_region
      %509 = dma.done [#allocation24], 80
    $region217: #{mm_disentangled_forward.3} parent=1 // pred_fallthru
      _
    // Predicated region
    $region218: #{mm_disentangled_forward.3} parent=1 // pred_check
      _
    $region219: #{mm_disentangled_forward.3} parent=1 // pred_check_branch
      %511 = sbr.rel (0) target = $region221
    $region220: #{mm_disentangled_forward.3} parent=1 // pred_region
      %512 = dma.done [#allocation24], 512
    $region221: #{mm_disentangled_forward.3} parent=1 // pred_fallthru
      _
    // Predicated region
    $region222: #{mm_disentangled_forward.3} parent=1 // pred_check
      _
    $region223: #{mm_disentangled_forward.3} parent=1 // pred_check_branch
      %514 = sbr.rel (0) target = $region225
    $region224: #{mm_disentangled_forward.3} parent=1 // pred_region
      %515 = dma.done [#allocation27], 16
    $region225: #{mm_disentangled_forward.3} parent=1 // pred_fallthru
      _
    // Predicated region
    $region226: #{mm_disentangled_forward.3} parent=1 // pred_check
      _
    $region227: #{mm_disentangled_forward.3} parent=1 // pred_check_branch
      %517 = sbr.rel (0) target = $region229
    $region228: #{mm_disentangled_forward.3} parent=1 // pred_region
      %518 = dma.done [#allocation27], 32
    $region229: #{mm_disentangled_forward.3} parent=1 // pred_fallthru
      _
    // Predicated region
    $region230: #{mm_disentangled_forward.3} parent=1 // pred_check
      _
    $region231: #{mm_disentangled_forward.3} parent=1 // pred_check_branch
      %520 = sbr.rel (0) target = $region233
    $region232: #{mm_disentangled_forward.3} parent=1 // pred_region
      %521 = dma.done [#allocation30], 32
    $region233: #{mm_disentangled_forward.3} parent=1 // pred_fallthru
      _
    // Predicated region
    $region234: #{mm_disentangled_forward.3} parent=1 // pred_check
      _
    $region235: #{mm_disentangled_forward.3} parent=1 // pred_check_branch
      %523 = sbr.rel (0) target = $region237
    $region236: #{mm_disentangled_forward.3} parent=1 // pred_region
      %524 = dma.done [#allocation30], 1024
    $region237: #{mm_disentangled_forward.3} parent=1 // pred_fallthru
      _
    // Predicated region
    $region238: #{mm_disentangled_forward.3} parent=1 // pred_check
      _
    $region239: #{mm_disentangled_forward.3} parent=1 // pred_check_branch
      %526 = sbr.rel (0) target = $region241
    $region240: #{mm_disentangled_forward.3} parent=1 // pred_region
      %527 = dma.done [#allocation33], 1024
    $region241: #{mm_disentangled_forward.3} parent=1 // pred_fallthru
      _
    // Predicated region
    $region242: #{mm_disentangled_forward.3} parent=1 // pred_check
      _
    $region243: #{mm_disentangled_forward.3} parent=1 // pred_check_branch
      %529 = sbr.rel (0) target = $region245
    $region244: #{mm_disentangled_forward.3} parent=1 // pred_region
      %530 = dma.done [#allocation33], 1024
    $region245: #{mm_disentangled_forward.3} parent=1 // pred_fallthru
      _
    // Predicated region
    $region246: #{mm_disentangled_forward.3} parent=1 // pred_check
      _
    $region247: #{mm_disentangled_forward.3} parent=1 // pred_check_branch
      %532 = sbr.rel (0) target = $region249
    $region248: #{mm_disentangled_forward.3} parent=1 // pred_region
      %533 = dma.done [#allocation36], 32
    $region249: #{mm_disentangled_forward.3} parent=1 // pred_fallthru
      _
    // Predicated region
    $region250: #{mm_disentangled_forward.3} parent=1 // pred_check
      _
    $region251: #{mm_disentangled_forward.3} parent=1 // pred_check_branch
      %535 = sbr.rel (0) target = $region253
    $region252: #{mm_disentangled_forward.3} parent=1 // pred_region
      %536 = dma.done [#allocation36], 32
    $region253: #{mm_disentangled_forward.3} parent=1 // pred_fallthru
      _
    // Predicated region
    $region254: #{mm_disentangled_forward.3} parent=1 // pred_check
      _
    $region255: #{mm_disentangled_forward.3} parent=1 // pred_check_branch
      %538 = sbr.rel (0) target = $region257
    $region256: #{mm_disentangled_forward.3} parent=1 // pred_region
      %539 = dma.done [#allocation39], 32
    $region257: #{mm_disentangled_forward.3} parent=1 // pred_fallthru
      _
    // Predicated region
    $region258: #{mm_disentangled_forward.3} parent=1 // pred_check
      _
    $region259: #{mm_disentangled_forward.3} parent=1 // pred_check_branch
      %541 = sbr.rel (0) target = $region261
    $region260: #{mm_disentangled_forward.3} parent=1 // pred_region
      %542 = dma.done [#allocation39], 4096
    $region261: #{mm_disentangled_forward.3} parent=1 // pred_fallthru
      _
    // Predicated region
    $region262: #{mm_disentangled_forward.3} parent=1 // pred_check
      _
    $region263: #{mm_disentangled_forward.3} parent=1 // pred_check_branch
      %544 = sbr.rel (0) target = $region265
    $region264: #{mm_disentangled_forward.3} parent=1 // pred_region
      %545 = dma.done [#allocation42], 128
    $region265: #{mm_disentangled_forward.3} parent=1 // pred_fallthru
      _
    // Predicated region
    $region266: #{mm_disentangled_forward.3} parent=1 // pred_check
      _
    $region267: #{mm_disentangled_forward.3} parent=1 // pred_check_branch
      %547 = sbr.rel (0) target = $region269
    $region268: #{mm_disentangled_forward.3} parent=1 // pred_region
      %548 = dma.done [#allocation42], 57344
    $region269: #{mm_disentangled_forward.3} parent=1 // pred_fallthru
      _
    // Predicated region
    $region270: #{mm_disentangled_forward.3} parent=1 // pred_check
      _
    $region271: #{mm_disentangled_forward.3} parent=1 // pred_check_branch
      %550 = sbr.rel (0) target = $region273
    $region272: #{mm_disentangled_forward.3} parent=1 // pred_region
      %551 = dma.done [#allocation45], 128
    $region273: #{mm_disentangled_forward.3} parent=1 // pred_fallthru
      _
    // Predicated region
    $region274: #{mm_disentangled_forward.3} parent=1 // pred_check
      _
    $region275: #{mm_disentangled_forward.3} parent=1 // pred_check_branch
      %553 = sbr.rel (0) target = $region277
    $region276: #{mm_disentangled_forward.3} parent=1 // pred_region
      %554 = dma.done [#allocation45], 512
    $region277: #{mm_disentangled_forward.3} parent=1 // pred_fallthru
      _
    // Predicated region
    $region278: #{mm_disentangled_forward.3} parent=1 // pred_check
      _
    $region279: #{mm_disentangled_forward.3} parent=1 // pred_check_branch
      %556 = sbr.rel (0) target = $region281
    $region280: #{mm_disentangled_forward.3} parent=1 // pred_region
      %557 = dma.done [#allocation48], 16
    $region281: #{mm_disentangled_forward.3} parent=1 // pred_fallthru
      _
    %v558 = vld [vmem:[%s1] sm:$0x3]
    %v559 = vld [vmem:[#allocation2] sm:$0xff]
    %v560 = vld [vmem:[#allocation2 + $0x8] sm:$0xff]
    %v561 = vld [vmem:[#allocation2 + $0x10] sm:$0xff]
    %v562 = vld [vmem:[#allocation2 + $0x18] sm:$0xff]
    %v563 = vld [vmem:[#allocation2 + $0x20] sm:$0xff]
    %v564 = vld [vmem:[#allocation2 + $0x28] sm:$0xff]
    %v565 = vld [vmem:[#allocation2 + $0x30] sm:$0xff]
    %v566 = vld [vmem:[#allocation5] sm:$0x1]
    %v568 = vlaneseq
    %v569 = vshrl.u32 %v568, 7
    %v570 = vsub.s32 0, %v569
    %v571 = vrot.slane %v566, %v570
    %vm573 = vcmask 457728
    %v575 = vsel %vm573, %v558, 0
    %577 = vmatprep.subr.mxu0 0.0
    %578 = vmatpush1.msra.mxu0 %v559
    %579 = vmatprep.subr.mxu0 0.0
    %580 = vmatpush1.msra.mxu0 %v560
    %581 = vmatprep.subr.mxu0 0.0
    %582 = vmatpush1.msra.mxu0 %v561
    %583 = vmatprep.subr.mxu0 0.0
    %584 = vmatpush1.msra.mxu0 %v562
    %585 = vmatprep.subr.mxu0 0.0
    %586 = vmatpush1.msra.mxu0 %v563
    %587 = vmatprep.subr.mxu0 0.0
    %588 = vmatpush1.msra.mxu0 %v564
    %589 = vmatprep.subr.mxu0 0.0
    %590 = vmatpush1.msra.mxu0 %v565
    %591 = vmatprep.subr.mxu0 0.0
    %592 = vmatpush1.msra.mxu0 0.0
    %593 = vmatprep.subr.mxu0 0.0
    %594 = vmatpush1.msra.mxu0 0.0
    %595 = vmatprep.subr.mxu0 0.0
    %596 = vmatpush1.msra.mxu0 0.0
    %597 = vmatprep.subr.mxu0 0.0
    %598 = vmatpush1.msra.mxu0 0.0
    %599 = vmatprep.subr.mxu0 0.0
    %600 = vmatpush1.msra.mxu0 0.0
    %601 = vmatprep.subr.mxu0 0.0
    %602 = vmatpush1.msra.mxu0 0.0
    %603 = vmatprep.subr.mxu0 0.0
    %604 = vmatpush1.msra.mxu0 0.0
    %605 = vmatprep.subr.mxu0 0.0
    %606 = vmatpush1.msra.mxu0 0.0
    %607 = vmatprep.subr.mxu0 0.0
    %608 = vmatpush1.msra.mxu0 0.0
    %609 = vmatprep.subr.mxu0 0.0
    %610 = vmatpush1.msra.mxu0 0.0
    %611 = vmatprep.subr.mxu0 0.0
    %612 = vmatpush1.msra.mxu0 0.0
    %613 = vmatprep.subr.mxu0 0.0
    %614 = vmatpush1.msra.mxu0 0.0
    %615 = vmatprep.subr.mxu0 0.0
    %616 = vmatpush1.msra.mxu0 0.0
    %617 = vmatprep.subr.mxu0 0.0
    %618 = vmatpush1.msra.mxu0 0.0
    %619 = vmatprep.subr.mxu0 0.0
    %620 = vmatpush1.msra.mxu0 0.0
    %621 = vmatprep.subr.mxu0 0.0
    %622 = vmatpush1.msra.mxu0 0.0
    %623 = vmatprep.subr.mxu0 0.0
    %624 = vmatpush1.msra.mxu0 0.0
    %625 = vmatprep.subr.mxu0 0.0
    %626 = vmatpush1.msra.mxu0 0.0
    %627 = vmatprep.subr.mxu0 0.0
    %628 = vmatpush1.msra.mxu0 0.0
    %629 = vmatprep.subr.mxu0 0.0
    %630 = vmatpush1.msra.mxu0 0.0
    %631 = vmatprep.subr.mxu0 0.0
    %632 = vmatpush1.msra.mxu0 0.0
    %633 = vmatprep.subr.mxu0 0.0
    %634 = vmatpush1.msra.mxu0 0.0
    %635 = vmatprep.subr.mxu0 0.0
    %636 = vmatpush1.msra.mxu0 0.0
    %637 = vmatprep.subr.mxu0 0.0
    %638 = vmatpush1.msra.mxu0 0.0
    %639 = vmatprep.subr.mxu0 0.0
    %640 = vmatpush1.msra.mxu0 0.0
    %641 = vmatprep.mubr.f32.mxu0 0.0
    %642 = vmatmul.mubr.f32.gmra.mrb[0].mxu0 %v575
    %v643 = vpop.f32.mrb[0].mxu0
    %v644 = vadd.f32 %v571, %v643
    %v645 = vpop.f32.mrb[0].mxu0
    %646 = vdwg.mxu0
    %v647 = vld [vmem:[#allocation7] sm:$0xff]
    %v648 = vld [vmem:[#allocation7 + $0x8] sm:$0xff]
    %v649 = vld [vmem:[#allocation7 + $0x10] sm:$0xff]
    %v650 = vld [vmem:[#allocation7 + $0x18] sm:$0xff]
    %v651 = vld [vmem:[#allocation7 + $0x20] sm:$0xff]
    %v652 = vld [vmem:[#allocation7 + $0x28] sm:$0xff]
    %v653 = vld [vmem:[#allocation7 + $0x30] sm:$0xff]
    %v654 = vld [vmem:[#allocation7 + $0x38] sm:$0xff]
    %v655 = vld [vmem:[#allocation7 + $0x40] sm:$0xff]
    %v656 = vld [vmem:[#allocation7 + $0x48] sm:$0xff]
    %v657 = vld [vmem:[#allocation7 + $0x50] sm:$0xff]
    %v658 = vld [vmem:[#allocation7 + $0x58] sm:$0xff]
    %v659 = vld [vmem:[#allocation8] sm:$0x1]
    %v661 = vlaneseq
    %v662 = vshrl.u32 %v661, 7
    %v663 = vsub.s32 0, %v662
    %v664 = vrot.slane %v659, %v663
    %vm666 = vcmask 785408
    %v668 = vsel %vm666, %v644, 0
    %670 = vmatprep.subr.mxu0 0.0
    %671 = vmatpush1.msra.mxu0 %v647
    %672 = vmatprep.subr.mxu0 0.0
    %673 = vmatpush1.msra.mxu0 %v648
    %674 = vmatprep.subr.mxu0 0.0
    %675 = vmatpush1.msra.mxu0 %v649
    %676 = vmatprep.subr.mxu0 0.0
    %677 = vmatpush1.msra.mxu0 %v650
    %678 = vmatprep.subr.mxu0 0.0
    %679 = vmatpush1.msra.mxu0 %v651
    %680 = vmatprep.subr.mxu0 0.0
    %681 = vmatpush1.msra.mxu0 %v652
    %682 = vmatprep.subr.mxu0 0.0
    %683 = vmatpush1.msra.mxu0 %v653
    %684 = vmatprep.subr.mxu0 0.0
    %685 = vmatpush1.msra.mxu0 %v654
    %686 = vmatprep.subr.mxu0 0.0
    %687 = vmatpush1.msra.mxu0 %v655
    %688 = vmatprep.subr.mxu0 0.0
    %689 = vmatpush1.msra.mxu0 %v656
    %690 = vmatprep.subr.mxu0 0.0
    %691 = vmatpush1.msra.mxu0 %v657
    %692 = vmatprep.subr.mxu0 0.0
    %693 = vmatpush1.msra.mxu0 %v658
    %694 = vmatprep.subr.mxu0 0.0
    %695 = vmatpush1.msra.mxu0 0.0
    %696 = vmatprep.subr.mxu0 0.0
    %697 = vmatpush1.msra.mxu0 0.0
    %698 = vmatprep.subr.mxu0 0.0
    %699 = vmatpush1.msra.mxu0 0.0
    %700 = vmatprep.subr.mxu0 0.0
    %701 = vmatpush1.msra.mxu0 0.0
    %702 = vmatprep.subr.mxu0 0.0
    %703 = vmatpush1.msra.mxu0 0.0
    %704 = vmatprep.subr.mxu0 0.0
    %705 = vmatpush1.msra.mxu0 0.0
    %706 = vmatprep.subr.mxu0 0.0
    %707 = vmatpush1.msra.mxu0 0.0
    %708 = vmatprep.subr.mxu0 0.0
    %709 = vmatpush1.msra.mxu0 0.0
    %710 = vmatprep.subr.mxu0 0.0
    %711 = vmatpush1.msra.mxu0 0.0
    %712 = vmatprep.subr.mxu0 0.0
    %713 = vmatpush1.msra.mxu0 0.0
    %714 = vmatprep.subr.mxu0 0.0
    %715 = vmatpush1.msra.mxu0 0.0
    %716 = vmatprep.subr.mxu0 0.0
    %717 = vmatpush1.msra.mxu0 0.0
    %718 = vmatprep.subr.mxu0 0.0
    %719 = vmatpush1.msra.mxu0 0.0
    %720 = vmatprep.subr.mxu0 0.0
    %721 = vmatpush1.msra.mxu0 0.0
    %722 = vmatprep.subr.mxu0 0.0
    %723 = vmatpush1.msra.mxu0 0.0
    %724 = vmatprep.subr.mxu0 0.0
    %725 = vmatpush1.msra.mxu0 0.0
    %726 = vmatprep.subr.mxu0 0.0
    %727 = vmatpush1.msra.mxu0 0.0
    %728 = vmatprep.subr.mxu0 0.0
    %729 = vmatpush1.msra.mxu0 0.0
    %730 = vmatprep.subr.mxu0 0.0
    %731 = vmatpush1.msra.mxu0 0.0
    %732 = vmatprep.subr.mxu0 0.0
    %733 = vmatpush1.msra.mxu0 0.0
    %734 = vmatprep.mubr.f32.mxu0 0.0
    %735 = vmatmul.mubr.f32.gmra.mrb[0].mxu0 %v668
    %v736 = vpop.f32.mrb[0].mxu0
    %v737 = vadd.f32 %v664, %v736
    %v738 = vpop.f32.mrb[0].mxu0
    %739 = vdwg.mxu0
    %v740 = vmax.f32 %v737, 0.0
    %v741 = vld [vmem:[#allocation10] sm:$0xff]
    %v742 = vld [vmem:[#allocation10 + $0x8] sm:$0xff]
    %v743 = vld [vmem:[#allocation10 + $0x10] sm:$0xff]
    %v744 = vld [vmem:[#allocation10 + $0x18] sm:$0xff]
    %v745 = vld [vmem:[#allocation10 + $0x20] sm:$0xff]
    %v746 = vld [vmem:[#allocation10 + $0x28] sm:$0xff]
    %v747 = vld [vmem:[#allocation10 + $0x30] sm:$0xff]
    %v748 = vld [vmem:[#allocation10 + $0x38] sm:$0xff]
    %v749 = vld [vmem:[#allocation10 + $0x40] sm:$0xff]
    %v750 = vld [vmem:[#allocation10 + $0x48] sm:$0xff]
    %v751 = vld [vmem:[#allocation10 + $0x50] sm:$0xff]
    %v752 = vld [vmem:[#allocation10 + $0x58] sm:$0xff]
    %v753 = vld [vmem:[#allocation10 + $0x60] sm:$0xff]
    %v754 = vld [vmem:[#allocation10 + $0x68] sm:$0xff]
    %v755 = vld [vmem:[#allocation10 + $0x70] sm:$0xff]
    %v756 = vld [vmem:[#allocation10 + $0x78] sm:$0xff]
    %v757 = vld [vmem:[#allocation10 + $0x80] sm:$0xff]
    %v758 = vld [vmem:[#allocation10 + $0x88] sm:$0xff]
    %v759 = vld [vmem:[#allocation10 + $0x90] sm:$0xff]
    %v760 = vld [vmem:[#allocation10 + $0x98] sm:$0xff]
    %v761 = vld [vmem:[#allocation10 + $0xa0] sm:$0xff]
    %v762 = vld [vmem:[#allocation10 + $0xa8] sm:$0xff]
    %v763 = vld [vmem:[#allocation10 + $0xb0] sm:$0xff]
    %v764 = vld [vmem:[#allocation10 + $0xb8] sm:$0xff]
    %v765 = vld [vmem:[#allocation11] sm:$0x3]
    %v767 = vlaneseq
    %v768 = vshrl.u32 %v767, 7
    %v769 = vsub.s32 0, %v768
    %v770 = vrot.slane %v765, %v769
    %v771 = vlaneseq
    %v772 = vshrl.u32 %v771, 7
    %v773 = vsub.s32 1, %v772
    %v774 = vrot.slane %v765, %v773
    %v778 = vsel %vm666, %v740, 0
    %780 = vmatprep.subr.mxu0 %v742
    %781 = vmatpush1.msra.mxu0 %v741
    %782 = vmatprep.subr.mxu0 %v744
    %783 = vmatpush1.msra.mxu0 %v743
    %784 = vmatprep.subr.mxu0 %v746
    %785 = vmatpush1.msra.mxu0 %v745
    %786 = vmatprep.subr.mxu0 %v748
    %787 = vmatpush1.msra.mxu0 %v747
    %788 = vmatprep.subr.mxu0 %v750
    %789 = vmatpush1.msra.mxu0 %v749
    %790 = vmatprep.subr.mxu0 %v752
    %791 = vmatpush1.msra.mxu0 %v751
    %792 = vmatprep.subr.mxu0 %v754
    %793 = vmatpush1.msra.mxu0 %v753
    %794 = vmatprep.subr.mxu0 %v756
    %795 = vmatpush1.msra.mxu0 %v755
    %796 = vmatprep.subr.mxu0 %v758
    %797 = vmatpush1.msra.mxu0 %v757
    %798 = vmatprep.subr.mxu0 %v760
    %799 = vmatpush1.msra.mxu0 %v759
    %800 = vmatprep.subr.mxu0 %v762
    %801 = vmatpush1.msra.mxu0 %v761
    %802 = vmatprep.subr.mxu0 %v764
    %803 = vmatpush1.msra.mxu0 %v763
    %804 = vmatprep.subr.mxu0 0.0
    %805 = vmatpush1.msra.mxu0 0.0
    %806 = vmatprep.subr.mxu0 0.0
    %807 = vmatpush1.msra.mxu0 0.0
    %808 = vmatprep.subr.mxu0 0.0
    %809 = vmatpush1.msra.mxu0 0.0
    %810 = vmatprep.subr.mxu0 0.0
    %811 = vmatpush1.msra.mxu0 0.0
    %812 = vmatprep.subr.mxu0 0.0
    %813 = vmatpush1.msra.mxu0 0.0
    %814 = vmatprep.subr.mxu0 0.0
    %815 = vmatpush1.msra.mxu0 0.0
    %816 = vmatprep.subr.mxu0 0.0
    %817 = vmatpush1.msra.mxu0 0.0
    %818 = vmatprep.subr.mxu0 0.0
    %819 = vmatpush1.msra.mxu0 0.0
    %820 = vmatprep.subr.mxu0 0.0
    %821 = vmatpush1.msra.mxu0 0.0
    %822 = vmatprep.subr.mxu0 0.0
    %823 = vmatpush1.msra.mxu0 0.0
    %824 = vmatprep.subr.mxu0 0.0
    %825 = vmatpush1.msra.mxu0 0.0
    %826 = vmatprep.subr.mxu0 0.0
    %827 = vmatpush1.msra.mxu0 0.0
    %828 = vmatprep.subr.mxu0 0.0
    %829 = vmatpush1.msra.mxu0 0.0
    %830 = vmatprep.subr.mxu0 0.0
    %831 = vmatpush1.msra.mxu0 0.0
    %832 = vmatprep.subr.mxu0 0.0
    %833 = vmatpush1.msra.mxu0 0.0
    %834 = vmatprep.subr.mxu0 0.0
    %835 = vmatpush1.msra.mxu0 0.0
    %836 = vmatprep.subr.mxu0 0.0
    %837 = vmatpush1.msra.mxu0 0.0
    %838 = vmatprep.subr.mxu0 0.0
    %839 = vmatpush1.msra.mxu0 0.0
    %840 = vmatprep.subr.mxu0 0.0
    %841 = vmatpush1.msra.mxu0 0.0
    %842 = vmatprep.subr.mxu0 0.0
    %843 = vmatpush1.msra.mxu0 0.0
    %844 = vmatprep.mubr.f32.mxu0 0.0
    %845 = vmatmul.mubr.f32.gmra.mrb[0].mxu0 %v778
    %v846 = vpop.f32.mrb[0].mxu0
    %v847 = vadd.f32 %v770, %v846
    %v848 = vpop.f32.mrb[0].mxu0
    %v849 = vadd.f32 %v774, %v848
    %850 = vdwg.mxu0
    %v851 = vmax.f32 %v847, 0.0
    %v852 = vmax.f32 %v849, 0.0
    %v853 = vld [vmem:[#allocation13] sm:$0xff]
    %v854 = vld [vmem:[#allocation13 + $0x8] sm:$0xff]
    %v855 = vld [vmem:[#allocation13 + $0x10] sm:$0xff]
    %v856 = vld [vmem:[#allocation13 + $0x18] sm:$0xff]
    %v857 = vld [vmem:[#allocation13 + $0x20] sm:$0xff]
    %v858 = vld [vmem:[#allocation13 + $0x28] sm:$0xff]
    %v859 = vld [vmem:[#allocation13 + $0x30] sm:$0xff]
    %v860 = vld [vmem:[#allocation13 + $0x38] sm:$0xff]
    %v861 = vld [vmem:[#allocation13 + $0x40] sm:$0xff]
    %v862 = vld [vmem:[#allocation13 + $0x48] sm:$0xff]
    %v863 = vld [vmem:[#allocation13 + $0x50] sm:$0xff]
    %v864 = vld [vmem:[#allocation13 + $0x58] sm:$0xff]
    %v865 = vld [vmem:[#allocation13 + $0x60] sm:$0xff]
    %v866 = vld [vmem:[#allocation13 + $0x68] sm:$0xff]
    %v867 = vld [vmem:[#allocation13 + $0x70] sm:$0xff]
    %v868 = vld [vmem:[#allocation13 + $0x78] sm:$0xff]
    %v869 = vld [vmem:[#allocation13 + $0x80] sm:$0xff]
    %v870 = vld [vmem:[#allocation13 + $0x88] sm:$0xff]
    %v871 = vld [vmem:[#allocation13 + $0x90] sm:$0xff]
    %v872 = vld [vmem:[#allocation13 + $0x98] sm:$0xff]
    %v873 = vld [vmem:[#allocation13 + $0xa0] sm:$0xff]
    %v874 = vld [vmem:[#allocation13 + $0xa8] sm:$0xff]
    %v875 = vld [vmem:[#allocation13 + $0xb0] sm:$0xff]
    %v876 = vld [vmem:[#allocation13 + $0xb8] sm:$0xff]
    %v877 = vld [vmem:[#allocation13 + $0xc0] sm:$0xff]
    %v878 = vld [vmem:[#allocation13 + $0xc8] sm:$0xff]
    %v879 = vld [vmem:[#allocation13 + $0xd0] sm:$0xff]
    %v880 = vld [vmem:[#allocation13 + $0xd8] sm:$0xff]
    %v881 = vld [vmem:[#allocation13 + $0xe0] sm:$0xff]
    %v882 = vld [vmem:[#allocation13 + $0xe8] sm:$0xff]
    %v883 = vld [vmem:[#allocation13 + $0xf0] sm:$0xff]
    %v884 = vld [vmem:[#allocation13 + $0xf8] sm:$0xff]
    %v885 = vld [vmem:[#allocation13 + $0x100] sm:$0xff]
    %v886 = vld [vmem:[#allocation13 + $0x108] sm:$0xff]
    %v887 = vld [vmem:[#allocation13 + $0x110] sm:$0xff]
    %v888 = vld [vmem:[#allocation13 + $0x118] sm:$0xff]
    %v889 = vld [vmem:[#allocation13 + $0x120] sm:$0xff]
    %v890 = vld [vmem:[#allocation13 + $0x128] sm:$0xff]
    %v891 = vld [vmem:[#allocation13 + $0x130] sm:$0xff]
    %v892 = vld [vmem:[#allocation13 + $0x138] sm:$0xff]
    %v893 = vld [vmem:[#allocation13 + $0x140] sm:$0xff]
    %v894 = vld [vmem:[#allocation13 + $0x148] sm:$0xff]
    %v895 = vld [vmem:[#allocation13 + $0x150] sm:$0xff]
    %v896 = vld [vmem:[#allocation13 + $0x158] sm:$0xff]
    %v897 = vld [vmem:[#allocation13 + $0x160] sm:$0xff]
    %v898 = vld [vmem:[#allocation13 + $0x168] sm:$0xff]
    %v899 = vld [vmem:[#allocation13 + $0x170] sm:$0xff]
    %v900 = vld [vmem:[#allocation13 + $0x178] sm:$0xff]
    %v901 = vld [vmem:[#allocation13 + $0x180] sm:$0xff]
    %v902 = vld [vmem:[#allocation13 + $0x188] sm:$0xff]
    %v903 = vld [vmem:[#allocation13 + $0x190] sm:$0xff]
    %v904 = vld [vmem:[#allocation13 + $0x198] sm:$0xff]
    %v905 = vld [vmem:[#allocation13 + $0x1a0] sm:$0xff]
    %v906 = vld [vmem:[#allocation13 + $0x1a8] sm:$0xff]
    %v907 = vld [vmem:[#allocation13 + $0x1b0] sm:$0xff]
    %v908 = vld [vmem:[#allocation13 + $0x1b8] sm:$0xff]
    %v909 = vld [vmem:[#allocation13 + $0x1c0] sm:$0xff]
    %v910 = vld [vmem:[#allocation13 + $0x1c8] sm:$0xff]
    %v911 = vld [vmem:[#allocation13 + $0x1d0] sm:$0xff]
    %v912 = vld [vmem:[#allocation13 + $0x1d8] sm:$0xff]
    %v913 = vld [vmem:[#allocation13 + $0x1e0] sm:$0xff]
    %v914 = vld [vmem:[#allocation13 + $0x1e8] sm:$0xff]
    %v915 = vld [vmem:[#allocation13 + $0x1f0] sm:$0xff]
    %v916 = vld [vmem:[#allocation13 + $0x1f8] sm:$0xff]
    %v917 = vld [vmem:[#allocation13 + $0x200] sm:$0xff]
    %v918 = vld [vmem:[#allocation13 + $0x208] sm:$0xff]
    %v919 = vld [vmem:[#allocation13 + $0x210] sm:$0xff]
    %v920 = vld [vmem:[#allocation13 + $0x218] sm:$0xff]
    %v921 = vld [vmem:[#allocation13 + $0x220] sm:$0xff]
    %v922 = vld [vmem:[#allocation13 + $0x228] sm:$0xff]
    %v923 = vld [vmem:[#allocation13 + $0x230] sm:$0xff]
    %v924 = vld [vmem:[#allocation13 + $0x238] sm:$0xff]
    %v925 = vld [vmem:[#allocation14] sm:$0x7]
    %v927 = vlaneseq
    %v928 = vshrl.u32 %v927, 7
    %v929 = vsub.s32 0, %v928
    %v930 = vrot.slane %v925, %v929
    %v931 = vlaneseq
    %v932 = vshrl.u32 %v931, 7
    %v933 = vsub.s32 1, %v932
    %v934 = vrot.slane %v925, %v933
    %v935 = vlaneseq
    %v936 = vshrl.u32 %v935, 7
    %v937 = vsub.s32 2, %v936
    %v938 = vrot.slane %v925, %v937
    %vm942 = vcmask 523264
    %v944 = vsel %vm942, %v852, 0
    %946 = vmatprep.subr.mxu0 %v854
    %947 = vmatpush1.msra.mxu0 %v853
    %948 = vmatprep.subr.mxu0 %v857
    %949 = vmatpush1.msra.mxu0 %v856
    %950 = vmatprep.subr.mxu0 %v860
    %951 = vmatpush1.msra.mxu0 %v859
    %952 = vmatprep.subr.mxu0 %v863
    %953 = vmatpush1.msra.mxu0 %v862
    %954 = vmatprep.subr.mxu0 %v866
    %955 = vmatpush1.msra.mxu0 %v865
    %956 = vmatprep.subr.mxu0 %v869
    %957 = vmatpush1.msra.mxu0 %v868
    %958 = vmatprep.subr.mxu0 %v872
    %959 = vmatpush1.msra.mxu0 %v871
    %960 = vmatprep.subr.mxu0 %v875
    %961 = vmatpush1.msra.mxu0 %v874
    %962 = vmatprep.subr.mxu0 %v878
    %963 = vmatpush1.msra.mxu0 %v877
    %964 = vmatprep.subr.mxu0 %v881
    %965 = vmatpush1.msra.mxu0 %v880
    %966 = vmatprep.subr.mxu0 %v884
    %967 = vmatpush1.msra.mxu0 %v883
    %968 = vmatprep.subr.mxu0 %v887
    %969 = vmatpush1.msra.mxu0 %v886
    %970 = vmatprep.subr.mxu0 %v890
    %971 = vmatpush1.msra.mxu0 %v889
    %972 = vmatprep.subr.mxu0 %v893
    %973 = vmatpush1.msra.mxu0 %v892
    %974 = vmatprep.subr.mxu0 %v896
    %975 = vmatpush1.msra.mxu0 %v895
    %976 = vmatprep.subr.mxu0 %v899
    %977 = vmatpush1.msra.mxu0 %v898
    %978 = vmatprep.subr.mxu0 %v902
    %979 = vmatpush1.msra.mxu0 %v901
    %980 = vmatprep.subr.mxu0 %v905
    %981 = vmatpush1.msra.mxu0 %v904
    %982 = vmatprep.subr.mxu0 %v908
    %983 = vmatpush1.msra.mxu0 %v907
    %984 = vmatprep.subr.mxu0 %v911
    %985 = vmatpush1.msra.mxu0 %v910
    %986 = vmatprep.subr.mxu0 %v914
    %987 = vmatpush1.msra.mxu0 %v913
    %988 = vmatprep.subr.mxu0 %v917
    %989 = vmatpush1.msra.mxu0 %v916
    %990 = vmatprep.subr.mxu0 %v920
    %991 = vmatpush1.msra.mxu0 %v919
    %992 = vmatprep.subr.mxu0 %v923
    %993 = vmatpush1.msra.mxu0 %v922
    %994 = vmatprep.subr.mxu0 0.0
    %995 = vmatpush1.msra.mxu0 0.0
    %996 = vmatprep.subr.mxu0 0.0
    %997 = vmatpush1.msra.mxu0 0.0
    %998 = vmatprep.subr.mxu0 0.0
    %999 = vmatpush1.msra.mxu0 0.0
    %1000 = vmatprep.subr.mxu0 0.0
    %1001 = vmatpush1.msra.mxu0 0.0
    %1002 = vmatprep.subr.mxu0 0.0
    %1003 = vmatpush1.msra.mxu0 0.0
    %1004 = vmatprep.subr.mxu0 0.0
    %1005 = vmatpush1.msra.mxu0 0.0
    %1006 = vmatprep.subr.mxu0 0.0
    %1007 = vmatpush1.msra.mxu0 0.0
    %1008 = vmatprep.subr.mxu0 0.0
    %1009 = vmatpush1.msra.mxu0 0.0
    %1010 = vmatprep.mubr.f32.mxu0 %v944
    %1011 = vmatmul.mubr.f32.gmra.mrb[0].mxu0 %v851
    %v1012 = vpop.f32.mrb[0].mxu0
    %v1013 = vadd.f32 %v930, %v1012
    %v1014 = vpop.f32.mrb[0].mxu0
    %v1015 = vadd.f32 %v934, %v1014
    %1016 = vdwg.mxu0
    %1017 = vmatprep.subr.mxu0 0.0
    %1018 = vmatpush1.msra.mxu0 %v855
    %1019 = vmatprep.subr.mxu0 0.0
    %1020 = vmatpush1.msra.mxu0 %v858
    %1021 = vmatprep.subr.mxu0 0.0
    %1022 = vmatpush1.msra.mxu0 %v861
    %1023 = vmatprep.subr.mxu0 0.0
    %1024 = vmatpush1.msra.mxu0 %v864
    %1025 = vmatprep.subr.mxu0 0.0
    %1026 = vmatpush1.msra.mxu0 %v867
    %1027 = vmatprep.subr.mxu0 0.0
    %1028 = vmatpush1.msra.mxu0 %v870
    %1029 = vmatprep.subr.mxu0 0.0
    %1030 = vmatpush1.msra.mxu0 %v873
    %1031 = vmatprep.subr.mxu0 0.0
    %1032 = vmatpush1.msra.mxu0 %v876
    %1033 = vmatprep.subr.mxu0 0.0
    %1034 = vmatpush1.msra.mxu0 %v879
    %1035 = vmatprep.subr.mxu0 0.0
    %1036 = vmatpush1.msra.mxu0 %v882
    %1037 = vmatprep.subr.mxu0 0.0
    %1038 = vmatpush1.msra.mxu0 %v885
    %1039 = vmatprep.subr.mxu0 0.0
    %1040 = vmatpush1.msra.mxu0 %v888
    %1041 = vmatprep.subr.mxu0 0.0
    %1042 = vmatpush1.msra.mxu0 %v891
    %1043 = vmatprep.subr.mxu0 0.0
    %1044 = vmatpush1.msra.mxu0 %v894
    %1045 = vmatprep.subr.mxu0 0.0
    %1046 = vmatpush1.msra.mxu0 %v897
    %1047 = vmatprep.subr.mxu0 0.0
    %1048 = vmatpush1.msra.mxu0 %v900
    %1049 = vmatprep.subr.mxu0 0.0
    %1050 = vmatpush1.msra.mxu0 %v903
    %1051 = vmatprep.subr.mxu0 0.0
    %1052 = vmatpush1.msra.mxu0 %v906
    %1053 = vmatprep.subr.mxu0 0.0
    %1054 = vmatpush1.msra.mxu0 %v909
    %1055 = vmatprep.subr.mxu0 0.0
    %1056 = vmatpush1.msra.mxu0 %v912
    %1057 = vmatprep.subr.mxu0 0.0
    %1058 = vmatpush1.msra.mxu0 %v915
    %1059 = vmatprep.subr.mxu0 0.0
    %1060 = vmatpush1.msra.mxu0 %v918
    %1061 = vmatprep.subr.mxu0 0.0
    %1062 = vmatpush1.msra.mxu0 %v921
    %1063 = vmatprep.subr.mxu0 0.0
    %1064 = vmatpush1.msra.mxu0 %v924
    %1065 = vmatprep.subr.mxu0 0.0
    %1066 = vmatpush1.msra.mxu0 0.0
    %1067 = vmatprep.subr.mxu0 0.0
    %1068 = vmatpush1.msra.mxu0 0.0
    %1069 = vmatprep.subr.mxu0 0.0
    %1070 = vmatpush1.msra.mxu0 0.0
    %1071 = vmatprep.subr.mxu0 0.0
    %1072 = vmatpush1.msra.mxu0 0.0
    %1073 = vmatprep.subr.mxu0 0.0
    %1074 = vmatpush1.msra.mxu0 0.0
    %1075 = vmatprep.subr.mxu0 0.0
    %1076 = vmatpush1.msra.mxu0 0.0
    %1077 = vmatprep.subr.mxu0 0.0
    %1078 = vmatpush1.msra.mxu0 0.0
    %1079 = vmatprep.subr.mxu0 0.0
    %1080 = vmatpush1.msra.mxu0 0.0
    %1081 = vmatprep.mubr.f32.mxu0 %v944
    %1082 = vmatmul.mubr.f32.gmra.mrb[0].mxu0 %v851
    %v1083 = vpop.f32.mrb[0].mxu0
    %v1084 = vadd.f32 %v938, %v1083
    %v1085 = vpop.f32.mrb[0].mxu0
    %1086 = vdwg.mxu0
    %v1087 = vld [vmem:[%s5] sm:$0xf]
    %v1088 = vmul.f32 %v1013, 0.5
    %v1089 = vmul.f32 %v1015, 0.5
    %v1090 = vmul.f32 %v1088, 1.442695
    %v1091 = vpow.pop %v1090
    %v1092 = vmul.f32 %v1089, 1.442695
    %v1093 = vpow.pop %v1092
    %v1096 = vcombine.low %v1091, %v1093
    %v1098 = vunpack.c.l.s4 1983009808
    %v1099 = vunpack.c.0.s8 %v1098
    %v1100 = vlaneseq
    %v1101 = vshrl.u32 %v1100, 7
    %v1102 = vsub.s32 %v1099, %v1101
    %v1103 = vrot.slane %v1096, %v1102
    %1104 = vrot.lane.b32.xlu0 %v1103, 32
    %v1105 = vpop.permute.xlu0 %1104
    %v1106 = vrot.slane %v1105, 2
    %vm1107 = vcmask 261120
    %v1108 = vsel %vm1107, %v1105, %v1106
    %v1110 = vmul.f32 %v1087, %v1108
    %v1111 = vadd.f32 %v1013, %v1110
    %v1112 = vmul.f32 %v1084, 0.5
    %v1113 = vmul.f32 %v1112, 1.442695
    %v1114 = vpow.pop %v1113
    %v1117 = vunpack.c.l.s4 1983009808
    %v1118 = vunpack.c.0.s8 %v1117
    %v1119 = vlaneseq
    %v1120 = vshrl.u32 %v1119, 7
    %v1121 = vsub.s32 %v1118, %v1120
    %v1122 = vrot.slane %v1114, %v1121
    %1123 = vrot.lane.b32.xlu0 %v1122, 64
    %v1124 = vpop.permute.xlu0 %1123
    %v1125 = vrot.slane %v1124, 6
    %v1126 = vsel %vm942, %v1125, %v1124
    %v1128 = vmul.f32 %v1087, %v1126
    %v1131 = vunpack.c.l.s4 1983009808
    %v1132 = vunpack.c.0.s8 %v1131
    %v1133 = vlaneseq
    %v1134 = vshrl.u32 %v1133, 7
    %v1135 = vsub.s32 %v1132, %v1134
    %v1136 = vrot.slane %v1128, %v1135
    %v1137 = vcombine.high %v1136, %v1136
    %1138 = vrot.lane.b32.xlu0 %v1136, 96
    %v1139 = vpop.permute.xlu0 %1138
    %1140 = vrot.lane.b32.xlu0 %v1137, 96
    %v1141 = vpop.permute.xlu0 %1140
    %v1142 = vsel %vm666, %v1139, %v1141
    %v1145 = vadd.f32 %v1015, %v1142
    %v1146 = vadd.f32 %v1084, %v1141
    %vm1147 = vcmask 779264
    %1148 = vst.msk [vmem:[%s81] sm:$0x3] %vm1147, %v1111
    %1151 = vrot.lane.b32.xlu0 %v1145, 64
    %v1152 = vpop.permute.xlu0 %1151
    %1153 = vrot.lane.b32.xlu0 %v1146, 64
    %v1154 = vpop.permute.xlu0 %1153
    %v1155 = vsel %vm942, %v1152, %v1154
    %1157 = vst.msk [vmem:[%s83] sm:$0x3] %vm1147, %v1155
    %v1158 = vld [vmem:[%s25] sm:$0xff]
    %v1159 = vld [vmem:[%s25 + $0x8] sm:$0xff]
    %v1160 = vld [vmem:[%s25 + $0x10] sm:$0xff]
    %v1161 = vld [vmem:[%s25 + $0x18] sm:$0xff]
    %v1162 = vld [vmem:[%s25 + $0x20] sm:$0xff]
    %v1163 = vld [vmem:[%s25 + $0x28] sm:$0xff]
    %v1164 = vld [vmem:[%s25 + $0x30] sm:$0xff]
    %v1165 = vld [vmem:[%s25 + $0x38] sm:$0xff]
    %v1166 = vld [vmem:[%s25 + $0x40] sm:$0xff]
    %v1167 = vld [vmem:[%s25 + $0x48] sm:$0xff]
    %v1168 = vld [vmem:[%s25 + $0x50] sm:$0xff]
    %v1169 = vld [vmem:[%s25 + $0x58] sm:$0xff]
    %v1170 = vld [vmem:[#allocation16] sm:$0x1]
    %v1172 = vlaneseq
    %v1173 = vshrl.u32 %v1172, 7
    %v1174 = vsub.s32 0, %v1173
    %v1175 = vrot.slane %v1170, %v1174
    %v1178 = vsel %vm666, %v1111, 0
    %1180 = vmatprep.subr.mxu0 0.0
    %1181 = vmatpush1.msra.mxu0 %v1158
    %1182 = vmatprep.subr.mxu0 0.0
    %1183 = vmatpush1.msra.mxu0 %v1159
    %1184 = vmatprep.subr.mxu0 0.0
    %1185 = vmatpush1.msra.mxu0 %v1160
    %1186 = vmatprep.subr.mxu0 0.0
    %1187 = vmatpush1.msra.mxu0 %v1161
    %1188 = vmatprep.subr.mxu0 0.0
    %1189 = vmatpush1.msra.mxu0 %v1162
    %1190 = vmatprep.subr.mxu0 0.0
    %1191 = vmatpush1.msra.mxu0 %v1163
    %1192 = vmatprep.subr.mxu0 0.0
    %1193 = vmatpush1.msra.mxu0 %v1164
    %1194 = vmatprep.subr.mxu0 0.0
    %1195 = vmatpush1.msra.mxu0 %v1165
    %1196 = vmatprep.subr.mxu0 0.0
    %1197 = vmatpush1.msra.mxu0 %v1166
    %1198 = vmatprep.subr.mxu0 0.0
    %1199 = vmatpush1.msra.mxu0 %v1167
    %1200 = vmatprep.subr.mxu0 0.0
    %1201 = vmatpush1.msra.mxu0 %v1168
    %1202 = vmatprep.subr.mxu0 0.0
    %1203 = vmatpush1.msra.mxu0 %v1169
    %1204 = vmatprep.subr.mxu0 0.0
    %1205 = vmatpush1.msra.mxu0 0.0
    %1206 = vmatprep.subr.mxu0 0.0
    %1207 = vmatpush1.msra.mxu0 0.0
    %1208 = vmatprep.subr.mxu0 0.0
    %1209 = vmatpush1.msra.mxu0 0.0
    %1210 = vmatprep.subr.mxu0 0.0
    %1211 = vmatpush1.msra.mxu0 0.0
    %1212 = vmatprep.subr.mxu0 0.0
    %1213 = vmatpush1.msra.mxu0 0.0
    %1214 = vmatprep.subr.mxu0 0.0
    %1215 = vmatpush1.msra.mxu0 0.0
    %1216 = vmatprep.subr.mxu0 0.0
    %1217 = vmatpush1.msra.mxu0 0.0
    %1218 = vmatprep.subr.mxu0 0.0
    %1219 = vmatpush1.msra.mxu0 0.0
    %1220 = vmatprep.subr.mxu0 0.0
    %1221 = vmatpush1.msra.mxu0 0.0
    %1222 = vmatprep.subr.mxu0 0.0
    %1223 = vmatpush1.msra.mxu0 0.0
    %1224 = vmatprep.subr.mxu0 0.0
    %1225 = vmatpush1.msra.mxu0 0.0
    %1226 = vmatprep.subr.mxu0 0.0
    %1227 = vmatpush1.msra.mxu0 0.0
    %1228 = vmatprep.subr.mxu0 0.0
    %1229 = vmatpush1.msra.mxu0 0.0
    %1230 = vmatprep.subr.mxu0 0.0
    %1231 = vmatpush1.msra.mxu0 0.0
    %1232 = vmatprep.subr.mxu0 0.0
    %1233 = vmatpush1.msra.mxu0 0.0
    %1234 = vmatprep.subr.mxu0 0.0
    %1235 = vmatpush1.msra.mxu0 0.0
    %1236 = vmatprep.subr.mxu0 0.0
    %1237 = vmatpush1.msra.mxu0 0.0
    %1238 = vmatprep.subr.mxu0 0.0
    %1239 = vmatpush1.msra.mxu0 0.0
    %1240 = vmatprep.subr.mxu0 0.0
    %1241 = vmatpush1.msra.mxu0 0.0
    %1242 = vmatprep.subr.mxu0 0.0
    %1243 = vmatpush1.msra.mxu0 0.0
    %1244 = vmatprep.mubr.f32.mxu0 0.0
    %1245 = vmatmul.mubr.f32.gmra.mrb[0].mxu0 %v1178
    %v1246 = vpop.f32.mrb[0].mxu0
    %v1247 = vadd.f32 %v1175, %v1246
    %v1248 = vpop.f32.mrb[0].mxu0
    %1249 = vdwg.mxu0
    %v1250 = vld [vmem:[%s29] sm:$0xff]
    %v1251 = vld [vmem:[%s29 + $0x8] sm:$0xff]
    %v1252 = vld [vmem:[%s29 + $0x10] sm:$0xff]
    %v1253 = vld [vmem:[%s29 + $0x18] sm:$0xff]
    %v1254 = vld [vmem:[#allocation17] sm:$0x1]
    %v1256 = vlaneseq
    %v1257 = vshrl.u32 %v1256, 7
    %v1258 = vsub.s32 0, %v1257
    %v1259 = vrot.slane %v1254, %v1258
    %v1262 = vsel %vm1107, %v1247, 0
    %1264 = vmatprep.subr.mxu0 0.0
    %1265 = vmatpush1.msra.mxu0 %v1250
    %1266 = vmatprep.subr.mxu0 0.0
    %1267 = vmatpush1.msra.mxu0 %v1251
    %1268 = vmatprep.subr.mxu0 0.0
    %1269 = vmatpush1.msra.mxu0 %v1252
    %1270 = vmatprep.subr.mxu0 0.0
    %1271 = vmatpush1.msra.mxu0 %v1253
    %1272 = vmatprep.subr.mxu0 0.0
    %1273 = vmatpush1.msra.mxu0 0.0
    %1274 = vmatprep.subr.mxu0 0.0
    %1275 = vmatpush1.msra.mxu0 0.0
    %1276 = vmatprep.subr.mxu0 0.0
    %1277 = vmatpush1.msra.mxu0 0.0
    %1278 = vmatprep.subr.mxu0 0.0
    %1279 = vmatpush1.msra.mxu0 0.0
    %1280 = vmatprep.subr.mxu0 0.0
    %1281 = vmatpush1.msra.mxu0 0.0
    %1282 = vmatprep.subr.mxu0 0.0
    %1283 = vmatpush1.msra.mxu0 0.0
    %1284 = vmatprep.subr.mxu0 0.0
    %1285 = vmatpush1.msra.mxu0 0.0
    %1286 = vmatprep.subr.mxu0 0.0
    %1287 = vmatpush1.msra.mxu0 0.0
    %1288 = vmatprep.subr.mxu0 0.0
    %1289 = vmatpush1.msra.mxu0 0.0
    %1290 = vmatprep.subr.mxu0 0.0
    %1291 = vmatpush1.msra.mxu0 0.0
    %1292 = vmatprep.subr.mxu0 0.0
    %1293 = vmatpush1.msra.mxu0 0.0
    %1294 = vmatprep.subr.mxu0 0.0
    %1295 = vmatpush1.msra.mxu0 0.0
    %1296 = vmatprep.subr.mxu0 0.0
    %1297 = vmatpush1.msra.mxu0 0.0
    %1298 = vmatprep.subr.mxu0 0.0
    %1299 = vmatpush1.msra.mxu0 0.0
    %1300 = vmatprep.subr.mxu0 0.0
    %1301 = vmatpush1.msra.mxu0 0.0
    %1302 = vmatprep.subr.mxu0 0.0
    %1303 = vmatpush1.msra.mxu0 0.0
    %1304 = vmatprep.subr.mxu0 0.0
    %1305 = vmatpush1.msra.mxu0 0.0
    %1306 = vmatprep.subr.mxu0 0.0
    %1307 = vmatpush1.msra.mxu0 0.0
    %1308 = vmatprep.subr.mxu0 0.0
    %1309 = vmatpush1.msra.mxu0 0.0
    %1310 = vmatprep.subr.mxu0 0.0
    %1311 = vmatpush1.msra.mxu0 0.0
    %1312 = vmatprep.subr.mxu0 0.0
    %1313 = vmatpush1.msra.mxu0 0.0
    %1314 = vmatprep.subr.mxu0 0.0
    %1315 = vmatpush1.msra.mxu0 0.0
    %1316 = vmatprep.subr.mxu0 0.0
    %1317 = vmatpush1.msra.mxu0 0.0
    %1318 = vmatprep.subr.mxu0 0.0
    %1319 = vmatpush1.msra.mxu0 0.0
    %1320 = vmatprep.subr.mxu0 0.0
    %1321 = vmatpush1.msra.mxu0 0.0
    %1322 = vmatprep.subr.mxu0 0.0
    %1323 = vmatpush1.msra.mxu0 0.0
    %1324 = vmatprep.subr.mxu0 0.0
    %1325 = vmatpush1.msra.mxu0 0.0
    %1326 = vmatprep.subr.mxu0 0.0
    %1327 = vmatpush1.msra.mxu0 0.0
    %1328 = vmatprep.mubr.f32.mxu0 0.0
    %1329 = vmatmul.mubr.f32.gmra.mrb[0].mxu0 %v1262
    %v1330 = vpop.f32.mrb[0].mxu0
    %v1331 = vadd.f32 %v1259, %v1330
    %v1332 = vpop.f32.mrb[0].mxu0
    %1333 = vdwg.mxu0
    %vm1334 = vcmask 25608
    %v1335 = vsel %vm1334, %v1331, -inf
    %1336 = vmax.xlane.f32.xlu0 %v1335
    %v1337 = vpop.xlane.xlu0 %1336
    %v1338 = vsub.f32 %v1331, %v1337
    %v1339 = vmul.f32 %v1338, 1.442695
    %v1340 = vpow.pop %v1339
    %1342 = vrot.lane.b32.xlu0 %v1340, 127
    %v1343 = vpop.permute.xlu0 %1342
    %vm1345 = vcmask 17408
    %v1346 = vsel %vm1345, %v1343, 0.0
    %1347 = vadd.xlane.f32.xlu0 %v1346
    %v1348 = vpop.xlane.xlu0 %1347
    %v1349 = vrcp.pop %v1348
    %v1350 = vmul.f32 %v1340, %v1349
    %vm1351 = vcmask 66592
    %v1352 = vsel %vm1351, %v1331, -inf
    %1353 = vmax.xlane.f32.xlu0 %v1352
    %v1354 = vpop.xlane.xlu0 %1353
    %v1355 = vsub.f32 %v1331, %v1354
    %v1356 = vmul.f32 %v1355, 1.442695
    %v1357 = vpow.pop %v1356
    %1359 = vrot.lane.b32.xlu0 %v1357, 124
    %v1360 = vpop.permute.xlu0 %1359
    %vm1362 = vcmask 33792
    %v1363 = vsel %vm1362, %v1360, 0.0
    %1364 = vadd.xlane.f32.xlu0 %v1363
    %v1365 = vpop.xlane.xlu0 %1364
    %v1366 = vrcp.pop %v1365
    %v1367 = vmul.f32 %v1357, %v1366
    %v1368 = vld [vmem:[%s3] sm:$0x3]
    %v1369 = vsel %vm1345, %v1368, 0.0
    %1370 = vadd.xlane.f32.xlu0 %v1369
    %v1371 = vpop.xlane.xlu0 %1370
    %v1372 = vrcp.pop 3.0
    %v1373 = vmul.f32 %v1371, %v1372
    %v1374 = vsub.f32 1.0, %v1373
    %v1375 = vmul.f32 %v1350, %v1374
    %v1376 = vld [vmem:[#allocation19] sm:$0xff]
    %v1377 = vld [vmem:[#allocation19 + $0x8] sm:$0xff]
    %v1378 = vld [vmem:[#allocation19 + $0x10] sm:$0xff]
    %v1379 = vld [vmem:[#allocation19 + $0x18] sm:$0xff]
    %v1380 = vld [vmem:[#allocation19 + $0x20] sm:$0xff]
    %v1381 = vld [vmem:[#allocation19 + $0x28] sm:$0xff]
    %v1382 = vld [vmem:[#allocation19 + $0x30] sm:$0xff]
    %v1383 = vld [vmem:[#allocation19 + $0x38] sm:$0xff]
    %v1384 = vld [vmem:[#allocation19 + $0x40] sm:$0xff]
    %v1385 = vld [vmem:[#allocation19 + $0x48] sm:$0xff]
    %v1386 = vld [vmem:[#allocation19 + $0x50] sm:$0xff]
    %v1387 = vld [vmem:[#allocation19 + $0x58] sm:$0xff]
    %v1388 = vld [vmem:[#allocation20] sm:$0x7]
    %v1390 = vlaneseq
    %v1391 = vshrl.u32 %v1390, 7
    %v1392 = vsub.s32 0, %v1391
    %v1393 = vrot.slane %v1388, %v1392
    %v1394 = vlaneseq
    %v1395 = vshrl.u32 %v1394, 7
    %v1396 = vsub.s32 1, %v1395
    %v1397 = vrot.slane %v1388, %v1396
    %v1398 = vlaneseq
    %v1399 = vshrl.u32 %v1398, 7
    %v1400 = vsub.s32 2, %v1399
    %v1401 = vrot.slane %v1388, %v1400
    %1405 = vmatprep.subr.mxu0 %v1377
    %1406 = vmatpush1.msra.mxu0 %v1376
    %1407 = vmatprep.subr.mxu0 %v1380
    %1408 = vmatpush1.msra.mxu0 %v1379
    %1409 = vmatprep.subr.mxu0 %v1383
    %1410 = vmatpush1.msra.mxu0 %v1382
    %1411 = vmatprep.subr.mxu0 %v1386
    %1412 = vmatpush1.msra.mxu0 %v1385
    %1413 = vmatprep.subr.mxu0 0.0
    %1414 = vmatpush1.msra.mxu0 0.0
    %1415 = vmatprep.subr.mxu0 0.0
    %1416 = vmatpush1.msra.mxu0 0.0
    %1417 = vmatprep.subr.mxu0 0.0
    %1418 = vmatpush1.msra.mxu0 0.0
    %1419 = vmatprep.subr.mxu0 0.0
    %1420 = vmatpush1.msra.mxu0 0.0
    %1421 = vmatprep.subr.mxu0 0.0
    %1422 = vmatpush1.msra.mxu0 0.0
    %1423 = vmatprep.subr.mxu0 0.0
    %1424 = vmatpush1.msra.mxu0 0.0
    %1425 = vmatprep.subr.mxu0 0.0
    %1426 = vmatpush1.msra.mxu0 0.0
    %1427 = vmatprep.subr.mxu0 0.0
    %1428 = vmatpush1.msra.mxu0 0.0
    %1429 = vmatprep.subr.mxu0 0.0
    %1430 = vmatpush1.msra.mxu0 0.0
    %1431 = vmatprep.subr.mxu0 0.0
    %1432 = vmatpush1.msra.mxu0 0.0
    %1433 = vmatprep.subr.mxu0 0.0
    %1434 = vmatpush1.msra.mxu0 0.0
    %1435 = vmatprep.subr.mxu0 0.0
    %1436 = vmatpush1.msra.mxu0 0.0
    %1437 = vmatprep.subr.mxu0 0.0
    %1438 = vmatpush1.msra.mxu0 0.0
    %1439 = vmatprep.subr.mxu0 0.0
    %1440 = vmatpush1.msra.mxu0 0.0
    %1441 = vmatprep.subr.mxu0 0.0
    %1442 = vmatpush1.msra.mxu0 0.0
    %1443 = vmatprep.subr.mxu0 0.0
    %1444 = vmatpush1.msra.mxu0 0.0
    %1445 = vmatprep.subr.mxu0 0.0
    %1446 = vmatpush1.msra.mxu0 0.0
    %1447 = vmatprep.subr.mxu0 0.0
    %1448 = vmatpush1.msra.mxu0 0.0
    %1449 = vmatprep.subr.mxu0 0.0
    %1450 = vmatpush1.msra.mxu0 0.0
    %1451 = vmatprep.subr.mxu0 0.0
    %1452 = vmatpush1.msra.mxu0 0.0
    %1453 = vmatprep.subr.mxu0 0.0
    %1454 = vmatpush1.msra.mxu0 0.0
    %1455 = vmatprep.subr.mxu0 0.0
    %1456 = vmatpush1.msra.mxu0 0.0
    %1457 = vmatprep.subr.mxu0 0.0
    %1458 = vmatpush1.msra.mxu0 0.0
    %1459 = vmatprep.subr.mxu0 0.0
    %1460 = vmatpush1.msra.mxu0 0.0
    %1461 = vmatprep.subr.mxu0 0.0
    %1462 = vmatpush1.msra.mxu0 0.0
    %1463 = vmatprep.subr.mxu0 0.0
    %1464 = vmatpush1.msra.mxu0 0.0
    %1465 = vmatprep.subr.mxu0 0.0
    %1466 = vmatpush1.msra.mxu0 0.0
    %1467 = vmatprep.subr.mxu0 0.0
    %1468 = vmatpush1.msra.mxu0 0.0
    %1469 = vmatprep.mubr.f32.mxu0 0.0
    %1470 = vmatmul.mubr.f32.gmra.mrb[0].mxu0 %v1262
    %v1471 = vpop.f32.mrb[0].mxu0
    %v1472 = vadd.f32 %v1393, %v1471
    %v1473 = vpop.f32.mrb[0].mxu0
    %v1474 = vadd.f32 %v1397, %v1473
    %1475 = vdwg.mxu0
    %1476 = vmatprep.subr.mxu0 0.0
    %1477 = vmatpush1.msra.mxu0 %v1378
    %1478 = vmatprep.subr.mxu0 0.0
    %1479 = vmatpush1.msra.mxu0 %v1381
    %1480 = vmatprep.subr.mxu0 0.0
    %1481 = vmatpush1.msra.mxu0 %v1384
    %1482 = vmatprep.subr.mxu0 0.0
    %1483 = vmatpush1.msra.mxu0 %v1387
    %1484 = vmatprep.subr.mxu0 0.0
    %1485 = vmatpush1.msra.mxu0 0.0
    %1486 = vmatprep.subr.mxu0 0.0
    %1487 = vmatpush1.msra.mxu0 0.0
    %1488 = vmatprep.subr.mxu0 0.0
    %1489 = vmatpush1.msra.mxu0 0.0
    %1490 = vmatprep.subr.mxu0 0.0
    %1491 = vmatpush1.msra.mxu0 0.0
    %1492 = vmatprep.subr.mxu0 0.0
    %1493 = vmatpush1.msra.mxu0 0.0
    %1494 = vmatprep.subr.mxu0 0.0
    %1495 = vmatpush1.msra.mxu0 0.0
    %1496 = vmatprep.subr.mxu0 0.0
    %1497 = vmatpush1.msra.mxu0 0.0
    %1498 = vmatprep.subr.mxu0 0.0
    %1499 = vmatpush1.msra.mxu0 0.0
    %1500 = vmatprep.subr.mxu0 0.0
    %1501 = vmatpush1.msra.mxu0 0.0
    %1502 = vmatprep.subr.mxu0 0.0
    %1503 = vmatpush1.msra.mxu0 0.0
    %1504 = vmatprep.subr.mxu0 0.0
    %1505 = vmatpush1.msra.mxu0 0.0
    %1506 = vmatprep.subr.mxu0 0.0
    %1507 = vmatpush1.msra.mxu0 0.0
    %1508 = vmatprep.subr.mxu0 0.0
    %1509 = vmatpush1.msra.mxu0 0.0
    %1510 = vmatprep.subr.mxu0 0.0
    %1511 = vmatpush1.msra.mxu0 0.0
    %1512 = vmatprep.subr.mxu0 0.0
    %1513 = vmatpush1.msra.mxu0 0.0
    %1514 = vmatprep.subr.mxu0 0.0
    %1515 = vmatpush1.msra.mxu0 0.0
    %1516 = vmatprep.subr.mxu0 0.0
    %1517 = vmatpush1.msra.mxu0 0.0
    %1518 = vmatprep.subr.mxu0 0.0
    %1519 = vmatpush1.msra.mxu0 0.0
    %1520 = vmatprep.subr.mxu0 0.0
    %1521 = vmatpush1.msra.mxu0 0.0
    %1522 = vmatprep.subr.mxu0 0.0
    %1523 = vmatpush1.msra.mxu0 0.0
    %1524 = vmatprep.subr.mxu0 0.0
    %1525 = vmatpush1.msra.mxu0 0.0
    %1526 = vmatprep.subr.mxu0 0.0
    %1527 = vmatpush1.msra.mxu0 0.0
    %1528 = vmatprep.subr.mxu0 0.0
    %1529 = vmatpush1.msra.mxu0 0.0
    %1530 = vmatprep.subr.mxu0 0.0
    %1531 = vmatpush1.msra.mxu0 0.0
    %1532 = vmatprep.subr.mxu0 0.0
    %1533 = vmatpush1.msra.mxu0 0.0
    %1534 = vmatprep.subr.mxu0 0.0
    %1535 = vmatpush1.msra.mxu0 0.0
    %1536 = vmatprep.subr.mxu0 0.0
    %1537 = vmatpush1.msra.mxu0 0.0
    %1538 = vmatprep.subr.mxu0 0.0
    %1539 = vmatpush1.msra.mxu0 0.0
    %1540 = vmatprep.mubr.f32.mxu0 0.0
    %1541 = vmatmul.mubr.f32.gmra.mrb[0].mxu0 %v1262
    %v1542 = vpop.f32.mrb[0].mxu0
    %v1543 = vadd.f32 %v1401, %v1542
    %v1544 = vpop.f32.mrb[0].mxu0
    %1545 = vdwg.mxu0
    %v1546 = vmax.f32 %v1472, 0.0
    %v1547 = vmax.f32 %v1474, 0.0
    %v1548 = vmax.f32 %v1543, 0.0
    %v1549 = vld [vmem:[#allocation22] sm:$0xff]
    %v1550 = vld [vmem:[#allocation22 + $0x8] sm:$0xff]
    %v1551 = vld [vmem:[#allocation22 + $0x10] sm:$0xff]
    %v1552 = vld [vmem:[#allocation22 + $0x18] sm:$0xff]
    %v1553 = vld [vmem:[#allocation22 + $0x20] sm:$0xff]
    %v1554 = vld [vmem:[#allocation22 + $0x28] sm:$0xff]
    %v1555 = vld [vmem:[#allocation22 + $0x30] sm:$0xff]
    %v1556 = vld [vmem:[#allocation22 + $0x38] sm:$0xff]
    %v1557 = vld [vmem:[#allocation22 + $0x40] sm:$0xff]
    %v1558 = vld [vmem:[#allocation22 + $0x48] sm:$0xff]
    %v1559 = vld [vmem:[#allocation22 + $0x50] sm:$0xff]
    %v1560 = vld [vmem:[#allocation22 + $0x58] sm:$0xff]
    %v1561 = vld [vmem:[#allocation22 + $0x60] sm:$0xff]
    %v1562 = vld [vmem:[#allocation22 + $0x68] sm:$0xff]
    %v1563 = vld [vmem:[#allocation22 + $0x70] sm:$0xff]
    %v1564 = vld [vmem:[#allocation22 + $0x78] sm:$0xff]
    %v1565 = vld [vmem:[#allocation22 + $0x80] sm:$0xff]
    %v1566 = vld [vmem:[#allocation22 + $0x88] sm:$0xff]
    %v1567 = vld [vmem:[#allocation22 + $0x90] sm:$0xff]
    %v1568 = vld [vmem:[#allocation22 + $0x98] sm:$0xff]
    %v1569 = vld [vmem:[#allocation22 + $0xa0] sm:$0xff]
    %v1570 = vld [vmem:[#allocation22 + $0xa8] sm:$0xff]
    %v1571 = vld [vmem:[#allocation22 + $0xb0] sm:$0xff]
    %v1572 = vld [vmem:[#allocation22 + $0xb8] sm:$0xff]
    %v1573 = vld [vmem:[#allocation22 + $0xc0] sm:$0xff]
    %v1574 = vld [vmem:[#allocation22 + $0xc8] sm:$0xff]
    %v1575 = vld [vmem:[#allocation22 + $0xd0] sm:$0xff]
    %v1576 = vld [vmem:[#allocation22 + $0xd8] sm:$0xff]
    %v1577 = vld [vmem:[#allocation22 + $0xe0] sm:$0xff]
    %v1578 = vld [vmem:[#allocation22 + $0xe8] sm:$0xff]
    %v1579 = vld [vmem:[#allocation22 + $0xf0] sm:$0xff]
    %v1580 = vld [vmem:[#allocation22 + $0xf8] sm:$0xff]
    %v1581 = vld [vmem:[#allocation22 + $0x100] sm:$0xff]
    %v1582 = vld [vmem:[#allocation22 + $0x108] sm:$0xff]
    %v1583 = vld [vmem:[#allocation22 + $0x110] sm:$0xff]
    %v1584 = vld [vmem:[#allocation22 + $0x118] sm:$0xff]
    %v1585 = vld [vmem:[#allocation22 + $0x120] sm:$0xff]
    %v1586 = vld [vmem:[#allocation22 + $0x128] sm:$0xff]
    %v1587 = vld [vmem:[#allocation22 + $0x130] sm:$0xff]
    %v1588 = vld [vmem:[#allocation22 + $0x138] sm:$0xff]
    %v1589 = vld [vmem:[#allocation22 + $0x140] sm:$0xff]
    %v1590 = vld [vmem:[#allocation22 + $0x148] sm:$0xff]
    %v1591 = vld [vmem:[#allocation22 + $0x150] sm:$0xff]
    %v1592 = vld [vmem:[#allocation22 + $0x158] sm:$0xff]
    %v1593 = vld [vmem:[#allocation22 + $0x160] sm:$0xff]
    %v1594 = vld [vmem:[#allocation22 + $0x168] sm:$0xff]
    %v1595 = vld [vmem:[#allocation22 + $0x170] sm:$0xff]
    %v1596 = vld [vmem:[#allocation22 + $0x178] sm:$0xff]
    %v1597 = vld [vmem:[#allocation22 + $0x180] sm:$0xff]
    %v1598 = vld [vmem:[#allocation22 + $0x188] sm:$0xff]
    %v1599 = vld [vmem:[#allocation22 + $0x190] sm:$0xff]
    %v1600 = vld [vmem:[#allocation22 + $0x198] sm:$0xff]
    %v1601 = vld [vmem:[#allocation22 + $0x1a0] sm:$0xff]
    %v1602 = vld [vmem:[#allocation22 + $0x1a8] sm:$0xff]
    %v1603 = vld [vmem:[#allocation22 + $0x1b0] sm:$0xff]
    %v1604 = vld [vmem:[#allocation22 + $0x1b8] sm:$0xff]
    %v1605 = vld [vmem:[#allocation22 + $0x1c0] sm:$0xff]
    %v1606 = vld [vmem:[#allocation22 + $0x1c8] sm:$0xff]
    %v1607 = vld [vmem:[#allocation22 + $0x1d0] sm:$0xff]
    %v1608 = vld [vmem:[#allocation22 + $0x1d8] sm:$0xff]
    %v1609 = vld [vmem:[#allocation22 + $0x1e0] sm:$0xff]
    %v1610 = vld [vmem:[#allocation22 + $0x1e8] sm:$0xff]
    %v1611 = vld [vmem:[#allocation22 + $0x1f0] sm:$0xff]
    %v1612 = vld [vmem:[#allocation22 + $0x1f8] sm:$0xff]
    %v1613 = vld [vmem:[#allocation22 + $0x200] sm:$0xff]
    %v1614 = vld [vmem:[#allocation22 + $0x208] sm:$0xff]
    %v1615 = vld [vmem:[#allocation22 + $0x210] sm:$0xff]
    %v1616 = vld [vmem:[#allocation22 + $0x218] sm:$0xff]
    %v1617 = vld [vmem:[#allocation22 + $0x220] sm:$0xff]
    %v1618 = vld [vmem:[#allocation22 + $0x228] sm:$0xff]
    %v1619 = vld [vmem:[#allocation22 + $0x230] sm:$0xff]
    %v1620 = vld [vmem:[#allocation22 + $0x238] sm:$0xff]
    %v1621 = vld [vmem:[#allocation22 + $0x240] sm:$0xff]
    %v1622 = vld [vmem:[#allocation22 + $0x248] sm:$0xff]
    %v1623 = vld [vmem:[#allocation22 + $0x250] sm:$0xff]
    %v1624 = vld [vmem:[#allocation22 + $0x258] sm:$0xff]
    %v1625 = vld [vmem:[#allocation22 + $0x260] sm:$0xff]
    %v1626 = vld [vmem:[#allocation22 + $0x268] sm:$0xff]
    %v1627 = vld [vmem:[#allocation22 + $0x270] sm:$0xff]
    %v1628 = vld [vmem:[#allocation22 + $0x278] sm:$0xff]
    %v1629 = vld [vmem:[#allocation22 + $0x280] sm:$0xff]
    %v1630 = vld [vmem:[#allocation22 + $0x288] sm:$0xff]
    %v1631 = vld [vmem:[#allocation22 + $0x290] sm:$0xff]
    %v1632 = vld [vmem:[#allocation22 + $0x298] sm:$0xff]
    %v1633 = vld [vmem:[#allocation22 + $0x2a0] sm:$0xff]
    %v1634 = vld [vmem:[#allocation22 + $0x2a8] sm:$0xff]
    %v1635 = vld [vmem:[#allocation22 + $0x2b0] sm:$0xff]
    %v1636 = vld [vmem:[#allocation22 + $0x2b8] sm:$0xff]
    %v1637 = vld [vmem:[#allocation22 + $0x2c0] sm:$0xff]
    %v1638 = vld [vmem:[#allocation22 + $0x2c8] sm:$0xff]
    %v1639 = vld [vmem:[#allocation22 + $0x2d0] sm:$0xff]
    %v1640 = vld [vmem:[#allocation22 + $0x2d8] sm:$0xff]
    %v1641 = vld [vmem:[#allocation22 + $0x2e0] sm:$0xff]
    %v1642 = vld [vmem:[#allocation22 + $0x2e8] sm:$0xff]
    %v1643 = vld [vmem:[#allocation22 + $0x2f0] sm:$0xff]
    %v1644 = vld [vmem:[#allocation22 + $0x2f8] sm:$0xff]
    %v1645 = vld [vmem:[#allocation22 + $0x300] sm:$0xff]
    %v1646 = vld [vmem:[#allocation22 + $0x308] sm:$0xff]
    %v1647 = vld [vmem:[#allocation22 + $0x310] sm:$0xff]
    %v1648 = vld [vmem:[#allocation22 + $0x318] sm:$0xff]
    %v1649 = vld [vmem:[#allocation22 + $0x320] sm:$0xff]
    %v1650 = vld [vmem:[#allocation22 + $0x328] sm:$0xff]
    %v1651 = vld [vmem:[#allocation22 + $0x330] sm:$0xff]
    %v1652 = vld [vmem:[#allocation22 + $0x338] sm:$0xff]
    %v1653 = vld [vmem:[#allocation22 + $0x340] sm:$0xff]
    %v1654 = vld [vmem:[#allocation22 + $0x348] sm:$0xff]
    %v1655 = vld [vmem:[#allocation22 + $0x350] sm:$0xff]
    %v1656 = vld [vmem:[#allocation22 + $0x358] sm:$0xff]
    %v1657 = vld [vmem:[#allocation22 + $0x360] sm:$0xff]
    %v1658 = vld [vmem:[#allocation22 + $0x368] sm:$0xff]
    %v1659 = vld [vmem:[#allocation22 + $0x370] sm:$0xff]
    %v1660 = vld [vmem:[#allocation22 + $0x378] sm:$0xff]
    %v1661 = vld [vmem:[#allocation22 + $0x380] sm:$0xff]
    %v1662 = vld [vmem:[#allocation22 + $0x388] sm:$0xff]
    %v1663 = vld [vmem:[#allocation22 + $0x390] sm:$0xff]
    %v1664 = vld [vmem:[#allocation22 + $0x398] sm:$0xff]
    %v1665 = vld [vmem:[#allocation22 + $0x3a0] sm:$0xff]
    %v1666 = vld [vmem:[#allocation22 + $0x3a8] sm:$0xff]
    %v1667 = vld [vmem:[#allocation22 + $0x3b0] sm:$0xff]
    %v1668 = vld [vmem:[#allocation22 + $0x3b8] sm:$0xff]
    %v1669 = vld [vmem:[#allocation22 + $0x3c0] sm:$0xff]
    %v1670 = vld [vmem:[#allocation22 + $0x3c8] sm:$0xff]
    %v1671 = vld [vmem:[#allocation22 + $0x3d0] sm:$0xff]
    %v1672 = vld [vmem:[#allocation22 + $0x3d8] sm:$0xff]
    %v1673 = vld [vmem:[#allocation22 + $0x3e0] sm:$0xff]
    %v1674 = vld [vmem:[#allocation22 + $0x3e8] sm:$0xff]
    %v1675 = vld [vmem:[#allocation22 + $0x3f0] sm:$0xff]
    %v1676 = vld [vmem:[#allocation22 + $0x3f8] sm:$0xff]
    %v1677 = vld [vmem:[#allocation22 + $0x400] sm:$0xff]
    %v1678 = vld [vmem:[#allocation22 + $0x408] sm:$0xff]
    %v1679 = vld [vmem:[#allocation22 + $0x410] sm:$0xff]
    %v1680 = vld [vmem:[#allocation22 + $0x418] sm:$0xff]
    %v1681 = vld [vmem:[#allocation22 + $0x420] sm:$0xff]
    %v1682 = vld [vmem:[#allocation22 + $0x428] sm:$0xff]
    %v1683 = vld [vmem:[#allocation22 + $0x430] sm:$0xff]
    %v1684 = vld [vmem:[#allocation22 + $0x438] sm:$0xff]
    %v1685 = vld [vmem:[#allocation22 + $0x440] sm:$0xff]
    %v1686 = vld [vmem:[#allocation22 + $0x448] sm:$0xff]
    %v1687 = vld [vmem:[#allocation22 + $0x450] sm:$0xff]
    %v1688 = vld [vmem:[#allocation22 + $0x458] sm:$0xff]
    %v1689 = vld [vmem:[#allocation22 + $0x460] sm:$0xff]
    %v1690 = vld [vmem:[#allocation22 + $0x468] sm:$0xff]
    %v1691 = vld [vmem:[#allocation22 + $0x470] sm:$0xff]
    %v1692 = vld [vmem:[#allocation22 + $0x478] sm:$0xff]
    %v1693 = vld [vmem:[#allocation22 + $0x480] sm:$0xff]
    %v1694 = vld [vmem:[#allocation22 + $0x488] sm:$0xff]
    %v1695 = vld [vmem:[#allocation22 + $0x490] sm:$0xff]
    %v1696 = vld [vmem:[#allocation22 + $0x498] sm:$0xff]
    %v1697 = vld [vmem:[#allocation22 + $0x4a0] sm:$0xff]
    %v1698 = vld [vmem:[#allocation22 + $0x4a8] sm:$0xff]
    %v1699 = vld [vmem:[#allocation22 + $0x4b0] sm:$0xff]
    %v1700 = vld [vmem:[#allocation22 + $0x4b8] sm:$0xff]
    %v1701 = vld [vmem:[#allocation22 + $0x4c0] sm:$0xff]
    %v1702 = vld [vmem:[#allocation22 + $0x4c8] sm:$0xff]
    %v1703 = vld [vmem:[#allocation22 + $0x4d0] sm:$0xff]
    %v1704 = vld [vmem:[#allocation22 + $0x4d8] sm:$0xff]
    %v1705 = vld [vmem:[#allocation22 + $0x4e0] sm:$0xff]
    %v1706 = vld [vmem:[#allocation22 + $0x4e8] sm:$0xff]
    %v1707 = vld [vmem:[#allocation22 + $0x4f0] sm:$0xff]
    %v1708 = vld [vmem:[#allocation22 + $0x4f8] sm:$0xff]
    %v1709 = vld [vmem:[#allocation22 + $0x500] sm:$0xff]
    %v1710 = vld [vmem:[#allocation22 + $0x508] sm:$0xff]
    %v1711 = vld [vmem:[#allocation22 + $0x510] sm:$0xff]
    %v1712 = vld [vmem:[#allocation22 + $0x518] sm:$0xff]
    %v1713 = vld [vmem:[#allocation22 + $0x520] sm:$0xff]
    %v1714 = vld [vmem:[#allocation22 + $0x528] sm:$0xff]
    %v1715 = vld [vmem:[#allocation22 + $0x530] sm:$0xff]
    %v1716 = vld [vmem:[#allocation22 + $0x538] sm:$0xff]
    %v1717 = vld [vmem:[#allocation22 + $0x540] sm:$0xff]
    %v1718 = vld [vmem:[#allocation22 + $0x548] sm:$0xff]
    %v1719 = vld [vmem:[#allocation22 + $0x550] sm:$0xff]
    %v1720 = vld [vmem:[#allocation22 + $0x558] sm:$0xff]
    %v1721 = vld [vmem:[#allocation22 + $0x560] sm:$0xff]
    %v1722 = vld [vmem:[#allocation22 + $0x568] sm:$0xff]
    %v1723 = vld [vmem:[#allocation22 + $0x570] sm:$0xff]
    %v1724 = vld [vmem:[#allocation22 + $0x578] sm:$0xff]
    %v1725 = vld [vmem:[#allocation22 + $0x580] sm:$0xff]
    %v1726 = vld [vmem:[#allocation22 + $0x588] sm:$0xff]
    %v1727 = vld [vmem:[#allocation22 + $0x590] sm:$0xff]
    %v1728 = vld [vmem:[#allocation22 + $0x598] sm:$0xff]
    %v1729 = vld [vmem:[#allocation23] sm:$0x1f]
    %v1731 = vlaneseq
    %v1732 = vshrl.u32 %v1731, 7
    %v1733 = vsub.s32 0, %v1732
    %v1734 = vrot.slane %v1729, %v1733
    %v1735 = vlaneseq
    %v1736 = vshrl.u32 %v1735, 7
    %v1737 = vsub.s32 1, %v1736
    %v1738 = vrot.slane %v1729, %v1737
    %v1739 = vlaneseq
    %v1740 = vshrl.u32 %v1739, 7
    %v1741 = vsub.s32 2, %v1740
    %v1742 = vrot.slane %v1729, %v1741
    %v1743 = vlaneseq
    %v1744 = vshrl.u32 %v1743, 7
    %v1745 = vsub.s32 3, %v1744
    %v1746 = vrot.slane %v1729, %v1745
    %v1747 = vlaneseq
    %v1748 = vshrl.u32 %v1747, 7
    %v1749 = vsub.s32 4, %v1748
    %v1750 = vrot.slane %v1729, %v1749
    %v1757 = vsel %vm1107, %v1548, 0
    %1759 = vmatprep.subr.mxu0 %v1550
    %1760 = vmatpush1.msra.mxu0 %v1549
    %1761 = vmatprep.subr.mxu0 %v1555
    %1762 = vmatpush1.msra.mxu0 %v1554
    %1763 = vmatprep.subr.mxu0 %v1560
    %1764 = vmatpush1.msra.mxu0 %v1559
    %1765 = vmatprep.subr.mxu0 %v1565
    %1766 = vmatpush1.msra.mxu0 %v1564
    %1767 = vmatprep.subr.mxu0 %v1570
    %1768 = vmatpush1.msra.mxu0 %v1569
    %1769 = vmatprep.subr.mxu0 %v1575
    %1770 = vmatpush1.msra.mxu0 %v1574
    %1771 = vmatprep.subr.mxu0 %v1580
    %1772 = vmatpush1.msra.mxu0 %v1579
    %1773 = vmatprep.subr.mxu0 %v1585
    %1774 = vmatpush1.msra.mxu0 %v1584
    %1775 = vmatprep.subr.mxu0 %v1590
    %1776 = vmatpush1.msra.mxu0 %v1589
    %1777 = vmatprep.subr.mxu0 %v1595
    %1778 = vmatpush1.msra.mxu0 %v1594
    %1779 = vmatprep.subr.mxu0 %v1600
    %1780 = vmatpush1.msra.mxu0 %v1599
    %1781 = vmatprep.subr.mxu0 %v1605
    %1782 = vmatpush1.msra.mxu0 %v1604
    %1783 = vmatprep.subr.mxu0 %v1610
    %1784 = vmatpush1.msra.mxu0 %v1609
    %1785 = vmatprep.subr.mxu0 %v1615
    %1786 = vmatpush1.msra.mxu0 %v1614
    %1787 = vmatprep.subr.mxu0 %v1620
    %1788 = vmatpush1.msra.mxu0 %v1619
    %1789 = vmatprep.subr.mxu0 %v1625
    %1790 = vmatpush1.msra.mxu0 %v1624
    %1791 = vmatprep.subr.mxu0 %v1630
    %1792 = vmatpush1.msra.mxu0 %v1629
    %1793 = vmatprep.subr.mxu0 %v1635
    %1794 = vmatpush1.msra.mxu0 %v1634
    %1795 = vmatprep.subr.mxu0 %v1640
    %1796 = vmatpush1.msra.mxu0 %v1639
    %1797 = vmatprep.subr.mxu0 %v1645
    %1798 = vmatpush1.msra.mxu0 %v1644
    %1799 = vmatprep.subr.mxu0 %v1650
    %1800 = vmatpush1.msra.mxu0 %v1649
    %1801 = vmatprep.subr.mxu0 %v1655
    %1802 = vmatpush1.msra.mxu0 %v1654
    %1803 = vmatprep.subr.mxu0 %v1660
    %1804 = vmatpush1.msra.mxu0 %v1659
    %1805 = vmatprep.subr.mxu0 %v1665
    %1806 = vmatpush1.msra.mxu0 %v1664
    %1807 = vmatprep.subr.mxu0 %v1670
    %1808 = vmatpush1.msra.mxu0 %v1669
    %1809 = vmatprep.subr.mxu0 %v1675
    %1810 = vmatpush1.msra.mxu0 %v1674
    %1811 = vmatprep.subr.mxu0 %v1680
    %1812 = vmatpush1.msra.mxu0 %v1679
    %1813 = vmatprep.subr.mxu0 %v1685
    %1814 = vmatpush1.msra.mxu0 %v1684
    %1815 = vmatprep.subr.mxu0 %v1690
    %1816 = vmatpush1.msra.mxu0 %v1689
    %1817 = vmatprep.subr.mxu0 %v1695
    %1818 = vmatpush1.msra.mxu0 %v1694
    %1819 = vmatprep.subr.mxu0 %v1700
    %1820 = vmatpush1.msra.mxu0 %v1699
    %1821 = vmatprep.subr.mxu0 %v1705
    %1822 = vmatpush1.msra.mxu0 %v1704
    %1823 = vmatprep.mubr.f32.mxu0 %v1547
    %1824 = vmatmul.mubr.f32.gmra.mrb[0].mxu0 %v1546
    %v1825 = vpop.f32.mrb[0].mxu0
    %v1826 = vadd.f32 %v1734, %v1825
    %v1827 = vpop.f32.mrb[0].mxu0
    %v1828 = vadd.f32 %v1738, %v1827
    %1829 = vdwg.mxu0
    %1830 = vmatprep.subr.mxu0 %v1710
    %1831 = vmatpush1.msra.mxu0 %v1709
    %1832 = vmatprep.subr.mxu0 %v1715
    %1833 = vmatpush1.msra.mxu0 %v1714
    %1834 = vmatprep.subr.mxu0 %v1720
    %1835 = vmatpush1.msra.mxu0 %v1719
    %1836 = vmatprep.subr.mxu0 %v1725
    %1837 = vmatpush1.msra.mxu0 %v1724
    %1838 = vmatprep.subr.mxu0 0.0
    %1839 = vmatpush1.msra.mxu0 0.0
    %1840 = vmatprep.subr.mxu0 0.0
    %1841 = vmatpush1.msra.mxu0 0.0
    %1842 = vmatprep.subr.mxu0 0.0
    %1843 = vmatpush1.msra.mxu0 0.0
    %1844 = vmatprep.subr.mxu0 0.0
    %1845 = vmatpush1.msra.mxu0 0.0
    %1846 = vmatprep.subr.mxu0 0.0
    %1847 = vmatpush1.msra.mxu0 0.0
    %1848 = vmatprep.subr.mxu0 0.0
    %1849 = vmatpush1.msra.mxu0 0.0
    %1850 = vmatprep.subr.mxu0 0.0
    %1851 = vmatpush1.msra.mxu0 0.0
    %1852 = vmatprep.subr.mxu0 0.0
    %1853 = vmatpush1.msra.mxu0 0.0
    %1854 = vmatprep.subr.mxu0 0.0
    %1855 = vmatpush1.msra.mxu0 0.0
    %1856 = vmatprep.subr.mxu0 0.0
    %1857 = vmatpush1.msra.mxu0 0.0
    %1858 = vmatprep.subr.mxu0 0.0
    %1859 = vmatpush1.msra.mxu0 0.0
    %1860 = vmatprep.subr.mxu0 0.0
    %1861 = vmatpush1.msra.mxu0 0.0
    %1862 = vmatprep.subr.mxu0 0.0
    %1863 = vmatpush1.msra.mxu0 0.0
    %1864 = vmatprep.subr.mxu0 0.0
    %1865 = vmatpush1.msra.mxu0 0.0
    %1866 = vmatprep.subr.mxu0 0.0
    %1867 = vmatpush1.msra.mxu0 0.0
    %1868 = vmatprep.subr.mxu0 0.0
    %1869 = vmatpush1.msra.mxu0 0.0
    %1870 = vmatprep.subr.mxu0 0.0
    %1871 = vmatpush1.msra.mxu0 0.0
    %1872 = vmatprep.subr.mxu0 0.0
    %1873 = vmatpush1.msra.mxu0 0.0
    %1874 = vmatprep.subr.mxu0 0.0
    %1875 = vmatpush1.msra.mxu0 0.0
    %1876 = vmatprep.subr.mxu0 0.0
    %1877 = vmatpush1.msra.mxu0 0.0
    %1878 = vmatprep.subr.mxu0 0.0
    %1879 = vmatpush1.msra.mxu0 0.0
    %1880 = vmatprep.subr.mxu0 0.0
    %1881 = vmatpush1.msra.mxu0 0.0
    %1882 = vmatprep.subr.mxu0 0.0
    %1883 = vmatpush1.msra.mxu0 0.0
    %1884 = vmatprep.subr.mxu0 0.0
    %1885 = vmatpush1.msra.mxu0 0.0
    %1886 = vmatprep.subr.mxu0 0.0
    %1887 = vmatpush1.msra.mxu0 0.0
    %1888 = vmatprep.subr.mxu0 0.0
    %1889 = vmatpush1.msra.mxu0 0.0
    %1890 = vmatprep.subr.mxu0 0.0
    %1891 = vmatpush1.msra.mxu0 0.0
    %1892 = vmatprep.subr.mxu0 0.0
    %1893 = vmatpush1.msra.mxu0 0.0
    %1894 = vmatprep.mubr.f32.mxu0 0.0
    %1895 = vmatmul.mubr.f32.gmra.mrb[0].mxu0 %v1757
    %v1896 = vpop.f32.mrb[0].mxu0
    %v1897 = vadd.f32 %v1826, %v1896
    %v1898 = vpop.f32.mrb[0].mxu0
    %v1899 = vadd.f32 %v1828, %v1898
    %1900 = vdwg.mxu0
    %1901 = vmatprep.subr.mxu0 %v1552
    %1902 = vmatpush1.msra.mxu0 %v1551
    %1903 = vmatprep.subr.mxu0 %v1557
    %1904 = vmatpush1.msra.mxu0 %v1556
    %1905 = vmatprep.subr.mxu0 %v1562
    %1906 = vmatpush1.msra.mxu0 %v1561
    %1907 = vmatprep.subr.mxu0 %v1567
    %1908 = vmatpush1.msra.mxu0 %v1566
    %1909 = vmatprep.subr.mxu0 %v1572
    %1910 = vmatpush1.msra.mxu0 %v1571
    %1911 = vmatprep.subr.mxu0 %v1577
    %1912 = vmatpush1.msra.mxu0 %v1576
    %1913 = vmatprep.subr.mxu0 %v1582
    %1914 = vmatpush1.msra.mxu0 %v1581
    %1915 = vmatprep.subr.mxu0 %v1587
    %1916 = vmatpush1.msra.mxu0 %v1586
    %1917 = vmatprep.subr.mxu0 %v1592
    %1918 = vmatpush1.msra.mxu0 %v1591
    %1919 = vmatprep.subr.mxu0 %v1597
    %1920 = vmatpush1.msra.mxu0 %v1596
    %1921 = vmatprep.subr.mxu0 %v1602
    %1922 = vmatpush1.msra.mxu0 %v1601
    %1923 = vmatprep.subr.mxu0 %v1607
    %1924 = vmatpush1.msra.mxu0 %v1606
    %1925 = vmatprep.subr.mxu0 %v1612
    %1926 = vmatpush1.msra.mxu0 %v1611
    %1927 = vmatprep.subr.mxu0 %v1617
    %1928 = vmatpush1.msra.mxu0 %v1616
    %1929 = vmatprep.subr.mxu0 %v1622
    %1930 = vmatpush1.msra.mxu0 %v1621
    %1931 = vmatprep.subr.mxu0 %v1627
    %1932 = vmatpush1.msra.mxu0 %v1626
    %1933 = vmatprep.subr.mxu0 %v1632
    %1934 = vmatpush1.msra.mxu0 %v1631
    %1935 = vmatprep.subr.mxu0 %v1637
    %1936 = vmatpush1.msra.mxu0 %v1636
    %1937 = vmatprep.subr.mxu0 %v1642
    %1938 = vmatpush1.msra.mxu0 %v1641
    %1939 = vmatprep.subr.mxu0 %v1647
    %1940 = vmatpush1.msra.mxu0 %v1646
    %1941 = vmatprep.subr.mxu0 %v1652
    %1942 = vmatpush1.msra.mxu0 %v1651
    %1943 = vmatprep.subr.mxu0 %v1657
    %1944 = vmatpush1.msra.mxu0 %v1656
    %1945 = vmatprep.subr.mxu0 %v1662
    %1946 = vmatpush1.msra.mxu0 %v1661
    %1947 = vmatprep.subr.mxu0 %v1667
    %1948 = vmatpush1.msra.mxu0 %v1666
    %1949 = vmatprep.subr.mxu0 %v1672
    %1950 = vmatpush1.msra.mxu0 %v1671
    %1951 = vmatprep.subr.mxu0 %v1677
    %1952 = vmatpush1.msra.mxu0 %v1676
    %1953 = vmatprep.subr.mxu0 %v1682
    %1954 = vmatpush1.msra.mxu0 %v1681
    %1955 = vmatprep.subr.mxu0 %v1687
    %1956 = vmatpush1.msra.mxu0 %v1686
    %1957 = vmatprep.subr.mxu0 %v1692
    %1958 = vmatpush1.msra.mxu0 %v1691
    %1959 = vmatprep.subr.mxu0 %v1697
    %1960 = vmatpush1.msra.mxu0 %v1696
    %1961 = vmatprep.subr.mxu0 %v1702
    %1962 = vmatpush1.msra.mxu0 %v1701
    %1963 = vmatprep.subr.mxu0 %v1707
    %1964 = vmatpush1.msra.mxu0 %v1706
    %1965 = vmatprep.mubr.f32.mxu0 %v1547
    %1966 = vmatmul.mubr.f32.gmra.mrb[0].mxu0 %v1546
    %v1967 = vpop.f32.mrb[0].mxu0
    %v1968 = vadd.f32 %v1742, %v1967
    %v1969 = vpop.f32.mrb[0].mxu0
    %v1970 = vadd.f32 %v1746, %v1969
    %1971 = vdwg.mxu0
    %1972 = vmatprep.subr.mxu0 %v1712
    %1973 = vmatpush1.msra.mxu0 %v1711
    %1974 = vmatprep.subr.mxu0 %v1717
    %1975 = vmatpush1.msra.mxu0 %v1716
    %1976 = vmatprep.subr.mxu0 %v1722
    %1977 = vmatpush1.msra.mxu0 %v1721
    %1978 = vmatprep.subr.mxu0 %v1727
    %1979 = vmatpush1.msra.mxu0 %v1726
    %1980 = vmatprep.subr.mxu0 0.0
    %1981 = vmatpush1.msra.mxu0 0.0
    %1982 = vmatprep.subr.mxu0 0.0
    %1983 = vmatpush1.msra.mxu0 0.0
    %1984 = vmatprep.subr.mxu0 0.0
    %1985 = vmatpush1.msra.mxu0 0.0
    %1986 = vmatprep.subr.mxu0 0.0
    %1987 = vmatpush1.msra.mxu0 0.0
    %1988 = vmatprep.subr.mxu0 0.0
    %1989 = vmatpush1.msra.mxu0 0.0
    %1990 = vmatprep.subr.mxu0 0.0
    %1991 = vmatpush1.msra.mxu0 0.0
    %1992 = vmatprep.subr.mxu0 0.0
    %1993 = vmatpush1.msra.mxu0 0.0
    %1994 = vmatprep.subr.mxu0 0.0
    %1995 = vmatpush1.msra.mxu0 0.0
    %1996 = vmatprep.subr.mxu0 0.0
    %1997 = vmatpush1.msra.mxu0 0.0
    %1998 = vmatprep.subr.mxu0 0.0
    %1999 = vmatpush1.msra.mxu0 0.0
    %2000 = vmatprep.subr.mxu0 0.0
    %2001 = vmatpush1.msra.mxu0 0.0
    %2002 = vmatprep.subr.mxu0 0.0
    %2003 = vmatpush1.msra.mxu0 0.0
    %2004 = vmatprep.subr.mxu0 0.0
    %2005 = vmatpush1.msra.mxu0 0.0
    %2006 = vmatprep.subr.mxu0 0.0
    %2007 = vmatpush1.msra.mxu0 0.0
    %2008 = vmatprep.subr.mxu0 0.0
    %2009 = vmatpush1.msra.mxu0 0.0
    %2010 = vmatprep.subr.mxu0 0.0
    %2011 = vmatpush1.msra.mxu0 0.0
    %2012 = vmatprep.subr.mxu0 0.0
    %2013 = vmatpush1.msra.mxu0 0.0
    %2014 = vmatprep.subr.mxu0 0.0
    %2015 = vmatpush1.msra.mxu0 0.0
    %2016 = vmatprep.subr.mxu0 0.0
    %2017 = vmatpush1.msra.mxu0 0.0
    %2018 = vmatprep.subr.mxu0 0.0
    %2019 = vmatpush1.msra.mxu0 0.0
    %2020 = vmatprep.subr.mxu0 0.0
    %2021 = vmatpush1.msra.mxu0 0.0
    %2022 = vmatprep.subr.mxu0 0.0
    %2023 = vmatpush1.msra.mxu0 0.0
    %2024 = vmatprep.subr.mxu0 0.0
    %2025 = vmatpush1.msra.mxu0 0.0
    %2026 = vmatprep.subr.mxu0 0.0
    %2027 = vmatpush1.msra.mxu0 0.0
    %2028 = vmatprep.subr.mxu0 0.0
    %2029 = vmatpush1.msra.mxu0 0.0
    %2030 = vmatprep.subr.mxu0 0.0
    %2031 = vmatpush1.msra.mxu0 0.0
    %2032 = vmatprep.subr.mxu0 0.0
    %2033 = vmatpush1.msra.mxu0 0.0
    %2034 = vmatprep.subr.mxu0 0.0
    %2035 = vmatpush1.msra.mxu0 0.0
    %2036 = vmatprep.mubr.f32.mxu0 0.0
    %2037 = vmatmul.mubr.f32.gmra.mrb[0].mxu0 %v1757
    %v2038 = vpop.f32.mrb[0].mxu0
    %v2039 = vadd.f32 %v1968, %v2038
    %v2040 = vpop.f32.mrb[0].mxu0
    %v2041 = vadd.f32 %v1970, %v2040
    %2042 = vdwg.mxu0
    %2043 = vmatprep.subr.mxu0 0.0
    %2044 = vmatpush1.msra.mxu0 %v1553
    %2045 = vmatprep.subr.mxu0 0.0
    %2046 = vmatpush1.msra.mxu0 %v1558
    %2047 = vmatprep.subr.mxu0 0.0
    %2048 = vmatpush1.msra.mxu0 %v1563
    %2049 = vmatprep.subr.mxu0 0.0
    %2050 = vmatpush1.msra.mxu0 %v1568
    %2051 = vmatprep.subr.mxu0 0.0
    %2052 = vmatpush1.msra.mxu0 %v1573
    %2053 = vmatprep.subr.mxu0 0.0
    %2054 = vmatpush1.msra.mxu0 %v1578
    %2055 = vmatprep.subr.mxu0 0.0
    %2056 = vmatpush1.msra.mxu0 %v1583
    %2057 = vmatprep.subr.mxu0 0.0
    %2058 = vmatpush1.msra.mxu0 %v1588
    %2059 = vmatprep.subr.mxu0 0.0
    %2060 = vmatpush1.msra.mxu0 %v1593
    %2061 = vmatprep.subr.mxu0 0.0
    %2062 = vmatpush1.msra.mxu0 %v1598
    %2063 = vmatprep.subr.mxu0 0.0
    %2064 = vmatpush1.msra.mxu0 %v1603
    %2065 = vmatprep.subr.mxu0 0.0
    %2066 = vmatpush1.msra.mxu0 %v1608
    %2067 = vmatprep.subr.mxu0 0.0
    %2068 = vmatpush1.msra.mxu0 %v1613
    %2069 = vmatprep.subr.mxu0 0.0
    %2070 = vmatpush1.msra.mxu0 %v1618
    %2071 = vmatprep.subr.mxu0 0.0
    %2072 = vmatpush1.msra.mxu0 %v1623
    %2073 = vmatprep.subr.mxu0 0.0
    %2074 = vmatpush1.msra.mxu0 %v1628
    %2075 = vmatprep.subr.mxu0 0.0
    %2076 = vmatpush1.msra.mxu0 %v1633
    %2077 = vmatprep.subr.mxu0 0.0
    %2078 = vmatpush1.msra.mxu0 %v1638
    %2079 = vmatprep.subr.mxu0 0.0
    %2080 = vmatpush1.msra.mxu0 %v1643
    %2081 = vmatprep.subr.mxu0 0.0
    %2082 = vmatpush1.msra.mxu0 %v1648
    %2083 = vmatprep.subr.mxu0 0.0
    %2084 = vmatpush1.msra.mxu0 %v1653
    %2085 = vmatprep.subr.mxu0 0.0
    %2086 = vmatpush1.msra.mxu0 %v1658
    %2087 = vmatprep.subr.mxu0 0.0
    %2088 = vmatpush1.msra.mxu0 %v1663
    %2089 = vmatprep.subr.mxu0 0.0
    %2090 = vmatpush1.msra.mxu0 %v1668
    %2091 = vmatprep.subr.mxu0 0.0
    %2092 = vmatpush1.msra.mxu0 %v1673
    %2093 = vmatprep.subr.mxu0 0.0
    %2094 = vmatpush1.msra.mxu0 %v1678
    %2095 = vmatprep.subr.mxu0 0.0
    %2096 = vmatpush1.msra.mxu0 %v1683
    %2097 = vmatprep.subr.mxu0 0.0
    %2098 = vmatpush1.msra.mxu0 %v1688
    %2099 = vmatprep.subr.mxu0 0.0
    %2100 = vmatpush1.msra.mxu0 %v1693
    %2101 = vmatprep.subr.mxu0 0.0
    %2102 = vmatpush1.msra.mxu0 %v1698
    %2103 = vmatprep.subr.mxu0 0.0
    %2104 = vmatpush1.msra.mxu0 %v1703
    %2105 = vmatprep.subr.mxu0 0.0
    %2106 = vmatpush1.msra.mxu0 %v1708
    %2107 = vmatprep.mubr.f32.mxu0 %v1547
    %2108 = vmatmul.mubr.f32.gmra.mrb[0].mxu0 %v1546
    %v2109 = vpop.f32.mrb[0].mxu0
    %v2110 = vadd.f32 %v1750, %v2109
    %v2111 = vpop.f32.mrb[0].mxu0
    %2112 = vdwg.mxu0
    %2113 = vmatprep.subr.mxu0 0.0
    %2114 = vmatpush1.msra.mxu0 %v1713
    %2115 = vmatprep.subr.mxu0 0.0
    %2116 = vmatpush1.msra.mxu0 %v1718
    %2117 = vmatprep.subr.mxu0 0.0
    %2118 = vmatpush1.msra.mxu0 %v1723
    %2119 = vmatprep.subr.mxu0 0.0
    %2120 = vmatpush1.msra.mxu0 %v1728
    %2121 = vmatprep.subr.mxu0 0.0
    %2122 = vmatpush1.msra.mxu0 0.0
    %2123 = vmatprep.subr.mxu0 0.0
    %2124 = vmatpush1.msra.mxu0 0.0
    %2125 = vmatprep.subr.mxu0 0.0
    %2126 = vmatpush1.msra.mxu0 0.0
    %2127 = vmatprep.subr.mxu0 0.0
    %2128 = vmatpush1.msra.mxu0 0.0
    %2129 = vmatprep.subr.mxu0 0.0
    %2130 = vmatpush1.msra.mxu0 0.0
    %2131 = vmatprep.subr.mxu0 0.0
    %2132 = vmatpush1.msra.mxu0 0.0
    %2133 = vmatprep.subr.mxu0 0.0
    %2134 = vmatpush1.msra.mxu0 0.0
    %2135 = vmatprep.subr.mxu0 0.0
    %2136 = vmatpush1.msra.mxu0 0.0
    %2137 = vmatprep.subr.mxu0 0.0
    %2138 = vmatpush1.msra.mxu0 0.0
    %2139 = vmatprep.subr.mxu0 0.0
    %2140 = vmatpush1.msra.mxu0 0.0
    %2141 = vmatprep.subr.mxu0 0.0
    %2142 = vmatpush1.msra.mxu0 0.0
    %2143 = vmatprep.subr.mxu0 0.0
    %2144 = vmatpush1.msra.mxu0 0.0
    %2145 = vmatprep.subr.mxu0 0.0
    %2146 = vmatpush1.msra.mxu0 0.0
    %2147 = vmatprep.subr.mxu0 0.0
    %2148 = vmatpush1.msra.mxu0 0.0
    %2149 = vmatprep.subr.mxu0 0.0
    %2150 = vmatpush1.msra.mxu0 0.0
    %2151 = vmatprep.subr.mxu0 0.0
    %2152 = vmatpush1.msra.mxu0 0.0
    %2153 = vmatprep.subr.mxu0 0.0
    %2154 = vmatpush1.msra.mxu0 0.0
    %2155 = vmatprep.subr.mxu0 0.0
    %2156 = vmatpush1.msra.mxu0 0.0
    %2157 = vmatprep.subr.mxu0 0.0
    %2158 = vmatpush1.msra.mxu0 0.0
    %2159 = vmatprep.subr.mxu0 0.0
    %2160 = vmatpush1.msra.mxu0 0.0
    %2161 = vmatprep.subr.mxu0 0.0
    %2162 = vmatpush1.msra.mxu0 0.0
    %2163 = vmatprep.subr.mxu0 0.0
    %2164 = vmatpush1.msra.mxu0 0.0
    %2165 = vmatprep.subr.mxu0 0.0
    %2166 = vmatpush1.msra.mxu0 0.0
    %2167 = vmatprep.subr.mxu0 0.0
    %2168 = vmatpush1.msra.mxu0 0.0
    %2169 = vmatprep.subr.mxu0 0.0
    %2170 = vmatpush1.msra.mxu0 0.0
    %2171 = vmatprep.subr.mxu0 0.0
    %2172 = vmatpush1.msra.mxu0 0.0
    %2173 = vmatprep.subr.mxu0 0.0
    %2174 = vmatpush1.msra.mxu0 0.0
    %2175 = vmatprep.subr.mxu0 0.0
    %2176 = vmatpush1.msra.mxu0 0.0
    %2177 = vmatprep.mubr.f32.mxu0 0.0
    %2178 = vmatmul.mubr.f32.gmra.mrb[0].mxu0 %v1757
    %v2179 = vpop.f32.mrb[0].mxu0
    %v2180 = vadd.f32 %v2110, %v2179
    %v2181 = vpop.f32.mrb[0].mxu0
    %2182 = vdwg.mxu0
    %v2183 = vmul.f32 %v2039, 1.442695
    %v2184 = vpow.pop %v2183
    %v2185 = vadd.f32 %v2184, 1e-08
    %v2186 = vrcp.pop %v2185
    %v2187 = vadd.f32 %v2186, 0.0
    %2189 = vrot.lane.b32.xlu0 %v2186, 96
    %v2190 = vpop.permute.xlu0 %2189
    %v2192 = vmul.f32 %v1897, %v2190
    %v2193 = vadd.f32 %v2192, 0.0
    %v2194 = vadd.f32 %v2187, %v2190
    %2196 = vset.pattern.permute.xlu0 1
    %2197 = vperm.xlu0 %2196, %v1375
    %v2198 = vpop.permute.xlu0 %2197
    %v2200 = vmul.f32 %v1897, %v2198
    %v2201 = vmul.f32 %v2200, %v2190
    %2203 = vrot.lane.b32.xlu0 %v2201, 96
    %v2204 = vpop.permute.xlu0 %2203
    %v2206 = vadd.f32 %v2193, %v2204
    %2207 = vrot.lane.b32.xlu0 %v2186, 64
    %v2208 = vpop.permute.xlu0 %2207
    %v2210 = vadd.f32 %v2194, %v2208
    %2211 = vset.pattern.permute.xlu0 2
    %2212 = vperm.xlu0 %2211, %v1375
    %v2213 = vpop.permute.xlu0 %2212
    %v2215 = vmul.f32 %v1897, %v2213
    %v2216 = vmul.f32 %v2215, %v2190
    %2218 = vrot.lane.b32.xlu0 %v2216, 64
    %v2219 = vpop.permute.xlu0 %2218
    %v2221 = vadd.f32 %v2206, %v2219
    %v2222 = vmul.f32 %v2041, 1.442695
    %v2223 = vpow.pop %v2222
    %v2224 = vadd.f32 %v2223, 1e-08
    %v2225 = vrcp.pop %v2224
    %2227 = vrot.lane.b32.xlu0 %v2225, 32
    %v2228 = vpop.permute.xlu0 %2227
    %v2230 = vadd.f32 %v2210, %v2228
    %2231 = vset.pattern.permute.xlu0 3
    %2232 = vperm.xlu0 %2231, %v1375
    %v2233 = vpop.permute.xlu0 %2232
    %v2235 = vmul.f32 %v1897, %v2233
    %2236 = vrot.lane.b32.xlu0 %v2225, 96
    %v2237 = vpop.permute.xlu0 %2236
    %v2239 = vmul.f32 %v2235, %v2237
    %2241 = vrot.lane.b32.xlu0 %v2239, 32
    %v2242 = vpop.permute.xlu0 %2241
    %v2244 = vadd.f32 %v2221, %v2242
    %v2245 = vadd.f32 %v2230, %v2225
    %2247 = vset.pattern.permute.xlu0 4
    %2248 = vperm.xlu0 %2247, %v1367
    %v2249 = vpop.permute.xlu0 %2248
    %v2251 = vmul.f32 %v1899, %v2249
    %v2252 = vmul.f32 %v2251, %v2237
    %v2253 = vadd.f32 %v2244, %v2252
    %v2254 = vadd.f32 %v2245, %v2237
    %2255 = vset.pattern.permute.xlu0 5
    %2256 = vperm.xlu0 %2255, %v1367
    %v2257 = vpop.permute.xlu0 %2256
    %v2259 = vmul.f32 %v1899, %v2257
    %v2260 = vmul.f32 %v2259, %v2237
    %2262 = vrot.lane.b32.xlu0 %v2260, 96
    %v2263 = vpop.permute.xlu0 %2262
    %v2265 = vadd.f32 %v2253, %v2263
    %2266 = vrot.lane.b32.xlu0 %v2225, 64
    %v2267 = vpop.permute.xlu0 %2266
    %v2269 = vadd.f32 %v2254, %v2267
    %2270 = vset.pattern.permute.xlu0 6
    %2271 = vperm.xlu0 %2270, %v1367
    %v2272 = vpop.permute.xlu0 %2271
    %v2274 = vmul.f32 %v1899, %v2272
    %v2275 = vmul.f32 %v2274, %v2237
    %2277 = vrot.lane.b32.xlu0 %v2275, 64
    %v2278 = vpop.permute.xlu0 %2277
    %v2280 = vadd.f32 %v2265, %v2278
    %v2281 = vmul.f32 %v2180, 1.442695
    %v2282 = vpow.pop %v2281
    %v2283 = vadd.f32 %v2282, 1e-08
    %v2284 = vrcp.pop %v2283
    %2286 = vrot.lane.b32.xlu0 %v2284, 32
    %v2287 = vpop.permute.xlu0 %2286
    %v2289 = vadd.f32 %v2269, %v2287
    %2290 = vset.pattern.permute.xlu0 7
    %2291 = vperm.xlu0 %2290, %v1367
    %v2292 = vpop.permute.xlu0 %2291
    %v2294 = vmul.f32 %v1899, %v2292
    %2295 = vrot.lane.b32.xlu0 %v2284, 96
    %v2296 = vpop.permute.xlu0 %2295
    %v2298 = vmul.f32 %v2294, %v2296
    %2300 = vrot.lane.b32.xlu0 %v2298, 32
    %v2301 = vpop.permute.xlu0 %2300
    %v2303 = vadd.f32 %v2280, %v2301
    %v2304 = vadd.f32 %v2289, %v2284
    %2305 = vset.pattern.permute.xlu0 8
    %2306 = vperm.xlu0 %2305, %v1367
    %v2307 = vpop.permute.xlu0 %2306
    %v2309 = vmul.f32 %v2039, %v2307
    %v2310 = vmul.f32 %v2309, %v2296
    %v2311 = vadd.f32 %v2303, %v2310
    %v2312 = vrcp.pop %v2304
    %2314 = vrot.lane.b32.xlu0 %v2312, 96
    %v2315 = vpop.permute.xlu0 %2314
    %v2317 = vmul.f32 %v2311, %v2315
    %v2318 = vadd.f32 %v2312, 1e-08
    %v2319 = vlog2.pop %v2318
    %v2320 = vmul.f32 %v2319, 0.6931472
    %v2321 = vsel %vm1107, %v2317, %v2320
    %vm2322 = vcmask 517120
    %2323 = vst.msk [vmem:[%s85] sm:$0x3] %vm2322, %v2321
    %v2324 = vld [vmem:[%s7] sm:$0x3]
    %v2325 = vmul.f32 %v2320, 0.5
    %v2326 = vmul.f32 %v2325, 1.442695
    %v2327 = vpow.pop %v2326
    %2329 = vrot.lane.b32.xlu0 %v2327, 96
    %v2330 = vpop.permute.xlu0 %2329
    %v2332 = vmul.f32 %v2324, %v2330
    %v2333 = vadd.f32 %v2317, %v2332
    %v2334 = vld [vmem:[#allocation25] sm:$0xff]
    %v2335 = vld [vmem:[#allocation25 + $0x8] sm:$0xff]
    %v2336 = vld [vmem:[#allocation25 + $0x10] sm:$0xff]
    %v2337 = vld [vmem:[#allocation25 + $0x18] sm:$0xff]
    %v2338 = vld [vmem:[#allocation26] sm:$0x1]
    %v2340 = vlaneseq
    %v2341 = vshrl.u32 %v2340, 7
    %v2342 = vsub.s32 0, %v2341
    %v2343 = vrot.slane %v2338, %v2342
    %v2346 = vsel %vm1107, %v2333, 0
    %2348 = vmatprep.subr.mxu0 0.0
    %2349 = vmatpush1.msra.mxu0 %v2334
    %2350 = vmatprep.subr.mxu0 0.0
    %2351 = vmatpush1.msra.mxu0 %v2335
    %2352 = vmatprep.subr.mxu0 0.0
    %2353 = vmatpush1.msra.mxu0 %v2336
    %2354 = vmatprep.subr.mxu0 0.0
    %2355 = vmatpush1.msra.mxu0 %v2337
    %2356 = vmatprep.subr.mxu0 0.0
    %2357 = vmatpush1.msra.mxu0 0.0
    %2358 = vmatprep.subr.mxu0 0.0
    %2359 = vmatpush1.msra.mxu0 0.0
    %2360 = vmatprep.subr.mxu0 0.0
    %2361 = vmatpush1.msra.mxu0 0.0
    %2362 = vmatprep.subr.mxu0 0.0
    %2363 = vmatpush1.msra.mxu0 0.0
    %2364 = vmatprep.subr.mxu0 0.0
    %2365 = vmatpush1.msra.mxu0 0.0
    %2366 = vmatprep.subr.mxu0 0.0
    %2367 = vmatpush1.msra.mxu0 0.0
    %2368 = vmatprep.subr.mxu0 0.0
    %2369 = vmatpush1.msra.mxu0 0.0
    %2370 = vmatprep.subr.mxu0 0.0
    %2371 = vmatpush1.msra.mxu0 0.0
    %2372 = vmatprep.subr.mxu0 0.0
    %2373 = vmatpush1.msra.mxu0 0.0
    %2374 = vmatprep.subr.mxu0 0.0
    %2375 = vmatpush1.msra.mxu0 0.0
    %2376 = vmatprep.subr.mxu0 0.0
    %2377 = vmatpush1.msra.mxu0 0.0
    %2378 = vmatprep.subr.mxu0 0.0
    %2379 = vmatpush1.msra.mxu0 0.0
    %2380 = vmatprep.subr.mxu0 0.0
    %2381 = vmatpush1.msra.mxu0 0.0
    %2382 = vmatprep.subr.mxu0 0.0
    %2383 = vmatpush1.msra.mxu0 0.0
    %2384 = vmatprep.subr.mxu0 0.0
    %2385 = vmatpush1.msra.mxu0 0.0
    %2386 = vmatprep.subr.mxu0 0.0
    %2387 = vmatpush1.msra.mxu0 0.0
    %2388 = vmatprep.subr.mxu0 0.0
    %2389 = vmatpush1.msra.mxu0 0.0
    %2390 = vmatprep.subr.mxu0 0.0
    %2391 = vmatpush1.msra.mxu0 0.0
    %2392 = vmatprep.subr.mxu0 0.0
    %2393 = vmatpush1.msra.mxu0 0.0
    %2394 = vmatprep.subr.mxu0 0.0
    %2395 = vmatpush1.msra.mxu0 0.0
    %2396 = vmatprep.subr.mxu0 0.0
    %2397 = vmatpush1.msra.mxu0 0.0
    %2398 = vmatprep.subr.mxu0 0.0
    %2399 = vmatpush1.msra.mxu0 0.0
    %2400 = vmatprep.subr.mxu0 0.0
    %2401 = vmatpush1.msra.mxu0 0.0
    %2402 = vmatprep.subr.mxu0 0.0
    %2403 = vmatpush1.msra.mxu0 0.0
    %2404 = vmatprep.subr.mxu0 0.0
    %2405 = vmatpush1.msra.mxu0 0.0
    %2406 = vmatprep.subr.mxu0 0.0
    %2407 = vmatpush1.msra.mxu0 0.0
    %2408 = vmatprep.subr.mxu0 0.0
    %2409 = vmatpush1.msra.mxu0 0.0
    %2410 = vmatprep.subr.mxu0 0.0
    %2411 = vmatpush1.msra.mxu0 0.0
    %2412 = vmatprep.mubr.f32.mxu0 0.0
    %2413 = vmatmul.mubr.f32.gmra.mrb[0].mxu0 %v2346
    %v2414 = vpop.f32.mrb[0].mxu0
    %v2415 = vadd.f32 %v2343, %v2414
    %v2416 = vpop.f32.mrb[0].mxu0
    %2417 = vdwg.mxu0
    %vm2418 = vcmask 254976
    %v2419 = vsel %vm2418, %v2415, 0.0
    %2420 = vadd.xlane.f32.xlu0 %v2419
    %v2421 = vpop.xlane.xlu0 %2420
    %v2422 = vrcp.pop 32.0
    %v2423 = vmul.f32 %v2421, %v2422
    %v2424 = vsub.f32 %v2415, %v2423
    %v2425 = vmul.f32 %v2424, %v2424
    %v2426 = vsel %vm2418, %v2425, 0.0
    %2427 = vadd.xlane.f32.xlu0 %v2426
    %v2428 = vpop.xlane.xlu0 %2427
    %v2429 = vmul.f32 %v2428, %v2422
    %v2430 = vadd.f32 %v2429, 1e-05
    %v2431 = vrsqrt.pop %v2430
    %v2432 = vmul.f32 %v2424, %v2431
    %v2433 = vld [vmem:[#allocation28] sm:$0x1]
    %v2435 = vlaneseq
    %v2436 = vshrl.u32 %v2435, 7
    %v2437 = vsub.s32 0, %v2436
    %v2438 = vrot.slane %v2433, %v2437
    %v2440 = vmul.f32 %v2432, %v2438
    %v2441 = vld [vmem:[#allocation29] sm:$0x1]
    %v2443 = vlaneseq
    %v2444 = vshrl.u32 %v2443, 7
    %v2445 = vsub.s32 0, %v2444
    %v2446 = vrot.slane %v2441, %v2445
    %v2448 = vadd.f32 %v2440, %v2446
    %v2449 = vld [vmem:[#allocation31] sm:$0xff]
    %v2450 = vld [vmem:[#allocation31 + $0x8] sm:$0xff]
    %v2451 = vld [vmem:[#allocation31 + $0x10] sm:$0xff]
    %v2452 = vld [vmem:[#allocation31 + $0x18] sm:$0xff]
    %v2454 = vsel %vm1107, %v2448, 0
    %2456 = vmatprep.subr.mxu0 0.0
    %2457 = vmatpush1.msra.mxu0 %v2449
    %2458 = vmatprep.subr.mxu0 0.0
    %2459 = vmatpush1.msra.mxu0 %v2450
    %2460 = vmatprep.subr.mxu0 0.0
    %2461 = vmatpush1.msra.mxu0 %v2451
    %2462 = vmatprep.subr.mxu0 0.0
    %2463 = vmatpush1.msra.mxu0 %v2452
    %2464 = vmatprep.subr.mxu0 0.0
    %2465 = vmatpush1.msra.mxu0 0.0
    %2466 = vmatprep.subr.mxu0 0.0
    %2467 = vmatpush1.msra.mxu0 0.0
    %2468 = vmatprep.subr.mxu0 0.0
    %2469 = vmatpush1.msra.mxu0 0.0
    %2470 = vmatprep.subr.mxu0 0.0
    %2471 = vmatpush1.msra.mxu0 0.0
    %2472 = vmatprep.subr.mxu0 0.0
    %2473 = vmatpush1.msra.mxu0 0.0
    %2474 = vmatprep.subr.mxu0 0.0
    %2475 = vmatpush1.msra.mxu0 0.0
    %2476 = vmatprep.subr.mxu0 0.0
    %2477 = vmatpush1.msra.mxu0 0.0
    %2478 = vmatprep.subr.mxu0 0.0
    %2479 = vmatpush1.msra.mxu0 0.0
    %2480 = vmatprep.subr.mxu0 0.0
    %2481 = vmatpush1.msra.mxu0 0.0
    %2482 = vmatprep.subr.mxu0 0.0
    %2483 = vmatpush1.msra.mxu0 0.0
    %2484 = vmatprep.subr.mxu0 0.0
    %2485 = vmatpush1.msra.mxu0 0.0
    %2486 = vmatprep.subr.mxu0 0.0
    %2487 = vmatpush1.msra.mxu0 0.0
    %2488 = vmatprep.subr.mxu0 0.0
    %2489 = vmatpush1.msra.mxu0 0.0
    %2490 = vmatprep.subr.mxu0 0.0
    %2491 = vmatpush1.msra.mxu0 0.0
    %2492 = vmatprep.subr.mxu0 0.0
    %2493 = vmatpush1.msra.mxu0 0.0
    %2494 = vmatprep.subr.mxu0 0.0
    %2495 = vmatpush1.msra.mxu0 0.0
    %2496 = vmatprep.subr.mxu0 0.0
    %2497 = vmatpush1.msra.mxu0 0.0
    %2498 = vmatprep.subr.mxu0 0.0
    %2499 = vmatpush1.msra.mxu0 0.0
    %2500 = vmatprep.subr.mxu0 0.0
    %2501 = vmatpush1.msra.mxu0 0.0
    %2502 = vmatprep.subr.mxu0 0.0
    %2503 = vmatpush1.msra.mxu0 0.0
    %2504 = vmatprep.subr.mxu0 0.0
    %2505 = vmatpush1.msra.mxu0 0.0
    %2506 = vmatprep.subr.mxu0 0.0
    %2507 = vmatpush1.msra.mxu0 0.0
    %2508 = vmatprep.subr.mxu0 0.0
    %2509 = vmatpush1.msra.mxu0 0.0
    %2510 = vmatprep.subr.mxu0 0.0
    %2511 = vmatpush1.msra.mxu0 0.0
    %2512 = vmatprep.subr.mxu0 0.0
    %2513 = vmatpush1.msra.mxu0 0.0
    %2514 = vmatprep.subr.mxu0 0.0
    %2515 = vmatpush1.msra.mxu0 0.0
    %2516 = vmatprep.subr.mxu0 0.0
    %2517 = vmatpush1.msra.mxu0 0.0
    %2518 = vmatprep.subr.mxu0 0.0
    %2519 = vmatpush1.msra.mxu0 0.0
    %2520 = vmatprep.mubr.f32.mxu0 0.0
    %2521 = vmatmul.mubr.f32.gmra.mrb[0].mxu0 %v2454
    %v2522 = vpop.f32.mrb[0].mxu0
    %v2523 = vadd.f32 0.0, %v2522
    %v2524 = vpop.f32.mrb[0].mxu0
    %2525 = vdwg.mxu0
    %v2526 = vld [vmem:[#allocation32] sm:$0xff]
    %v2527 = vld [vmem:[#allocation32 + $0x8] sm:$0xff]
    %v2528 = vld [vmem:[#allocation32 + $0x10] sm:$0xff]
    %v2529 = vld [vmem:[#allocation32 + $0x18] sm:$0xff]
    %2530 = vmatprep.subr.mxu0 0.0
    %2531 = vmatpush1.msra.mxu0 %v2526
    %2532 = vmatprep.subr.mxu0 0.0
    %2533 = vmatpush1.msra.mxu0 %v2527
    %2534 = vmatprep.subr.mxu0 0.0
    %2535 = vmatpush1.msra.mxu0 %v2528
    %2536 = vmatprep.subr.mxu0 0.0
    %2537 = vmatpush1.msra.mxu0 %v2529
    %2538 = vmatprep.subr.mxu0 0.0
    %2539 = vmatpush1.msra.mxu0 0.0
    %2540 = vmatprep.subr.mxu0 0.0
    %2541 = vmatpush1.msra.mxu0 0.0
    %2542 = vmatprep.subr.mxu0 0.0
    %2543 = vmatpush1.msra.mxu0 0.0
    %2544 = vmatprep.subr.mxu0 0.0
    %2545 = vmatpush1.msra.mxu0 0.0
    %2546 = vmatprep.subr.mxu0 0.0
    %2547 = vmatpush1.msra.mxu0 0.0
    %2548 = vmatprep.subr.mxu0 0.0
    %2549 = vmatpush1.msra.mxu0 0.0
    %2550 = vmatprep.subr.mxu0 0.0
    %2551 = vmatpush1.msra.mxu0 0.0
    %2552 = vmatprep.subr.mxu0 0.0
    %2553 = vmatpush1.msra.mxu0 0.0
    %2554 = vmatprep.subr.mxu0 0.0
    %2555 = vmatpush1.msra.mxu0 0.0
    %2556 = vmatprep.subr.mxu0 0.0
    %2557 = vmatpush1.msra.mxu0 0.0
    %2558 = vmatprep.subr.mxu0 0.0
    %2559 = vmatpush1.msra.mxu0 0.0
    %2560 = vmatprep.subr.mxu0 0.0
    %2561 = vmatpush1.msra.mxu0 0.0
    %2562 = vmatprep.subr.mxu0 0.0
    %2563 = vmatpush1.msra.mxu0 0.0
    %2564 = vmatprep.subr.mxu0 0.0
    %2565 = vmatpush1.msra.mxu0 0.0
    %2566 = vmatprep.subr.mxu0 0.0
    %2567 = vmatpush1.msra.mxu0 0.0
    %2568 = vmatprep.subr.mxu0 0.0
    %2569 = vmatpush1.msra.mxu0 0.0
    %2570 = vmatprep.subr.mxu0 0.0
    %2571 = vmatpush1.msra.mxu0 0.0
    %2572 = vmatprep.subr.mxu0 0.0
    %2573 = vmatpush1.msra.mxu0 0.0
    %2574 = vmatprep.subr.mxu0 0.0
    %2575 = vmatpush1.msra.mxu0 0.0
    %2576 = vmatprep.subr.mxu0 0.0
    %2577 = vmatpush1.msra.mxu0 0.0
    %2578 = vmatprep.subr.mxu0 0.0
    %2579 = vmatpush1.msra.mxu0 0.0
    %2580 = vmatprep.subr.mxu0 0.0
    %2581 = vmatpush1.msra.mxu0 0.0
    %2582 = vmatprep.subr.mxu0 0.0
    %2583 = vmatpush1.msra.mxu0 0.0
    %2584 = vmatprep.subr.mxu0 0.0
    %2585 = vmatpush1.msra.mxu0 0.0
    %2586 = vmatprep.subr.mxu0 0.0
    %2587 = vmatpush1.msra.mxu0 0.0
    %2588 = vmatprep.subr.mxu0 0.0
    %2589 = vmatpush1.msra.mxu0 0.0
    %2590 = vmatprep.subr.mxu0 0.0
    %2591 = vmatpush1.msra.mxu0 0.0
    %2592 = vmatprep.subr.mxu0 0.0
    %2593 = vmatpush1.msra.mxu0 0.0
    %2594 = vmatprep.mubr.f32.mxu0 0.0
    %2595 = vmatmul.mubr.f32.gmra.mrb[0].mxu0 %v2454
    %v2596 = vpop.f32.mrb[0].mxu0
    %v2597 = vadd.f32 0.0, %v2596
    %v2598 = vpop.f32.mrb[0].mxu0
    %2599 = vdwg.mxu0
    %vm2600 = vcmask 64512
    %v2602 = vsel %vm2600, %v2523, 0
    %v2605 = vsel %vm2600, %v2597, 0
    %2607 = vmatprep.subr.mxu0 0.0
    %2608 = vmatpush1.xpose.msra.mxu0 %v2605
    %2609 = vmatprep.subr.mxu0 0.0
    %2610 = vmatpush1.xpose.msra.mxu0 0.0
    %2611 = vmatprep.subr.mxu0 0.0
    %2612 = vmatpush1.xpose.msra.mxu0 0.0
    %2613 = vmatprep.subr.mxu0 0.0
    %2614 = vmatpush1.xpose.msra.mxu0 0.0
    %2615 = vmatprep.subr.mxu0 0.0
    %2616 = vmatpush1.xpose.msra.mxu0 0.0
    %2617 = vmatprep.subr.mxu0 0.0
    %2618 = vmatpush1.xpose.msra.mxu0 0.0
    %2619 = vmatprep.subr.mxu0 0.0
    %2620 = vmatpush1.xpose.msra.mxu0 0.0
    %2621 = vmatprep.subr.mxu0 0.0
    %2622 = vmatpush1.xpose.msra.mxu0 0.0
    %2623 = vmatprep.subr.mxu0 0.0
    %2624 = vmatpush1.xpose.msra.mxu0 0.0
    %2625 = vmatprep.subr.mxu0 0.0
    %2626 = vmatpush1.xpose.msra.mxu0 0.0
    %2627 = vmatprep.subr.mxu0 0.0
    %2628 = vmatpush1.xpose.msra.mxu0 0.0
    %2629 = vmatprep.subr.mxu0 0.0
    %2630 = vmatpush1.xpose.msra.mxu0 0.0
    %2631 = vmatprep.subr.mxu0 0.0
    %2632 = vmatpush1.xpose.msra.mxu0 0.0
    %2633 = vmatprep.subr.mxu0 0.0
    %2634 = vmatpush1.xpose.msra.mxu0 0.0
    %2635 = vmatprep.subr.mxu0 0.0
    %2636 = vmatpush1.xpose.msra.mxu0 0.0
    %2637 = vmatprep.subr.mxu0 0.0
    %2638 = vmatpush1.xpose.msra.mxu0 0.0
    %2639 = vmatprep.subr.mxu0 0.0
    %2640 = vmatpush1.xpose.msra.mxu0 0.0
    %2641 = vmatprep.subr.mxu0 0.0
    %2642 = vmatpush1.xpose.msra.mxu0 0.0
    %2643 = vmatprep.subr.mxu0 0.0
    %2644 = vmatpush1.xpose.msra.mxu0 0.0
    %2645 = vmatprep.subr.mxu0 0.0
    %2646 = vmatpush1.xpose.msra.mxu0 0.0
    %2647 = vmatprep.subr.mxu0 0.0
    %2648 = vmatpush1.xpose.msra.mxu0 0.0
    %2649 = vmatprep.subr.mxu0 0.0
    %2650 = vmatpush1.xpose.msra.mxu0 0.0
    %2651 = vmatprep.subr.mxu0 0.0
    %2652 = vmatpush1.xpose.msra.mxu0 0.0
    %2653 = vmatprep.subr.mxu0 0.0
    %2654 = vmatpush1.xpose.msra.mxu0 0.0
    %2655 = vmatprep.subr.mxu0 0.0
    %2656 = vmatpush1.xpose.msra.mxu0 0.0
    %2657 = vmatprep.subr.mxu0 0.0
    %2658 = vmatpush1.xpose.msra.mxu0 0.0
    %2659 = vmatprep.subr.mxu0 0.0
    %2660 = vmatpush1.xpose.msra.mxu0 0.0
    %2661 = vmatprep.subr.mxu0 0.0
    %2662 = vmatpush1.xpose.msra.mxu0 0.0
    %2663 = vmatprep.subr.mxu0 0.0
    %2664 = vmatpush1.xpose.msra.mxu0 0.0
    %2665 = vmatprep.subr.mxu0 0.0
    %2666 = vmatpush1.xpose.msra.mxu0 0.0
    %2667 = vmatprep.subr.mxu0 0.0
    %2668 = vmatpush1.xpose.msra.mxu0 0.0
    %2669 = vmatprep.subr.mxu0 0.0
    %2670 = vmatpush1.xpose.msra.mxu0 0.0
    %2671 = vmatprep.mubr.f32.mxu0 0.0
    %2672 = vmatmul.mubr.f32.gmra.mrb[0].mxu0 %v2602
    %v2673 = vpop.f32.mrb[0].mxu0
    %v2674 = vadd.f32 0.0, %v2673
    %v2675 = vpop.f32.mrb[0].mxu0
    %2676 = vdwg.mxu0
    %v2677 = vmul.f32 %v2674, 0.35355338
    %vm2678 = vcmask 9216
    %v2679 = vsel %vm2678, %v2677, -inf
    %2680 = vmax.xlane.f32.xlu0 %v2679
    %v2681 = vpop.xlane.xlu0 %2680
    %v2682 = vsub.f32 %v2677, %v2681
    %v2683 = vmul.f32 %v2682, 1.442695
    %v2684 = vpow.pop %v2683
    %v2685 = vsel %vm2678, %v2684, 0.0
    %2686 = vadd.xlane.f32.xlu0 %v2685
    %v2687 = vpop.xlane.xlu0 %2686
    %v2688 = vrcp.pop %v2687
    %v2689 = vmul.f32 %v2684, %v2688
    %2690 = vrot.lane.b32.xlu0 %v2597, 96
    %v2691 = vpop.permute.xlu0 %2690
    %vm2692 = vcmask 15360
    %v2694 = vsel %vm2692, %v2689, 0
    %vm2696 = vcmask 1041408
    %v2697 = vsel %vm2696, %v2691, 0
    %2699 = vmatprep.subr.mxu0 0.0
    %2700 = vmatpush1.msra.mxu0 %v2697
    %2701 = vmatprep.subr.mxu0 0.0
    %2702 = vmatpush1.msra.mxu0 0.0
    %2703 = vmatprep.subr.mxu0 0.0
    %2704 = vmatpush1.msra.mxu0 0.0
    %2705 = vmatprep.subr.mxu0 0.0
    %2706 = vmatpush1.msra.mxu0 0.0
    %2707 = vmatprep.subr.mxu0 0.0
    %2708 = vmatpush1.msra.mxu0 0.0
    %2709 = vmatprep.subr.mxu0 0.0
    %2710 = vmatpush1.msra.mxu0 0.0
    %2711 = vmatprep.subr.mxu0 0.0
    %2712 = vmatpush1.msra.mxu0 0.0
    %2713 = vmatprep.subr.mxu0 0.0
    %2714 = vmatpush1.msra.mxu0 0.0
    %2715 = vmatprep.subr.mxu0 0.0
    %2716 = vmatpush1.msra.mxu0 0.0
    %2717 = vmatprep.subr.mxu0 0.0
    %2718 = vmatpush1.msra.mxu0 0.0
    %2719 = vmatprep.subr.mxu0 0.0
    %2720 = vmatpush1.msra.mxu0 0.0
    %2721 = vmatprep.subr.mxu0 0.0
    %2722 = vmatpush1.msra.mxu0 0.0
    %2723 = vmatprep.subr.mxu0 0.0
    %2724 = vmatpush1.msra.mxu0 0.0
    %2725 = vmatprep.subr.mxu0 0.0
    %2726 = vmatpush1.msra.mxu0 0.0
    %2727 = vmatprep.subr.mxu0 0.0
    %2728 = vmatpush1.msra.mxu0 0.0
    %2729 = vmatprep.subr.mxu0 0.0
    %2730 = vmatpush1.msra.mxu0 0.0
    %2731 = vmatprep.subr.mxu0 0.0
    %2732 = vmatpush1.msra.mxu0 0.0
    %2733 = vmatprep.subr.mxu0 0.0
    %2734 = vmatpush1.msra.mxu0 0.0
    %2735 = vmatprep.subr.mxu0 0.0
    %2736 = vmatpush1.msra.mxu0 0.0
    %2737 = vmatprep.subr.mxu0 0.0
    %2738 = vmatpush1.msra.mxu0 0.0
    %2739 = vmatprep.subr.mxu0 0.0
    %2740 = vmatpush1.msra.mxu0 0.0
    %2741 = vmatprep.subr.mxu0 0.0
    %2742 = vmatpush1.msra.mxu0 0.0
    %2743 = vmatprep.subr.mxu0 0.0
    %2744 = vmatpush1.msra.mxu0 0.0
    %2745 = vmatprep.subr.mxu0 0.0
    %2746 = vmatpush1.msra.mxu0 0.0
    %2747 = vmatprep.subr.mxu0 0.0
    %2748 = vmatpush1.msra.mxu0 0.0
    %2749 = vmatprep.subr.mxu0 0.0
    %2750 = vmatpush1.msra.mxu0 0.0
    %2751 = vmatprep.subr.mxu0 0.0
    %2752 = vmatpush1.msra.mxu0 0.0
    %2753 = vmatprep.subr.mxu0 0.0
    %2754 = vmatpush1.msra.mxu0 0.0
    %2755 = vmatprep.subr.mxu0 0.0
    %2756 = vmatpush1.msra.mxu0 0.0
    %2757 = vmatprep.subr.mxu0 0.0
    %2758 = vmatpush1.msra.mxu0 0.0
    %2759 = vmatprep.subr.mxu0 0.0
    %2760 = vmatpush1.msra.mxu0 0.0
    %2761 = vmatprep.subr.mxu0 0.0
    %2762 = vmatpush1.msra.mxu0 0.0
    %2763 = vmatprep.mubr.f32.mxu0 0.0
    %2764 = vmatmul.mubr.f32.gmra.mrb[0].mxu0 %v2694
    %v2765 = vpop.f32.mrb[0].mxu0
    %v2766 = vadd.f32 0.0, %v2765
    %v2767 = vpop.f32.mrb[0].mxu0
    %2768 = vdwg.mxu0
    %2769 = vrot.lane.b32.xlu0 %v2523, 120
    %v2770 = vpop.permute.xlu0 %2769
    %2771 = vrot.lane.b32.xlu0 %v2597, 120
    %v2772 = vpop.permute.xlu0 %2771
    %v2773 = vsel %vm2600, %v2770, 0
    %v2775 = vsel %vm2600, %v2772, 0
    %2777 = vmatprep.subr.mxu0 0.0
    %2778 = vmatpush1.xpose.msra.mxu0 %v2775
    %2779 = vmatprep.subr.mxu0 0.0
    %2780 = vmatpush1.xpose.msra.mxu0 0.0
    %2781 = vmatprep.subr.mxu0 0.0
    %2782 = vmatpush1.xpose.msra.mxu0 0.0
    %2783 = vmatprep.subr.mxu0 0.0
    %2784 = vmatpush1.xpose.msra.mxu0 0.0
    %2785 = vmatprep.subr.mxu0 0.0
    %2786 = vmatpush1.xpose.msra.mxu0 0.0
    %2787 = vmatprep.subr.mxu0 0.0
    %2788 = vmatpush1.xpose.msra.mxu0 0.0
    %2789 = vmatprep.subr.mxu0 0.0
    %2790 = vmatpush1.xpose.msra.mxu0 0.0
    %2791 = vmatprep.subr.mxu0 0.0
    %2792 = vmatpush1.xpose.msra.mxu0 0.0
    %2793 = vmatprep.subr.mxu0 0.0
    %2794 = vmatpush1.xpose.msra.mxu0 0.0
    %2795 = vmatprep.subr.mxu0 0.0
    %2796 = vmatpush1.xpose.msra.mxu0 0.0
    %2797 = vmatprep.subr.mxu0 0.0
    %2798 = vmatpush1.xpose.msra.mxu0 0.0
    %2799 = vmatprep.subr.mxu0 0.0
    %2800 = vmatpush1.xpose.msra.mxu0 0.0
    %2801 = vmatprep.subr.mxu0 0.0
    %2802 = vmatpush1.xpose.msra.mxu0 0.0
    %2803 = vmatprep.subr.mxu0 0.0
    %2804 = vmatpush1.xpose.msra.mxu0 0.0
    %2805 = vmatprep.subr.mxu0 0.0
    %2806 = vmatpush1.xpose.msra.mxu0 0.0
    %2807 = vmatprep.subr.mxu0 0.0
    %2808 = vmatpush1.xpose.msra.mxu0 0.0
    %2809 = vmatprep.subr.mxu0 0.0
    %2810 = vmatpush1.xpose.msra.mxu0 0.0
    %2811 = vmatprep.subr.mxu0 0.0
    %2812 = vmatpush1.xpose.msra.mxu0 0.0
    %2813 = vmatprep.subr.mxu0 0.0
    %2814 = vmatpush1.xpose.msra.mxu0 0.0
    %2815 = vmatprep.subr.mxu0 0.0
    %2816 = vmatpush1.xpose.msra.mxu0 0.0
    %2817 = vmatprep.subr.mxu0 0.0
    %2818 = vmatpush1.xpose.msra.mxu0 0.0
    %2819 = vmatprep.subr.mxu0 0.0
    %2820 = vmatpush1.xpose.msra.mxu0 0.0
    %2821 = vmatprep.subr.mxu0 0.0
    %2822 = vmatpush1.xpose.msra.mxu0 0.0
    %2823 = vmatprep.subr.mxu0 0.0
    %2824 = vmatpush1.xpose.msra.mxu0 0.0
    %2825 = vmatprep.subr.mxu0 0.0
    %2826 = vmatpush1.xpose.msra.mxu0 0.0
    %2827 = vmatprep.subr.mxu0 0.0
    %2828 = vmatpush1.xpose.msra.mxu0 0.0
    %2829 = vmatprep.subr.mxu0 0.0
    %2830 = vmatpush1.xpose.msra.mxu0 0.0
    %2831 = vmatprep.subr.mxu0 0.0
    %2832 = vmatpush1.xpose.msra.mxu0 0.0
    %2833 = vmatprep.subr.mxu0 0.0
    %2834 = vmatpush1.xpose.msra.mxu0 0.0
    %2835 = vmatprep.subr.mxu0 0.0
    %2836 = vmatpush1.xpose.msra.mxu0 0.0
    %2837 = vmatprep.subr.mxu0 0.0
    %2838 = vmatpush1.xpose.msra.mxu0 0.0
    %2839 = vmatprep.subr.mxu0 0.0
    %2840 = vmatpush1.xpose.msra.mxu0 0.0
    %2841 = vmatprep.mubr.f32.mxu0 0.0
    %2842 = vmatmul.mubr.f32.gmra.mrb[0].mxu0 %v2773
    %v2843 = vpop.f32.mrb[0].mxu0
    %v2844 = vadd.f32 0.0, %v2843
    %v2845 = vpop.f32.mrb[0].mxu0
    %2846 = vdwg.mxu0
    %v2847 = vmul.f32 %v2844, 0.35355338
    %v2848 = vsel %vm2678, %v2847, -inf
    %2849 = vmax.xlane.f32.xlu0 %v2848
    %v2850 = vpop.xlane.xlu0 %2849
    %v2851 = vsub.f32 %v2847, %v2850
    %v2852 = vmul.f32 %v2851, 1.442695
    %v2853 = vpow.pop %v2852
    %v2854 = vsel %vm2678, %v2853, 0.0
    %2855 = vadd.xlane.f32.xlu0 %v2854
    %v2856 = vpop.xlane.xlu0 %2855
    %v2857 = vrcp.pop %v2856
    %v2858 = vmul.f32 %v2853, %v2857
    %2859 = vrot.lane.b32.xlu0 %v2597, 88
    %v2860 = vpop.permute.xlu0 %2859
    %v2862 = vsel %vm2692, %v2858, 0
    %v2864 = vsel %vm2696, %v2860, 0
    %2866 = vmatprep.subr.mxu0 0.0
    %2867 = vmatpush1.msra.mxu0 %v2864
    %2868 = vmatprep.subr.mxu0 0.0
    %2869 = vmatpush1.msra.mxu0 0.0
    %2870 = vmatprep.subr.mxu0 0.0
    %2871 = vmatpush1.msra.mxu0 0.0
    %2872 = vmatprep.subr.mxu0 0.0
    %2873 = vmatpush1.msra.mxu0 0.0
    %2874 = vmatprep.subr.mxu0 0.0
    %2875 = vmatpush1.msra.mxu0 0.0
    %2876 = vmatprep.subr.mxu0 0.0
    %2877 = vmatpush1.msra.mxu0 0.0
    %2878 = vmatprep.subr.mxu0 0.0
    %2879 = vmatpush1.msra.mxu0 0.0
    %2880 = vmatprep.subr.mxu0 0.0
    %2881 = vmatpush1.msra.mxu0 0.0
    %2882 = vmatprep.subr.mxu0 0.0
    %2883 = vmatpush1.msra.mxu0 0.0
    %2884 = vmatprep.subr.mxu0 0.0
    %2885 = vmatpush1.msra.mxu0 0.0
    %2886 = vmatprep.subr.mxu0 0.0
    %2887 = vmatpush1.msra.mxu0 0.0
    %2888 = vmatprep.subr.mxu0 0.0
    %2889 = vmatpush1.msra.mxu0 0.0
    %2890 = vmatprep.subr.mxu0 0.0
    %2891 = vmatpush1.msra.mxu0 0.0
    %2892 = vmatprep.subr.mxu0 0.0
    %2893 = vmatpush1.msra.mxu0 0.0
    %2894 = vmatprep.subr.mxu0 0.0
    %2895 = vmatpush1.msra.mxu0 0.0
    %2896 = vmatprep.subr.mxu0 0.0
    %2897 = vmatpush1.msra.mxu0 0.0
    %2898 = vmatprep.subr.mxu0 0.0
    %2899 = vmatpush1.msra.mxu0 0.0
    %2900 = vmatprep.subr.mxu0 0.0
    %2901 = vmatpush1.msra.mxu0 0.0
    %2902 = vmatprep.subr.mxu0 0.0
    %2903 = vmatpush1.msra.mxu0 0.0
    %2904 = vmatprep.subr.mxu0 0.0
    %2905 = vmatpush1.msra.mxu0 0.0
    %2906 = vmatprep.subr.mxu0 0.0
    %2907 = vmatpush1.msra.mxu0 0.0
    %2908 = vmatprep.subr.mxu0 0.0
    %2909 = vmatpush1.msra.mxu0 0.0
    %2910 = vmatprep.subr.mxu0 0.0
    %2911 = vmatpush1.msra.mxu0 0.0
    %2912 = vmatprep.subr.mxu0 0.0
    %2913 = vmatpush1.msra.mxu0 0.0
    %2914 = vmatprep.subr.mxu0 0.0
    %2915 = vmatpush1.msra.mxu0 0.0
    %2916 = vmatprep.subr.mxu0 0.0
    %2917 = vmatpush1.msra.mxu0 0.0
    %2918 = vmatprep.subr.mxu0 0.0
    %2919 = vmatpush1.msra.mxu0 0.0
    %2920 = vmatprep.subr.mxu0 0.0
    %2921 = vmatpush1.msra.mxu0 0.0
    %2922 = vmatprep.subr.mxu0 0.0
    %2923 = vmatpush1.msra.mxu0 0.0
    %2924 = vmatprep.subr.mxu0 0.0
    %2925 = vmatpush1.msra.mxu0 0.0
    %2926 = vmatprep.subr.mxu0 0.0
    %2927 = vmatpush1.msra.mxu0 0.0
    %2928 = vmatprep.subr.mxu0 0.0
    %2929 = vmatpush1.msra.mxu0 0.0
    %2930 = vmatprep.mubr.f32.mxu0 0.0
    %2931 = vmatmul.mubr.f32.gmra.mrb[0].mxu0 %v2862
    %v2932 = vpop.f32.mrb[0].mxu0
    %v2933 = vadd.f32 0.0, %v2932
    %v2934 = vpop.f32.mrb[0].mxu0
    %2935 = vdwg.mxu0
    %2936 = vrot.lane.b32.xlu0 %v2523, 112
    %v2937 = vpop.permute.xlu0 %2936
    %2938 = vrot.lane.b32.xlu0 %v2597, 112
    %v2939 = vpop.permute.xlu0 %2938
    %v2940 = vsel %vm2600, %v2937, 0
    %v2942 = vsel %vm2600, %v2939, 0
    %2944 = vmatprep.subr.mxu0 0.0
    %2945 = vmatpush1.xpose.msra.mxu0 %v2942
    %2946 = vmatprep.subr.mxu0 0.0
    %2947 = vmatpush1.xpose.msra.mxu0 0.0
    %2948 = vmatprep.subr.mxu0 0.0
    %2949 = vmatpush1.xpose.msra.mxu0 0.0
    %2950 = vmatprep.subr.mxu0 0.0
    %2951 = vmatpush1.xpose.msra.mxu0 0.0
    %2952 = vmatprep.subr.mxu0 0.0
    %2953 = vmatpush1.xpose.msra.mxu0 0.0
    %2954 = vmatprep.subr.mxu0 0.0
    %2955 = vmatpush1.xpose.msra.mxu0 0.0
    %2956 = vmatprep.subr.mxu0 0.0
    %2957 = vmatpush1.xpose.msra.mxu0 0.0
    %2958 = vmatprep.subr.mxu0 0.0
    %2959 = vmatpush1.xpose.msra.mxu0 0.0
    %2960 = vmatprep.subr.mxu0 0.0
    %2961 = vmatpush1.xpose.msra.mxu0 0.0
    %2962 = vmatprep.subr.mxu0 0.0
    %2963 = vmatpush1.xpose.msra.mxu0 0.0
    %2964 = vmatprep.subr.mxu0 0.0
    %2965 = vmatpush1.xpose.msra.mxu0 0.0
    %2966 = vmatprep.subr.mxu0 0.0
    %2967 = vmatpush1.xpose.msra.mxu0 0.0
    %2968 = vmatprep.subr.mxu0 0.0
    %2969 = vmatpush1.xpose.msra.mxu0 0.0
    %2970 = vmatprep.subr.mxu0 0.0
    %2971 = vmatpush1.xpose.msra.mxu0 0.0
    %2972 = vmatprep.subr.mxu0 0.0
    %2973 = vmatpush1.xpose.msra.mxu0 0.0
    %2974 = vmatprep.subr.mxu0 0.0
    %2975 = vmatpush1.xpose.msra.mxu0 0.0
    %2976 = vmatprep.subr.mxu0 0.0
    %2977 = vmatpush1.xpose.msra.mxu0 0.0
    %2978 = vmatprep.subr.mxu0 0.0
    %2979 = vmatpush1.xpose.msra.mxu0 0.0
    %2980 = vmatprep.subr.mxu0 0.0
    %2981 = vmatpush1.xpose.msra.mxu0 0.0
    %2982 = vmatprep.subr.mxu0 0.0
    %2983 = vmatpush1.xpose.msra.mxu0 0.0
    %2984 = vmatprep.subr.mxu0 0.0
    %2985 = vmatpush1.xpose.msra.mxu0 0.0
    %2986 = vmatprep.subr.mxu0 0.0
    %2987 = vmatpush1.xpose.msra.mxu0 0.0
    %2988 = vmatprep.subr.mxu0 0.0
    %2989 = vmatpush1.xpose.msra.mxu0 0.0
    %2990 = vmatprep.subr.mxu0 0.0
    %2991 = vmatpush1.xpose.msra.mxu0 0.0
    %2992 = vmatprep.subr.mxu0 0.0
    %2993 = vmatpush1.xpose.msra.mxu0 0.0
    %2994 = vmatprep.subr.mxu0 0.0
    %2995 = vmatpush1.xpose.msra.mxu0 0.0
    %2996 = vmatprep.subr.mxu0 0.0
    %2997 = vmatpush1.xpose.msra.mxu0 0.0
    %2998 = vmatprep.subr.mxu0 0.0
    %2999 = vmatpush1.xpose.msra.mxu0 0.0
    %3000 = vmatprep.subr.mxu0 0.0
    %3001 = vmatpush1.xpose.msra.mxu0 0.0
    %3002 = vmatprep.subr.mxu0 0.0
    %3003 = vmatpush1.xpose.msra.mxu0 0.0
    %3004 = vmatprep.subr.mxu0 0.0
    %3005 = vmatpush1.xpose.msra.mxu0 0.0
    %3006 = vmatprep.subr.mxu0 0.0
    %3007 = vmatpush1.xpose.msra.mxu0 0.0
    %3008 = vmatprep.mubr.f32.mxu0 0.0
    %3009 = vmatmul.mubr.f32.gmra.mrb[0].mxu0 %v2940
    %v3010 = vpop.f32.mrb[0].mxu0
    %v3011 = vadd.f32 0.0, %v3010
    %v3012 = vpop.f32.mrb[0].mxu0
    %3013 = vdwg.mxu0
    %v3014 = vmul.f32 %v3011, 0.35355338
    %v3015 = vsel %vm2678, %v3014, -inf
    %3016 = vmax.xlane.f32.xlu0 %v3015
    %v3017 = vpop.xlane.xlu0 %3016
    %v3018 = vsub.f32 %v3014, %v3017
    %v3019 = vmul.f32 %v3018, 1.442695
    %v3020 = vpow.pop %v3019
    %v3021 = vsel %vm2678, %v3020, 0.0
    %3022 = vadd.xlane.f32.xlu0 %v3021
    %v3023 = vpop.xlane.xlu0 %3022
    %v3024 = vrcp.pop %v3023
    %v3025 = vmul.f32 %v3020, %v3024
    %3026 = vrot.lane.b32.xlu0 %v2597, 80
    %v3027 = vpop.permute.xlu0 %3026
    %v3029 = vsel %vm2692, %v3025, 0
    %v3031 = vsel %vm2696, %v3027, 0
    %3033 = vmatprep.subr.mxu0 0.0
    %3034 = vmatpush1.msra.mxu0 %v3031
    %3035 = vmatprep.subr.mxu0 0.0
    %3036 = vmatpush1.msra.mxu0 0.0
    %3037 = vmatprep.subr.mxu0 0.0
    %3038 = vmatpush1.msra.mxu0 0.0
    %3039 = vmatprep.subr.mxu0 0.0
    %3040 = vmatpush1.msra.mxu0 0.0
    %3041 = vmatprep.subr.mxu0 0.0
    %3042 = vmatpush1.msra.mxu0 0.0
    %3043 = vmatprep.subr.mxu0 0.0
    %3044 = vmatpush1.msra.mxu0 0.0
    %3045 = vmatprep.subr.mxu0 0.0
    %3046 = vmatpush1.msra.mxu0 0.0
    %3047 = vmatprep.subr.mxu0 0.0
    %3048 = vmatpush1.msra.mxu0 0.0
    %3049 = vmatprep.subr.mxu0 0.0
    %3050 = vmatpush1.msra.mxu0 0.0
    %3051 = vmatprep.subr.mxu0 0.0
    %3052 = vmatpush1.msra.mxu0 0.0
    %3053 = vmatprep.subr.mxu0 0.0
    %3054 = vmatpush1.msra.mxu0 0.0
    %3055 = vmatprep.subr.mxu0 0.0
    %3056 = vmatpush1.msra.mxu0 0.0
    %3057 = vmatprep.subr.mxu0 0.0
    %3058 = vmatpush1.msra.mxu0 0.0
    %3059 = vmatprep.subr.mxu0 0.0
    %3060 = vmatpush1.msra.mxu0 0.0
    %3061 = vmatprep.subr.mxu0 0.0
    %3062 = vmatpush1.msra.mxu0 0.0
    %3063 = vmatprep.subr.mxu0 0.0
    %3064 = vmatpush1.msra.mxu0 0.0
    %3065 = vmatprep.subr.mxu0 0.0
    %3066 = vmatpush1.msra.mxu0 0.0
    %3067 = vmatprep.subr.mxu0 0.0
    %3068 = vmatpush1.msra.mxu0 0.0
    %3069 = vmatprep.subr.mxu0 0.0
    %3070 = vmatpush1.msra.mxu0 0.0
    %3071 = vmatprep.subr.mxu0 0.0
    %3072 = vmatpush1.msra.mxu0 0.0
    %3073 = vmatprep.subr.mxu0 0.0
    %3074 = vmatpush1.msra.mxu0 0.0
    %3075 = vmatprep.subr.mxu0 0.0
    %3076 = vmatpush1.msra.mxu0 0.0
    %3077 = vmatprep.subr.mxu0 0.0
    %3078 = vmatpush1.msra.mxu0 0.0
    %3079 = vmatprep.subr.mxu0 0.0
    %3080 = vmatpush1.msra.mxu0 0.0
    %3081 = vmatprep.subr.mxu0 0.0
    %3082 = vmatpush1.msra.mxu0 0.0
    %3083 = vmatprep.subr.mxu0 0.0
    %3084 = vmatpush1.msra.mxu0 0.0
    %3085 = vmatprep.subr.mxu0 0.0
    %3086 = vmatpush1.msra.mxu0 0.0
    %3087 = vmatprep.subr.mxu0 0.0
    %3088 = vmatpush1.msra.mxu0 0.0
    %3089 = vmatprep.subr.mxu0 0.0
    %3090 = vmatpush1.msra.mxu0 0.0
    %3091 = vmatprep.subr.mxu0 0.0
    %3092 = vmatpush1.msra.mxu0 0.0
    %3093 = vmatprep.subr.mxu0 0.0
    %3094 = vmatpush1.msra.mxu0 0.0
    %3095 = vmatprep.subr.mxu0 0.0
    %3096 = vmatpush1.msra.mxu0 0.0
    %3097 = vmatprep.mubr.f32.mxu0 0.0
    %3098 = vmatmul.mubr.f32.gmra.mrb[0].mxu0 %v3029
    %v3099 = vpop.f32.mrb[0].mxu0
    %v3100 = vadd.f32 0.0, %v3099
    %v3101 = vpop.f32.mrb[0].mxu0
    %3102 = vdwg.mxu0
    %3103 = vrot.lane.b32.xlu0 %v2523, 104
    %v3104 = vpop.permute.xlu0 %3103
    %3105 = vrot.lane.b32.xlu0 %v2597, 104
    %v3106 = vpop.permute.xlu0 %3105
    %v3107 = vsel %vm2600, %v3104, 0
    %v3109 = vsel %vm2600, %v3106, 0
    %3111 = vmatprep.subr.mxu0 0.0
    %3112 = vmatpush1.xpose.msra.mxu0 %v3109
    %3113 = vmatprep.subr.mxu0 0.0
    %3114 = vmatpush1.xpose.msra.mxu0 0.0
    %3115 = vmatprep.subr.mxu0 0.0
    %3116 = vmatpush1.xpose.msra.mxu0 0.0
    %3117 = vmatprep.subr.mxu0 0.0
    %3118 = vmatpush1.xpose.msra.mxu0 0.0
    %3119 = vmatprep.subr.mxu0 0.0
    %3120 = vmatpush1.xpose.msra.mxu0 0.0
    %3121 = vmatprep.subr.mxu0 0.0
    %3122 = vmatpush1.xpose.msra.mxu0 0.0
    %3123 = vmatprep.subr.mxu0 0.0
    %3124 = vmatpush1.xpose.msra.mxu0 0.0
    %3125 = vmatprep.subr.mxu0 0.0
    %3126 = vmatpush1.xpose.msra.mxu0 0.0
    %3127 = vmatprep.subr.mxu0 0.0
    %3128 = vmatpush1.xpose.msra.mxu0 0.0
    %3129 = vmatprep.subr.mxu0 0.0
    %3130 = vmatpush1.xpose.msra.mxu0 0.0
    %3131 = vmatprep.subr.mxu0 0.0
    %3132 = vmatpush1.xpose.msra.mxu0 0.0
    %3133 = vmatprep.subr.mxu0 0.0
    %3134 = vmatpush1.xpose.msra.mxu0 0.0
    %3135 = vmatprep.subr.mxu0 0.0
    %3136 = vmatpush1.xpose.msra.mxu0 0.0
    %3137 = vmatprep.subr.mxu0 0.0
    %3138 = vmatpush1.xpose.msra.mxu0 0.0
    %3139 = vmatprep.subr.mxu0 0.0
    %3140 = vmatpush1.xpose.msra.mxu0 0.0
    %3141 = vmatprep.subr.mxu0 0.0
    %3142 = vmatpush1.xpose.msra.mxu0 0.0
    %3143 = vmatprep.subr.mxu0 0.0
    %3144 = vmatpush1.xpose.msra.mxu0 0.0
    %3145 = vmatprep.subr.mxu0 0.0
    %3146 = vmatpush1.xpose.msra.mxu0 0.0
    %3147 = vmatprep.subr.mxu0 0.0
    %3148 = vmatpush1.xpose.msra.mxu0 0.0
    %3149 = vmatprep.subr.mxu0 0.0
    %3150 = vmatpush1.xpose.msra.mxu0 0.0
    %3151 = vmatprep.subr.mxu0 0.0
    %3152 = vmatpush1.xpose.msra.mxu0 0.0
    %3153 = vmatprep.subr.mxu0 0.0
    %3154 = vmatpush1.xpose.msra.mxu0 0.0
    %3155 = vmatprep.subr.mxu0 0.0
    %3156 = vmatpush1.xpose.msra.mxu0 0.0
    %3157 = vmatprep.subr.mxu0 0.0
    %3158 = vmatpush1.xpose.msra.mxu0 0.0
    %3159 = vmatprep.subr.mxu0 0.0
    %3160 = vmatpush1.xpose.msra.mxu0 0.0
    %3161 = vmatprep.subr.mxu0 0.0
    %3162 = vmatpush1.xpose.msra.mxu0 0.0
    %3163 = vmatprep.subr.mxu0 0.0
    %3164 = vmatpush1.xpose.msra.mxu0 0.0
    %3165 = vmatprep.subr.mxu0 0.0
    %3166 = vmatpush1.xpose.msra.mxu0 0.0
    %3167 = vmatprep.subr.mxu0 0.0
    %3168 = vmatpush1.xpose.msra.mxu0 0.0
    %3169 = vmatprep.subr.mxu0 0.0
    %3170 = vmatpush1.xpose.msra.mxu0 0.0
    %3171 = vmatprep.subr.mxu0 0.0
    %3172 = vmatpush1.xpose.msra.mxu0 0.0
    %3173 = vmatprep.subr.mxu0 0.0
    %3174 = vmatpush1.xpose.msra.mxu0 0.0
    %3175 = vmatprep.mubr.f32.mxu0 0.0
    %3176 = vmatmul.mubr.f32.gmra.mrb[0].mxu0 %v3107
    %v3177 = vpop.f32.mrb[0].mxu0
    %v3178 = vadd.f32 0.0, %v3177
    %v3179 = vpop.f32.mrb[0].mxu0
    %3180 = vdwg.mxu0
    %v3181 = vmul.f32 %v3178, 0.35355338
    %v3182 = vsel %vm2678, %v3181, -inf
    %3183 = vmax.xlane.f32.xlu0 %v3182
    %v3184 = vpop.xlane.xlu0 %3183
    %v3185 = vsub.f32 %v3181, %v3184
    %v3186 = vmul.f32 %v3185, 1.442695
    %v3187 = vpow.pop %v3186
    %v3188 = vsel %vm2678, %v3187, 0.0
    %3189 = vadd.xlane.f32.xlu0 %v3188
    %v3190 = vpop.xlane.xlu0 %3189
    %v3191 = vrcp.pop %v3190
    %v3192 = vmul.f32 %v3187, %v3191
    %3193 = vrot.lane.b32.xlu0 %v2597, 72
    %v3194 = vpop.permute.xlu0 %3193
    %v3196 = vsel %vm2692, %v3192, 0
    %v3198 = vsel %vm2696, %v3194, 0
    %3200 = vmatprep.subr.mxu0 0.0
    %3201 = vmatpush1.msra.mxu0 %v3198
    %3202 = vmatprep.subr.mxu0 0.0
    %3203 = vmatpush1.msra.mxu0 0.0
    %3204 = vmatprep.subr.mxu0 0.0
    %3205 = vmatpush1.msra.mxu0 0.0
    %3206 = vmatprep.subr.mxu0 0.0
    %3207 = vmatpush1.msra.mxu0 0.0
    %3208 = vmatprep.subr.mxu0 0.0
    %3209 = vmatpush1.msra.mxu0 0.0
    %3210 = vmatprep.subr.mxu0 0.0
    %3211 = vmatpush1.msra.mxu0 0.0
    %3212 = vmatprep.subr.mxu0 0.0
    %3213 = vmatpush1.msra.mxu0 0.0
    %3214 = vmatprep.subr.mxu0 0.0
    %3215 = vmatpush1.msra.mxu0 0.0
    %3216 = vmatprep.subr.mxu0 0.0
    %3217 = vmatpush1.msra.mxu0 0.0
    %3218 = vmatprep.subr.mxu0 0.0
    %3219 = vmatpush1.msra.mxu0 0.0
    %3220 = vmatprep.subr.mxu0 0.0
    %3221 = vmatpush1.msra.mxu0 0.0
    %3222 = vmatprep.subr.mxu0 0.0
    %3223 = vmatpush1.msra.mxu0 0.0
    %3224 = vmatprep.subr.mxu0 0.0
    %3225 = vmatpush1.msra.mxu0 0.0
    %3226 = vmatprep.subr.mxu0 0.0
    %3227 = vmatpush1.msra.mxu0 0.0
    %3228 = vmatprep.subr.mxu0 0.0
    %3229 = vmatpush1.msra.mxu0 0.0
    %3230 = vmatprep.subr.mxu0 0.0
    %3231 = vmatpush1.msra.mxu0 0.0
    %3232 = vmatprep.subr.mxu0 0.0
    %3233 = vmatpush1.msra.mxu0 0.0
    %3234 = vmatprep.subr.mxu0 0.0
    %3235 = vmatpush1.msra.mxu0 0.0
    %3236 = vmatprep.subr.mxu0 0.0
    %3237 = vmatpush1.msra.mxu0 0.0
    %3238 = vmatprep.subr.mxu0 0.0
    %3239 = vmatpush1.msra.mxu0 0.0
    %3240 = vmatprep.subr.mxu0 0.0
    %3241 = vmatpush1.msra.mxu0 0.0
    %3242 = vmatprep.subr.mxu0 0.0
    %3243 = vmatpush1.msra.mxu0 0.0
    %3244 = vmatprep.subr.mxu0 0.0
    %3245 = vmatpush1.msra.mxu0 0.0
    %3246 = vmatprep.subr.mxu0 0.0
    %3247 = vmatpush1.msra.mxu0 0.0
    %3248 = vmatprep.subr.mxu0 0.0
    %3249 = vmatpush1.msra.mxu0 0.0
    %3250 = vmatprep.subr.mxu0 0.0
    %3251 = vmatpush1.msra.mxu0 0.0
    %3252 = vmatprep.subr.mxu0 0.0
    %3253 = vmatpush1.msra.mxu0 0.0
    %3254 = vmatprep.subr.mxu0 0.0
    %3255 = vmatpush1.msra.mxu0 0.0
    %3256 = vmatprep.subr.mxu0 0.0
    %3257 = vmatpush1.msra.mxu0 0.0
    %3258 = vmatprep.subr.mxu0 0.0
    %3259 = vmatpush1.msra.mxu0 0.0
    %3260 = vmatprep.subr.mxu0 0.0
    %3261 = vmatpush1.msra.mxu0 0.0
    %3262 = vmatprep.subr.mxu0 0.0
    %3263 = vmatpush1.msra.mxu0 0.0
    %3264 = vmatprep.mubr.f32.mxu0 0.0
    %3265 = vmatmul.mubr.f32.gmra.mrb[0].mxu0 %v3196
    %v3266 = vpop.f32.mrb[0].mxu0
    %v3267 = vadd.f32 0.0, %v3266
    %v3268 = vpop.f32.mrb[0].mxu0
    %3269 = vdwg.mxu0
    %3271 = vrot.lane.b32.xlu0 %v2933, 8
    %v3272 = vpop.permute.xlu0 %3271
    %3275 = vrot.lane.b32.xlu0 %v3100, 16
    %v3276 = vpop.permute.xlu0 %3275
    %3279 = vrot.lane.b32.xlu0 %v3267, 24
    %v3280 = vpop.permute.xlu0 %3279
    %v3282 = vsel %vm2600, %v2766, %v3272
    %vm3283 = vcmask 130048
    %v3284 = vsel %vm3283, %v3282, %v3276
    %vm3285 = vcmask 195584
    %v3286 = vsel %vm3285, %v3284, %v3280
    %v3287 = vld [vmem:[#allocation34] sm:$0xff]
    %v3288 = vld [vmem:[#allocation34 + $0x8] sm:$0xff]
    %v3289 = vld [vmem:[#allocation34 + $0x10] sm:$0xff]
    %v3290 = vld [vmem:[#allocation34 + $0x18] sm:$0xff]
    %v3292 = vsel %vm1107, %v3286, 0
    %3294 = vmatprep.subr.mxu0 0.0
    %3295 = vmatpush1.msra.mxu0 %v3287
    %3296 = vmatprep.subr.mxu0 0.0
    %3297 = vmatpush1.msra.mxu0 %v3288
    %3298 = vmatprep.subr.mxu0 0.0
    %3299 = vmatpush1.msra.mxu0 %v3289
    %3300 = vmatprep.subr.mxu0 0.0
    %3301 = vmatpush1.msra.mxu0 %v3290
    %3302 = vmatprep.subr.mxu0 0.0
    %3303 = vmatpush1.msra.mxu0 0.0
    %3304 = vmatprep.subr.mxu0 0.0
    %3305 = vmatpush1.msra.mxu0 0.0
    %3306 = vmatprep.subr.mxu0 0.0
    %3307 = vmatpush1.msra.mxu0 0.0
    %3308 = vmatprep.subr.mxu0 0.0
    %3309 = vmatpush1.msra.mxu0 0.0
    %3310 = vmatprep.subr.mxu0 0.0
    %3311 = vmatpush1.msra.mxu0 0.0
    %3312 = vmatprep.subr.mxu0 0.0
    %3313 = vmatpush1.msra.mxu0 0.0
    %3314 = vmatprep.subr.mxu0 0.0
    %3315 = vmatpush1.msra.mxu0 0.0
    %3316 = vmatprep.subr.mxu0 0.0
    %3317 = vmatpush1.msra.mxu0 0.0
    %3318 = vmatprep.subr.mxu0 0.0
    %3319 = vmatpush1.msra.mxu0 0.0
    %3320 = vmatprep.subr.mxu0 0.0
    %3321 = vmatpush1.msra.mxu0 0.0
    %3322 = vmatprep.subr.mxu0 0.0
    %3323 = vmatpush1.msra.mxu0 0.0
    %3324 = vmatprep.subr.mxu0 0.0
    %3325 = vmatpush1.msra.mxu0 0.0
    %3326 = vmatprep.subr.mxu0 0.0
    %3327 = vmatpush1.msra.mxu0 0.0
    %3328 = vmatprep.subr.mxu0 0.0
    %3329 = vmatpush1.msra.mxu0 0.0
    %3330 = vmatprep.subr.mxu0 0.0
    %3331 = vmatpush1.msra.mxu0 0.0
    %3332 = vmatprep.subr.mxu0 0.0
    %3333 = vmatpush1.msra.mxu0 0.0
    %3334 = vmatprep.subr.mxu0 0.0
    %3335 = vmatpush1.msra.mxu0 0.0
    %3336 = vmatprep.subr.mxu0 0.0
    %3337 = vmatpush1.msra.mxu0 0.0
    %3338 = vmatprep.subr.mxu0 0.0
    %3339 = vmatpush1.msra.mxu0 0.0
    %3340 = vmatprep.subr.mxu0 0.0
    %3341 = vmatpush1.msra.mxu0 0.0
    %3342 = vmatprep.subr.mxu0 0.0
    %3343 = vmatpush1.msra.mxu0 0.0
    %3344 = vmatprep.subr.mxu0 0.0
    %3345 = vmatpush1.msra.mxu0 0.0
    %3346 = vmatprep.subr.mxu0 0.0
    %3347 = vmatpush1.msra.mxu0 0.0
    %3348 = vmatprep.subr.mxu0 0.0
    %3349 = vmatpush1.msra.mxu0 0.0
    %3350 = vmatprep.subr.mxu0 0.0
    %3351 = vmatpush1.msra.mxu0 0.0
    %3352 = vmatprep.subr.mxu0 0.0
    %3353 = vmatpush1.msra.mxu0 0.0
    %3354 = vmatprep.subr.mxu0 0.0
    %3355 = vmatpush1.msra.mxu0 0.0
    %3356 = vmatprep.subr.mxu0 0.0
    %3357 = vmatpush1.msra.mxu0 0.0
    %3358 = vmatprep.mubr.f32.mxu0 0.0
    %3359 = vmatmul.mubr.f32.gmra.mrb[0].mxu0 %v3292
    %v3360 = vpop.f32.mrb[0].mxu0
    %v3361 = vadd.f32 0.0, %v3360
    %v3362 = vpop.f32.mrb[0].mxu0
    %3363 = vdwg.mxu0
    %v3364 = vadd.f32 %v2415, %v3361
    %v3365 = vld [vmem:[#allocation35] sm:$0x1]
    %v3367 = vlaneseq
    %v3368 = vshrl.u32 %v3367, 7
    %v3369 = vsub.s32 0, %v3368
    %v3370 = vrot.slane %v3365, %v3369
    %v3372 = vadd.f32 %v3364, %v3370
    %v3373 = vsel %vm2418, %v3372, 0.0
    %3374 = vadd.xlane.f32.xlu0 %v3373
    %v3375 = vpop.xlane.xlu0 %3374
    %v3376 = vmul.f32 %v3375, %v2422
    %v3377 = vsub.f32 %v3372, %v3376
    %v3378 = vmul.f32 %v3377, %v3377
    %v3379 = vsel %vm2418, %v3378, 0.0
    %3380 = vadd.xlane.f32.xlu0 %v3379
    %v3381 = vpop.xlane.xlu0 %3380
    %v3382 = vmul.f32 %v3381, %v2422
    %v3383 = vadd.f32 %v3382, 1e-05
    %v3384 = vrsqrt.pop %v3383
    %v3385 = vmul.f32 %v3377, %v3384
    %v3386 = vld [vmem:[#allocation37] sm:$0x1]
    %v3388 = vlaneseq
    %v3389 = vshrl.u32 %v3388, 7
    %v3390 = vsub.s32 0, %v3389
    %v3391 = vrot.slane %v3386, %v3390
    %v3393 = vmul.f32 %v3385, %v3391
    %v3394 = vld [vmem:[#allocation38] sm:$0x1]
    %v3396 = vlaneseq
    %v3397 = vshrl.u32 %v3396, 7
    %v3398 = vsub.s32 0, %v3397
    %v3399 = vrot.slane %v3394, %v3398
    %v3401 = vadd.f32 %v3393, %v3399
    %v3402 = vld [vmem:[%s61] sm:$0xff]
    %v3403 = vld [vmem:[%s61 + $0x8] sm:$0xff]
    %v3404 = vld [vmem:[%s61 + $0x10] sm:$0xff]
    %v3405 = vld [vmem:[%s61 + $0x18] sm:$0xff]
    %v3407 = vsel %vm1107, %v3401, 0
    %3409 = vmatprep.subr.mxu0 0.0
    %3410 = vmatpush1.msra.mxu0 %v3402
    %3411 = vmatprep.subr.mxu0 0.0
    %3412 = vmatpush1.msra.mxu0 %v3403
    %3413 = vmatprep.subr.mxu0 0.0
    %3414 = vmatpush1.msra.mxu0 %v3404
    %3415 = vmatprep.subr.mxu0 0.0
    %3416 = vmatpush1.msra.mxu0 %v3405
    %3417 = vmatprep.subr.mxu0 0.0
    %3418 = vmatpush1.msra.mxu0 0.0
    %3419 = vmatprep.subr.mxu0 0.0
    %3420 = vmatpush1.msra.mxu0 0.0
    %3421 = vmatprep.subr.mxu0 0.0
    %3422 = vmatpush1.msra.mxu0 0.0
    %3423 = vmatprep.subr.mxu0 0.0
    %3424 = vmatpush1.msra.mxu0 0.0
    %3425 = vmatprep.subr.mxu0 0.0
    %3426 = vmatpush1.msra.mxu0 0.0
    %3427 = vmatprep.subr.mxu0 0.0
    %3428 = vmatpush1.msra.mxu0 0.0
    %3429 = vmatprep.subr.mxu0 0.0
    %3430 = vmatpush1.msra.mxu0 0.0
    %3431 = vmatprep.subr.mxu0 0.0
    %3432 = vmatpush1.msra.mxu0 0.0
    %3433 = vmatprep.subr.mxu0 0.0
    %3434 = vmatpush1.msra.mxu0 0.0
    %3435 = vmatprep.subr.mxu0 0.0
    %3436 = vmatpush1.msra.mxu0 0.0
    %3437 = vmatprep.subr.mxu0 0.0
    %3438 = vmatpush1.msra.mxu0 0.0
    %3439 = vmatprep.subr.mxu0 0.0
    %3440 = vmatpush1.msra.mxu0 0.0
    %3441 = vmatprep.subr.mxu0 0.0
    %3442 = vmatpush1.msra.mxu0 0.0
    %3443 = vmatprep.subr.mxu0 0.0
    %3444 = vmatpush1.msra.mxu0 0.0
    %3445 = vmatprep.subr.mxu0 0.0
    %3446 = vmatpush1.msra.mxu0 0.0
    %3447 = vmatprep.subr.mxu0 0.0
    %3448 = vmatpush1.msra.mxu0 0.0
    %3449 = vmatprep.subr.mxu0 0.0
    %3450 = vmatpush1.msra.mxu0 0.0
    %3451 = vmatprep.subr.mxu0 0.0
    %3452 = vmatpush1.msra.mxu0 0.0
    %3453 = vmatprep.subr.mxu0 0.0
    %3454 = vmatpush1.msra.mxu0 0.0
    %3455 = vmatprep.subr.mxu0 0.0
    %3456 = vmatpush1.msra.mxu0 0.0
    %3457 = vmatprep.subr.mxu0 0.0
    %3458 = vmatpush1.msra.mxu0 0.0
    %3459 = vmatprep.subr.mxu0 0.0
    %3460 = vmatpush1.msra.mxu0 0.0
    %3461 = vmatprep.subr.mxu0 0.0
    %3462 = vmatpush1.msra.mxu0 0.0
    %3463 = vmatprep.subr.mxu0 0.0
    %3464 = vmatpush1.msra.mxu0 0.0
    %3465 = vmatprep.subr.mxu0 0.0
    %3466 = vmatpush1.msra.mxu0 0.0
    %3467 = vmatprep.subr.mxu0 0.0
    %3468 = vmatpush1.msra.mxu0 0.0
    %3469 = vmatprep.subr.mxu0 0.0
    %3470 = vmatpush1.msra.mxu0 0.0
    %3471 = vmatprep.subr.mxu0 0.0
    %3472 = vmatpush1.msra.mxu0 0.0
    %3473 = vmatprep.mubr.f32.mxu0 0.0
    %3474 = vmatmul.mubr.f32.gmra.mrb[0].mxu0 %v3407
    %v3475 = vpop.f32.mrb[0].mxu0
    %v3476 = vadd.f32 0.0, %v3475
    %v3477 = vpop.f32.mrb[0].mxu0
    %3478 = vdwg.mxu0
    %v3479 = vlaneseq
    %v3480 = vand.u32 %v3479, 127
    %v3481 = vcvt.s32.f32 %v3480
    %vm3482 = vcmask 50176
    %v3483 = vsel %vm3482, %v3476, -inf
    %3484 = vmax.xlane.f32.xlu0 %v3483
    %v3485 = vpop.xlane.xlu0 %3484
    %vm3486 = vcmp.ge.f32.partialorder %v3476, %v3485
    %v3487 = vsel %vm3486, %v3481, 7.0
    %v3488 = vsel %vm3482, %v3487, inf
    %3489 = vmin.xlane.f32.xlu0 %v3488
    %v3490 = vpop.xlane.xlu0 %3489
    %vm3491 = vcmp.eq.f32.partialorder %v3481, %v3490
    %v3492 = vsel %vm3491, -inf, %v3476
    %v3493 = vsel %vm3482, %v3492, -inf
    %3494 = vmax.xlane.f32.xlu0 %v3493
    %v3495 = vpop.xlane.xlu0 %3494
    %vm3496 = vcmp.ge.f32.partialorder %v3492, %v3495
    %v3497 = vsel %vm3496, %v3481, 7.0
    %v3498 = vsel %vm3482, %v3497, inf
    %3499 = vmin.xlane.f32.xlu0 %v3498
    %v3500 = vpop.xlane.xlu0 %3499
    %vm3501 = vcmp.eq.f32.partialorder %v3481, %v3500
    %v3502 = vsel %vm3491, 1, 0
    %v3503 = vcvt.s32.f32 %v3502
    %v3504 = vsel %vm3501, 1, 0
    %v3505 = vcvt.s32.f32 %v3504
    %v3506 = vadd.f32 %v3503, %v3505
    %v3507 = vrcp.pop 2.0
    %v3508 = vmul.f32 %v3506, %v3507
    %v3509 = vld [vmem:[#allocation40] sm:$0xff]
    %v3510 = vld [vmem:[#allocation40 + $0x8] sm:$0xff]
    %v3511 = vld [vmem:[#allocation40 + $0x10] sm:$0xff]
    %v3512 = vld [vmem:[#allocation40 + $0x18] sm:$0xff]
    %v3513 = vld [vmem:[#allocation40 + $0x20] sm:$0xff]
    %v3514 = vld [vmem:[#allocation40 + $0x28] sm:$0xff]
    %v3515 = vld [vmem:[#allocation40 + $0x30] sm:$0xff]
    %v3516 = vld [vmem:[#allocation40 + $0x38] sm:$0xff]
    %v3517 = vld [vmem:[#allocation40 + $0x40] sm:$0xff]
    %v3518 = vld [vmem:[#allocation40 + $0x48] sm:$0xff]
    %v3519 = vld [vmem:[#allocation40 + $0x50] sm:$0xff]
    %v3520 = vld [vmem:[#allocation40 + $0x58] sm:$0xff]
    %v3521 = vld [vmem:[#allocation40 + $0x60] sm:$0xff]
    %v3522 = vld [vmem:[#allocation40 + $0x68] sm:$0xff]
    %v3523 = vld [vmem:[#allocation40 + $0x70] sm:$0xff]
    %v3524 = vld [vmem:[#allocation40 + $0x78] sm:$0xff]
    %v3525 = vld [vmem:[#allocation41] sm:$0xf]
    %v3527 = vlaneseq
    %v3528 = vshrl.u32 %v3527, 7
    %v3529 = vsub.s32 0, %v3528
    %v3530 = vrot.slane %v3525, %v3529
    %v3531 = vlaneseq
    %v3532 = vshrl.u32 %v3531, 7
    %v3533 = vsub.s32 1, %v3532
    %v3534 = vrot.slane %v3525, %v3533
    %v3535 = vlaneseq
    %v3536 = vshrl.u32 %v3535, 7
    %v3537 = vsub.s32 2, %v3536
    %v3538 = vrot.slane %v3525, %v3537
    %v3539 = vlaneseq
    %v3540 = vshrl.u32 %v3539, 7
    %v3541 = vsub.s32 3, %v3540
    %v3542 = vrot.slane %v3525, %v3541
    %3547 = vmatprep.subr.mxu0 %v3510
    %3548 = vmatpush1.msra.mxu0 %v3509
    %3549 = vmatprep.subr.mxu0 %v3514
    %3550 = vmatpush1.msra.mxu0 %v3513
    %3551 = vmatprep.subr.mxu0 %v3518
    %3552 = vmatpush1.msra.mxu0 %v3517
    %3553 = vmatprep.subr.mxu0 %v3522
    %3554 = vmatpush1.msra.mxu0 %v3521
    %3555 = vmatprep.subr.mxu0 0.0
    %3556 = vmatpush1.msra.mxu0 0.0
    %3557 = vmatprep.subr.mxu0 0.0
    %3558 = vmatpush1.msra.mxu0 0.0
    %3559 = vmatprep.subr.mxu0 0.0
    %3560 = vmatpush1.msra.mxu0 0.0
    %3561 = vmatprep.subr.mxu0 0.0
    %3562 = vmatpush1.msra.mxu0 0.0
    %3563 = vmatprep.subr.mxu0 0.0
    %3564 = vmatpush1.msra.mxu0 0.0
    %3565 = vmatprep.subr.mxu0 0.0
    %3566 = vmatpush1.msra.mxu0 0.0
    %3567 = vmatprep.subr.mxu0 0.0
    %3568 = vmatpush1.msra.mxu0 0.0
    %3569 = vmatprep.subr.mxu0 0.0
    %3570 = vmatpush1.msra.mxu0 0.0
    %3571 = vmatprep.subr.mxu0 0.0
    %3572 = vmatpush1.msra.mxu0 0.0
    %3573 = vmatprep.subr.mxu0 0.0
    %3574 = vmatpush1.msra.mxu0 0.0
    %3575 = vmatprep.subr.mxu0 0.0
    %3576 = vmatpush1.msra.mxu0 0.0
    %3577 = vmatprep.subr.mxu0 0.0
    %3578 = vmatpush1.msra.mxu0 0.0
    %3579 = vmatprep.subr.mxu0 0.0
    %3580 = vmatpush1.msra.mxu0 0.0
    %3581 = vmatprep.subr.mxu0 0.0
    %3582 = vmatpush1.msra.mxu0 0.0
    %3583 = vmatprep.subr.mxu0 0.0
    %3584 = vmatpush1.msra.mxu0 0.0
    %3585 = vmatprep.subr.mxu0 0.0
    %3586 = vmatpush1.msra.mxu0 0.0
    %3587 = vmatprep.subr.mxu0 0.0
    %3588 = vmatpush1.msra.mxu0 0.0
    %3589 = vmatprep.subr.mxu0 0.0
    %3590 = vmatpush1.msra.mxu0 0.0
    %3591 = vmatprep.subr.mxu0 0.0
    %3592 = vmatpush1.msra.mxu0 0.0
    %3593 = vmatprep.subr.mxu0 0.0
    %3594 = vmatpush1.msra.mxu0 0.0
    %3595 = vmatprep.subr.mxu0 0.0
    %3596 = vmatpush1.msra.mxu0 0.0
    %3597 = vmatprep.subr.mxu0 0.0
    %3598 = vmatpush1.msra.mxu0 0.0
    %3599 = vmatprep.subr.mxu0 0.0
    %3600 = vmatpush1.msra.mxu0 0.0
    %3601 = vmatprep.subr.mxu0 0.0
    %3602 = vmatpush1.msra.mxu0 0.0
    %3603 = vmatprep.subr.mxu0 0.0
    %3604 = vmatpush1.msra.mxu0 0.0
    %3605 = vmatprep.subr.mxu0 0.0
    %3606 = vmatpush1.msra.mxu0 0.0
    %3607 = vmatprep.subr.mxu0 0.0
    %3608 = vmatpush1.msra.mxu0 0.0
    %3609 = vmatprep.subr.mxu0 0.0
    %3610 = vmatpush1.msra.mxu0 0.0
    %3611 = vmatprep.mubr.f32.mxu0 0.0
    %3612 = vmatmul.mubr.f32.gmra.mrb[0].mxu0 %v3407
    %v3613 = vpop.f32.mrb[0].mxu0
    %v3614 = vadd.f32 %v3530, %v3613
    %v3615 = vpop.f32.mrb[0].mxu0
    %v3616 = vadd.f32 %v3534, %v3615
    %3617 = vdwg.mxu0
    %3618 = vmatprep.subr.mxu0 %v3512
    %3619 = vmatpush1.msra.mxu0 %v3511
    %3620 = vmatprep.subr.mxu0 %v3516
    %3621 = vmatpush1.msra.mxu0 %v3515
    %3622 = vmatprep.subr.mxu0 %v3520
    %3623 = vmatpush1.msra.mxu0 %v3519
    %3624 = vmatprep.subr.mxu0 %v3524
    %3625 = vmatpush1.msra.mxu0 %v3523
    %3626 = vmatprep.subr.mxu0 0.0
    %3627 = vmatpush1.msra.mxu0 0.0
    %3628 = vmatprep.subr.mxu0 0.0
    %3629 = vmatpush1.msra.mxu0 0.0
    %3630 = vmatprep.subr.mxu0 0.0
    %3631 = vmatpush1.msra.mxu0 0.0
    %3632 = vmatprep.subr.mxu0 0.0
    %3633 = vmatpush1.msra.mxu0 0.0
    %3634 = vmatprep.subr.mxu0 0.0
    %3635 = vmatpush1.msra.mxu0 0.0
    %3636 = vmatprep.subr.mxu0 0.0
    %3637 = vmatpush1.msra.mxu0 0.0
    %3638 = vmatprep.subr.mxu0 0.0
    %3639 = vmatpush1.msra.mxu0 0.0
    %3640 = vmatprep.subr.mxu0 0.0
    %3641 = vmatpush1.msra.mxu0 0.0
    %3642 = vmatprep.subr.mxu0 0.0
    %3643 = vmatpush1.msra.mxu0 0.0
    %3644 = vmatprep.subr.mxu0 0.0
    %3645 = vmatpush1.msra.mxu0 0.0
    %3646 = vmatprep.subr.mxu0 0.0
    %3647 = vmatpush1.msra.mxu0 0.0
    %3648 = vmatprep.subr.mxu0 0.0
    %3649 = vmatpush1.msra.mxu0 0.0
    %3650 = vmatprep.subr.mxu0 0.0
    %3651 = vmatpush1.msra.mxu0 0.0
    %3652 = vmatprep.subr.mxu0 0.0
    %3653 = vmatpush1.msra.mxu0 0.0
    %3654 = vmatprep.subr.mxu0 0.0
    %3655 = vmatpush1.msra.mxu0 0.0
    %3656 = vmatprep.subr.mxu0 0.0
    %3657 = vmatpush1.msra.mxu0 0.0
    %3658 = vmatprep.subr.mxu0 0.0
    %3659 = vmatpush1.msra.mxu0 0.0
    %3660 = vmatprep.subr.mxu0 0.0
    %3661 = vmatpush1.msra.mxu0 0.0
    %3662 = vmatprep.subr.mxu0 0.0
    %3663 = vmatpush1.msra.mxu0 0.0
    %3664 = vmatprep.subr.mxu0 0.0
    %3665 = vmatpush1.msra.mxu0 0.0
    %3666 = vmatprep.subr.mxu0 0.0
    %3667 = vmatpush1.msra.mxu0 0.0
    %3668 = vmatprep.subr.mxu0 0.0
    %3669 = vmatpush1.msra.mxu0 0.0
    %3670 = vmatprep.subr.mxu0 0.0
    %3671 = vmatpush1.msra.mxu0 0.0
    %3672 = vmatprep.subr.mxu0 0.0
    %3673 = vmatpush1.msra.mxu0 0.0
    %3674 = vmatprep.subr.mxu0 0.0
    %3675 = vmatpush1.msra.mxu0 0.0
    %3676 = vmatprep.subr.mxu0 0.0
    %3677 = vmatpush1.msra.mxu0 0.0
    %3678 = vmatprep.subr.mxu0 0.0
    %3679 = vmatpush1.msra.mxu0 0.0
    %3680 = vmatprep.subr.mxu0 0.0
    %3681 = vmatpush1.msra.mxu0 0.0
    %3682 = vmatprep.mubr.f32.mxu0 0.0
    %3683 = vmatmul.mubr.f32.gmra.mrb[0].mxu0 %v3407
    %v3684 = vpop.f32.mrb[0].mxu0
    %v3685 = vadd.f32 %v3538, %v3684
    %v3686 = vpop.f32.mrb[0].mxu0
    %v3687 = vadd.f32 %v3542, %v3686
    %3688 = vdwg.mxu0
    %v3689 = vmul.f32 %v3614, %v3614
    %v3690 = vmul.f32 %v3616, %v3616
    %v3691 = vmul.f32 %v3685, %v3685
    %v3692 = vmul.f32 %v3687, %v3687
    %v3693 = vmul.f32 %v3614, %v3689
    %v3694 = vmul.f32 %v3616, %v3690
    %v3695 = vmul.f32 %v3685, %v3691
    %v3696 = vmul.f32 %v3687, %v3692
    %v3697 = vmul.f32 %v3693, 0.044715
    %v3698 = vmul.f32 %v3694, 0.044715
    %v3699 = vmul.f32 %v3695, 0.044715
    %v3700 = vmul.f32 %v3696, 0.044715
    %v3701 = vadd.f32 %v3614, %v3697
    %v3702 = vadd.f32 %v3616, %v3698
    %v3703 = vadd.f32 %v3685, %v3699
    %v3704 = vadd.f32 %v3687, %v3700
    %v3705 = vmul.f32 %v3701, 0.7978846
    %v3706 = vmul.f32 %v3702, 0.7978846
    %v3707 = vmul.f32 %v3703, 0.7978846
    %v3708 = vmul.f32 %v3704, 0.7978846
    %v3709 = vtanh.pop %v3705
    %v3710 = vtanh.pop %v3706
    %v3711 = vtanh.pop %v3707
    %v3712 = vtanh.pop %v3708
    %v3713 = vadd.f32 %v3709, 1.0
    %v3714 = vadd.f32 %v3710, 1.0
    %v3715 = vadd.f32 %v3711, 1.0
    %v3716 = vadd.f32 %v3712, 1.0
    %v3717 = vmul.f32 %v3713, 0.5
    %v3718 = vmul.f32 %v3714, 0.5
    %v3719 = vmul.f32 %v3715, 0.5
    %v3720 = vmul.f32 %v3716, 0.5
    %v3721 = vmul.f32 %v3614, %v3717
    %v3722 = vmul.f32 %v3616, %v3718
    %v3723 = vmul.f32 %v3685, %v3719
    %v3724 = vmul.f32 %v3687, %v3720
    %v3725 = vld [vmem:[#allocation43] sm:$0xff]
    %v3726 = vld [vmem:[#allocation43 + $0x8] sm:$0xff]
    %v3727 = vld [vmem:[#allocation43 + $0x10] sm:$0xff]
    %v3728 = vld [vmem:[#allocation43 + $0x18] sm:$0xff]
    %v3729 = vld [vmem:[#allocation43 + $0x20] sm:$0xff]
    %v3730 = vld [vmem:[#allocation43 + $0x28] sm:$0xff]
    %v3731 = vld [vmem:[#allocation43 + $0x30] sm:$0xff]
    %v3732 = vld [vmem:[#allocation43 + $0x38] sm:$0xff]
    %v3733 = vld [vmem:[#allocation43 + $0x40] sm:$0xff]
    %v3734 = vld [vmem:[#allocation43 + $0x48] sm:$0xff]
    %v3735 = vld [vmem:[#allocation43 + $0x50] sm:$0xff]
    %v3736 = vld [vmem:[#allocation43 + $0x58] sm:$0xff]
    %v3737 = vld [vmem:[#allocation43 + $0x60] sm:$0xff]
    %v3738 = vld [vmem:[#allocation43 + $0x68] sm:$0xff]
    %v3739 = vld [vmem:[#allocation43 + $0x70] sm:$0xff]
    %v3740 = vld [vmem:[#allocation43 + $0x78] sm:$0xff]
    %v3741 = vld [vmem:[#allocation43 + $0x80] sm:$0xff]
    %v3742 = vld [vmem:[#allocation43 + $0x88] sm:$0xff]
    %v3743 = vld [vmem:[#allocation43 + $0x90] sm:$0xff]
    %v3744 = vld [vmem:[#allocation43 + $0x98] sm:$0xff]
    %v3745 = vld [vmem:[#allocation43 + $0xa0] sm:$0xff]
    %v3746 = vld [vmem:[#allocation43 + $0xa8] sm:$0xff]
    %v3747 = vld [vmem:[#allocation43 + $0xb0] sm:$0xff]
    %v3748 = vld [vmem:[#allocation43 + $0xb8] sm:$0xff]
    %v3749 = vld [vmem:[#allocation43 + $0xc0] sm:$0xff]
    %v3750 = vld [vmem:[#allocation43 + $0xc8] sm:$0xff]
    %v3751 = vld [vmem:[#allocation43 + $0xd0] sm:$0xff]
    %v3752 = vld [vmem:[#allocation43 + $0xd8] sm:$0xff]
    %v3753 = vld [vmem:[#allocation43 + $0xe0] sm:$0xff]
    %v3754 = vld [vmem:[#allocation43 + $0xe8] sm:$0xff]
    %v3755 = vld [vmem:[#allocation43 + $0xf0] sm:$0xff]
    %v3756 = vld [vmem:[#allocation43 + $0xf8] sm:$0xff]
    %v3757 = vld [vmem:[#allocation43 + $0x100] sm:$0xff]
    %v3758 = vld [vmem:[#allocation43 + $0x108] sm:$0xff]
    %v3759 = vld [vmem:[#allocation43 + $0x110] sm:$0xff]
    %v3760 = vld [vmem:[#allocation43 + $0x118] sm:$0xff]
    %v3761 = vld [vmem:[#allocation43 + $0x120] sm:$0xff]
    %v3762 = vld [vmem:[#allocation43 + $0x128] sm:$0xff]
    %v3763 = vld [vmem:[#allocation43 + $0x130] sm:$0xff]
    %v3764 = vld [vmem:[#allocation43 + $0x138] sm:$0xff]
    %v3765 = vld [vmem:[#allocation43 + $0x140] sm:$0xff]
    %v3766 = vld [vmem:[#allocation43 + $0x148] sm:$0xff]
    %v3767 = vld [vmem:[#allocation43 + $0x150] sm:$0xff]
    %v3768 = vld [vmem:[#allocation43 + $0x158] sm:$0xff]
    %v3769 = vld [vmem:[#allocation43 + $0x160] sm:$0xff]
    %v3770 = vld [vmem:[#allocation43 + $0x168] sm:$0xff]
    %v3771 = vld [vmem:[#allocation43 + $0x170] sm:$0xff]
    %v3772 = vld [vmem:[#allocation43 + $0x178] sm:$0xff]
    %v3773 = vld [vmem:[#allocation43 + $0x180] sm:$0xff]
    %v3774 = vld [vmem:[#allocation43 + $0x188] sm:$0xff]
    %v3775 = vld [vmem:[#allocation43 + $0x190] sm:$0xff]
    %v3776 = vld [vmem:[#allocation43 + $0x198] sm:$0xff]
    %v3777 = vld [vmem:[#allocation43 + $0x1a0] sm:$0xff]
    %v3778 = vld [vmem:[#allocation43 + $0x1a8] sm:$0xff]
    %v3779 = vld [vmem:[#allocation43 + $0x1b0] sm:$0xff]
    %v3780 = vld [vmem:[#allocation43 + $0x1b8] sm:$0xff]
    %v3781 = vld [vmem:[#allocation43 + $0x1c0] sm:$0xff]
    %v3782 = vld [vmem:[#allocation43 + $0x1c8] sm:$0xff]
    %v3783 = vld [vmem:[#allocation43 + $0x1d0] sm:$0xff]
    %v3784 = vld [vmem:[#allocation43 + $0x1d8] sm:$0xff]
    %v3785 = vld [vmem:[#allocation43 + $0x1e0] sm:$0xff]
    %v3786 = vld [vmem:[#allocation43 + $0x1e8] sm:$0xff]
    %v3787 = vld [vmem:[#allocation43 + $0x1f0] sm:$0xff]
    %v3788 = vld [vmem:[#allocation43 + $0x1f8] sm:$0xff]
    %v3789 = vld [vmem:[#allocation43 + $0x200] sm:$0xff]
    %v3790 = vld [vmem:[#allocation43 + $0x208] sm:$0xff]
    %v3791 = vld [vmem:[#allocation43 + $0x210] sm:$0xff]
    %v3792 = vld [vmem:[#allocation43 + $0x218] sm:$0xff]
    %v3793 = vld [vmem:[#allocation43 + $0x220] sm:$0xff]
    %v3794 = vld [vmem:[#allocation43 + $0x228] sm:$0xff]
    %v3795 = vld [vmem:[#allocation43 + $0x230] sm:$0xff]
    %v3796 = vld [vmem:[#allocation43 + $0x238] sm:$0xff]
    %v3797 = vld [vmem:[#allocation43 + $0x240] sm:$0xff]
    %v3798 = vld [vmem:[#allocation43 + $0x248] sm:$0xff]
    %v3799 = vld [vmem:[#allocation43 + $0x250] sm:$0xff]
    %v3800 = vld [vmem:[#allocation43 + $0x258] sm:$0xff]
    %v3801 = vld [vmem:[#allocation43 + $0x260] sm:$0xff]
    %v3802 = vld [vmem:[#allocation43 + $0x268] sm:$0xff]
    %v3803 = vld [vmem:[#allocation43 + $0x270] sm:$0xff]
    %v3804 = vld [vmem:[#allocation43 + $0x278] sm:$0xff]
    %v3805 = vld [vmem:[#allocation43 + $0x280] sm:$0xff]
    %v3806 = vld [vmem:[#allocation43 + $0x288] sm:$0xff]
    %v3807 = vld [vmem:[#allocation43 + $0x290] sm:$0xff]
    %v3808 = vld [vmem:[#allocation43 + $0x298] sm:$0xff]
    %v3809 = vld [vmem:[#allocation43 + $0x2a0] sm:$0xff]
    %v3810 = vld [vmem:[#allocation43 + $0x2a8] sm:$0xff]
    %v3811 = vld [vmem:[#allocation43 + $0x2b0] sm:$0xff]
    %v3812 = vld [vmem:[#allocation43 + $0x2b8] sm:$0xff]
    %v3813 = vld [vmem:[#allocation43 + $0x2c0] sm:$0xff]
    %v3814 = vld [vmem:[#allocation43 + $0x2c8] sm:$0xff]
    %v3815 = vld [vmem:[#allocation43 + $0x2d0] sm:$0xff]
    %v3816 = vld [vmem:[#allocation43 + $0x2d8] sm:$0xff]
    %v3817 = vld [vmem:[#allocation43 + $0x2e0] sm:$0xff]
    %v3818 = vld [vmem:[#allocation43 + $0x2e8] sm:$0xff]
    %v3819 = vld [vmem:[#allocation43 + $0x2f0] sm:$0xff]
    %v3820 = vld [vmem:[#allocation43 + $0x2f8] sm:$0xff]
    %v3821 = vld [vmem:[#allocation43 + $0x300] sm:$0xff]
    %v3822 = vld [vmem:[#allocation43 + $0x308] sm:$0xff]
    %v3823 = vld [vmem:[#allocation43 + $0x310] sm:$0xff]
    %v3824 = vld [vmem:[#allocation43 + $0x318] sm:$0xff]
    %v3825 = vld [vmem:[#allocation43 + $0x320] sm:$0xff]
    %v3826 = vld [vmem:[#allocation43 + $0x328] sm:$0xff]
    %v3827 = vld [vmem:[#allocation43 + $0x330] sm:$0xff]
    %v3828 = vld [vmem:[#allocation43 + $0x338] sm:$0xff]
    %v3829 = vld [vmem:[#allocation43 + $0x340] sm:$0xff]
    %v3830 = vld [vmem:[#allocation43 + $0x348] sm:$0xff]
    %v3831 = vld [vmem:[#allocation43 + $0x350] sm:$0xff]
    %v3832 = vld [vmem:[#allocation43 + $0x358] sm:$0xff]
    %v3833 = vld [vmem:[#allocation43 + $0x360] sm:$0xff]
    %v3834 = vld [vmem:[#allocation43 + $0x368] sm:$0xff]
    %v3835 = vld [vmem:[#allocation43 + $0x370] sm:$0xff]
    %v3836 = vld [vmem:[#allocation43 + $0x378] sm:$0xff]
    %v3837 = vld [vmem:[#allocation43 + $0x380] sm:$0xff]
    %v3838 = vld [vmem:[#allocation43 + $0x388] sm:$0xff]
    %v3839 = vld [vmem:[#allocation43 + $0x390] sm:$0xff]
    %v3840 = vld [vmem:[#allocation43 + $0x398] sm:$0xff]
    %v3841 = vld [vmem:[#allocation43 + $0x3a0] sm:$0xff]
    %v3842 = vld [vmem:[#allocation43 + $0x3a8] sm:$0xff]
    %v3843 = vld [vmem:[#allocation43 + $0x3b0] sm:$0xff]
    %v3844 = vld [vmem:[#allocation43 + $0x3b8] sm:$0xff]
    %v3845 = vld [vmem:[#allocation43 + $0x3c0] sm:$0xff]
    %v3846 = vld [vmem:[#allocation43 + $0x3c8] sm:$0xff]
    %v3847 = vld [vmem:[#allocation43 + $0x3d0] sm:$0xff]
    %v3848 = vld [vmem:[#allocation43 + $0x3d8] sm:$0xff]
    %v3849 = vld [vmem:[#allocation43 + $0x3e0] sm:$0xff]
    %v3850 = vld [vmem:[#allocation43 + $0x3e8] sm:$0xff]
    %v3851 = vld [vmem:[#allocation43 + $0x3f0] sm:$0xff]
    %v3852 = vld [vmem:[#allocation43 + $0x3f8] sm:$0xff]
    %v3853 = vld [vmem:[#allocation43 + $0x400] sm:$0xff]
    %v3854 = vld [vmem:[#allocation43 + $0x408] sm:$0xff]
    %v3855 = vld [vmem:[#allocation43 + $0x410] sm:$0xff]
    %v3856 = vld [vmem:[#allocation43 + $0x418] sm:$0xff]
    %v3857 = vld [vmem:[#allocation43 + $0x420] sm:$0xff]
    %v3858 = vld [vmem:[#allocation43 + $0x428] sm:$0xff]
    %v3859 = vld [vmem:[#allocation43 + $0x430] sm:$0xff]
    %v3860 = vld [vmem:[#allocation43 + $0x438] sm:$0xff]
    %v3861 = vld [vmem:[#allocation43 + $0x440] sm:$0xff]
    %v3862 = vld [vmem:[#allocation43 + $0x448] sm:$0xff]
    %v3863 = vld [vmem:[#allocation43 + $0x450] sm:$0xff]
    %v3864 = vld [vmem:[#allocation43 + $0x458] sm:$0xff]
    %v3865 = vld [vmem:[#allocation43 + $0x460] sm:$0xff]
    %v3866 = vld [vmem:[#allocation43 + $0x468] sm:$0xff]
    %v3867 = vld [vmem:[#allocation43 + $0x470] sm:$0xff]
    %v3868 = vld [vmem:[#allocation43 + $0x478] sm:$0xff]
    %v3869 = vld [vmem:[#allocation43 + $0x480] sm:$0xff]
    %v3870 = vld [vmem:[#allocation43 + $0x488] sm:$0xff]
    %v3871 = vld [vmem:[#allocation43 + $0x490] sm:$0xff]
    %v3872 = vld [vmem:[#allocation43 + $0x498] sm:$0xff]
    %v3873 = vld [vmem:[#allocation43 + $0x4a0] sm:$0xff]
    %v3874 = vld [vmem:[#allocation43 + $0x4a8] sm:$0xff]
    %v3875 = vld [vmem:[#allocation43 + $0x4b0] sm:$0xff]
    %v3876 = vld [vmem:[#allocation43 + $0x4b8] sm:$0xff]
    %v3877 = vld [vmem:[#allocation43 + $0x4c0] sm:$0xff]
    %v3878 = vld [vmem:[#allocation43 + $0x4c8] sm:$0xff]
    %v3879 = vld [vmem:[#allocation43 + $0x4d0] sm:$0xff]
    %v3880 = vld [vmem:[#allocation43 + $0x4d8] sm:$0xff]
    %v3881 = vld [vmem:[#allocation43 + $0x4e0] sm:$0xff]
    %v3882 = vld [vmem:[#allocation43 + $0x4e8] sm:$0xff]
    %v3883 = vld [vmem:[#allocation43 + $0x4f0] sm:$0xff]
    %v3884 = vld [vmem:[#allocation43 + $0x4f8] sm:$0xff]
    %v3885 = vld [vmem:[#allocation43 + $0x500] sm:$0xff]
    %v3886 = vld [vmem:[#allocation43 + $0x508] sm:$0xff]
    %v3887 = vld [vmem:[#allocation43 + $0x510] sm:$0xff]
    %v3888 = vld [vmem:[#allocation43 + $0x518] sm:$0xff]
    %v3889 = vld [vmem:[#allocation43 + $0x520] sm:$0xff]
    %v3890 = vld [vmem:[#allocation43 + $0x528] sm:$0xff]
    %v3891 = vld [vmem:[#allocation43 + $0x530] sm:$0xff]
    %v3892 = vld [vmem:[#allocation43 + $0x538] sm:$0xff]
    %v3893 = vld [vmem:[#allocation43 + $0x540] sm:$0xff]
    %v3894 = vld [vmem:[#allocation43 + $0x548] sm:$0xff]
    %v3895 = vld [vmem:[#allocation43 + $0x550] sm:$0xff]
    %v3896 = vld [vmem:[#allocation43 + $0x558] sm:$0xff]
    %v3897 = vld [vmem:[#allocation43 + $0x560] sm:$0xff]
    %v3898 = vld [vmem:[#allocation43 + $0x568] sm:$0xff]
    %v3899 = vld [vmem:[#allocation43 + $0x570] sm:$0xff]
    %v3900 = vld [vmem:[#allocation43 + $0x578] sm:$0xff]
    %v3901 = vld [vmem:[#allocation43 + $0x580] sm:$0xff]
    %v3902 = vld [vmem:[#allocation43 + $0x588] sm:$0xff]
    %v3903 = vld [vmem:[#allocation43 + $0x590] sm:$0xff]
    %v3904 = vld [vmem:[#allocation43 + $0x598] sm:$0xff]
    %v3905 = vld [vmem:[#allocation43 + $0x5a0] sm:$0xff]
    %v3906 = vld [vmem:[#allocation43 + $0x5a8] sm:$0xff]
    %v3907 = vld [vmem:[#allocation43 + $0x5b0] sm:$0xff]
    %v3908 = vld [vmem:[#allocation43 + $0x5b8] sm:$0xff]
    %v3909 = vld [vmem:[#allocation43 + $0x5c0] sm:$0xff]
    %v3910 = vld [vmem:[#allocation43 + $0x5c8] sm:$0xff]
    %v3911 = vld [vmem:[#allocation43 + $0x5d0] sm:$0xff]
    %v3912 = vld [vmem:[#allocation43 + $0x5d8] sm:$0xff]
    %v3913 = vld [vmem:[#allocation43 + $0x5e0] sm:$0xff]
    %v3914 = vld [vmem:[#allocation43 + $0x5e8] sm:$0xff]
    %v3915 = vld [vmem:[#allocation43 + $0x5f0] sm:$0xff]
    %v3916 = vld [vmem:[#allocation43 + $0x5f8] sm:$0xff]
    %v3917 = vld [vmem:[#allocation43 + $0x600] sm:$0xff]
    %v3918 = vld [vmem:[#allocation43 + $0x608] sm:$0xff]
    %v3919 = vld [vmem:[#allocation43 + $0x610] sm:$0xff]
    %v3920 = vld [vmem:[#allocation43 + $0x618] sm:$0xff]
    %v3921 = vld [vmem:[#allocation43 + $0x620] sm:$0xff]
    %v3922 = vld [vmem:[#allocation43 + $0x628] sm:$0xff]
    %v3923 = vld [vmem:[#allocation43 + $0x630] sm:$0xff]
    %v3924 = vld [vmem:[#allocation43 + $0x638] sm:$0xff]
    %v3925 = vld [vmem:[#allocation43 + $0x640] sm:$0xff]
    %v3926 = vld [vmem:[#allocation43 + $0x648] sm:$0xff]
    %v3927 = vld [vmem:[#allocation43 + $0x650] sm:$0xff]
    %v3928 = vld [vmem:[#allocation43 + $0x658] sm:$0xff]
    %v3929 = vld [vmem:[#allocation43 + $0x660] sm:$0xff]
    %v3930 = vld [vmem:[#allocation43 + $0x668] sm:$0xff]
    %v3931 = vld [vmem:[#allocation43 + $0x670] sm:$0xff]
    %v3932 = vld [vmem:[#allocation43 + $0x678] sm:$0xff]
    %v3933 = vld [vmem:[#allocation43 + $0x680] sm:$0xff]
    %v3934 = vld [vmem:[#allocation43 + $0x688] sm:$0xff]
    %v3935 = vld [vmem:[#allocation43 + $0x690] sm:$0xff]
    %v3936 = vld [vmem:[#allocation43 + $0x698] sm:$0xff]
    %v3937 = vld [vmem:[#allocation43 + $0x6a0] sm:$0xff]
    %v3938 = vld [vmem:[#allocation43 + $0x6a8] sm:$0xff]
    %v3939 = vld [vmem:[#allocation43 + $0x6b0] sm:$0xff]
    %v3940 = vld [vmem:[#allocation43 + $0x6b8] sm:$0xff]
    %v3941 = vld [vmem:[#allocation43 + $0x6c0] sm:$0xff]
    %v3942 = vld [vmem:[#allocation43 + $0x6c8] sm:$0xff]
    %v3943 = vld [vmem:[#allocation43 + $0x6d0] sm:$0xff]
    %v3944 = vld [vmem:[#allocation43 + $0x6d8] sm:$0xff]
    %v3945 = vld [vmem:[#allocation43 + $0x6e0] sm:$0xff]
    %v3946 = vld [vmem:[#allocation43 + $0x6e8] sm:$0xff]
    %v3947 = vld [vmem:[#allocation43 + $0x6f0] sm:$0xff]
    %v3948 = vld [vmem:[#allocation43 + $0x6f8] sm:$0xff]
    %v3949 = vld [vmem:[#allocation44] sm:$0xf]
    %v3951 = vlaneseq
    %v3952 = vshrl.u32 %v3951, 7
    %v3953 = vsub.s32 0, %v3952
    %v3954 = vrot.slane %v3949, %v3953
    %v3955 = vlaneseq
    %v3956 = vshrl.u32 %v3955, 7
    %v3957 = vsub.s32 1, %v3956
    %v3958 = vrot.slane %v3949, %v3957
    %v3959 = vlaneseq
    %v3960 = vshrl.u32 %v3959, 7
    %v3961 = vsub.s32 2, %v3960
    %v3962 = vrot.slane %v3949, %v3961
    %v3963 = vlaneseq
    %v3964 = vshrl.u32 %v3963, 7
    %v3965 = vsub.s32 3, %v3964
    %v3966 = vrot.slane %v3949, %v3965
    %v3972 = vsel %vm942, %v3724, 0
    %3974 = vmatprep.subr.mxu0 %v3726
    %3975 = vmatpush1.msra.mxu0 %v3725
    %3976 = vmatprep.subr.mxu0 %v3730
    %3977 = vmatpush1.msra.mxu0 %v3729
    %3978 = vmatprep.subr.mxu0 %v3734
    %3979 = vmatpush1.msra.mxu0 %v3733
    %3980 = vmatprep.subr.mxu0 %v3738
    %3981 = vmatpush1.msra.mxu0 %v3737
    %3982 = vmatprep.subr.mxu0 %v3742
    %3983 = vmatpush1.msra.mxu0 %v3741
    %3984 = vmatprep.subr.mxu0 %v3746
    %3985 = vmatpush1.msra.mxu0 %v3745
    %3986 = vmatprep.subr.mxu0 %v3750
    %3987 = vmatpush1.msra.mxu0 %v3749
    %3988 = vmatprep.subr.mxu0 %v3754
    %3989 = vmatpush1.msra.mxu0 %v3753
    %3990 = vmatprep.subr.mxu0 %v3758
    %3991 = vmatpush1.msra.mxu0 %v3757
    %3992 = vmatprep.subr.mxu0 %v3762
    %3993 = vmatpush1.msra.mxu0 %v3761
    %3994 = vmatprep.subr.mxu0 %v3766
    %3995 = vmatpush1.msra.mxu0 %v3765
    %3996 = vmatprep.subr.mxu0 %v3770
    %3997 = vmatpush1.msra.mxu0 %v3769
    %3998 = vmatprep.subr.mxu0 %v3774
    %3999 = vmatpush1.msra.mxu0 %v3773
    %4000 = vmatprep.subr.mxu0 %v3778
    %4001 = vmatpush1.msra.mxu0 %v3777
    %4002 = vmatprep.subr.mxu0 %v3782
    %4003 = vmatpush1.msra.mxu0 %v3781
    %4004 = vmatprep.subr.mxu0 %v3786
    %4005 = vmatpush1.msra.mxu0 %v3785
    %4006 = vmatprep.subr.mxu0 %v3790
    %4007 = vmatpush1.msra.mxu0 %v3789
    %4008 = vmatprep.subr.mxu0 %v3794
    %4009 = vmatpush1.msra.mxu0 %v3793
    %4010 = vmatprep.subr.mxu0 %v3798
    %4011 = vmatpush1.msra.mxu0 %v3797
    %4012 = vmatprep.subr.mxu0 %v3802
    %4013 = vmatpush1.msra.mxu0 %v3801
    %4014 = vmatprep.subr.mxu0 %v3806
    %4015 = vmatpush1.msra.mxu0 %v3805
    %4016 = vmatprep.subr.mxu0 %v3810
    %4017 = vmatpush1.msra.mxu0 %v3809
    %4018 = vmatprep.subr.mxu0 %v3814
    %4019 = vmatpush1.msra.mxu0 %v3813
    %4020 = vmatprep.subr.mxu0 %v3818
    %4021 = vmatpush1.msra.mxu0 %v3817
    %4022 = vmatprep.subr.mxu0 %v3822
    %4023 = vmatpush1.msra.mxu0 %v3821
    %4024 = vmatprep.subr.mxu0 %v3826
    %4025 = vmatpush1.msra.mxu0 %v3825
    %4026 = vmatprep.subr.mxu0 %v3830
    %4027 = vmatpush1.msra.mxu0 %v3829
    %4028 = vmatprep.subr.mxu0 %v3834
    %4029 = vmatpush1.msra.mxu0 %v3833
    %4030 = vmatprep.subr.mxu0 %v3838
    %4031 = vmatpush1.msra.mxu0 %v3837
    %4032 = vmatprep.subr.mxu0 %v3842
    %4033 = vmatpush1.msra.mxu0 %v3841
    %4034 = vmatprep.subr.mxu0 %v3846
    %4035 = vmatpush1.msra.mxu0 %v3845
    %4036 = vmatprep.subr.mxu0 %v3850
    %4037 = vmatpush1.msra.mxu0 %v3849
    %4038 = vmatprep.mubr.f32.mxu0 %v3722
    %4039 = vmatmul.mubr.f32.gmra.mrb[0].mxu0 %v3721
    %v4040 = vpop.f32.mrb[0].mxu0
    %v4041 = vadd.f32 %v3954, %v4040
    %v4042 = vpop.f32.mrb[0].mxu0
    %v4043 = vadd.f32 %v3958, %v4042
    %4044 = vdwg.mxu0
    %4045 = vmatprep.subr.mxu0 %v3854
    %4046 = vmatpush1.msra.mxu0 %v3853
    %4047 = vmatprep.subr.mxu0 %v3858
    %4048 = vmatpush1.msra.mxu0 %v3857
    %4049 = vmatprep.subr.mxu0 %v3862
    %4050 = vmatpush1.msra.mxu0 %v3861
    %4051 = vmatprep.subr.mxu0 %v3866
    %4052 = vmatpush1.msra.mxu0 %v3865
    %4053 = vmatprep.subr.mxu0 %v3870
    %4054 = vmatpush1.msra.mxu0 %v3869
    %4055 = vmatprep.subr.mxu0 %v3874
    %4056 = vmatpush1.msra.mxu0 %v3873
    %4057 = vmatprep.subr.mxu0 %v3878
    %4058 = vmatpush1.msra.mxu0 %v3877
    %4059 = vmatprep.subr.mxu0 %v3882
    %4060 = vmatpush1.msra.mxu0 %v3881
    %4061 = vmatprep.subr.mxu0 %v3886
    %4062 = vmatpush1.msra.mxu0 %v3885
    %4063 = vmatprep.subr.mxu0 %v3890
    %4064 = vmatpush1.msra.mxu0 %v3889
    %4065 = vmatprep.subr.mxu0 %v3894
    %4066 = vmatpush1.msra.mxu0 %v3893
    %4067 = vmatprep.subr.mxu0 %v3898
    %4068 = vmatpush1.msra.mxu0 %v3897
    %4069 = vmatprep.subr.mxu0 %v3902
    %4070 = vmatpush1.msra.mxu0 %v3901
    %4071 = vmatprep.subr.mxu0 %v3906
    %4072 = vmatpush1.msra.mxu0 %v3905
    %4073 = vmatprep.subr.mxu0 %v3910
    %4074 = vmatpush1.msra.mxu0 %v3909
    %4075 = vmatprep.subr.mxu0 %v3914
    %4076 = vmatpush1.msra.mxu0 %v3913
    %4077 = vmatprep.subr.mxu0 %v3918
    %4078 = vmatpush1.msra.mxu0 %v3917
    %4079 = vmatprep.subr.mxu0 %v3922
    %4080 = vmatpush1.msra.mxu0 %v3921
    %4081 = vmatprep.subr.mxu0 %v3926
    %4082 = vmatpush1.msra.mxu0 %v3925
    %4083 = vmatprep.subr.mxu0 %v3930
    %4084 = vmatpush1.msra.mxu0 %v3929
    %4085 = vmatprep.subr.mxu0 %v3934
    %4086 = vmatpush1.msra.mxu0 %v3933
    %4087 = vmatprep.subr.mxu0 %v3938
    %4088 = vmatpush1.msra.mxu0 %v3937
    %4089 = vmatprep.subr.mxu0 %v3942
    %4090 = vmatpush1.msra.mxu0 %v3941
    %4091 = vmatprep.subr.mxu0 %v3946
    %4092 = vmatpush1.msra.mxu0 %v3945
    %4093 = vmatprep.subr.mxu0 0.0
    %4094 = vmatpush1.msra.mxu0 0.0
    %4095 = vmatprep.subr.mxu0 0.0
    %4096 = vmatpush1.msra.mxu0 0.0
    %4097 = vmatprep.subr.mxu0 0.0
    %4098 = vmatpush1.msra.mxu0 0.0
    %4099 = vmatprep.subr.mxu0 0.0
    %4100 = vmatpush1.msra.mxu0 0.0
    %4101 = vmatprep.subr.mxu0 0.0
    %4102 = vmatpush1.msra.mxu0 0.0
    %4103 = vmatprep.subr.mxu0 0.0
    %4104 = vmatpush1.msra.mxu0 0.0
    %4105 = vmatprep.subr.mxu0 0.0
    %4106 = vmatpush1.msra.mxu0 0.0
    %4107 = vmatprep.subr.mxu0 0.0
    %4108 = vmatpush1.msra.mxu0 0.0
    %4109 = vmatprep.mubr.f32.mxu0 %v3972
    %4110 = vmatmul.mubr.f32.gmra.mrb[0].mxu0 %v3723
    %v4111 = vpop.f32.mrb[0].mxu0
    %v4112 = vadd.f32 %v4041, %v4111
    %v4113 = vpop.f32.mrb[0].mxu0
    %v4114 = vadd.f32 %v4043, %v4113
    %4115 = vdwg.mxu0
    %4116 = vmatprep.subr.mxu0 %v3728
    %4117 = vmatpush1.msra.mxu0 %v3727
    %4118 = vmatprep.subr.mxu0 %v3732
    %4119 = vmatpush1.msra.mxu0 %v3731
    %4120 = vmatprep.subr.mxu0 %v3736
    %4121 = vmatpush1.msra.mxu0 %v3735
    %4122 = vmatprep.subr.mxu0 %v3740
    %4123 = vmatpush1.msra.mxu0 %v3739
    %4124 = vmatprep.subr.mxu0 %v3744
    %4125 = vmatpush1.msra.mxu0 %v3743
    %4126 = vmatprep.subr.mxu0 %v3748
    %4127 = vmatpush1.msra.mxu0 %v3747
    %4128 = vmatprep.subr.mxu0 %v3752
    %4129 = vmatpush1.msra.mxu0 %v3751
    %4130 = vmatprep.subr.mxu0 %v3756
    %4131 = vmatpush1.msra.mxu0 %v3755
    %4132 = vmatprep.subr.mxu0 %v3760
    %4133 = vmatpush1.msra.mxu0 %v3759
    %4134 = vmatprep.subr.mxu0 %v3764
    %4135 = vmatpush1.msra.mxu0 %v3763
    %4136 = vmatprep.subr.mxu0 %v3768
    %4137 = vmatpush1.msra.mxu0 %v3767
    %4138 = vmatprep.subr.mxu0 %v3772
    %4139 = vmatpush1.msra.mxu0 %v3771
    %4140 = vmatprep.subr.mxu0 %v3776
    %4141 = vmatpush1.msra.mxu0 %v3775
    %4142 = vmatprep.subr.mxu0 %v3780
    %4143 = vmatpush1.msra.mxu0 %v3779
    %4144 = vmatprep.subr.mxu0 %v3784
    %4145 = vmatpush1.msra.mxu0 %v3783
    %4146 = vmatprep.subr.mxu0 %v3788
    %4147 = vmatpush1.msra.mxu0 %v3787
    %4148 = vmatprep.subr.mxu0 %v3792
    %4149 = vmatpush1.msra.mxu0 %v3791
    %4150 = vmatprep.subr.mxu0 %v3796
    %4151 = vmatpush1.msra.mxu0 %v3795
    %4152 = vmatprep.subr.mxu0 %v3800
    %4153 = vmatpush1.msra.mxu0 %v3799
    %4154 = vmatprep.subr.mxu0 %v3804
    %4155 = vmatpush1.msra.mxu0 %v3803
    %4156 = vmatprep.subr.mxu0 %v3808
    %4157 = vmatpush1.msra.mxu0 %v3807
    %4158 = vmatprep.subr.mxu0 %v3812
    %4159 = vmatpush1.msra.mxu0 %v3811
    %4160 = vmatprep.subr.mxu0 %v3816
    %4161 = vmatpush1.msra.mxu0 %v3815
    %4162 = vmatprep.subr.mxu0 %v3820
    %4163 = vmatpush1.msra.mxu0 %v3819
    %4164 = vmatprep.subr.mxu0 %v3824
    %4165 = vmatpush1.msra.mxu0 %v3823
    %4166 = vmatprep.subr.mxu0 %v3828
    %4167 = vmatpush1.msra.mxu0 %v3827
    %4168 = vmatprep.subr.mxu0 %v3832
    %4169 = vmatpush1.msra.mxu0 %v3831
    %4170 = vmatprep.subr.mxu0 %v3836
    %4171 = vmatpush1.msra.mxu0 %v3835
    %4172 = vmatprep.subr.mxu0 %v3840
    %4173 = vmatpush1.msra.mxu0 %v3839
    %4174 = vmatprep.subr.mxu0 %v3844
    %4175 = vmatpush1.msra.mxu0 %v3843
    %4176 = vmatprep.subr.mxu0 %v3848
    %4177 = vmatpush1.msra.mxu0 %v3847
    %4178 = vmatprep.subr.mxu0 %v3852
    %4179 = vmatpush1.msra.mxu0 %v3851
    %4180 = vmatprep.mubr.f32.mxu0 %v3722
    %4181 = vmatmul.mubr.f32.gmra.mrb[0].mxu0 %v3721
    %v4182 = vpop.f32.mrb[0].mxu0
    %v4183 = vadd.f32 %v3962, %v4182
    %v4184 = vpop.f32.mrb[0].mxu0
    %v4185 = vadd.f32 %v3966, %v4184
    %4186 = vdwg.mxu0
    %4187 = vmatprep.subr.mxu0 %v3856
    %4188 = vmatpush1.msra.mxu0 %v3855
    %4189 = vmatprep.subr.mxu0 %v3860
    %4190 = vmatpush1.msra.mxu0 %v3859
    %4191 = vmatprep.subr.mxu0 %v3864
    %4192 = vmatpush1.msra.mxu0 %v3863
    %4193 = vmatprep.subr.mxu0 %v3868
    %4194 = vmatpush1.msra.mxu0 %v3867
    %4195 = vmatprep.subr.mxu0 %v3872
    %4196 = vmatpush1.msra.mxu0 %v3871
    %4197 = vmatprep.subr.mxu0 %v3876
    %4198 = vmatpush1.msra.mxu0 %v3875
    %4199 = vmatprep.subr.mxu0 %v3880
    %4200 = vmatpush1.msra.mxu0 %v3879
    %4201 = vmatprep.subr.mxu0 %v3884
    %4202 = vmatpush1.msra.mxu0 %v3883
    %4203 = vmatprep.subr.mxu0 %v3888
    %4204 = vmatpush1.msra.mxu0 %v3887
    %4205 = vmatprep.subr.mxu0 %v3892
    %4206 = vmatpush1.msra.mxu0 %v3891
    %4207 = vmatprep.subr.mxu0 %v3896
    %4208 = vmatpush1.msra.mxu0 %v3895
    %4209 = vmatprep.subr.mxu0 %v3900
    %4210 = vmatpush1.msra.mxu0 %v3899
    %4211 = vmatprep.subr.mxu0 %v3904
    %4212 = vmatpush1.msra.mxu0 %v3903
    %4213 = vmatprep.subr.mxu0 %v3908
    %4214 = vmatpush1.msra.mxu0 %v3907
    %4215 = vmatprep.subr.mxu0 %v3912
    %4216 = vmatpush1.msra.mxu0 %v3911
    %4217 = vmatprep.subr.mxu0 %v3916
    %4218 = vmatpush1.msra.mxu0 %v3915
    %4219 = vmatprep.subr.mxu0 %v3920
    %4220 = vmatpush1.msra.mxu0 %v3919
    %4221 = vmatprep.subr.mxu0 %v3924
    %4222 = vmatpush1.msra.mxu0 %v3923
    %4223 = vmatprep.subr.mxu0 %v3928
    %4224 = vmatpush1.msra.mxu0 %v3927
    %4225 = vmatprep.subr.mxu0 %v3932
    %4226 = vmatpush1.msra.mxu0 %v3931
    %4227 = vmatprep.subr.mxu0 %v3936
    %4228 = vmatpush1.msra.mxu0 %v3935
    %4229 = vmatprep.subr.mxu0 %v3940
    %4230 = vmatpush1.msra.mxu0 %v3939
    %4231 = vmatprep.subr.mxu0 %v3944
    %4232 = vmatpush1.msra.mxu0 %v3943
    %4233 = vmatprep.subr.mxu0 %v3948
    %4234 = vmatpush1.msra.mxu0 %v3947
    %4235 = vmatprep.subr.mxu0 0.0
    %4236 = vmatpush1.msra.mxu0 0.0
    %4237 = vmatprep.subr.mxu0 0.0
    %4238 = vmatpush1.msra.mxu0 0.0
    %4239 = vmatprep.subr.mxu0 0.0
    %4240 = vmatpush1.msra.mxu0 0.0
    %4241 = vmatprep.subr.mxu0 0.0
    %4242 = vmatpush1.msra.mxu0 0.0
    %4243 = vmatprep.subr.mxu0 0.0
    %4244 = vmatpush1.msra.mxu0 0.0
    %4245 = vmatprep.subr.mxu0 0.0
    %4246 = vmatpush1.msra.mxu0 0.0
    %4247 = vmatprep.subr.mxu0 0.0
    %4248 = vmatpush1.msra.mxu0 0.0
    %4249 = vmatprep.subr.mxu0 0.0
    %4250 = vmatpush1.msra.mxu0 0.0
    %4251 = vmatprep.mubr.f32.mxu0 %v3972
    %4252 = vmatmul.mubr.f32.gmra.mrb[0].mxu0 %v3723
    %v4253 = vpop.f32.mrb[0].mxu0
    %v4254 = vadd.f32 %v4183, %v4253
    %v4255 = vpop.f32.mrb[0].mxu0
    %v4256 = vadd.f32 %v4185, %v4255
    %4257 = vdwg.mxu0
    %v4258 = vmul.f32 %v4112, %v4112
    %v4259 = vmul.f32 %v4114, %v4114
    %v4260 = vmul.f32 %v4254, %v4254
    %v4261 = vmul.f32 %v4256, %v4256
    %v4262 = vmul.f32 %v4112, %v4258
    %v4263 = vmul.f32 %v4114, %v4259
    %v4264 = vmul.f32 %v4254, %v4260
    %v4265 = vmul.f32 %v4256, %v4261
    %v4266 = vmul.f32 %v4262, 0.044715
    %v4267 = vmul.f32 %v4263, 0.044715
    %v4268 = vmul.f32 %v4264, 0.044715
    %v4269 = vmul.f32 %v4265, 0.044715
    %v4270 = vadd.f32 %v4112, %v4266
    %v4271 = vadd.f32 %v4114, %v4267
    %v4272 = vadd.f32 %v4254, %v4268
    %v4273 = vadd.f32 %v4256, %v4269
    %v4274 = vmul.f32 %v4270, 0.7978846
    %v4275 = vmul.f32 %v4271, 0.7978846
    %v4276 = vmul.f32 %v4272, 0.7978846
    %v4277 = vmul.f32 %v4273, 0.7978846
    %v4278 = vtanh.pop %v4274
    %v4279 = vtanh.pop %v4275
    %v4280 = vtanh.pop %v4276
    %v4281 = vtanh.pop %v4277
    %v4282 = vadd.f32 %v4278, 1.0
    %v4283 = vadd.f32 %v4279, 1.0
    %v4284 = vadd.f32 %v4280, 1.0
    %v4285 = vadd.f32 %v4281, 1.0
    %v4286 = vmul.f32 %v4282, 0.5
    %v4287 = vmul.f32 %v4283, 0.5
    %v4288 = vmul.f32 %v4284, 0.5
    %v4289 = vmul.f32 %v4285, 0.5
    %v4290 = vmul.f32 %v4112, %v4286
    %v4291 = vmul.f32 %v4114, %v4287
    %v4292 = vmul.f32 %v4254, %v4288
    %v4293 = vmul.f32 %v4256, %v4289
    %v4294 = vld [vmem:[#allocation46] sm:$0x7f]
    %v4295 = vld [vmem:[#allocation46 + $0x8] sm:$0x7f]
    %v4296 = vld [vmem:[#allocation46 + $0x10] sm:$0x7f]
    %v4297 = vld [vmem:[#allocation46 + $0x18] sm:$0x7f]
    %vm4298 = vcmask 56320
    %v4300 = vsel %vm4298, %v3508, 0
    %vm4302 = vcmask 1046528
    %v4304 = vsel %vm4302, %v4294, 0
    %v4307 = vsel %vm4302, %v4295, 0
    %v4310 = vsel %vm4302, %v4296, 0
    %v4313 = vsel %vm4302, %v4297, 0
    %4315 = vmatprep.subr.mxu0 %v4307
    %4316 = vmatpush1.msra.mxu0 %v4304
    %4317 = vmatprep.subr.mxu0 0.0
    %4318 = vmatpush1.msra.mxu0 0.0
    %4319 = vmatprep.subr.mxu0 0.0
    %4320 = vmatpush1.msra.mxu0 0.0
    %4321 = vmatprep.subr.mxu0 0.0
    %4322 = vmatpush1.msra.mxu0 0.0
    %4323 = vmatprep.subr.mxu0 0.0
    %4324 = vmatpush1.msra.mxu0 0.0
    %4325 = vmatprep.subr.mxu0 0.0
    %4326 = vmatpush1.msra.mxu0 0.0
    %4327 = vmatprep.subr.mxu0 0.0
    %4328 = vmatpush1.msra.mxu0 0.0
    %4329 = vmatprep.subr.mxu0 0.0
    %4330 = vmatpush1.msra.mxu0 0.0
    %4331 = vmatprep.subr.mxu0 0.0
    %4332 = vmatpush1.msra.mxu0 0.0
    %4333 = vmatprep.subr.mxu0 0.0
    %4334 = vmatpush1.msra.mxu0 0.0
    %4335 = vmatprep.subr.mxu0 0.0
    %4336 = vmatpush1.msra.mxu0 0.0
    %4337 = vmatprep.subr.mxu0 0.0
    %4338 = vmatpush1.msra.mxu0 0.0
    %4339 = vmatprep.subr.mxu0 0.0
    %4340 = vmatpush1.msra.mxu0 0.0
    %4341 = vmatprep.subr.mxu0 0.0
    %4342 = vmatpush1.msra.mxu0 0.0
    %4343 = vmatprep.subr.mxu0 0.0
    %4344 = vmatpush1.msra.mxu0 0.0
    %4345 = vmatprep.subr.mxu0 0.0
    %4346 = vmatpush1.msra.mxu0 0.0
    %4347 = vmatprep.subr.mxu0 0.0
    %4348 = vmatpush1.msra.mxu0 0.0
    %4349 = vmatprep.subr.mxu0 0.0
    %4350 = vmatpush1.msra.mxu0 0.0
    %4351 = vmatprep.subr.mxu0 0.0
    %4352 = vmatpush1.msra.mxu0 0.0
    %4353 = vmatprep.subr.mxu0 0.0
    %4354 = vmatpush1.msra.mxu0 0.0
    %4355 = vmatprep.subr.mxu0 0.0
    %4356 = vmatpush1.msra.mxu0 0.0
    %4357 = vmatprep.subr.mxu0 0.0
    %4358 = vmatpush1.msra.mxu0 0.0
    %4359 = vmatprep.subr.mxu0 0.0
    %4360 = vmatpush1.msra.mxu0 0.0
    %4361 = vmatprep.subr.mxu0 0.0
    %4362 = vmatpush1.msra.mxu0 0.0
    %4363 = vmatprep.subr.mxu0 0.0
    %4364 = vmatpush1.msra.mxu0 0.0
    %4365 = vmatprep.subr.mxu0 0.0
    %4366 = vmatpush1.msra.mxu0 0.0
    %4367 = vmatprep.subr.mxu0 0.0
    %4368 = vmatpush1.msra.mxu0 0.0
    %4369 = vmatprep.subr.mxu0 0.0
    %4370 = vmatpush1.msra.mxu0 0.0
    %4371 = vmatprep.subr.mxu0 0.0
    %4372 = vmatpush1.msra.mxu0 0.0
    %4373 = vmatprep.subr.mxu0 0.0
    %4374 = vmatpush1.msra.mxu0 0.0
    %4375 = vmatprep.subr.mxu0 0.0
    %4376 = vmatpush1.msra.mxu0 0.0
    %4377 = vmatprep.subr.mxu0 0.0
    %4378 = vmatpush1.msra.mxu0 0.0
    %4379 = vmatprep.mubr.f32.mxu0 0.0
    %4380 = vmatmul.mubr.f32.gmra.mrb[0].mxu0 %v4300
    %v4381 = vpop.f32.mrb[0].mxu0
    %v4382 = vadd.f32 0.0, %v4381
    %v4383 = vpop.f32.mrb[0].mxu0
    %v4384 = vadd.f32 0.0, %v4383
    %4385 = vdwg.mxu0
    %4386 = vmatprep.subr.mxu0 %v4313
    %4387 = vmatpush1.msra.mxu0 %v4310
    %4388 = vmatprep.subr.mxu0 0.0
    %4389 = vmatpush1.msra.mxu0 0.0
    %4390 = vmatprep.subr.mxu0 0.0
    %4391 = vmatpush1.msra.mxu0 0.0
    %4392 = vmatprep.subr.mxu0 0.0
    %4393 = vmatpush1.msra.mxu0 0.0
    %4394 = vmatprep.subr.mxu0 0.0
    %4395 = vmatpush1.msra.mxu0 0.0
    %4396 = vmatprep.subr.mxu0 0.0
    %4397 = vmatpush1.msra.mxu0 0.0
    %4398 = vmatprep.subr.mxu0 0.0
    %4399 = vmatpush1.msra.mxu0 0.0
    %4400 = vmatprep.subr.mxu0 0.0
    %4401 = vmatpush1.msra.mxu0 0.0
    %4402 = vmatprep.subr.mxu0 0.0
    %4403 = vmatpush1.msra.mxu0 0.0
    %4404 = vmatprep.subr.mxu0 0.0
    %4405 = vmatpush1.msra.mxu0 0.0
    %4406 = vmatprep.subr.mxu0 0.0
    %4407 = vmatpush1.msra.mxu0 0.0
    %4408 = vmatprep.subr.mxu0 0.0
    %4409 = vmatpush1.msra.mxu0 0.0
    %4410 = vmatprep.subr.mxu0 0.0
    %4411 = vmatpush1.msra.mxu0 0.0
    %4412 = vmatprep.subr.mxu0 0.0
    %4413 = vmatpush1.msra.mxu0 0.0
    %4414 = vmatprep.subr.mxu0 0.0
    %4415 = vmatpush1.msra.mxu0 0.0
    %4416 = vmatprep.subr.mxu0 0.0
    %4417 = vmatpush1.msra.mxu0 0.0
    %4418 = vmatprep.subr.mxu0 0.0
    %4419 = vmatpush1.msra.mxu0 0.0
    %4420 = vmatprep.subr.mxu0 0.0
    %4421 = vmatpush1.msra.mxu0 0.0
    %4422 = vmatprep.subr.mxu0 0.0
    %4423 = vmatpush1.msra.mxu0 0.0
    %4424 = vmatprep.subr.mxu0 0.0
    %4425 = vmatpush1.msra.mxu0 0.0
    %4426 = vmatprep.subr.mxu0 0.0
    %4427 = vmatpush1.msra.mxu0 0.0
    %4428 = vmatprep.subr.mxu0 0.0
    %4429 = vmatpush1.msra.mxu0 0.0
    %4430 = vmatprep.subr.mxu0 0.0
    %4431 = vmatpush1.msra.mxu0 0.0
    %4432 = vmatprep.subr.mxu0 0.0
    %4433 = vmatpush1.msra.mxu0 0.0
    %4434 = vmatprep.subr.mxu0 0.0
    %4435 = vmatpush1.msra.mxu0 0.0
    %4436 = vmatprep.subr.mxu0 0.0
    %4437 = vmatpush1.msra.mxu0 0.0
    %4438 = vmatprep.subr.mxu0 0.0
    %4439 = vmatpush1.msra.mxu0 0.0
    %4440 = vmatprep.subr.mxu0 0.0
    %4441 = vmatpush1.msra.mxu0 0.0
    %4442 = vmatprep.subr.mxu0 0.0
    %4443 = vmatpush1.msra.mxu0 0.0
    %4444 = vmatprep.subr.mxu0 0.0
    %4445 = vmatpush1.msra.mxu0 0.0
    %4446 = vmatprep.subr.mxu0 0.0
    %4447 = vmatpush1.msra.mxu0 0.0
    %4448 = vmatprep.subr.mxu0 0.0
    %4449 = vmatpush1.msra.mxu0 0.0
    %4450 = vmatprep.mubr.f32.mxu0 0.0
    %4451 = vmatmul.mubr.f32.gmra.mrb[0].mxu0 %v4300
    %v4452 = vpop.f32.mrb[0].mxu0
    %v4453 = vadd.f32 0.0, %v4452
    %v4454 = vpop.f32.mrb[0].mxu0
    %v4455 = vadd.f32 0.0, %v4454
    %4456 = vdwg.mxu0
    %v4457 = vmul.f32 %v4290, %v4382
    %v4458 = vmul.f32 %v4291, %v4384
    %v4459 = vmul.f32 %v4292, %v4453
    %v4460 = vmul.f32 %v4293, %v4455
    %v4461 = vld [vmem:[%s71] sm:$0xff]
    %v4462 = vld [vmem:[%s71 + $0x8] sm:$0xff]
    %v4463 = vld [vmem:[%s71 + $0x10] sm:$0xff]
    %v4464 = vld [vmem:[%s71 + $0x18] sm:$0xff]
    %v4465 = vld [vmem:[%s71 + $0x20] sm:$0xff]
    %v4466 = vld [vmem:[%s71 + $0x28] sm:$0xff]
    %v4467 = vld [vmem:[%s71 + $0x30] sm:$0xff]
    %v4468 = vld [vmem:[%s71 + $0x38] sm:$0xff]
    %v4469 = vld [vmem:[%s71 + $0x40] sm:$0xff]
    %v4470 = vld [vmem:[%s71 + $0x48] sm:$0xff]
    %v4471 = vld [vmem:[%s71 + $0x50] sm:$0xff]
    %v4472 = vld [vmem:[%s71 + $0x58] sm:$0xff]
    %v4473 = vld [vmem:[%s71 + $0x60] sm:$0xff]
    %v4474 = vld [vmem:[%s71 + $0x68] sm:$0xff]
    %v4475 = vld [vmem:[%s71 + $0x70] sm:$0xff]
    %v4476 = vld [vmem:[%s71 + $0x78] sm:$0xff]
    %v4477 = vld [vmem:[%s71 + $0x80] sm:$0xff]
    %v4478 = vld [vmem:[%s71 + $0x88] sm:$0xff]
    %v4479 = vld [vmem:[%s71 + $0x90] sm:$0xff]
    %v4480 = vld [vmem:[%s71 + $0x98] sm:$0xff]
    %v4481 = vld [vmem:[%s71 + $0xa0] sm:$0xff]
    %v4482 = vld [vmem:[%s71 + $0xa8] sm:$0xff]
    %v4483 = vld [vmem:[%s71 + $0xb0] sm:$0xff]
    %v4484 = vld [vmem:[%s71 + $0xb8] sm:$0xff]
    %v4485 = vld [vmem:[%s71 + $0xc0] sm:$0xff]
    %v4486 = vld [vmem:[%s71 + $0xc8] sm:$0xff]
    %v4487 = vld [vmem:[%s71 + $0xd0] sm:$0xff]
    %v4488 = vld [vmem:[%s71 + $0xd8] sm:$0xff]
    %v4489 = vld [vmem:[%s71 + $0xe0] sm:$0xff]
    %v4490 = vld [vmem:[%s71 + $0xe8] sm:$0xff]
    %v4491 = vld [vmem:[%s71 + $0xf0] sm:$0xff]
    %v4492 = vld [vmem:[%s71 + $0xf8] sm:$0xff]
    %v4493 = vld [vmem:[%s71 + $0x100] sm:$0xff]
    %v4494 = vld [vmem:[%s71 + $0x108] sm:$0xff]
    %v4495 = vld [vmem:[%s71 + $0x110] sm:$0xff]
    %v4496 = vld [vmem:[%s71 + $0x118] sm:$0xff]
    %v4497 = vld [vmem:[%s71 + $0x120] sm:$0xff]
    %v4498 = vld [vmem:[%s71 + $0x128] sm:$0xff]
    %v4499 = vld [vmem:[%s71 + $0x130] sm:$0xff]
    %v4500 = vld [vmem:[%s71 + $0x138] sm:$0xff]
    %v4501 = vld [vmem:[%s71 + $0x140] sm:$0xff]
    %v4502 = vld [vmem:[%s71 + $0x148] sm:$0xff]
    %v4503 = vld [vmem:[%s71 + $0x150] sm:$0xff]
    %v4504 = vld [vmem:[%s71 + $0x158] sm:$0xff]
    %v4505 = vld [vmem:[%s71 + $0x160] sm:$0xff]
    %v4506 = vld [vmem:[%s71 + $0x168] sm:$0xff]
    %v4507 = vld [vmem:[%s71 + $0x170] sm:$0xff]
    %v4508 = vld [vmem:[%s71 + $0x178] sm:$0xff]
    %v4509 = vld [vmem:[%s71 + $0x180] sm:$0xff]
    %v4510 = vld [vmem:[%s71 + $0x188] sm:$0xff]
    %v4511 = vld [vmem:[%s71 + $0x190] sm:$0xff]
    %v4512 = vld [vmem:[%s71 + $0x198] sm:$0xff]
    %v4513 = vld [vmem:[%s71 + $0x1a0] sm:$0xff]
    %v4514 = vld [vmem:[%s71 + $0x1a8] sm:$0xff]
    %v4515 = vld [vmem:[%s71 + $0x1b0] sm:$0xff]
    %v4516 = vld [vmem:[%s71 + $0x1b8] sm:$0xff]
    %v4518 = vsel %vm942, %v4460, 0
    %4520 = vmatprep.subr.mxu0 0.0
    %4521 = vmatpush1.msra.mxu0 %v4461
    %4522 = vmatprep.subr.mxu0 0.0
    %4523 = vmatpush1.msra.mxu0 %v4462
    %4524 = vmatprep.subr.mxu0 0.0
    %4525 = vmatpush1.msra.mxu0 %v4463
    %4526 = vmatprep.subr.mxu0 0.0
    %4527 = vmatpush1.msra.mxu0 %v4464
    %4528 = vmatprep.subr.mxu0 0.0
    %4529 = vmatpush1.msra.mxu0 %v4465
    %4530 = vmatprep.subr.mxu0 0.0
    %4531 = vmatpush1.msra.mxu0 %v4466
    %4532 = vmatprep.subr.mxu0 0.0
    %4533 = vmatpush1.msra.mxu0 %v4467
    %4534 = vmatprep.subr.mxu0 0.0
    %4535 = vmatpush1.msra.mxu0 %v4468
    %4536 = vmatprep.subr.mxu0 0.0
    %4537 = vmatpush1.msra.mxu0 %v4469
    %4538 = vmatprep.subr.mxu0 0.0
    %4539 = vmatpush1.msra.mxu0 %v4470
    %4540 = vmatprep.subr.mxu0 0.0
    %4541 = vmatpush1.msra.mxu0 %v4471
    %4542 = vmatprep.subr.mxu0 0.0
    %4543 = vmatpush1.msra.mxu0 %v4472
    %4544 = vmatprep.subr.mxu0 0.0
    %4545 = vmatpush1.msra.mxu0 %v4473
    %4546 = vmatprep.subr.mxu0 0.0
    %4547 = vmatpush1.msra.mxu0 %v4474
    %4548 = vmatprep.subr.mxu0 0.0
    %4549 = vmatpush1.msra.mxu0 %v4475
    %4550 = vmatprep.subr.mxu0 0.0
    %4551 = vmatpush1.msra.mxu0 %v4476
    %4552 = vmatprep.subr.mxu0 0.0
    %4553 = vmatpush1.msra.mxu0 %v4477
    %4554 = vmatprep.subr.mxu0 0.0
    %4555 = vmatpush1.msra.mxu0 %v4478
    %4556 = vmatprep.subr.mxu0 0.0
    %4557 = vmatpush1.msra.mxu0 %v4479
    %4558 = vmatprep.subr.mxu0 0.0
    %4559 = vmatpush1.msra.mxu0 %v4480
    %4560 = vmatprep.subr.mxu0 0.0
    %4561 = vmatpush1.msra.mxu0 %v4481
    %4562 = vmatprep.subr.mxu0 0.0
    %4563 = vmatpush1.msra.mxu0 %v4482
    %4564 = vmatprep.subr.mxu0 0.0
    %4565 = vmatpush1.msra.mxu0 %v4483
    %4566 = vmatprep.subr.mxu0 0.0
    %4567 = vmatpush1.msra.mxu0 %v4484
    %4568 = vmatprep.subr.mxu0 0.0
    %4569 = vmatpush1.msra.mxu0 %v4485
    %4570 = vmatprep.subr.mxu0 0.0
    %4571 = vmatpush1.msra.mxu0 %v4486
    %4572 = vmatprep.subr.mxu0 0.0
    %4573 = vmatpush1.msra.mxu0 %v4487
    %4574 = vmatprep.subr.mxu0 0.0
    %4575 = vmatpush1.msra.mxu0 %v4488
    %4576 = vmatprep.subr.mxu0 0.0
    %4577 = vmatpush1.msra.mxu0 %v4489
    %4578 = vmatprep.subr.mxu0 0.0
    %4579 = vmatpush1.msra.mxu0 %v4490
    %4580 = vmatprep.subr.mxu0 0.0
    %4581 = vmatpush1.msra.mxu0 %v4491
    %4582 = vmatprep.subr.mxu0 0.0
    %4583 = vmatpush1.msra.mxu0 %v4492
    %4584 = vmatprep.mubr.f32.mxu0 %v4458
    %4585 = vmatmul.mubr.f32.gmra.mrb[0].mxu0 %v4457
    %v4586 = vpop.f32.mrb[0].mxu0
    %v4587 = vadd.f32 0.0, %v4586
    %v4588 = vpop.f32.mrb[0].mxu0
    %4589 = vdwg.mxu0
    %4590 = vmatprep.subr.mxu0 0.0
    %4591 = vmatpush1.msra.mxu0 %v4493
    %4592 = vmatprep.subr.mxu0 0.0
    %4593 = vmatpush1.msra.mxu0 %v4494
    %4594 = vmatprep.subr.mxu0 0.0
    %4595 = vmatpush1.msra.mxu0 %v4495
    %4596 = vmatprep.subr.mxu0 0.0
    %4597 = vmatpush1.msra.mxu0 %v4496
    %4598 = vmatprep.subr.mxu0 0.0
    %4599 = vmatpush1.msra.mxu0 %v4497
    %4600 = vmatprep.subr.mxu0 0.0
    %4601 = vmatpush1.msra.mxu0 %v4498
    %4602 = vmatprep.subr.mxu0 0.0
    %4603 = vmatpush1.msra.mxu0 %v4499
    %4604 = vmatprep.subr.mxu0 0.0
    %4605 = vmatpush1.msra.mxu0 %v4500
    %4606 = vmatprep.subr.mxu0 0.0
    %4607 = vmatpush1.msra.mxu0 %v4501
    %4608 = vmatprep.subr.mxu0 0.0
    %4609 = vmatpush1.msra.mxu0 %v4502
    %4610 = vmatprep.subr.mxu0 0.0
    %4611 = vmatpush1.msra.mxu0 %v4503
    %4612 = vmatprep.subr.mxu0 0.0
    %4613 = vmatpush1.msra.mxu0 %v4504
    %4614 = vmatprep.subr.mxu0 0.0
    %4615 = vmatpush1.msra.mxu0 %v4505
    %4616 = vmatprep.subr.mxu0 0.0
    %4617 = vmatpush1.msra.mxu0 %v4506
    %4618 = vmatprep.subr.mxu0 0.0
    %4619 = vmatpush1.msra.mxu0 %v4507
    %4620 = vmatprep.subr.mxu0 0.0
    %4621 = vmatpush1.msra.mxu0 %v4508
    %4622 = vmatprep.subr.mxu0 0.0
    %4623 = vmatpush1.msra.mxu0 %v4509
    %4624 = vmatprep.subr.mxu0 0.0
    %4625 = vmatpush1.msra.mxu0 %v4510
    %4626 = vmatprep.subr.mxu0 0.0
    %4627 = vmatpush1.msra.mxu0 %v4511
    %4628 = vmatprep.subr.mxu0 0.0
    %4629 = vmatpush1.msra.mxu0 %v4512
    %4630 = vmatprep.subr.mxu0 0.0
    %4631 = vmatpush1.msra.mxu0 %v4513
    %4632 = vmatprep.subr.mxu0 0.0
    %4633 = vmatpush1.msra.mxu0 %v4514
    %4634 = vmatprep.subr.mxu0 0.0
    %4635 = vmatpush1.msra.mxu0 %v4515
    %4636 = vmatprep.subr.mxu0 0.0
    %4637 = vmatpush1.msra.mxu0 %v4516
    %4638 = vmatprep.subr.mxu0 0.0
    %4639 = vmatpush1.msra.mxu0 0.0
    %4640 = vmatprep.subr.mxu0 0.0
    %4641 = vmatpush1.msra.mxu0 0.0
    %4642 = vmatprep.subr.mxu0 0.0
    %4643 = vmatpush1.msra.mxu0 0.0
    %4644 = vmatprep.subr.mxu0 0.0
    %4645 = vmatpush1.msra.mxu0 0.0
    %4646 = vmatprep.subr.mxu0 0.0
    %4647 = vmatpush1.msra.mxu0 0.0
    %4648 = vmatprep.subr.mxu0 0.0
    %4649 = vmatpush1.msra.mxu0 0.0
    %4650 = vmatprep.subr.mxu0 0.0
    %4651 = vmatpush1.msra.mxu0 0.0
    %4652 = vmatprep.subr.mxu0 0.0
    %4653 = vmatpush1.msra.mxu0 0.0
    %4654 = vmatprep.mubr.f32.mxu0 %v4518
    %4655 = vmatmul.mubr.f32.gmra.mrb[0].mxu0 %v4459
    %v4656 = vpop.f32.mrb[0].mxu0
    %v4657 = vadd.f32 %v4587, %v4656
    %v4658 = vpop.f32.mrb[0].mxu0
    %4659 = vdwg.mxu0
    %v4660 = vadd.f32 %v3372, %v4657
    %v4661 = vld [vmem:[%s73] sm:$0x7f]
    %v4663 = vsel %vm4302, %v4661, 0
    %4665 = vmatprep.subr.mxu0 0.0
    %4666 = vmatpush1.msra.mxu0 %v4663
    %4667 = vmatprep.subr.mxu0 0.0
    %4668 = vmatpush1.msra.mxu0 0.0
    %4669 = vmatprep.subr.mxu0 0.0
    %4670 = vmatpush1.msra.mxu0 0.0
    %4671 = vmatprep.subr.mxu0 0.0
    %4672 = vmatpush1.msra.mxu0 0.0
    %4673 = vmatprep.subr.mxu0 0.0
    %4674 = vmatpush1.msra.mxu0 0.0
    %4675 = vmatprep.subr.mxu0 0.0
    %4676 = vmatpush1.msra.mxu0 0.0
    %4677 = vmatprep.subr.mxu0 0.0
    %4678 = vmatpush1.msra.mxu0 0.0
    %4679 = vmatprep.subr.mxu0 0.0
    %4680 = vmatpush1.msra.mxu0 0.0
    %4681 = vmatprep.subr.mxu0 0.0
    %4682 = vmatpush1.msra.mxu0 0.0
    %4683 = vmatprep.subr.mxu0 0.0
    %4684 = vmatpush1.msra.mxu0 0.0
    %4685 = vmatprep.subr.mxu0 0.0
    %4686 = vmatpush1.msra.mxu0 0.0
    %4687 = vmatprep.subr.mxu0 0.0
    %4688 = vmatpush1.msra.mxu0 0.0
    %4689 = vmatprep.subr.mxu0 0.0
    %4690 = vmatpush1.msra.mxu0 0.0
    %4691 = vmatprep.subr.mxu0 0.0
    %4692 = vmatpush1.msra.mxu0 0.0
    %4693 = vmatprep.subr.mxu0 0.0
    %4694 = vmatpush1.msra.mxu0 0.0
    %4695 = vmatprep.subr.mxu0 0.0
    %4696 = vmatpush1.msra.mxu0 0.0
    %4697 = vmatprep.subr.mxu0 0.0
    %4698 = vmatpush1.msra.mxu0 0.0
    %4699 = vmatprep.subr.mxu0 0.0
    %4700 = vmatpush1.msra.mxu0 0.0
    %4701 = vmatprep.subr.mxu0 0.0
    %4702 = vmatpush1.msra.mxu0 0.0
    %4703 = vmatprep.subr.mxu0 0.0
    %4704 = vmatpush1.msra.mxu0 0.0
    %4705 = vmatprep.subr.mxu0 0.0
    %4706 = vmatpush1.msra.mxu0 0.0
    %4707 = vmatprep.subr.mxu0 0.0
    %4708 = vmatpush1.msra.mxu0 0.0
    %4709 = vmatprep.subr.mxu0 0.0
    %4710 = vmatpush1.msra.mxu0 0.0
    %4711 = vmatprep.subr.mxu0 0.0
    %4712 = vmatpush1.msra.mxu0 0.0
    %4713 = vmatprep.subr.mxu0 0.0
    %4714 = vmatpush1.msra.mxu0 0.0
    %4715 = vmatprep.subr.mxu0 0.0
    %4716 = vmatpush1.msra.mxu0 0.0
    %4717 = vmatprep.subr.mxu0 0.0
    %4718 = vmatpush1.msra.mxu0 0.0
    %4719 = vmatprep.subr.mxu0 0.0
    %4720 = vmatpush1.msra.mxu0 0.0
    %4721 = vmatprep.subr.mxu0 0.0
    %4722 = vmatpush1.msra.mxu0 0.0
    %4723 = vmatprep.subr.mxu0 0.0
    %4724 = vmatpush1.msra.mxu0 0.0
    %4725 = vmatprep.subr.mxu0 0.0
    %4726 = vmatpush1.msra.mxu0 0.0
    %4727 = vmatprep.subr.mxu0 0.0
    %4728 = vmatpush1.msra.mxu0 0.0
    %4729 = vmatprep.mubr.f32.mxu0 0.0
    %4730 = vmatmul.mubr.f32.gmra.mrb[0].mxu0 %v4300
    %v4731 = vpop.f32.mrb[0].mxu0
    %v4732 = vadd.f32 0.0, %v4731
    %v4733 = vpop.f32.mrb[0].mxu0
    %4734 = vdwg.mxu0
    %v4735 = vadd.f32 %v4660, %v4732
    %v4736 = vsel %vm2418, %v4735, 0.0
    %4737 = vadd.xlane.f32.xlu0 %v4736
    %v4738 = vpop.xlane.xlu0 %4737
    %v4739 = vmul.f32 %v4738, %v2422
    %v4740 = vsub.f32 %v4735, %v4739
    %v4741 = vmul.f32 %v4740, %v4740
    %v4742 = vsel %vm2418, %v4741, 0.0
    %4743 = vadd.xlane.f32.xlu0 %v4742
    %v4744 = vpop.xlane.xlu0 %4743
    %v4745 = vmul.f32 %v4744, %v2422
    %v4746 = vadd.f32 %v4745, 1e-05
    %v4747 = vrsqrt.pop %v4746
    %v4748 = vmul.f32 %v4740, %v4747
    %s4749 = scalar_lea.vmem [#allocation28], 1
    %v4750 = vld [vmem:[%s4749] sm:$0x1]
    %v4752 = vlaneseq
    %v4753 = vshrl.u32 %v4752, 7
    %v4754 = vsub.s32 0, %v4753
    %v4755 = vrot.slane %v4750, %v4754
    %v4757 = vmul.f32 %v4748, %v4755
    %s4758 = scalar_lea.vmem [#allocation29], 1
    %v4759 = vld [vmem:[%s4758] sm:$0x1]
    %v4761 = vlaneseq
    %v4762 = vshrl.u32 %v4761, 7
    %v4763 = vsub.s32 0, %v4762
    %v4764 = vrot.slane %v4759, %v4763
    %v4766 = vadd.f32 %v4757, %v4764
    %s4767 = scalar_lea.vmem [#allocation31], 32
    %v4768 = vld [vmem:[%s4767] sm:$0xff]
    %v4769 = vld [vmem:[%s4767 + $0x8] sm:$0xff]
    %v4770 = vld [vmem:[%s4767 + $0x10] sm:$0xff]
    %v4771 = vld [vmem:[%s4767 + $0x18] sm:$0xff]
    %v4773 = vsel %vm1107, %v4766, 0
    %4775 = vmatprep.subr.mxu0 0.0
    %4776 = vmatpush1.msra.mxu0 %v4768
    %4777 = vmatprep.subr.mxu0 0.0
    %4778 = vmatpush1.msra.mxu0 %v4769
    %4779 = vmatprep.subr.mxu0 0.0
    %4780 = vmatpush1.msra.mxu0 %v4770
    %4781 = vmatprep.subr.mxu0 0.0
    %4782 = vmatpush1.msra.mxu0 %v4771
    %4783 = vmatprep.subr.mxu0 0.0
    %4784 = vmatpush1.msra.mxu0 0.0
    %4785 = vmatprep.subr.mxu0 0.0
    %4786 = vmatpush1.msra.mxu0 0.0
    %4787 = vmatprep.subr.mxu0 0.0
    %4788 = vmatpush1.msra.mxu0 0.0
    %4789 = vmatprep.subr.mxu0 0.0
    %4790 = vmatpush1.msra.mxu0 0.0
    %4791 = vmatprep.subr.mxu0 0.0
    %4792 = vmatpush1.msra.mxu0 0.0
    %4793 = vmatprep.subr.mxu0 0.0
    %4794 = vmatpush1.msra.mxu0 0.0
    %4795 = vmatprep.subr.mxu0 0.0
    %4796 = vmatpush1.msra.mxu0 0.0
    %4797 = vmatprep.subr.mxu0 0.0
    %4798 = vmatpush1.msra.mxu0 0.0
    %4799 = vmatprep.subr.mxu0 0.0
    %4800 = vmatpush1.msra.mxu0 0.0
    %4801 = vmatprep.subr.mxu0 0.0
    %4802 = vmatpush1.msra.mxu0 0.0
    %4803 = vmatprep.subr.mxu0 0.0
    %4804 = vmatpush1.msra.mxu0 0.0
    %4805 = vmatprep.subr.mxu0 0.0
    %4806 = vmatpush1.msra.mxu0 0.0
    %4807 = vmatprep.subr.mxu0 0.0
    %4808 = vmatpush1.msra.mxu0 0.0
    %4809 = vmatprep.subr.mxu0 0.0
    %4810 = vmatpush1.msra.mxu0 0.0
    %4811 = vmatprep.subr.mxu0 0.0
    %4812 = vmatpush1.msra.mxu0 0.0
    %4813 = vmatprep.subr.mxu0 0.0
    %4814 = vmatpush1.msra.mxu0 0.0
    %4815 = vmatprep.subr.mxu0 0.0
    %4816 = vmatpush1.msra.mxu0 0.0
    %4817 = vmatprep.subr.mxu0 0.0
    %4818 = vmatpush1.msra.mxu0 0.0
    %4819 = vmatprep.subr.mxu0 0.0
    %4820 = vmatpush1.msra.mxu0 0.0
    %4821 = vmatprep.subr.mxu0 0.0
    %4822 = vmatpush1.msra.mxu0 0.0
    %4823 = vmatprep.subr.mxu0 0.0
    %4824 = vmatpush1.msra.mxu0 0.0
    %4825 = vmatprep.subr.mxu0 0.0
    %4826 = vmatpush1.msra.mxu0 0.0
    %4827 = vmatprep.subr.mxu0 0.0
    %4828 = vmatpush1.msra.mxu0 0.0
    %4829 = vmatprep.subr.mxu0 0.0
    %4830 = vmatpush1.msra.mxu0 0.0
    %4831 = vmatprep.subr.mxu0 0.0
    %4832 = vmatpush1.msra.mxu0 0.0
    %4833 = vmatprep.subr.mxu0 0.0
    %4834 = vmatpush1.msra.mxu0 0.0
    %4835 = vmatprep.subr.mxu0 0.0
    %4836 = vmatpush1.msra.mxu0 0.0
    %4837 = vmatprep.subr.mxu0 0.0
    %4838 = vmatpush1.msra.mxu0 0.0
    %4839 = vmatprep.mubr.f32.mxu0 0.0
    %4840 = vmatmul.mubr.f32.gmra.mrb[0].mxu0 %v4773
    %v4841 = vpop.f32.mrb[0].mxu0
    %v4842 = vadd.f32 0.0, %v4841
    %v4843 = vpop.f32.mrb[0].mxu0
    %4844 = vdwg.mxu0
    %s4845 = scalar_lea.vmem [#allocation32], 32
    %v4846 = vld [vmem:[%s4845] sm:$0xff]
    %v4847 = vld [vmem:[%s4845 + $0x8] sm:$0xff]
    %v4848 = vld [vmem:[%s4845 + $0x10] sm:$0xff]
    %v4849 = vld [vmem:[%s4845 + $0x18] sm:$0xff]
    %4850 = vmatprep.subr.mxu0 0.0
    %4851 = vmatpush1.msra.mxu0 %v4846
    %4852 = vmatprep.subr.mxu0 0.0
    %4853 = vmatpush1.msra.mxu0 %v4847
    %4854 = vmatprep.subr.mxu0 0.0
    %4855 = vmatpush1.msra.mxu0 %v4848
    %4856 = vmatprep.subr.mxu0 0.0
    %4857 = vmatpush1.msra.mxu0 %v4849
    %4858 = vmatprep.subr.mxu0 0.0
    %4859 = vmatpush1.msra.mxu0 0.0
    %4860 = vmatprep.subr.mxu0 0.0
    %4861 = vmatpush1.msra.mxu0 0.0
    %4862 = vmatprep.subr.mxu0 0.0
    %4863 = vmatpush1.msra.mxu0 0.0
    %4864 = vmatprep.subr.mxu0 0.0
    %4865 = vmatpush1.msra.mxu0 0.0
    %4866 = vmatprep.subr.mxu0 0.0
    %4867 = vmatpush1.msra.mxu0 0.0
    %4868 = vmatprep.subr.mxu0 0.0
    %4869 = vmatpush1.msra.mxu0 0.0
    %4870 = vmatprep.subr.mxu0 0.0
    %4871 = vmatpush1.msra.mxu0 0.0
    %4872 = vmatprep.subr.mxu0 0.0
    %4873 = vmatpush1.msra.mxu0 0.0
    %4874 = vmatprep.subr.mxu0 0.0
    %4875 = vmatpush1.msra.mxu0 0.0
    %4876 = vmatprep.subr.mxu0 0.0
    %4877 = vmatpush1.msra.mxu0 0.0
    %4878 = vmatprep.subr.mxu0 0.0
    %4879 = vmatpush1.msra.mxu0 0.0
    %4880 = vmatprep.subr.mxu0 0.0
    %4881 = vmatpush1.msra.mxu0 0.0
    %4882 = vmatprep.subr.mxu0 0.0
    %4883 = vmatpush1.msra.mxu0 0.0
    %4884 = vmatprep.subr.mxu0 0.0
    %4885 = vmatpush1.msra.mxu0 0.0
    %4886 = vmatprep.subr.mxu0 0.0
    %4887 = vmatpush1.msra.mxu0 0.0
    %4888 = vmatprep.subr.mxu0 0.0
    %4889 = vmatpush1.msra.mxu0 0.0
    %4890 = vmatprep.subr.mxu0 0.0
    %4891 = vmatpush1.msra.mxu0 0.0
    %4892 = vmatprep.subr.mxu0 0.0
    %4893 = vmatpush1.msra.mxu0 0.0
    %4894 = vmatprep.subr.mxu0 0.0
    %4895 = vmatpush1.msra.mxu0 0.0
    %4896 = vmatprep.subr.mxu0 0.0
    %4897 = vmatpush1.msra.mxu0 0.0
    %4898 = vmatprep.subr.mxu0 0.0
    %4899 = vmatpush1.msra.mxu0 0.0
    %4900 = vmatprep.subr.mxu0 0.0
    %4901 = vmatpush1.msra.mxu0 0.0
    %4902 = vmatprep.subr.mxu0 0.0
    %4903 = vmatpush1.msra.mxu0 0.0
    %4904 = vmatprep.subr.mxu0 0.0
    %4905 = vmatpush1.msra.mxu0 0.0
    %4906 = vmatprep.subr.mxu0 0.0
    %4907 = vmatpush1.msra.mxu0 0.0
    %4908 = vmatprep.subr.mxu0 0.0
    %4909 = vmatpush1.msra.mxu0 0.0
    %4910 = vmatprep.subr.mxu0 0.0
    %4911 = vmatpush1.msra.mxu0 0.0
    %4912 = vmatprep.subr.mxu0 0.0
    %4913 = vmatpush1.msra.mxu0 0.0
    %4914 = vmatprep.mubr.f32.mxu0 0.0
    %4915 = vmatmul.mubr.f32.gmra.mrb[0].mxu0 %v4773
    %v4916 = vpop.f32.mrb[0].mxu0
    %v4917 = vadd.f32 0.0, %v4916
    %v4918 = vpop.f32.mrb[0].mxu0
    %4919 = vdwg.mxu0
    %v4921 = vsel %vm2600, %v4842, 0
    %v4924 = vsel %vm2600, %v4917, 0
    %4926 = vmatprep.subr.mxu0 0.0
    %4927 = vmatpush1.xpose.msra.mxu0 %v4924
    %4928 = vmatprep.subr.mxu0 0.0
    %4929 = vmatpush1.xpose.msra.mxu0 0.0
    %4930 = vmatprep.subr.mxu0 0.0
    %4931 = vmatpush1.xpose.msra.mxu0 0.0
    %4932 = vmatprep.subr.mxu0 0.0
    %4933 = vmatpush1.xpose.msra.mxu0 0.0
    %4934 = vmatprep.subr.mxu0 0.0
    %4935 = vmatpush1.xpose.msra.mxu0 0.0
    %4936 = vmatprep.subr.mxu0 0.0
    %4937 = vmatpush1.xpose.msra.mxu0 0.0
    %4938 = vmatprep.subr.mxu0 0.0
    %4939 = vmatpush1.xpose.msra.mxu0 0.0
    %4940 = vmatprep.subr.mxu0 0.0
    %4941 = vmatpush1.xpose.msra.mxu0 0.0
    %4942 = vmatprep.subr.mxu0 0.0
    %4943 = vmatpush1.xpose.msra.mxu0 0.0
    %4944 = vmatprep.subr.mxu0 0.0
    %4945 = vmatpush1.xpose.msra.mxu0 0.0
    %4946 = vmatprep.subr.mxu0 0.0
    %4947 = vmatpush1.xpose.msra.mxu0 0.0
    %4948 = vmatprep.subr.mxu0 0.0
    %4949 = vmatpush1.xpose.msra.mxu0 0.0
    %4950 = vmatprep.subr.mxu0 0.0
    %4951 = vmatpush1.xpose.msra.mxu0 0.0
    %4952 = vmatprep.subr.mxu0 0.0
    %4953 = vmatpush1.xpose.msra.mxu0 0.0
    %4954 = vmatprep.subr.mxu0 0.0
    %4955 = vmatpush1.xpose.msra.mxu0 0.0
    %4956 = vmatprep.subr.mxu0 0.0
    %4957 = vmatpush1.xpose.msra.mxu0 0.0
    %4958 = vmatprep.subr.mxu0 0.0
    %4959 = vmatpush1.xpose.msra.mxu0 0.0
    %4960 = vmatprep.subr.mxu0 0.0
    %4961 = vmatpush1.xpose.msra.mxu0 0.0
    %4962 = vmatprep.subr.mxu0 0.0
    %4963 = vmatpush1.xpose.msra.mxu0 0.0
    %4964 = vmatprep.subr.mxu0 0.0
    %4965 = vmatpush1.xpose.msra.mxu0 0.0
    %4966 = vmatprep.subr.mxu0 0.0
    %4967 = vmatpush1.xpose.msra.mxu0 0.0
    %4968 = vmatprep.subr.mxu0 0.0
    %4969 = vmatpush1.xpose.msra.mxu0 0.0
    %4970 = vmatprep.subr.mxu0 0.0
    %4971 = vmatpush1.xpose.msra.mxu0 0.0
    %4972 = vmatprep.subr.mxu0 0.0
    %4973 = vmatpush1.xpose.msra.mxu0 0.0
    %4974 = vmatprep.subr.mxu0 0.0
    %4975 = vmatpush1.xpose.msra.mxu0 0.0
    %4976 = vmatprep.subr.mxu0 0.0
    %4977 = vmatpush1.xpose.msra.mxu0 0.0
    %4978 = vmatprep.subr.mxu0 0.0
    %4979 = vmatpush1.xpose.msra.mxu0 0.0
    %4980 = vmatprep.subr.mxu0 0.0
    %4981 = vmatpush1.xpose.msra.mxu0 0.0
    %4982 = vmatprep.subr.mxu0 0.0
    %4983 = vmatpush1.xpose.msra.mxu0 0.0
    %4984 = vmatprep.subr.mxu0 0.0
    %4985 = vmatpush1.xpose.msra.mxu0 0.0
    %4986 = vmatprep.subr.mxu0 0.0
    %4987 = vmatpush1.xpose.msra.mxu0 0.0
    %4988 = vmatprep.subr.mxu0 0.0
    %4989 = vmatpush1.xpose.msra.mxu0 0.0
    %4990 = vmatprep.mubr.f32.mxu0 0.0
    %4991 = vmatmul.mubr.f32.gmra.mrb[0].mxu0 %v4921
    %v4992 = vpop.f32.mrb[0].mxu0
    %v4993 = vadd.f32 0.0, %v4992
    %v4994 = vpop.f32.mrb[0].mxu0
    %4995 = vdwg.mxu0
    %v4996 = vmul.f32 %v4993, 0.35355338
    %v4997 = vsel %vm2678, %v4996, -inf
    %4998 = vmax.xlane.f32.xlu0 %v4997
    %v4999 = vpop.xlane.xlu0 %4998
    %v5000 = vsub.f32 %v4996, %v4999
    %v5001 = vmul.f32 %v5000, 1.442695
    %v5002 = vpow.pop %v5001
    %v5003 = vsel %vm2678, %v5002, 0.0
    %5004 = vadd.xlane.f32.xlu0 %v5003
    %v5005 = vpop.xlane.xlu0 %5004
    %v5006 = vrcp.pop %v5005
    %v5007 = vmul.f32 %v5002, %v5006
    %5008 = vrot.lane.b32.xlu0 %v4917, 96
    %v5009 = vpop.permute.xlu0 %5008
    %v5011 = vsel %vm2692, %v5007, 0
    %v5013 = vsel %vm2696, %v5009, 0
    %5015 = vmatprep.subr.mxu0 0.0
    %5016 = vmatpush1.msra.mxu0 %v5013
    %5017 = vmatprep.subr.mxu0 0.0
    %5018 = vmatpush1.msra.mxu0 0.0
    %5019 = vmatprep.subr.mxu0 0.0
    %5020 = vmatpush1.msra.mxu0 0.0
    %5021 = vmatprep.subr.mxu0 0.0
    %5022 = vmatpush1.msra.mxu0 0.0
    %5023 = vmatprep.subr.mxu0 0.0
    %5024 = vmatpush1.msra.mxu0 0.0
    %5025 = vmatprep.subr.mxu0 0.0
    %5026 = vmatpush1.msra.mxu0 0.0
    %5027 = vmatprep.subr.mxu0 0.0
    %5028 = vmatpush1.msra.mxu0 0.0
    %5029 = vmatprep.subr.mxu0 0.0
    %5030 = vmatpush1.msra.mxu0 0.0
    %5031 = vmatprep.subr.mxu0 0.0
    %5032 = vmatpush1.msra.mxu0 0.0
    %5033 = vmatprep.subr.mxu0 0.0
    %5034 = vmatpush1.msra.mxu0 0.0
    %5035 = vmatprep.subr.mxu0 0.0
    %5036 = vmatpush1.msra.mxu0 0.0
    %5037 = vmatprep.subr.mxu0 0.0
    %5038 = vmatpush1.msra.mxu0 0.0
    %5039 = vmatprep.subr.mxu0 0.0
    %5040 = vmatpush1.msra.mxu0 0.0
    %5041 = vmatprep.subr.mxu0 0.0
    %5042 = vmatpush1.msra.mxu0 0.0
    %5043 = vmatprep.subr.mxu0 0.0
    %5044 = vmatpush1.msra.mxu0 0.0
    %5045 = vmatprep.subr.mxu0 0.0
    %5046 = vmatpush1.msra.mxu0 0.0
    %5047 = vmatprep.subr.mxu0 0.0
    %5048 = vmatpush1.msra.mxu0 0.0
    %5049 = vmatprep.subr.mxu0 0.0
    %5050 = vmatpush1.msra.mxu0 0.0
    %5051 = vmatprep.subr.mxu0 0.0
    %5052 = vmatpush1.msra.mxu0 0.0
    %5053 = vmatprep.subr.mxu0 0.0
    %5054 = vmatpush1.msra.mxu0 0.0
    %5055 = vmatprep.subr.mxu0 0.0
    %5056 = vmatpush1.msra.mxu0 0.0
    %5057 = vmatprep.subr.mxu0 0.0
    %5058 = vmatpush1.msra.mxu0 0.0
    %5059 = vmatprep.subr.mxu0 0.0
    %5060 = vmatpush1.msra.mxu0 0.0
    %5061 = vmatprep.subr.mxu0 0.0
    %5062 = vmatpush1.msra.mxu0 0.0
    %5063 = vmatprep.subr.mxu0 0.0
    %5064 = vmatpush1.msra.mxu0 0.0
    %5065 = vmatprep.subr.mxu0 0.0
    %5066 = vmatpush1.msra.mxu0 0.0
    %5067 = vmatprep.subr.mxu0 0.0
    %5068 = vmatpush1.msra.mxu0 0.0
    %5069 = vmatprep.subr.mxu0 0.0
    %5070 = vmatpush1.msra.mxu0 0.0
    %5071 = vmatprep.subr.mxu0 0.0
    %5072 = vmatpush1.msra.mxu0 0.0
    %5073 = vmatprep.subr.mxu0 0.0
    %5074 = vmatpush1.msra.mxu0 0.0
    %5075 = vmatprep.subr.mxu0 0.0
    %5076 = vmatpush1.msra.mxu0 0.0
    %5077 = vmatprep.subr.mxu0 0.0
    %5078 = vmatpush1.msra.mxu0 0.0
    %5079 = vmatprep.mubr.f32.mxu0 0.0
    %5080 = vmatmul.mubr.f32.gmra.mrb[0].mxu0 %v5011
    %v5081 = vpop.f32.mrb[0].mxu0
    %v5082 = vadd.f32 0.0, %v5081
    %v5083 = vpop.f32.mrb[0].mxu0
    %5084 = vdwg.mxu0
    %5085 = vrot.lane.b32.xlu0 %v4842, 120
    %v5086 = vpop.permute.xlu0 %5085
    %5087 = vrot.lane.b32.xlu0 %v4917, 120
    %v5088 = vpop.permute.xlu0 %5087
    %v5089 = vsel %vm2600, %v5086, 0
    %v5091 = vsel %vm2600, %v5088, 0
    %5093 = vmatprep.subr.mxu0 0.0
    %5094 = vmatpush1.xpose.msra.mxu0 %v5091
    %5095 = vmatprep.subr.mxu0 0.0
    %5096 = vmatpush1.xpose.msra.mxu0 0.0
    %5097 = vmatprep.subr.mxu0 0.0
    %5098 = vmatpush1.xpose.msra.mxu0 0.0
    %5099 = vmatprep.subr.mxu0 0.0
    %5100 = vmatpush1.xpose.msra.mxu0 0.0
    %5101 = vmatprep.subr.mxu0 0.0
    %5102 = vmatpush1.xpose.msra.mxu0 0.0
    %5103 = vmatprep.subr.mxu0 0.0
    %5104 = vmatpush1.xpose.msra.mxu0 0.0
    %5105 = vmatprep.subr.mxu0 0.0
    %5106 = vmatpush1.xpose.msra.mxu0 0.0
    %5107 = vmatprep.subr.mxu0 0.0
    %5108 = vmatpush1.xpose.msra.mxu0 0.0
    %5109 = vmatprep.subr.mxu0 0.0
    %5110 = vmatpush1.xpose.msra.mxu0 0.0
    %5111 = vmatprep.subr.mxu0 0.0
    %5112 = vmatpush1.xpose.msra.mxu0 0.0
    %5113 = vmatprep.subr.mxu0 0.0
    %5114 = vmatpush1.xpose.msra.mxu0 0.0
    %5115 = vmatprep.subr.mxu0 0.0
    %5116 = vmatpush1.xpose.msra.mxu0 0.0
    %5117 = vmatprep.subr.mxu0 0.0
    %5118 = vmatpush1.xpose.msra.mxu0 0.0
    %5119 = vmatprep.subr.mxu0 0.0
    %5120 = vmatpush1.xpose.msra.mxu0 0.0
    %5121 = vmatprep.subr.mxu0 0.0
    %5122 = vmatpush1.xpose.msra.mxu0 0.0
    %5123 = vmatprep.subr.mxu0 0.0
    %5124 = vmatpush1.xpose.msra.mxu0 0.0
    %5125 = vmatprep.subr.mxu0 0.0
    %5126 = vmatpush1.xpose.msra.mxu0 0.0
    %5127 = vmatprep.subr.mxu0 0.0
    %5128 = vmatpush1.xpose.msra.mxu0 0.0
    %5129 = vmatprep.subr.mxu0 0.0
    %5130 = vmatpush1.xpose.msra.mxu0 0.0
    %5131 = vmatprep.subr.mxu0 0.0
    %5132 = vmatpush1.xpose.msra.mxu0 0.0
    %5133 = vmatprep.subr.mxu0 0.0
    %5134 = vmatpush1.xpose.msra.mxu0 0.0
    %5135 = vmatprep.subr.mxu0 0.0
    %5136 = vmatpush1.xpose.msra.mxu0 0.0
    %5137 = vmatprep.subr.mxu0 0.0
    %5138 = vmatpush1.xpose.msra.mxu0 0.0
    %5139 = vmatprep.subr.mxu0 0.0
    %5140 = vmatpush1.xpose.msra.mxu0 0.0
    %5141 = vmatprep.subr.mxu0 0.0
    %5142 = vmatpush1.xpose.msra.mxu0 0.0
    %5143 = vmatprep.subr.mxu0 0.0
    %5144 = vmatpush1.xpose.msra.mxu0 0.0
    %5145 = vmatprep.subr.mxu0 0.0
    %5146 = vmatpush1.xpose.msra.mxu0 0.0
    %5147 = vmatprep.subr.mxu0 0.0
    %5148 = vmatpush1.xpose.msra.mxu0 0.0
    %5149 = vmatprep.subr.mxu0 0.0
    %5150 = vmatpush1.xpose.msra.mxu0 0.0
    %5151 = vmatprep.subr.mxu0 0.0
    %5152 = vmatpush1.xpose.msra.mxu0 0.0
    %5153 = vmatprep.subr.mxu0 0.0
    %5154 = vmatpush1.xpose.msra.mxu0 0.0
    %5155 = vmatprep.subr.mxu0 0.0
    %5156 = vmatpush1.xpose.msra.mxu0 0.0
    %5157 = vmatprep.mubr.f32.mxu0 0.0
    %5158 = vmatmul.mubr.f32.gmra.mrb[0].mxu0 %v5089
    %v5159 = vpop.f32.mrb[0].mxu0
    %v5160 = vadd.f32 0.0, %v5159
    %v5161 = vpop.f32.mrb[0].mxu0
    %5162 = vdwg.mxu0
    %v5163 = vmul.f32 %v5160, 0.35355338
    %v5164 = vsel %vm2678, %v5163, -inf
    %5165 = vmax.xlane.f32.xlu0 %v5164
    %v5166 = vpop.xlane.xlu0 %5165
    %v5167 = vsub.f32 %v5163, %v5166
    %v5168 = vmul.f32 %v5167, 1.442695
    %v5169 = vpow.pop %v5168
    %v5170 = vsel %vm2678, %v5169, 0.0
    %5171 = vadd.xlane.f32.xlu0 %v5170
    %v5172 = vpop.xlane.xlu0 %5171
    %v5173 = vrcp.pop %v5172
    %v5174 = vmul.f32 %v5169, %v5173
    %5175 = vrot.lane.b32.xlu0 %v4917, 88
    %v5176 = vpop.permute.xlu0 %5175
    %v5178 = vsel %vm2692, %v5174, 0
    %v5180 = vsel %vm2696, %v5176, 0
    %5182 = vmatprep.subr.mxu0 0.0
    %5183 = vmatpush1.msra.mxu0 %v5180
    %5184 = vmatprep.subr.mxu0 0.0
    %5185 = vmatpush1.msra.mxu0 0.0
    %5186 = vmatprep.subr.mxu0 0.0
    %5187 = vmatpush1.msra.mxu0 0.0
    %5188 = vmatprep.subr.mxu0 0.0
    %5189 = vmatpush1.msra.mxu0 0.0
    %5190 = vmatprep.subr.mxu0 0.0
    %5191 = vmatpush1.msra.mxu0 0.0
    %5192 = vmatprep.subr.mxu0 0.0
    %5193 = vmatpush1.msra.mxu0 0.0
    %5194 = vmatprep.subr.mxu0 0.0
    %5195 = vmatpush1.msra.mxu0 0.0
    %5196 = vmatprep.subr.mxu0 0.0
    %5197 = vmatpush1.msra.mxu0 0.0
    %5198 = vmatprep.subr.mxu0 0.0
    %5199 = vmatpush1.msra.mxu0 0.0
    %5200 = vmatprep.subr.mxu0 0.0
    %5201 = vmatpush1.msra.mxu0 0.0
    %5202 = vmatprep.subr.mxu0 0.0
    %5203 = vmatpush1.msra.mxu0 0.0
    %5204 = vmatprep.subr.mxu0 0.0
    %5205 = vmatpush1.msra.mxu0 0.0
    %5206 = vmatprep.subr.mxu0 0.0
    %5207 = vmatpush1.msra.mxu0 0.0
    %5208 = vmatprep.subr.mxu0 0.0
    %5209 = vmatpush1.msra.mxu0 0.0
    %5210 = vmatprep.subr.mxu0 0.0
    %5211 = vmatpush1.msra.mxu0 0.0
    %5212 = vmatprep.subr.mxu0 0.0
    %5213 = vmatpush1.msra.mxu0 0.0
    %5214 = vmatprep.subr.mxu0 0.0
    %5215 = vmatpush1.msra.mxu0 0.0
    %5216 = vmatprep.subr.mxu0 0.0
    %5217 = vmatpush1.msra.mxu0 0.0
    %5218 = vmatprep.subr.mxu0 0.0
    %5219 = vmatpush1.msra.mxu0 0.0
    %5220 = vmatprep.subr.mxu0 0.0
    %5221 = vmatpush1.msra.mxu0 0.0
    %5222 = vmatprep.subr.mxu0 0.0
    %5223 = vmatpush1.msra.mxu0 0.0
    %5224 = vmatprep.subr.mxu0 0.0
    %5225 = vmatpush1.msra.mxu0 0.0
    %5226 = vmatprep.subr.mxu0 0.0
    %5227 = vmatpush1.msra.mxu0 0.0
    %5228 = vmatprep.subr.mxu0 0.0
    %5229 = vmatpush1.msra.mxu0 0.0
    %5230 = vmatprep.subr.mxu0 0.0
    %5231 = vmatpush1.msra.mxu0 0.0
    %5232 = vmatprep.subr.mxu0 0.0
    %5233 = vmatpush1.msra.mxu0 0.0
    %5234 = vmatprep.subr.mxu0 0.0
    %5235 = vmatpush1.msra.mxu0 0.0
    %5236 = vmatprep.subr.mxu0 0.0
    %5237 = vmatpush1.msra.mxu0 0.0
    %5238 = vmatprep.subr.mxu0 0.0
    %5239 = vmatpush1.msra.mxu0 0.0
    %5240 = vmatprep.subr.mxu0 0.0
    %5241 = vmatpush1.msra.mxu0 0.0
    %5242 = vmatprep.subr.mxu0 0.0
    %5243 = vmatpush1.msra.mxu0 0.0
    %5244 = vmatprep.subr.mxu0 0.0
    %5245 = vmatpush1.msra.mxu0 0.0
    %5246 = vmatprep.mubr.f32.mxu0 0.0
    %5247 = vmatmul.mubr.f32.gmra.mrb[0].mxu0 %v5178
    %v5248 = vpop.f32.mrb[0].mxu0
    %v5249 = vadd.f32 0.0, %v5248
    %v5250 = vpop.f32.mrb[0].mxu0
    %5251 = vdwg.mxu0
    %5252 = vrot.lane.b32.xlu0 %v4842, 112
    %v5253 = vpop.permute.xlu0 %5252
    %5254 = vrot.lane.b32.xlu0 %v4917, 112
    %v5255 = vpop.permute.xlu0 %5254
    %v5256 = vsel %vm2600, %v5253, 0
    %v5258 = vsel %vm2600, %v5255, 0
    %5260 = vmatprep.subr.mxu0 0.0
    %5261 = vmatpush1.xpose.msra.mxu0 %v5258
    %5262 = vmatprep.subr.mxu0 0.0
    %5263 = vmatpush1.xpose.msra.mxu0 0.0
    %5264 = vmatprep.subr.mxu0 0.0
    %5265 = vmatpush1.xpose.msra.mxu0 0.0
    %5266 = vmatprep.subr.mxu0 0.0
    %5267 = vmatpush1.xpose.msra.mxu0 0.0
    %5268 = vmatprep.subr.mxu0 0.0
    %5269 = vmatpush1.xpose.msra.mxu0 0.0
    %5270 = vmatprep.subr.mxu0 0.0
    %5271 = vmatpush1.xpose.msra.mxu0 0.0
    %5272 = vmatprep.subr.mxu0 0.0
    %5273 = vmatpush1.xpose.msra.mxu0 0.0
    %5274 = vmatprep.subr.mxu0 0.0
    %5275 = vmatpush1.xpose.msra.mxu0 0.0
    %5276 = vmatprep.subr.mxu0 0.0
    %5277 = vmatpush1.xpose.msra.mxu0 0.0
    %5278 = vmatprep.subr.mxu0 0.0
    %5279 = vmatpush1.xpose.msra.mxu0 0.0
    %5280 = vmatprep.subr.mxu0 0.0
    %5281 = vmatpush1.xpose.msra.mxu0 0.0
    %5282 = vmatprep.subr.mxu0 0.0
    %5283 = vmatpush1.xpose.msra.mxu0 0.0
    %5284 = vmatprep.subr.mxu0 0.0
    %5285 = vmatpush1.xpose.msra.mxu0 0.0
    %5286 = vmatprep.subr.mxu0 0.0
    %5287 = vmatpush1.xpose.msra.mxu0 0.0
    %5288 = vmatprep.subr.mxu0 0.0
    %5289 = vmatpush1.xpose.msra.mxu0 0.0
    %5290 = vmatprep.subr.mxu0 0.0
    %5291 = vmatpush1.xpose.msra.mxu0 0.0
    %5292 = vmatprep.subr.mxu0 0.0
    %5293 = vmatpush1.xpose.msra.mxu0 0.0
    %5294 = vmatprep.subr.mxu0 0.0
    %5295 = vmatpush1.xpose.msra.mxu0 0.0
    %5296 = vmatprep.subr.mxu0 0.0
    %5297 = vmatpush1.xpose.msra.mxu0 0.0
    %5298 = vmatprep.subr.mxu0 0.0
    %5299 = vmatpush1.xpose.msra.mxu0 0.0
    %5300 = vmatprep.subr.mxu0 0.0
    %5301 = vmatpush1.xpose.msra.mxu0 0.0
    %5302 = vmatprep.subr.mxu0 0.0
    %5303 = vmatpush1.xpose.msra.mxu0 0.0
    %5304 = vmatprep.subr.mxu0 0.0
    %5305 = vmatpush1.xpose.msra.mxu0 0.0
    %5306 = vmatprep.subr.mxu0 0.0
    %5307 = vmatpush1.xpose.msra.mxu0 0.0
    %5308 = vmatprep.subr.mxu0 0.0
    %5309 = vmatpush1.xpose.msra.mxu0 0.0
    %5310 = vmatprep.subr.mxu0 0.0
    %5311 = vmatpush1.xpose.msra.mxu0 0.0
    %5312 = vmatprep.subr.mxu0 0.0
    %5313 = vmatpush1.xpose.msra.mxu0 0.0
    %5314 = vmatprep.subr.mxu0 0.0
    %5315 = vmatpush1.xpose.msra.mxu0 0.0
    %5316 = vmatprep.subr.mxu0 0.0
    %5317 = vmatpush1.xpose.msra.mxu0 0.0
    %5318 = vmatprep.subr.mxu0 0.0
    %5319 = vmatpush1.xpose.msra.mxu0 0.0
    %5320 = vmatprep.subr.mxu0 0.0
    %5321 = vmatpush1.xpose.msra.mxu0 0.0
    %5322 = vmatprep.subr.mxu0 0.0
    %5323 = vmatpush1.xpose.msra.mxu0 0.0
    %5324 = vmatprep.mubr.f32.mxu0 0.0
    %5325 = vmatmul.mubr.f32.gmra.mrb[0].mxu0 %v5256
    %v5326 = vpop.f32.mrb[0].mxu0
    %v5327 = vadd.f32 0.0, %v5326
    %v5328 = vpop.f32.mrb[0].mxu0
    %5329 = vdwg.mxu0
    %v5330 = vmul.f32 %v5327, 0.35355338
    %v5331 = vsel %vm2678, %v5330, -inf
    %5332 = vmax.xlane.f32.xlu0 %v5331
    %v5333 = vpop.xlane.xlu0 %5332
    %v5334 = vsub.f32 %v5330, %v5333
    %v5335 = vmul.f32 %v5334, 1.442695
    %v5336 = vpow.pop %v5335
    %v5337 = vsel %vm2678, %v5336, 0.0
    %5338 = vadd.xlane.f32.xlu0 %v5337
    %v5339 = vpop.xlane.xlu0 %5338
    %v5340 = vrcp.pop %v5339
    %v5341 = vmul.f32 %v5336, %v5340
    %5342 = vrot.lane.b32.xlu0 %v4917, 80
    %v5343 = vpop.permute.xlu0 %5342
    %v5345 = vsel %vm2692, %v5341, 0
    %v5347 = vsel %vm2696, %v5343, 0
    %5349 = vmatprep.subr.mxu0 0.0
    %5350 = vmatpush1.msra.mxu0 %v5347
    %5351 = vmatprep.subr.mxu0 0.0
    %5352 = vmatpush1.msra.mxu0 0.0
    %5353 = vmatprep.subr.mxu0 0.0
    %5354 = vmatpush1.msra.mxu0 0.0
    %5355 = vmatprep.subr.mxu0 0.0
    %5356 = vmatpush1.msra.mxu0 0.0
    %5357 = vmatprep.subr.mxu0 0.0
    %5358 = vmatpush1.msra.mxu0 0.0
    %5359 = vmatprep.subr.mxu0 0.0
    %5360 = vmatpush1.msra.mxu0 0.0
    %5361 = vmatprep.subr.mxu0 0.0
    %5362 = vmatpush1.msra.mxu0 0.0
    %5363 = vmatprep.subr.mxu0 0.0
    %5364 = vmatpush1.msra.mxu0 0.0
    %5365 = vmatprep.subr.mxu0 0.0
    %5366 = vmatpush1.msra.mxu0 0.0
    %5367 = vmatprep.subr.mxu0 0.0
    %5368 = vmatpush1.msra.mxu0 0.0
    %5369 = vmatprep.subr.mxu0 0.0
    %5370 = vmatpush1.msra.mxu0 0.0
    %5371 = vmatprep.subr.mxu0 0.0
    %5372 = vmatpush1.msra.mxu0 0.0
    %5373 = vmatprep.subr.mxu0 0.0
    %5374 = vmatpush1.msra.mxu0 0.0
    %5375 = vmatprep.subr.mxu0 0.0
    %5376 = vmatpush1.msra.mxu0 0.0
    %5377 = vmatprep.subr.mxu0 0.0
    %5378 = vmatpush1.msra.mxu0 0.0
    %5379 = vmatprep.subr.mxu0 0.0
    %5380 = vmatpush1.msra.mxu0 0.0
    %5381 = vmatprep.subr.mxu0 0.0
    %5382 = vmatpush1.msra.mxu0 0.0
    %5383 = vmatprep.subr.mxu0 0.0
    %5384 = vmatpush1.msra.mxu0 0.0
    %5385 = vmatprep.subr.mxu0 0.0
    %5386 = vmatpush1.msra.mxu0 0.0
    %5387 = vmatprep.subr.mxu0 0.0
    %5388 = vmatpush1.msra.mxu0 0.0
    %5389 = vmatprep.subr.mxu0 0.0
    %5390 = vmatpush1.msra.mxu0 0.0
    %5391 = vmatprep.subr.mxu0 0.0
    %5392 = vmatpush1.msra.mxu0 0.0
    %5393 = vmatprep.subr.mxu0 0.0
    %5394 = vmatpush1.msra.mxu0 0.0
    %5395 = vmatprep.subr.mxu0 0.0
    %5396 = vmatpush1.msra.mxu0 0.0
    %5397 = vmatprep.subr.mxu0 0.0
    %5398 = vmatpush1.msra.mxu0 0.0
    %5399 = vmatprep.subr.mxu0 0.0
    %5400 = vmatpush1.msra.mxu0 0.0
    %5401 = vmatprep.subr.mxu0 0.0
    %5402 = vmatpush1.msra.mxu0 0.0
    %5403 = vmatprep.subr.mxu0 0.0
    %5404 = vmatpush1.msra.mxu0 0.0
    %5405 = vmatprep.subr.mxu0 0.0
    %5406 = vmatpush1.msra.mxu0 0.0
    %5407 = vmatprep.subr.mxu0 0.0
    %5408 = vmatpush1.msra.mxu0 0.0
    %5409 = vmatprep.subr.mxu0 0.0
    %5410 = vmatpush1.msra.mxu0 0.0
    %5411 = vmatprep.subr.mxu0 0.0
    %5412 = vmatpush1.msra.mxu0 0.0
    %5413 = vmatprep.mubr.f32.mxu0 0.0
    %5414 = vmatmul.mubr.f32.gmra.mrb[0].mxu0 %v5345
    %v5415 = vpop.f32.mrb[0].mxu0
    %v5416 = vadd.f32 0.0, %v5415
    %v5417 = vpop.f32.mrb[0].mxu0
    %5418 = vdwg.mxu0
    %5419 = vrot.lane.b32.xlu0 %v4842, 104
    %v5420 = vpop.permute.xlu0 %5419
    %5421 = vrot.lane.b32.xlu0 %v4917, 104
    %v5422 = vpop.permute.xlu0 %5421
    %v5423 = vsel %vm2600, %v5420, 0
    %v5425 = vsel %vm2600, %v5422, 0
    %5427 = vmatprep.subr.mxu0 0.0
    %5428 = vmatpush1.xpose.msra.mxu0 %v5425
    %5429 = vmatprep.subr.mxu0 0.0
    %5430 = vmatpush1.xpose.msra.mxu0 0.0
    %5431 = vmatprep.subr.mxu0 0.0
    %5432 = vmatpush1.xpose.msra.mxu0 0.0
    %5433 = vmatprep.subr.mxu0 0.0
    %5434 = vmatpush1.xpose.msra.mxu0 0.0
    %5435 = vmatprep.subr.mxu0 0.0
    %5436 = vmatpush1.xpose.msra.mxu0 0.0
    %5437 = vmatprep.subr.mxu0 0.0
    %5438 = vmatpush1.xpose.msra.mxu0 0.0
    %5439 = vmatprep.subr.mxu0 0.0
    %5440 = vmatpush1.xpose.msra.mxu0 0.0
    %5441 = vmatprep.subr.mxu0 0.0
    %5442 = vmatpush1.xpose.msra.mxu0 0.0
    %5443 = vmatprep.subr.mxu0 0.0
    %5444 = vmatpush1.xpose.msra.mxu0 0.0
    %5445 = vmatprep.subr.mxu0 0.0
    %5446 = vmatpush1.xpose.msra.mxu0 0.0
    %5447 = vmatprep.subr.mxu0 0.0
    %5448 = vmatpush1.xpose.msra.mxu0 0.0
    %5449 = vmatprep.subr.mxu0 0.0
    %5450 = vmatpush1.xpose.msra.mxu0 0.0
    %5451 = vmatprep.subr.mxu0 0.0
    %5452 = vmatpush1.xpose.msra.mxu0 0.0
    %5453 = vmatprep.subr.mxu0 0.0
    %5454 = vmatpush1.xpose.msra.mxu0 0.0
    %5455 = vmatprep.subr.mxu0 0.0
    %5456 = vmatpush1.xpose.msra.mxu0 0.0
    %5457 = vmatprep.subr.mxu0 0.0
    %5458 = vmatpush1.xpose.msra.mxu0 0.0
    %5459 = vmatprep.subr.mxu0 0.0
    %5460 = vmatpush1.xpose.msra.mxu0 0.0
    %5461 = vmatprep.subr.mxu0 0.0
    %5462 = vmatpush1.xpose.msra.mxu0 0.0
    %5463 = vmatprep.subr.mxu0 0.0
    %5464 = vmatpush1.xpose.msra.mxu0 0.0
    %5465 = vmatprep.subr.mxu0 0.0
    %5466 = vmatpush1.xpose.msra.mxu0 0.0
    %5467 = vmatprep.subr.mxu0 0.0
    %5468 = vmatpush1.xpose.msra.mxu0 0.0
    %5469 = vmatprep.subr.mxu0 0.0
    %5470 = vmatpush1.xpose.msra.mxu0 0.0
    %5471 = vmatprep.subr.mxu0 0.0
    %5472 = vmatpush1.xpose.msra.mxu0 0.0
    %5473 = vmatprep.subr.mxu0 0.0
    %5474 = vmatpush1.xpose.msra.mxu0 0.0
    %5475 = vmatprep.subr.mxu0 0.0
    %5476 = vmatpush1.xpose.msra.mxu0 0.0
    %5477 = vmatprep.subr.mxu0 0.0
    %5478 = vmatpush1.xpose.msra.mxu0 0.0
    %5479 = vmatprep.subr.mxu0 0.0
    %5480 = vmatpush1.xpose.msra.mxu0 0.0
    %5481 = vmatprep.subr.mxu0 0.0
    %5482 = vmatpush1.xpose.msra.mxu0 0.0
    %5483 = vmatprep.subr.mxu0 0.0
    %5484 = vmatpush1.xpose.msra.mxu0 0.0
    %5485 = vmatprep.subr.mxu0 0.0
    %5486 = vmatpush1.xpose.msra.mxu0 0.0
    %5487 = vmatprep.subr.mxu0 0.0
    %5488 = vmatpush1.xpose.msra.mxu0 0.0
    %5489 = vmatprep.subr.mxu0 0.0
    %5490 = vmatpush1.xpose.msra.mxu0 0.0
    %5491 = vmatprep.mubr.f32.mxu0 0.0
    %5492 = vmatmul.mubr.f32.gmra.mrb[0].mxu0 %v5423
    %v5493 = vpop.f32.mrb[0].mxu0
    %v5494 = vadd.f32 0.0, %v5493
    %v5495 = vpop.f32.mrb[0].mxu0
    %5496 = vdwg.mxu0
    %v5497 = vmul.f32 %v5494, 0.35355338
    %v5498 = vsel %vm2678, %v5497, -inf
    %5499 = vmax.xlane.f32.xlu0 %v5498
    %v5500 = vpop.xlane.xlu0 %5499
    %v5501 = vsub.f32 %v5497, %v5500
    %v5502 = vmul.f32 %v5501, 1.442695
    %v5503 = vpow.pop %v5502
    %v5504 = vsel %vm2678, %v5503, 0.0
    %5505 = vadd.xlane.f32.xlu0 %v5504
    %v5506 = vpop.xlane.xlu0 %5505
    %v5507 = vrcp.pop %v5506
    %v5508 = vmul.f32 %v5503, %v5507
    %5509 = vrot.lane.b32.xlu0 %v4917, 72
    %v5510 = vpop.permute.xlu0 %5509
    %v5512 = vsel %vm2692, %v5508, 0
    %v5514 = vsel %vm2696, %v5510, 0
    %5516 = vmatprep.subr.mxu0 0.0
    %5517 = vmatpush1.msra.mxu0 %v5514
    %5518 = vmatprep.subr.mxu0 0.0
    %5519 = vmatpush1.msra.mxu0 0.0
    %5520 = vmatprep.subr.mxu0 0.0
    %5521 = vmatpush1.msra.mxu0 0.0
    %5522 = vmatprep.subr.mxu0 0.0
    %5523 = vmatpush1.msra.mxu0 0.0
    %5524 = vmatprep.subr.mxu0 0.0
    %5525 = vmatpush1.msra.mxu0 0.0
    %5526 = vmatprep.subr.mxu0 0.0
    %5527 = vmatpush1.msra.mxu0 0.0
    %5528 = vmatprep.subr.mxu0 0.0
    %5529 = vmatpush1.msra.mxu0 0.0
    %5530 = vmatprep.subr.mxu0 0.0
    %5531 = vmatpush1.msra.mxu0 0.0
    %5532 = vmatprep.subr.mxu0 0.0
    %5533 = vmatpush1.msra.mxu0 0.0
    %5534 = vmatprep.subr.mxu0 0.0
    %5535 = vmatpush1.msra.mxu0 0.0
    %5536 = vmatprep.subr.mxu0 0.0
    %5537 = vmatpush1.msra.mxu0 0.0
    %5538 = vmatprep.subr.mxu0 0.0
    %5539 = vmatpush1.msra.mxu0 0.0
    %5540 = vmatprep.subr.mxu0 0.0
    %5541 = vmatpush1.msra.mxu0 0.0
    %5542 = vmatprep.subr.mxu0 0.0
    %5543 = vmatpush1.msra.mxu0 0.0
    %5544 = vmatprep.subr.mxu0 0.0
    %5545 = vmatpush1.msra.mxu0 0.0
    %5546 = vmatprep.subr.mxu0 0.0
    %5547 = vmatpush1.msra.mxu0 0.0
    %5548 = vmatprep.subr.mxu0 0.0
    %5549 = vmatpush1.msra.mxu0 0.0
    %5550 = vmatprep.subr.mxu0 0.0
    %5551 = vmatpush1.msra.mxu0 0.0
    %5552 = vmatprep.subr.mxu0 0.0
    %5553 = vmatpush1.msra.mxu0 0.0
    %5554 = vmatprep.subr.mxu0 0.0
    %5555 = vmatpush1.msra.mxu0 0.0
    %5556 = vmatprep.subr.mxu0 0.0
    %5557 = vmatpush1.msra.mxu0 0.0
    %5558 = vmatprep.subr.mxu0 0.0
    %5559 = vmatpush1.msra.mxu0 0.0
    %5560 = vmatprep.subr.mxu0 0.0
    %5561 = vmatpush1.msra.mxu0 0.0
    %5562 = vmatprep.subr.mxu0 0.0
    %5563 = vmatpush1.msra.mxu0 0.0
    %5564 = vmatprep.subr.mxu0 0.0
    %5565 = vmatpush1.msra.mxu0 0.0
    %5566 = vmatprep.subr.mxu0 0.0
    %5567 = vmatpush1.msra.mxu0 0.0
    %5568 = vmatprep.subr.mxu0 0.0
    %5569 = vmatpush1.msra.mxu0 0.0
    %5570 = vmatprep.subr.mxu0 0.0
    %5571 = vmatpush1.msra.mxu0 0.0
    %5572 = vmatprep.subr.mxu0 0.0
    %5573 = vmatpush1.msra.mxu0 0.0
    %5574 = vmatprep.subr.mxu0 0.0
    %5575 = vmatpush1.msra.mxu0 0.0
    %5576 = vmatprep.subr.mxu0 0.0
    %5577 = vmatpush1.msra.mxu0 0.0
    %5578 = vmatprep.subr.mxu0 0.0
    %5579 = vmatpush1.msra.mxu0 0.0
    %5580 = vmatprep.mubr.f32.mxu0 0.0
    %5581 = vmatmul.mubr.f32.gmra.mrb[0].mxu0 %v5512
    %v5582 = vpop.f32.mrb[0].mxu0
    %v5583 = vadd.f32 0.0, %v5582
    %v5584 = vpop.f32.mrb[0].mxu0
    %5585 = vdwg.mxu0
    %5587 = vrot.lane.b32.xlu0 %v5249, 8
    %v5588 = vpop.permute.xlu0 %5587
    %5591 = vrot.lane.b32.xlu0 %v5416, 16
    %v5592 = vpop.permute.xlu0 %5591
    %5595 = vrot.lane.b32.xlu0 %v5583, 24
    %v5596 = vpop.permute.xlu0 %5595
    %v5598 = vsel %vm2600, %v5082, %v5588
    %v5599 = vsel %vm3283, %v5598, %v5592
    %v5600 = vsel %vm3285, %v5599, %v5596
    %s5601 = scalar_lea.vmem [#allocation34], 32
    %v5602 = vld [vmem:[%s5601] sm:$0xff]
    %v5603 = vld [vmem:[%s5601 + $0x8] sm:$0xff]
    %v5604 = vld [vmem:[%s5601 + $0x10] sm:$0xff]
    %v5605 = vld [vmem:[%s5601 + $0x18] sm:$0xff]
    %v5607 = vsel %vm1107, %v5600, 0
    %5609 = vmatprep.subr.mxu0 0.0
    %5610 = vmatpush1.msra.mxu0 %v5602
    %5611 = vmatprep.subr.mxu0 0.0
    %5612 = vmatpush1.msra.mxu0 %v5603
    %5613 = vmatprep.subr.mxu0 0.0
    %5614 = vmatpush1.msra.mxu0 %v5604
    %5615 = vmatprep.subr.mxu0 0.0
    %5616 = vmatpush1.msra.mxu0 %v5605
    %5617 = vmatprep.subr.mxu0 0.0
    %5618 = vmatpush1.msra.mxu0 0.0
    %5619 = vmatprep.subr.mxu0 0.0
    %5620 = vmatpush1.msra.mxu0 0.0
    %5621 = vmatprep.subr.mxu0 0.0
    %5622 = vmatpush1.msra.mxu0 0.0
    %5623 = vmatprep.subr.mxu0 0.0
    %5624 = vmatpush1.msra.mxu0 0.0
    %5625 = vmatprep.subr.mxu0 0.0
    %5626 = vmatpush1.msra.mxu0 0.0
    %5627 = vmatprep.subr.mxu0 0.0
    %5628 = vmatpush1.msra.mxu0 0.0
    %5629 = vmatprep.subr.mxu0 0.0
    %5630 = vmatpush1.msra.mxu0 0.0
    %5631 = vmatprep.subr.mxu0 0.0
    %5632 = vmatpush1.msra.mxu0 0.0
    %5633 = vmatprep.subr.mxu0 0.0
    %5634 = vmatpush1.msra.mxu0 0.0
    %5635 = vmatprep.subr.mxu0 0.0
    %5636 = vmatpush1.msra.mxu0 0.0
    %5637 = vmatprep.subr.mxu0 0.0
    %5638 = vmatpush1.msra.mxu0 0.0
    %5639 = vmatprep.subr.mxu0 0.0
    %5640 = vmatpush1.msra.mxu0 0.0
    %5641 = vmatprep.subr.mxu0 0.0
    %5642 = vmatpush1.msra.mxu0 0.0
    %5643 = vmatprep.subr.mxu0 0.0
    %5644 = vmatpush1.msra.mxu0 0.0
    %5645 = vmatprep.subr.mxu0 0.0
    %5646 = vmatpush1.msra.mxu0 0.0
    %5647 = vmatprep.subr.mxu0 0.0
    %5648 = vmatpush1.msra.mxu0 0.0
    %5649 = vmatprep.subr.mxu0 0.0
    %5650 = vmatpush1.msra.mxu0 0.0
    %5651 = vmatprep.subr.mxu0 0.0
    %5652 = vmatpush1.msra.mxu0 0.0
    %5653 = vmatprep.subr.mxu0 0.0
    %5654 = vmatpush1.msra.mxu0 0.0
    %5655 = vmatprep.subr.mxu0 0.0
    %5656 = vmatpush1.msra.mxu0 0.0
    %5657 = vmatprep.subr.mxu0 0.0
    %5658 = vmatpush1.msra.mxu0 0.0
    %5659 = vmatprep.subr.mxu0 0.0
    %5660 = vmatpush1.msra.mxu0 0.0
    %5661 = vmatprep.subr.mxu0 0.0
    %5662 = vmatpush1.msra.mxu0 0.0
    %5663 = vmatprep.subr.mxu0 0.0
    %5664 = vmatpush1.msra.mxu0 0.0
    %5665 = vmatprep.subr.mxu0 0.0
    %5666 = vmatpush1.msra.mxu0 0.0
    %5667 = vmatprep.subr.mxu0 0.0
    %5668 = vmatpush1.msra.mxu0 0.0
    %5669 = vmatprep.subr.mxu0 0.0
    %5670 = vmatpush1.msra.mxu0 0.0
    %5671 = vmatprep.subr.mxu0 0.0
    %5672 = vmatpush1.msra.mxu0 0.0
    %5673 = vmatprep.mubr.f32.mxu0 0.0
    %5674 = vmatmul.mubr.f32.gmra.mrb[0].mxu0 %v5607
    %v5675 = vpop.f32.mrb[0].mxu0
    %v5676 = vadd.f32 0.0, %v5675
    %v5677 = vpop.f32.mrb[0].mxu0
    %5678 = vdwg.mxu0
    %v5679 = vadd.f32 %v4735, %v5676
    %s5680 = scalar_lea.vmem [#allocation35], 1
    %v5681 = vld [vmem:[%s5680] sm:$0x1]
    %v5683 = vlaneseq
    %v5684 = vshrl.u32 %v5683, 7
    %v5685 = vsub.s32 0, %v5684
    %v5686 = vrot.slane %v5681, %v5685
    %v5688 = vadd.f32 %v5679, %v5686
    %v5689 = vsel %vm2418, %v5688, 0.0
    %5690 = vadd.xlane.f32.xlu0 %v5689
    %v5691 = vpop.xlane.xlu0 %5690
    %v5692 = vmul.f32 %v5691, %v2422
    %v5693 = vsub.f32 %v5688, %v5692
    %v5694 = vmul.f32 %v5693, %v5693
    %v5695 = vsel %vm2418, %v5694, 0.0
    %5696 = vadd.xlane.f32.xlu0 %v5695
    %v5697 = vpop.xlane.xlu0 %5696
    %v5698 = vmul.f32 %v5697, %v2422
    %v5699 = vadd.f32 %v5698, 1e-05
    %v5700 = vrsqrt.pop %v5699
    %v5701 = vmul.f32 %v5693, %v5700
    %s5702 = scalar_lea.vmem [#allocation37], 1
    %v5703 = vld [vmem:[%s5702] sm:$0x1]
    %v5705 = vlaneseq
    %v5706 = vshrl.u32 %v5705, 7
    %v5707 = vsub.s32 0, %v5706
    %v5708 = vrot.slane %v5703, %v5707
    %v5710 = vmul.f32 %v5701, %v5708
    %s5711 = scalar_lea.vmem [#allocation38], 1
    %v5712 = vld [vmem:[%s5711] sm:$0x1]
    %v5714 = vlaneseq
    %v5715 = vshrl.u32 %v5714, 7
    %v5716 = vsub.s32 0, %v5715
    %v5717 = vrot.slane %v5712, %v5716
    %v5719 = vadd.f32 %v5710, %v5717
    %s5720 = scalar_lea.vmem %s61, 32
    %v5721 = vld [vmem:[%s5720] sm:$0xff]
    %v5722 = vld [vmem:[%s5720 + $0x8] sm:$0xff]
    %v5723 = vld [vmem:[%s5720 + $0x10] sm:$0xff]
    %v5724 = vld [vmem:[%s5720 + $0x18] sm:$0xff]
    %v5726 = vsel %vm1107, %v5719, 0
    %5728 = vmatprep.subr.mxu0 0.0
    %5729 = vmatpush1.msra.mxu0 %v5721
    %5730 = vmatprep.subr.mxu0 0.0
    %5731 = vmatpush1.msra.mxu0 %v5722
    %5732 = vmatprep.subr.mxu0 0.0
    %5733 = vmatpush1.msra.mxu0 %v5723
    %5734 = vmatprep.subr.mxu0 0.0
    %5735 = vmatpush1.msra.mxu0 %v5724
    %5736 = vmatprep.subr.mxu0 0.0
    %5737 = vmatpush1.msra.mxu0 0.0
    %5738 = vmatprep.subr.mxu0 0.0
    %5739 = vmatpush1.msra.mxu0 0.0
    %5740 = vmatprep.subr.mxu0 0.0
    %5741 = vmatpush1.msra.mxu0 0.0
    %5742 = vmatprep.subr.mxu0 0.0
    %5743 = vmatpush1.msra.mxu0 0.0
    %5744 = vmatprep.subr.mxu0 0.0
    %5745 = vmatpush1.msra.mxu0 0.0
    %5746 = vmatprep.subr.mxu0 0.0
    %5747 = vmatpush1.msra.mxu0 0.0
    %5748 = vmatprep.subr.mxu0 0.0
    %5749 = vmatpush1.msra.mxu0 0.0
    %5750 = vmatprep.subr.mxu0 0.0
    %5751 = vmatpush1.msra.mxu0 0.0
    %5752 = vmatprep.subr.mxu0 0.0
    %5753 = vmatpush1.msra.mxu0 0.0
    %5754 = vmatprep.subr.mxu0 0.0
    %5755 = vmatpush1.msra.mxu0 0.0
    %5756 = vmatprep.subr.mxu0 0.0
    %5757 = vmatpush1.msra.mxu0 0.0
    %5758 = vmatprep.subr.mxu0 0.0
    %5759 = vmatpush1.msra.mxu0 0.0
    %5760 = vmatprep.subr.mxu0 0.0
    %5761 = vmatpush1.msra.mxu0 0.0
    %5762 = vmatprep.subr.mxu0 0.0
    %5763 = vmatpush1.msra.mxu0 0.0
    %5764 = vmatprep.subr.mxu0 0.0
    %5765 = vmatpush1.msra.mxu0 0.0
    %5766 = vmatprep.subr.mxu0 0.0
    %5767 = vmatpush1.msra.mxu0 0.0
    %5768 = vmatprep.subr.mxu0 0.0
    %5769 = vmatpush1.msra.mxu0 0.0
    %5770 = vmatprep.subr.mxu0 0.0
    %5771 = vmatpush1.msra.mxu0 0.0
    %5772 = vmatprep.subr.mxu0 0.0
    %5773 = vmatpush1.msra.mxu0 0.0
    %5774 = vmatprep.subr.mxu0 0.0
    %5775 = vmatpush1.msra.mxu0 0.0
    %5776 = vmatprep.subr.mxu0 0.0
    %5777 = vmatpush1.msra.mxu0 0.0
    %5778 = vmatprep.subr.mxu0 0.0
    %5779 = vmatpush1.msra.mxu0 0.0
    %5780 = vmatprep.subr.mxu0 0.0
    %5781 = vmatpush1.msra.mxu0 0.0
    %5782 = vmatprep.subr.mxu0 0.0
    %5783 = vmatpush1.msra.mxu0 0.0
    %5784 = vmatprep.subr.mxu0 0.0
    %5785 = vmatpush1.msra.mxu0 0.0
    %5786 = vmatprep.subr.mxu0 0.0
    %5787 = vmatpush1.msra.mxu0 0.0
    %5788 = vmatprep.subr.mxu0 0.0
    %5789 = vmatpush1.msra.mxu0 0.0
    %5790 = vmatprep.subr.mxu0 0.0
    %5791 = vmatpush1.msra.mxu0 0.0
    %5792 = vmatprep.mubr.f32.mxu0 0.0
    %5793 = vmatmul.mubr.f32.gmra.mrb[0].mxu0 %v5726
    %v5794 = vpop.f32.mrb[0].mxu0
    %v5795 = vadd.f32 0.0, %v5794
    %v5796 = vpop.f32.mrb[0].mxu0
    %5797 = vdwg.mxu0
    %v5798 = vsel %vm3482, %v5795, -inf
    %5799 = vmax.xlane.f32.xlu0 %v5798
    %v5800 = vpop.xlane.xlu0 %5799
    %vm5801 = vcmp.ge.f32.partialorder %v5795, %v5800
    %v5802 = vsel %vm5801, %v3481, 7.0
    %v5803 = vsel %vm3482, %v5802, inf
    %5804 = vmin.xlane.f32.xlu0 %v5803
    %v5805 = vpop.xlane.xlu0 %5804
    %vm5806 = vcmp.eq.f32.partialorder %v3481, %v5805
    %v5807 = vsel %vm5806, -inf, %v5795
    %v5808 = vsel %vm3482, %v5807, -inf
    %5809 = vmax.xlane.f32.xlu0 %v5808
    %v5810 = vpop.xlane.xlu0 %5809
    %vm5811 = vcmp.ge.f32.partialorder %v5807, %v5810
    %v5812 = vsel %vm5811, %v3481, 7.0
    %v5813 = vsel %vm3482, %v5812, inf
    %5814 = vmin.xlane.f32.xlu0 %v5813
    %v5815 = vpop.xlane.xlu0 %5814
    %vm5816 = vcmp.eq.f32.partialorder %v3481, %v5815
    %v5817 = vsel %vm5806, 1, 0
    %v5818 = vcvt.s32.f32 %v5817
    %v5819 = vsel %vm5816, 1, 0
    %v5820 = vcvt.s32.f32 %v5819
    %v5821 = vadd.f32 %v5818, %v5820
    %v5822 = vmul.f32 %v5821, %v3507
    %s5823 = scalar_lea.vmem [#allocation40], 128
    %v5824 = vld [vmem:[%s5823] sm:$0xff]
    %v5825 = vld [vmem:[%s5823 + $0x8] sm:$0xff]
    %v5826 = vld [vmem:[%s5823 + $0x10] sm:$0xff]
    %v5827 = vld [vmem:[%s5823 + $0x18] sm:$0xff]
    %v5828 = vld [vmem:[%s5823 + $0x20] sm:$0xff]
    %v5829 = vld [vmem:[%s5823 + $0x28] sm:$0xff]
    %v5830 = vld [vmem:[%s5823 + $0x30] sm:$0xff]
    %v5831 = vld [vmem:[%s5823 + $0x38] sm:$0xff]
    %v5832 = vld [vmem:[%s5823 + $0x40] sm:$0xff]
    %v5833 = vld [vmem:[%s5823 + $0x48] sm:$0xff]
    %v5834 = vld [vmem:[%s5823 + $0x50] sm:$0xff]
    %v5835 = vld [vmem:[%s5823 + $0x58] sm:$0xff]
    %v5836 = vld [vmem:[%s5823 + $0x60] sm:$0xff]
    %v5837 = vld [vmem:[%s5823 + $0x68] sm:$0xff]
    %v5838 = vld [vmem:[%s5823 + $0x70] sm:$0xff]
    %v5839 = vld [vmem:[%s5823 + $0x78] sm:$0xff]
    %s5840 = scalar_lea.vmem [#allocation41], 4
    %v5841 = vld [vmem:[%s5840] sm:$0xf]
    %v5843 = vlaneseq
    %v5844 = vshrl.u32 %v5843, 7
    %v5845 = vsub.s32 0, %v5844
    %v5846 = vrot.slane %v5841, %v5845
    %v5847 = vlaneseq
    %v5848 = vshrl.u32 %v5847, 7
    %v5849 = vsub.s32 1, %v5848
    %v5850 = vrot.slane %v5841, %v5849
    %v5851 = vlaneseq
    %v5852 = vshrl.u32 %v5851, 7
    %v5853 = vsub.s32 2, %v5852
    %v5854 = vrot.slane %v5841, %v5853
    %v5855 = vlaneseq
    %v5856 = vshrl.u32 %v5855, 7
    %v5857 = vsub.s32 3, %v5856
    %v5858 = vrot.slane %v5841, %v5857
    %5863 = vmatprep.subr.mxu0 %v5825
    %5864 = vmatpush1.msra.mxu0 %v5824
    %5865 = vmatprep.subr.mxu0 %v5829
    %5866 = vmatpush1.msra.mxu0 %v5828
    %5867 = vmatprep.subr.mxu0 %v5833
    %5868 = vmatpush1.msra.mxu0 %v5832
    %5869 = vmatprep.subr.mxu0 %v5837
    %5870 = vmatpush1.msra.mxu0 %v5836
    %5871 = vmatprep.subr.mxu0 0.0
    %5872 = vmatpush1.msra.mxu0 0.0
    %5873 = vmatprep.subr.mxu0 0.0
    %5874 = vmatpush1.msra.mxu0 0.0
    %5875 = vmatprep.subr.mxu0 0.0
    %5876 = vmatpush1.msra.mxu0 0.0
    %5877 = vmatprep.subr.mxu0 0.0
    %5878 = vmatpush1.msra.mxu0 0.0
    %5879 = vmatprep.subr.mxu0 0.0
    %5880 = vmatpush1.msra.mxu0 0.0
    %5881 = vmatprep.subr.mxu0 0.0
    %5882 = vmatpush1.msra.mxu0 0.0
    %5883 = vmatprep.subr.mxu0 0.0
    %5884 = vmatpush1.msra.mxu0 0.0
    %5885 = vmatprep.subr.mxu0 0.0
    %5886 = vmatpush1.msra.mxu0 0.0
    %5887 = vmatprep.subr.mxu0 0.0
    %5888 = vmatpush1.msra.mxu0 0.0
    %5889 = vmatprep.subr.mxu0 0.0
    %5890 = vmatpush1.msra.mxu0 0.0
    %5891 = vmatprep.subr.mxu0 0.0
    %5892 = vmatpush1.msra.mxu0 0.0
    %5893 = vmatprep.subr.mxu0 0.0
    %5894 = vmatpush1.msra.mxu0 0.0
    %5895 = vmatprep.subr.mxu0 0.0
    %5896 = vmatpush1.msra.mxu0 0.0
    %5897 = vmatprep.subr.mxu0 0.0
    %5898 = vmatpush1.msra.mxu0 0.0
    %5899 = vmatprep.subr.mxu0 0.0
    %5900 = vmatpush1.msra.mxu0 0.0
    %5901 = vmatprep.subr.mxu0 0.0
    %5902 = vmatpush1.msra.mxu0 0.0
    %5903 = vmatprep.subr.mxu0 0.0
    %5904 = vmatpush1.msra.mxu0 0.0
    %5905 = vmatprep.subr.mxu0 0.0
    %5906 = vmatpush1.msra.mxu0 0.0
    %5907 = vmatprep.subr.mxu0 0.0
    %5908 = vmatpush1.msra.mxu0 0.0
    %5909 = vmatprep.subr.mxu0 0.0
    %5910 = vmatpush1.msra.mxu0 0.0
    %5911 = vmatprep.subr.mxu0 0.0
    %5912 = vmatpush1.msra.mxu0 0.0
    %5913 = vmatprep.subr.mxu0 0.0
    %5914 = vmatpush1.msra.mxu0 0.0
    %5915 = vmatprep.subr.mxu0 0.0
    %5916 = vmatpush1.msra.mxu0 0.0
    %5917 = vmatprep.subr.mxu0 0.0
    %5918 = vmatpush1.msra.mxu0 0.0
    %5919 = vmatprep.subr.mxu0 0.0
    %5920 = vmatpush1.msra.mxu0 0.0
    %5921 = vmatprep.subr.mxu0 0.0
    %5922 = vmatpush1.msra.mxu0 0.0
    %5923 = vmatprep.subr.mxu0 0.0
    %5924 = vmatpush1.msra.mxu0 0.0
    %5925 = vmatprep.subr.mxu0 0.0
    %5926 = vmatpush1.msra.mxu0 0.0
    %5927 = vmatprep.mubr.f32.mxu0 0.0
    %5928 = vmatmul.mubr.f32.gmra.mrb[0].mxu0 %v5726
    %v5929 = vpop.f32.mrb[0].mxu0
    %v5930 = vadd.f32 %v5846, %v5929
    %v5931 = vpop.f32.mrb[0].mxu0
    %v5932 = vadd.f32 %v5850, %v5931
    %5933 = vdwg.mxu0
    %5934 = vmatprep.subr.mxu0 %v5827
    %5935 = vmatpush1.msra.mxu0 %v5826
    %5936 = vmatprep.subr.mxu0 %v5831
    %5937 = vmatpush1.msra.mxu0 %v5830
    %5938 = vmatprep.subr.mxu0 %v5835
    %5939 = vmatpush1.msra.mxu0 %v5834
    %5940 = vmatprep.subr.mxu0 %v5839
    %5941 = vmatpush1.msra.mxu0 %v5838
    %5942 = vmatprep.subr.mxu0 0.0
    %5943 = vmatpush1.msra.mxu0 0.0
    %5944 = vmatprep.subr.mxu0 0.0
    %5945 = vmatpush1.msra.mxu0 0.0
    %5946 = vmatprep.subr.mxu0 0.0
    %5947 = vmatpush1.msra.mxu0 0.0
    %5948 = vmatprep.subr.mxu0 0.0
    %5949 = vmatpush1.msra.mxu0 0.0
    %5950 = vmatprep.subr.mxu0 0.0
    %5951 = vmatpush1.msra.mxu0 0.0
    %5952 = vmatprep.subr.mxu0 0.0
    %5953 = vmatpush1.msra.mxu0 0.0
    %5954 = vmatprep.subr.mxu0 0.0
    %5955 = vmatpush1.msra.mxu0 0.0
    %5956 = vmatprep.subr.mxu0 0.0
    %5957 = vmatpush1.msra.mxu0 0.0
    %5958 = vmatprep.subr.mxu0 0.0
    %5959 = vmatpush1.msra.mxu0 0.0
    %5960 = vmatprep.subr.mxu0 0.0
    %5961 = vmatpush1.msra.mxu0 0.0
    %5962 = vmatprep.subr.mxu0 0.0
    %5963 = vmatpush1.msra.mxu0 0.0
    %5964 = vmatprep.subr.mxu0 0.0
    %5965 = vmatpush1.msra.mxu0 0.0
    %5966 = vmatprep.subr.mxu0 0.0
    %5967 = vmatpush1.msra.mxu0 0.0
    %5968 = vmatprep.subr.mxu0 0.0
    %5969 = vmatpush1.msra.mxu0 0.0
    %5970 = vmatprep.subr.mxu0 0.0
    %5971 = vmatpush1.msra.mxu0 0.0
    %5972 = vmatprep.subr.mxu0 0.0
    %5973 = vmatpush1.msra.mxu0 0.0
    %5974 = vmatprep.subr.mxu0 0.0
    %5975 = vmatpush1.msra.mxu0 0.0
    %5976 = vmatprep.subr.mxu0 0.0
    %5977 = vmatpush1.msra.mxu0 0.0
    %5978 = vmatprep.subr.mxu0 0.0
    %5979 = vmatpush1.msra.mxu0 0.0
    %5980 = vmatprep.subr.mxu0 0.0
    %5981 = vmatpush1.msra.mxu0 0.0
    %5982 = vmatprep.subr.mxu0 0.0
    %5983 = vmatpush1.msra.mxu0 0.0
    %5984 = vmatprep.subr.mxu0 0.0
    %5985 = vmatpush1.msra.mxu0 0.0
    %5986 = vmatprep.subr.mxu0 0.0
    %5987 = vmatpush1.msra.mxu0 0.0
    %5988 = vmatprep.subr.mxu0 0.0
    %5989 = vmatpush1.msra.mxu0 0.0
    %5990 = vmatprep.subr.mxu0 0.0
    %5991 = vmatpush1.msra.mxu0 0.0
    %5992 = vmatprep.subr.mxu0 0.0
    %5993 = vmatpush1.msra.mxu0 0.0
    %5994 = vmatprep.subr.mxu0 0.0
    %5995 = vmatpush1.msra.mxu0 0.0
    %5996 = vmatprep.subr.mxu0 0.0
    %5997 = vmatpush1.msra.mxu0 0.0
    %5998 = vmatprep.mubr.f32.mxu0 0.0
    %5999 = vmatmul.mubr.f32.gmra.mrb[0].mxu0 %v5726
    %v6000 = vpop.f32.mrb[0].mxu0
    %v6001 = vadd.f32 %v5854, %v6000
    %v6002 = vpop.f32.mrb[0].mxu0
    %v6003 = vadd.f32 %v5858, %v6002
    %6004 = vdwg.mxu0
    %v6005 = vmul.f32 %v5930, %v5930
    %v6006 = vmul.f32 %v5932, %v5932
    %v6007 = vmul.f32 %v6001, %v6001
    %v6008 = vmul.f32 %v6003, %v6003
    %v6009 = vmul.f32 %v5930, %v6005
    %v6010 = vmul.f32 %v5932, %v6006
    %v6011 = vmul.f32 %v6001, %v6007
    %v6012 = vmul.f32 %v6003, %v6008
    %v6013 = vmul.f32 %v6009, 0.044715
    %v6014 = vmul.f32 %v6010, 0.044715
    %v6015 = vmul.f32 %v6011, 0.044715
    %v6016 = vmul.f32 %v6012, 0.044715
    %v6017 = vadd.f32 %v5930, %v6013
    %v6018 = vadd.f32 %v5932, %v6014
    %v6019 = vadd.f32 %v6001, %v6015
    %v6020 = vadd.f32 %v6003, %v6016
    %v6021 = vmul.f32 %v6017, 0.7978846
    %v6022 = vmul.f32 %v6018, 0.7978846
    %v6023 = vmul.f32 %v6019, 0.7978846
    %v6024 = vmul.f32 %v6020, 0.7978846
    %v6025 = vtanh.pop %v6021
    %v6026 = vtanh.pop %v6022
    %v6027 = vtanh.pop %v6023
    %v6028 = vtanh.pop %v6024
    %v6029 = vadd.f32 %v6025, 1.0
    %v6030 = vadd.f32 %v6026, 1.0
    %v6031 = vadd.f32 %v6027, 1.0
    %v6032 = vadd.f32 %v6028, 1.0
    %v6033 = vmul.f32 %v6029, 0.5
    %v6034 = vmul.f32 %v6030, 0.5
    %v6035 = vmul.f32 %v6031, 0.5
    %v6036 = vmul.f32 %v6032, 0.5
    %v6037 = vmul.f32 %v5930, %v6033
    %v6038 = vmul.f32 %v5932, %v6034
    %v6039 = vmul.f32 %v6001, %v6035
    %v6040 = vmul.f32 %v6003, %v6036
    %s6041 = scalar_lea.vmem [#allocation43], 1792
    %v6042 = vld [vmem:[%s6041] sm:$0xff]
    %v6043 = vld [vmem:[%s6041 + $0x8] sm:$0xff]
    %v6044 = vld [vmem:[%s6041 + $0x10] sm:$0xff]
    %v6045 = vld [vmem:[%s6041 + $0x18] sm:$0xff]
    %v6046 = vld [vmem:[%s6041 + $0x20] sm:$0xff]
    %v6047 = vld [vmem:[%s6041 + $0x28] sm:$0xff]
    %v6048 = vld [vmem:[%s6041 + $0x30] sm:$0xff]
    %v6049 = vld [vmem:[%s6041 + $0x38] sm:$0xff]
    %v6050 = vld [vmem:[%s6041 + $0x40] sm:$0xff]
    %v6051 = vld [vmem:[%s6041 + $0x48] sm:$0xff]
    %v6052 = vld [vmem:[%s6041 + $0x50] sm:$0xff]
    %v6053 = vld [vmem:[%s6041 + $0x58] sm:$0xff]
    %v6054 = vld [vmem:[%s6041 + $0x60] sm:$0xff]
    %v6055 = vld [vmem:[%s6041 + $0x68] sm:$0xff]
    %v6056 = vld [vmem:[%s6041 + $0x70] sm:$0xff]
    %v6057 = vld [vmem:[%s6041 + $0x78] sm:$0xff]
    %v6058 = vld [vmem:[%s6041 + $0x80] sm:$0xff]
    %v6059 = vld [vmem:[%s6041 + $0x88] sm:$0xff]
    %v6060 = vld [vmem:[%s6041 + $0x90] sm:$0xff]
    %v6061 = vld [vmem:[%s6041 + $0x98] sm:$0xff]
    %v6062 = vld [vmem:[%s6041 + $0xa0] sm:$0xff]
    %v6063 = vld [vmem:[%s6041 + $0xa8] sm:$0xff]
    %v6064 = vld [vmem:[%s6041 + $0xb0] sm:$0xff]
    %v6065 = vld [vmem:[%s6041 + $0xb8] sm:$0xff]
    %v6066 = vld [vmem:[%s6041 + $0xc0] sm:$0xff]
    %v6067 = vld [vmem:[%s6041 + $0xc8] sm:$0xff]
    %v6068 = vld [vmem:[%s6041 + $0xd0] sm:$0xff]
    %v6069 = vld [vmem:[%s6041 + $0xd8] sm:$0xff]
    %v6070 = vld [vmem:[%s6041 + $0xe0] sm:$0xff]
    %v6071 = vld [vmem:[%s6041 + $0xe8] sm:$0xff]
    %v6072 = vld [vmem:[%s6041 + $0xf0] sm:$0xff]
    %v6073 = vld [vmem:[%s6041 + $0xf8] sm:$0xff]
    %v6074 = vld [vmem:[%s6041 + $0x100] sm:$0xff]
    %v6075 = vld [vmem:[%s6041 + $0x108] sm:$0xff]
    %v6076 = vld [vmem:[%s6041 + $0x110] sm:$0xff]
    %v6077 = vld [vmem:[%s6041 + $0x118] sm:$0xff]
    %v6078 = vld [vmem:[%s6041 + $0x120] sm:$0xff]
    %v6079 = vld [vmem:[%s6041 + $0x128] sm:$0xff]
    %v6080 = vld [vmem:[%s6041 + $0x130] sm:$0xff]
    %v6081 = vld [vmem:[%s6041 + $0x138] sm:$0xff]
    %v6082 = vld [vmem:[%s6041 + $0x140] sm:$0xff]
    %v6083 = vld [vmem:[%s6041 + $0x148] sm:$0xff]
    %v6084 = vld [vmem:[%s6041 + $0x150] sm:$0xff]
    %v6085 = vld [vmem:[%s6041 + $0x158] sm:$0xff]
    %v6086 = vld [vmem:[%s6041 + $0x160] sm:$0xff]
    %v6087 = vld [vmem:[%s6041 + $0x168] sm:$0xff]
    %v6088 = vld [vmem:[%s6041 + $0x170] sm:$0xff]
    %v6089 = vld [vmem:[%s6041 + $0x178] sm:$0xff]
    %v6090 = vld [vmem:[%s6041 + $0x180] sm:$0xff]
    %v6091 = vld [vmem:[%s6041 + $0x188] sm:$0xff]
    %v6092 = vld [vmem:[%s6041 + $0x190] sm:$0xff]
    %v6093 = vld [vmem:[%s6041 + $0x198] sm:$0xff]
    %v6094 = vld [vmem:[%s6041 + $0x1a0] sm:$0xff]
    %v6095 = vld [vmem:[%s6041 + $0x1a8] sm:$0xff]
    %v6096 = vld [vmem:[%s6041 + $0x1b0] sm:$0xff]
    %v6097 = vld [vmem:[%s6041 + $0x1b8] sm:$0xff]
    %v6098 = vld [vmem:[%s6041 + $0x1c0] sm:$0xff]
    %v6099 = vld [vmem:[%s6041 + $0x1c8] sm:$0xff]
    %v6100 = vld [vmem:[%s6041 + $0x1d0] sm:$0xff]
    %v6101 = vld [vmem:[%s6041 + $0x1d8] sm:$0xff]
    %v6102 = vld [vmem:[%s6041 + $0x1e0] sm:$0xff]
    %v6103 = vld [vmem:[%s6041 + $0x1e8] sm:$0xff]
    %v6104 = vld [vmem:[%s6041 + $0x1f0] sm:$0xff]
    %v6105 = vld [vmem:[%s6041 + $0x1f8] sm:$0xff]
    %v6106 = vld [vmem:[%s6041 + $0x200] sm:$0xff]
    %v6107 = vld [vmem:[%s6041 + $0x208] sm:$0xff]
    %v6108 = vld [vmem:[%s6041 + $0x210] sm:$0xff]
    %v6109 = vld [vmem:[%s6041 + $0x218] sm:$0xff]
    %v6110 = vld [vmem:[%s6041 + $0x220] sm:$0xff]
    %v6111 = vld [vmem:[%s6041 + $0x228] sm:$0xff]
    %v6112 = vld [vmem:[%s6041 + $0x230] sm:$0xff]
    %v6113 = vld [vmem:[%s6041 + $0x238] sm:$0xff]
    %v6114 = vld [vmem:[%s6041 + $0x240] sm:$0xff]
    %v6115 = vld [vmem:[%s6041 + $0x248] sm:$0xff]
    %v6116 = vld [vmem:[%s6041 + $0x250] sm:$0xff]
    %v6117 = vld [vmem:[%s6041 + $0x258] sm:$0xff]
    %v6118 = vld [vmem:[%s6041 + $0x260] sm:$0xff]
    %v6119 = vld [vmem:[%s6041 + $0x268] sm:$0xff]
    %v6120 = vld [vmem:[%s6041 + $0x270] sm:$0xff]
    %v6121 = vld [vmem:[%s6041 + $0x278] sm:$0xff]
    %v6122 = vld [vmem:[%s6041 + $0x280] sm:$0xff]
    %v6123 = vld [vmem:[%s6041 + $0x288] sm:$0xff]
    %v6124 = vld [vmem:[%s6041 + $0x290] sm:$0xff]
    %v6125 = vld [vmem:[%s6041 + $0x298] sm:$0xff]
    %v6126 = vld [vmem:[%s6041 + $0x2a0] sm:$0xff]
    %v6127 = vld [vmem:[%s6041 + $0x2a8] sm:$0xff]
    %v6128 = vld [vmem:[%s6041 + $0x2b0] sm:$0xff]
    %v6129 = vld [vmem:[%s6041 + $0x2b8] sm:$0xff]
    %v6130 = vld [vmem:[%s6041 + $0x2c0] sm:$0xff]
    %v6131 = vld [vmem:[%s6041 + $0x2c8] sm:$0xff]
    %v6132 = vld [vmem:[%s6041 + $0x2d0] sm:$0xff]
    %v6133 = vld [vmem:[%s6041 + $0x2d8] sm:$0xff]
    %v6134 = vld [vmem:[%s6041 + $0x2e0] sm:$0xff]
    %v6135 = vld [vmem:[%s6041 + $0x2e8] sm:$0xff]
    %v6136 = vld [vmem:[%s6041 + $0x2f0] sm:$0xff]
    %v6137 = vld [vmem:[%s6041 + $0x2f8] sm:$0xff]
    %v6138 = vld [vmem:[%s6041 + $0x300] sm:$0xff]
    %v6139 = vld [vmem:[%s6041 + $0x308] sm:$0xff]
    %v6140 = vld [vmem:[%s6041 + $0x310] sm:$0xff]
    %v6141 = vld [vmem:[%s6041 + $0x318] sm:$0xff]
    %v6142 = vld [vmem:[%s6041 + $0x320] sm:$0xff]
    %v6143 = vld [vmem:[%s6041 + $0x328] sm:$0xff]
    %v6144 = vld [vmem:[%s6041 + $0x330] sm:$0xff]
    %v6145 = vld [vmem:[%s6041 + $0x338] sm:$0xff]
    %v6146 = vld [vmem:[%s6041 + $0x340] sm:$0xff]
    %v6147 = vld [vmem:[%s6041 + $0x348] sm:$0xff]
    %v6148 = vld [vmem:[%s6041 + $0x350] sm:$0xff]
    %v6149 = vld [vmem:[%s6041 + $0x358] sm:$0xff]
    %v6150 = vld [vmem:[%s6041 + $0x360] sm:$0xff]
    %v6151 = vld [vmem:[%s6041 + $0x368] sm:$0xff]
    %v6152 = vld [vmem:[%s6041 + $0x370] sm:$0xff]
    %v6153 = vld [vmem:[%s6041 + $0x378] sm:$0xff]
    %v6154 = vld [vmem:[%s6041 + $0x380] sm:$0xff]
    %v6155 = vld [vmem:[%s6041 + $0x388] sm:$0xff]
    %v6156 = vld [vmem:[%s6041 + $0x390] sm:$0xff]
    %v6157 = vld [vmem:[%s6041 + $0x398] sm:$0xff]
    %v6158 = vld [vmem:[%s6041 + $0x3a0] sm:$0xff]
    %v6159 = vld [vmem:[%s6041 + $0x3a8] sm:$0xff]
    %v6160 = vld [vmem:[%s6041 + $0x3b0] sm:$0xff]
    %v6161 = vld [vmem:[%s6041 + $0x3b8] sm:$0xff]
    %v6162 = vld [vmem:[%s6041 + $0x3c0] sm:$0xff]
    %v6163 = vld [vmem:[%s6041 + $0x3c8] sm:$0xff]
    %v6164 = vld [vmem:[%s6041 + $0x3d0] sm:$0xff]
    %v6165 = vld [vmem:[%s6041 + $0x3d8] sm:$0xff]
    %v6166 = vld [vmem:[%s6041 + $0x3e0] sm:$0xff]
    %v6167 = vld [vmem:[%s6041 + $0x3e8] sm:$0xff]
    %v6168 = vld [vmem:[%s6041 + $0x3f0] sm:$0xff]
    %v6169 = vld [vmem:[%s6041 + $0x3f8] sm:$0xff]
    %v6170 = vld [vmem:[%s6041 + $0x400] sm:$0xff]
    %v6171 = vld [vmem:[%s6041 + $0x408] sm:$0xff]
    %v6172 = vld [vmem:[%s6041 + $0x410] sm:$0xff]
    %v6173 = vld [vmem:[%s6041 + $0x418] sm:$0xff]
    %v6174 = vld [vmem:[%s6041 + $0x420] sm:$0xff]
    %v6175 = vld [vmem:[%s6041 + $0x428] sm:$0xff]
    %v6176 = vld [vmem:[%s6041 + $0x430] sm:$0xff]
    %v6177 = vld [vmem:[%s6041 + $0x438] sm:$0xff]
    %v6178 = vld [vmem:[%s6041 + $0x440] sm:$0xff]
    %v6179 = vld [vmem:[%s6041 + $0x448] sm:$0xff]
    %v6180 = vld [vmem:[%s6041 + $0x450] sm:$0xff]
    %v6181 = vld [vmem:[%s6041 + $0x458] sm:$0xff]
    %v6182 = vld [vmem:[%s6041 + $0x460] sm:$0xff]
    %v6183 = vld [vmem:[%s6041 + $0x468] sm:$0xff]
    %v6184 = vld [vmem:[%s6041 + $0x470] sm:$0xff]
    %v6185 = vld [vmem:[%s6041 + $0x478] sm:$0xff]
    %v6186 = vld [vmem:[%s6041 + $0x480] sm:$0xff]
    %v6187 = vld [vmem:[%s6041 + $0x488] sm:$0xff]
    %v6188 = vld [vmem:[%s6041 + $0x490] sm:$0xff]
    %v6189 = vld [vmem:[%s6041 + $0x498] sm:$0xff]
    %v6190 = vld [vmem:[%s6041 + $0x4a0] sm:$0xff]
    %v6191 = vld [vmem:[%s6041 + $0x4a8] sm:$0xff]
    %v6192 = vld [vmem:[%s6041 + $0x4b0] sm:$0xff]
    %v6193 = vld [vmem:[%s6041 + $0x4b8] sm:$0xff]
    %v6194 = vld [vmem:[%s6041 + $0x4c0] sm:$0xff]
    %v6195 = vld [vmem:[%s6041 + $0x4c8] sm:$0xff]
    %v6196 = vld [vmem:[%s6041 + $0x4d0] sm:$0xff]
    %v6197 = vld [vmem:[%s6041 + $0x4d8] sm:$0xff]
    %v6198 = vld [vmem:[%s6041 + $0x4e0] sm:$0xff]
    %v6199 = vld [vmem:[%s6041 + $0x4e8] sm:$0xff]
    %v6200 = vld [vmem:[%s6041 + $0x4f0] sm:$0xff]
    %v6201 = vld [vmem:[%s6041 + $0x4f8] sm:$0xff]
    %v6202 = vld [vmem:[%s6041 + $0x500] sm:$0xff]
    %v6203 = vld [vmem:[%s6041 + $0x508] sm:$0xff]
    %v6204 = vld [vmem:[%s6041 + $0x510] sm:$0xff]
    %v6205 = vld [vmem:[%s6041 + $0x518] sm:$0xff]
    %v6206 = vld [vmem:[%s6041 + $0x520] sm:$0xff]
    %v6207 = vld [vmem:[%s6041 + $0x528] sm:$0xff]
    %v6208 = vld [vmem:[%s6041 + $0x530] sm:$0xff]
    %v6209 = vld [vmem:[%s6041 + $0x538] sm:$0xff]
    %v6210 = vld [vmem:[%s6041 + $0x540] sm:$0xff]
    %v6211 = vld [vmem:[%s6041 + $0x548] sm:$0xff]
    %v6212 = vld [vmem:[%s6041 + $0x550] sm:$0xff]
    %v6213 = vld [vmem:[%s6041 + $0x558] sm:$0xff]
    %v6214 = vld [vmem:[%s6041 + $0x560] sm:$0xff]
    %v6215 = vld [vmem:[%s6041 + $0x568] sm:$0xff]
    %v6216 = vld [vmem:[%s6041 + $0x570] sm:$0xff]
    %v6217 = vld [vmem:[%s6041 + $0x578] sm:$0xff]
    %v6218 = vld [vmem:[%s6041 + $0x580] sm:$0xff]
    %v6219 = vld [vmem:[%s6041 + $0x588] sm:$0xff]
    %v6220 = vld [vmem:[%s6041 + $0x590] sm:$0xff]
    %v6221 = vld [vmem:[%s6041 + $0x598] sm:$0xff]
    %v6222 = vld [vmem:[%s6041 + $0x5a0] sm:$0xff]
    %v6223 = vld [vmem:[%s6041 + $0x5a8] sm:$0xff]
    %v6224 = vld [vmem:[%s6041 + $0x5b0] sm:$0xff]
    %v6225 = vld [vmem:[%s6041 + $0x5b8] sm:$0xff]
    %v6226 = vld [vmem:[%s6041 + $0x5c0] sm:$0xff]
    %v6227 = vld [vmem:[%s6041 + $0x5c8] sm:$0xff]
    %v6228 = vld [vmem:[%s6041 + $0x5d0] sm:$0xff]
    %v6229 = vld [vmem:[%s6041 + $0x5d8] sm:$0xff]
    %v6230 = vld [vmem:[%s6041 + $0x5e0] sm:$0xff]
    %v6231 = vld [vmem:[%s6041 + $0x5e8] sm:$0xff]
    %v6232 = vld [vmem:[%s6041 + $0x5f0] sm:$0xff]
    %v6233 = vld [vmem:[%s6041 + $0x5f8] sm:$0xff]
    %v6234 = vld [vmem:[%s6041 + $0x600] sm:$0xff]
    %v6235 = vld [vmem:[%s6041 + $0x608] sm:$0xff]
    %v6236 = vld [vmem:[%s6041 + $0x610] sm:$0xff]
    %v6237 = vld [vmem:[%s6041 + $0x618] sm:$0xff]
    %v6238 = vld [vmem:[%s6041 + $0x620] sm:$0xff]
    %v6239 = vld [vmem:[%s6041 + $0x628] sm:$0xff]
    %v6240 = vld [vmem:[%s6041 + $0x630] sm:$0xff]
    %v6241 = vld [vmem:[%s6041 + $0x638] sm:$0xff]
    %v6242 = vld [vmem:[%s6041 + $0x640] sm:$0xff]
    %v6243 = vld [vmem:[%s6041 + $0x648] sm:$0xff]
    %v6244 = vld [vmem:[%s6041 + $0x650] sm:$0xff]
    %v6245 = vld [vmem:[%s6041 + $0x658] sm:$0xff]
    %v6246 = vld [vmem:[%s6041 + $0x660] sm:$0xff]
    %v6247 = vld [vmem:[%s6041 + $0x668] sm:$0xff]
    %v6248 = vld [vmem:[%s6041 + $0x670] sm:$0xff]
    %v6249 = vld [vmem:[%s6041 + $0x678] sm:$0xff]
    %v6250 = vld [vmem:[%s6041 + $0x680] sm:$0xff]
    %v6251 = vld [vmem:[%s6041 + $0x688] sm:$0xff]
    %v6252 = vld [vmem:[%s6041 + $0x690] sm:$0xff]
    %v6253 = vld [vmem:[%s6041 + $0x698] sm:$0xff]
    %v6254 = vld [vmem:[%s6041 + $0x6a0] sm:$0xff]
    %v6255 = vld [vmem:[%s6041 + $0x6a8] sm:$0xff]
    %v6256 = vld [vmem:[%s6041 + $0x6b0] sm:$0xff]
    %v6257 = vld [vmem:[%s6041 + $0x6b8] sm:$0xff]
    %v6258 = vld [vmem:[%s6041 + $0x6c0] sm:$0xff]
    %v6259 = vld [vmem:[%s6041 + $0x6c8] sm:$0xff]
    %v6260 = vld [vmem:[%s6041 + $0x6d0] sm:$0xff]
    %v6261 = vld [vmem:[%s6041 + $0x6d8] sm:$0xff]
    %v6262 = vld [vmem:[%s6041 + $0x6e0] sm:$0xff]
    %v6263 = vld [vmem:[%s6041 + $0x6e8] sm:$0xff]
    %v6264 = vld [vmem:[%s6041 + $0x6f0] sm:$0xff]
    %v6265 = vld [vmem:[%s6041 + $0x6f8] sm:$0xff]
    %s6266 = scalar_lea.vmem [#allocation44], 4
    %v6267 = vld [vmem:[%s6266] sm:$0xf]
    %v6269 = vlaneseq
    %v6270 = vshrl.u32 %v6269, 7
    %v6271 = vsub.s32 0, %v6270
    %v6272 = vrot.slane %v6267, %v6271
    %v6273 = vlaneseq
    %v6274 = vshrl.u32 %v6273, 7
    %v6275 = vsub.s32 1, %v6274
    %v6276 = vrot.slane %v6267, %v6275
    %v6277 = vlaneseq
    %v6278 = vshrl.u32 %v6277, 7
    %v6279 = vsub.s32 2, %v6278
    %v6280 = vrot.slane %v6267, %v6279
    %v6281 = vlaneseq
    %v6282 = vshrl.u32 %v6281, 7
    %v6283 = vsub.s32 3, %v6282
    %v6284 = vrot.slane %v6267, %v6283
    %v6290 = vsel %vm942, %v6040, 0
    %6292 = vmatprep.subr.mxu0 %v6043
    %6293 = vmatpush1.msra.mxu0 %v6042
    %6294 = vmatprep.subr.mxu0 %v6047
    %6295 = vmatpush1.msra.mxu0 %v6046
    %6296 = vmatprep.subr.mxu0 %v6051
    %6297 = vmatpush1.msra.mxu0 %v6050
    %6298 = vmatprep.subr.mxu0 %v6055
    %6299 = vmatpush1.msra.mxu0 %v6054
    %6300 = vmatprep.subr.mxu0 %v6059
    %6301 = vmatpush1.msra.mxu0 %v6058
    %6302 = vmatprep.subr.mxu0 %v6063
    %6303 = vmatpush1.msra.mxu0 %v6062
    %6304 = vmatprep.subr.mxu0 %v6067
    %6305 = vmatpush1.msra.mxu0 %v6066
    %6306 = vmatprep.subr.mxu0 %v6071
    %6307 = vmatpush1.msra.mxu0 %v6070
    %6308 = vmatprep.subr.mxu0 %v6075
    %6309 = vmatpush1.msra.mxu0 %v6074
    %6310 = vmatprep.subr.mxu0 %v6079
    %6311 = vmatpush1.msra.mxu0 %v6078
    %6312 = vmatprep.subr.mxu0 %v6083
    %6313 = vmatpush1.msra.mxu0 %v6082
    %6314 = vmatprep.subr.mxu0 %v6087
    %6315 = vmatpush1.msra.mxu0 %v6086
    %6316 = vmatprep.subr.mxu0 %v6091
    %6317 = vmatpush1.msra.mxu0 %v6090
    %6318 = vmatprep.subr.mxu0 %v6095
    %6319 = vmatpush1.msra.mxu0 %v6094
    %6320 = vmatprep.subr.mxu0 %v6099
    %6321 = vmatpush1.msra.mxu0 %v6098
    %6322 = vmatprep.subr.mxu0 %v6103
    %6323 = vmatpush1.msra.mxu0 %v6102
    %6324 = vmatprep.subr.mxu0 %v6107
    %6325 = vmatpush1.msra.mxu0 %v6106
    %6326 = vmatprep.subr.mxu0 %v6111
    %6327 = vmatpush1.msra.mxu0 %v6110
    %6328 = vmatprep.subr.mxu0 %v6115
    %6329 = vmatpush1.msra.mxu0 %v6114
    %6330 = vmatprep.subr.mxu0 %v6119
    %6331 = vmatpush1.msra.mxu0 %v6118
    %6332 = vmatprep.subr.mxu0 %v6123
    %6333 = vmatpush1.msra.mxu0 %v6122
    %6334 = vmatprep.subr.mxu0 %v6127
    %6335 = vmatpush1.msra.mxu0 %v6126
    %6336 = vmatprep.subr.mxu0 %v6131
    %6337 = vmatpush1.msra.mxu0 %v6130
    %6338 = vmatprep.subr.mxu0 %v6135
    %6339 = vmatpush1.msra.mxu0 %v6134
    %6340 = vmatprep.subr.mxu0 %v6139
    %6341 = vmatpush1.msra.mxu0 %v6138
    %6342 = vmatprep.subr.mxu0 %v6143
    %6343 = vmatpush1.msra.mxu0 %v6142
    %6344 = vmatprep.subr.mxu0 %v6147
    %6345 = vmatpush1.msra.mxu0 %v6146
    %6346 = vmatprep.subr.mxu0 %v6151
    %6347 = vmatpush1.msra.mxu0 %v6150
    %6348 = vmatprep.subr.mxu0 %v6155
    %6349 = vmatpush1.msra.mxu0 %v6154
    %6350 = vmatprep.subr.mxu0 %v6159
    %6351 = vmatpush1.msra.mxu0 %v6158
    %6352 = vmatprep.subr.mxu0 %v6163
    %6353 = vmatpush1.msra.mxu0 %v6162
    %6354 = vmatprep.subr.mxu0 %v6167
    %6355 = vmatpush1.msra.mxu0 %v6166
    %6356 = vmatprep.mubr.f32.mxu0 %v6038
    %6357 = vmatmul.mubr.f32.gmra.mrb[0].mxu0 %v6037
    %v6358 = vpop.f32.mrb[0].mxu0
    %v6359 = vadd.f32 %v6272, %v6358
    %v6360 = vpop.f32.mrb[0].mxu0
    %v6361 = vadd.f32 %v6276, %v6360
    %6362 = vdwg.mxu0
    %6363 = vmatprep.subr.mxu0 %v6171
    %6364 = vmatpush1.msra.mxu0 %v6170
    %6365 = vmatprep.subr.mxu0 %v6175
    %6366 = vmatpush1.msra.mxu0 %v6174
    %6367 = vmatprep.subr.mxu0 %v6179
    %6368 = vmatpush1.msra.mxu0 %v6178
    %6369 = vmatprep.subr.mxu0 %v6183
    %6370 = vmatpush1.msra.mxu0 %v6182
    %6371 = vmatprep.subr.mxu0 %v6187
    %6372 = vmatpush1.msra.mxu0 %v6186
    %6373 = vmatprep.subr.mxu0 %v6191
    %6374 = vmatpush1.msra.mxu0 %v6190
    %6375 = vmatprep.subr.mxu0 %v6195
    %6376 = vmatpush1.msra.mxu0 %v6194
    %6377 = vmatprep.subr.mxu0 %v6199
    %6378 = vmatpush1.msra.mxu0 %v6198
    %6379 = vmatprep.subr.mxu0 %v6203
    %6380 = vmatpush1.msra.mxu0 %v6202
    %6381 = vmatprep.subr.mxu0 %v6207
    %6382 = vmatpush1.msra.mxu0 %v6206
    %6383 = vmatprep.subr.mxu0 %v6211
    %6384 = vmatpush1.msra.mxu0 %v6210
    %6385 = vmatprep.subr.mxu0 %v6215
    %6386 = vmatpush1.msra.mxu0 %v6214
    %6387 = vmatprep.subr.mxu0 %v6219
    %6388 = vmatpush1.msra.mxu0 %v6218
    %6389 = vmatprep.subr.mxu0 %v6223
    %6390 = vmatpush1.msra.mxu0 %v6222
    %6391 = vmatprep.subr.mxu0 %v6227
    %6392 = vmatpush1.msra.mxu0 %v6226
    %6393 = vmatprep.subr.mxu0 %v6231
    %6394 = vmatpush1.msra.mxu0 %v6230
    %6395 = vmatprep.subr.mxu0 %v6235
    %6396 = vmatpush1.msra.mxu0 %v6234
    %6397 = vmatprep.subr.mxu0 %v6239
    %6398 = vmatpush1.msra.mxu0 %v6238
    %6399 = vmatprep.subr.mxu0 %v6243
    %6400 = vmatpush1.msra.mxu0 %v6242
    %6401 = vmatprep.subr.mxu0 %v6247
    %6402 = vmatpush1.msra.mxu0 %v6246
    %6403 = vmatprep.subr.mxu0 %v6251
    %6404 = vmatpush1.msra.mxu0 %v6250
    %6405 = vmatprep.subr.mxu0 %v6255
    %6406 = vmatpush1.msra.mxu0 %v6254
    %6407 = vmatprep.subr.mxu0 %v6259
    %6408 = vmatpush1.msra.mxu0 %v6258
    %6409 = vmatprep.subr.mxu0 %v6263
    %6410 = vmatpush1.msra.mxu0 %v6262
    %6411 = vmatprep.subr.mxu0 0.0
    %6412 = vmatpush1.msra.mxu0 0.0
    %6413 = vmatprep.subr.mxu0 0.0
    %6414 = vmatpush1.msra.mxu0 0.0
    %6415 = vmatprep.subr.mxu0 0.0
    %6416 = vmatpush1.msra.mxu0 0.0
    %6417 = vmatprep.subr.mxu0 0.0
    %6418 = vmatpush1.msra.mxu0 0.0
    %6419 = vmatprep.subr.mxu0 0.0
    %6420 = vmatpush1.msra.mxu0 0.0
    %6421 = vmatprep.subr.mxu0 0.0
    %6422 = vmatpush1.msra.mxu0 0.0
    %6423 = vmatprep.subr.mxu0 0.0
    %6424 = vmatpush1.msra.mxu0 0.0
    %6425 = vmatprep.subr.mxu0 0.0
    %6426 = vmatpush1.msra.mxu0 0.0
    %6427 = vmatprep.mubr.f32.mxu0 %v6290
    %6428 = vmatmul.mubr.f32.gmra.mrb[0].mxu0 %v6039
    %v6429 = vpop.f32.mrb[0].mxu0
    %v6430 = vadd.f32 %v6359, %v6429
    %v6431 = vpop.f32.mrb[0].mxu0
    %v6432 = vadd.f32 %v6361, %v6431
    %6433 = vdwg.mxu0
    %6434 = vmatprep.subr.mxu0 %v6045
    %6435 = vmatpush1.msra.mxu0 %v6044
    %6436 = vmatprep.subr.mxu0 %v6049
    %6437 = vmatpush1.msra.mxu0 %v6048
    %6438 = vmatprep.subr.mxu0 %v6053
    %6439 = vmatpush1.msra.mxu0 %v6052
    %6440 = vmatprep.subr.mxu0 %v6057
    %6441 = vmatpush1.msra.mxu0 %v6056
    %6442 = vmatprep.subr.mxu0 %v6061
    %6443 = vmatpush1.msra.mxu0 %v6060
    %6444 = vmatprep.subr.mxu0 %v6065
    %6445 = vmatpush1.msra.mxu0 %v6064
    %6446 = vmatprep.subr.mxu0 %v6069
    %6447 = vmatpush1.msra.mxu0 %v6068
    %6448 = vmatprep.subr.mxu0 %v6073
    %6449 = vmatpush1.msra.mxu0 %v6072
    %6450 = vmatprep.subr.mxu0 %v6077
    %6451 = vmatpush1.msra.mxu0 %v6076
    %6452 = vmatprep.subr.mxu0 %v6081
    %6453 = vmatpush1.msra.mxu0 %v6080
    %6454 = vmatprep.subr.mxu0 %v6085
    %6455 = vmatpush1.msra.mxu0 %v6084
    %6456 = vmatprep.subr.mxu0 %v6089
    %6457 = vmatpush1.msra.mxu0 %v6088
    %6458 = vmatprep.subr.mxu0 %v6093
    %6459 = vmatpush1.msra.mxu0 %v6092
    %6460 = vmatprep.subr.mxu0 %v6097
    %6461 = vmatpush1.msra.mxu0 %v6096
    %6462 = vmatprep.subr.mxu0 %v6101
    %6463 = vmatpush1.msra.mxu0 %v6100
    %6464 = vmatprep.subr.mxu0 %v6105
    %6465 = vmatpush1.msra.mxu0 %v6104
    %6466 = vmatprep.subr.mxu0 %v6109
    %6467 = vmatpush1.msra.mxu0 %v6108
    %6468 = vmatprep.subr.mxu0 %v6113
    %6469 = vmatpush1.msra.mxu0 %v6112
    %6470 = vmatprep.subr.mxu0 %v6117
    %6471 = vmatpush1.msra.mxu0 %v6116
    %6472 = vmatprep.subr.mxu0 %v6121
    %6473 = vmatpush1.msra.mxu0 %v6120
    %6474 = vmatprep.subr.mxu0 %v6125
    %6475 = vmatpush1.msra.mxu0 %v6124
    %6476 = vmatprep.subr.mxu0 %v6129
    %6477 = vmatpush1.msra.mxu0 %v6128
    %6478 = vmatprep.subr.mxu0 %v6133
    %6479 = vmatpush1.msra.mxu0 %v6132
    %6480 = vmatprep.subr.mxu0 %v6137
    %6481 = vmatpush1.msra.mxu0 %v6136
    %6482 = vmatprep.subr.mxu0 %v6141
    %6483 = vmatpush1.msra.mxu0 %v6140
    %6484 = vmatprep.subr.mxu0 %v6145
    %6485 = vmatpush1.msra.mxu0 %v6144
    %6486 = vmatprep.subr.mxu0 %v6149
    %6487 = vmatpush1.msra.mxu0 %v6148
    %6488 = vmatprep.subr.mxu0 %v6153
    %6489 = vmatpush1.msra.mxu0 %v6152
    %6490 = vmatprep.subr.mxu0 %v6157
    %6491 = vmatpush1.msra.mxu0 %v6156
    %6492 = vmatprep.subr.mxu0 %v6161
    %6493 = vmatpush1.msra.mxu0 %v6160
    %6494 = vmatprep.subr.mxu0 %v6165
    %6495 = vmatpush1.msra.mxu0 %v6164
    %6496 = vmatprep.subr.mxu0 %v6169
    %6497 = vmatpush1.msra.mxu0 %v6168
    %6498 = vmatprep.mubr.f32.mxu0 %v6038
    %6499 = vmatmul.mubr.f32.gmra.mrb[0].mxu0 %v6037
    %v6500 = vpop.f32.mrb[0].mxu0
    %v6501 = vadd.f32 %v6280, %v6500
    %v6502 = vpop.f32.mrb[0].mxu0
    %v6503 = vadd.f32 %v6284, %v6502
    %6504 = vdwg.mxu0
    %6505 = vmatprep.subr.mxu0 %v6173
    %6506 = vmatpush1.msra.mxu0 %v6172
    %6507 = vmatprep.subr.mxu0 %v6177
    %6508 = vmatpush1.msra.mxu0 %v6176
    %6509 = vmatprep.subr.mxu0 %v6181
    %6510 = vmatpush1.msra.mxu0 %v6180
    %6511 = vmatprep.subr.mxu0 %v6185
    %6512 = vmatpush1.msra.mxu0 %v6184
    %6513 = vmatprep.subr.mxu0 %v6189
    %6514 = vmatpush1.msra.mxu0 %v6188
    %6515 = vmatprep.subr.mxu0 %v6193
    %6516 = vmatpush1.msra.mxu0 %v6192
    %6517 = vmatprep.subr.mxu0 %v6197
    %6518 = vmatpush1.msra.mxu0 %v6196
    %6519 = vmatprep.subr.mxu0 %v6201
    %6520 = vmatpush1.msra.mxu0 %v6200
    %6521 = vmatprep.subr.mxu0 %v6205
    %6522 = vmatpush1.msra.mxu0 %v6204
    %6523 = vmatprep.subr.mxu0 %v6209
    %6524 = vmatpush1.msra.mxu0 %v6208
    %6525 = vmatprep.subr.mxu0 %v6213
    %6526 = vmatpush1.msra.mxu0 %v6212
    %6527 = vmatprep.subr.mxu0 %v6217
    %6528 = vmatpush1.msra.mxu0 %v6216
    %6529 = vmatprep.subr.mxu0 %v6221
    %6530 = vmatpush1.msra.mxu0 %v6220
    %6531 = vmatprep.subr.mxu0 %v6225
    %6532 = vmatpush1.msra.mxu0 %v6224
    %6533 = vmatprep.subr.mxu0 %v6229
    %6534 = vmatpush1.msra.mxu0 %v6228
    %6535 = vmatprep.subr.mxu0 %v6233
    %6536 = vmatpush1.msra.mxu0 %v6232
    %6537 = vmatprep.subr.mxu0 %v6237
    %6538 = vmatpush1.msra.mxu0 %v6236
    %6539 = vmatprep.subr.mxu0 %v6241
    %6540 = vmatpush1.msra.mxu0 %v6240
    %6541 = vmatprep.subr.mxu0 %v6245
    %6542 = vmatpush1.msra.mxu0 %v6244
    %6543 = vmatprep.subr.mxu0 %v6249
    %6544 = vmatpush1.msra.mxu0 %v6248
    %6545 = vmatprep.subr.mxu0 %v6253
    %6546 = vmatpush1.msra.mxu0 %v6252
    %6547 = vmatprep.subr.mxu0 %v6257
    %6548 = vmatpush1.msra.mxu0 %v6256
    %6549 = vmatprep.subr.mxu0 %v6261
    %6550 = vmatpush1.msra.mxu0 %v6260
    %6551 = vmatprep.subr.mxu0 %v6265
    %6552 = vmatpush1.msra.mxu0 %v6264
    %6553 = vmatprep.subr.mxu0 0.0
    %6554 = vmatpush1.msra.mxu0 0.0
    %6555 = vmatprep.subr.mxu0 0.0
    %6556 = vmatpush1.msra.mxu0 0.0
    %6557 = vmatprep.subr.mxu0 0.0
    %6558 = vmatpush1.msra.mxu0 0.0
    %6559 = vmatprep.subr.mxu0 0.0
    %6560 = vmatpush1.msra.mxu0 0.0
    %6561 = vmatprep.subr.mxu0 0.0
    %6562 = vmatpush1.msra.mxu0 0.0
    %6563 = vmatprep.subr.mxu0 0.0
    %6564 = vmatpush1.msra.mxu0 0.0
    %6565 = vmatprep.subr.mxu0 0.0
    %6566 = vmatpush1.msra.mxu0 0.0
    %6567 = vmatprep.subr.mxu0 0.0
    %6568 = vmatpush1.msra.mxu0 0.0
    %6569 = vmatprep.mubr.f32.mxu0 %v6290
    %6570 = vmatmul.mubr.f32.gmra.mrb[0].mxu0 %v6039
    %v6571 = vpop.f32.mrb[0].mxu0
    %v6572 = vadd.f32 %v6501, %v6571
    %v6573 = vpop.f32.mrb[0].mxu0
    %v6574 = vadd.f32 %v6503, %v6573
    %6575 = vdwg.mxu0
    %v6576 = vmul.f32 %v6430, %v6430
    %v6577 = vmul.f32 %v6432, %v6432
    %v6578 = vmul.f32 %v6572, %v6572
    %v6579 = vmul.f32 %v6574, %v6574
    %v6580 = vmul.f32 %v6430, %v6576
    %v6581 = vmul.f32 %v6432, %v6577
    %v6582 = vmul.f32 %v6572, %v6578
    %v6583 = vmul.f32 %v6574, %v6579
    %v6584 = vmul.f32 %v6580, 0.044715
    %v6585 = vmul.f32 %v6581, 0.044715
    %v6586 = vmul.f32 %v6582, 0.044715
    %v6587 = vmul.f32 %v6583, 0.044715
    %v6588 = vadd.f32 %v6430, %v6584
    %v6589 = vadd.f32 %v6432, %v6585
    %v6590 = vadd.f32 %v6572, %v6586
    %v6591 = vadd.f32 %v6574, %v6587
    %v6592 = vmul.f32 %v6588, 0.7978846
    %v6593 = vmul.f32 %v6589, 0.7978846
    %v6594 = vmul.f32 %v6590, 0.7978846
    %v6595 = vmul.f32 %v6591, 0.7978846
    %v6596 = vtanh.pop %v6592
    %v6597 = vtanh.pop %v6593
    %v6598 = vtanh.pop %v6594
    %v6599 = vtanh.pop %v6595
    %v6600 = vadd.f32 %v6596, 1.0
    %v6601 = vadd.f32 %v6597, 1.0
    %v6602 = vadd.f32 %v6598, 1.0
    %v6603 = vadd.f32 %v6599, 1.0
    %v6604 = vmul.f32 %v6600, 0.5
    %v6605 = vmul.f32 %v6601, 0.5
    %v6606 = vmul.f32 %v6602, 0.5
    %v6607 = vmul.f32 %v6603, 0.5
    %v6608 = vmul.f32 %v6430, %v6604
    %v6609 = vmul.f32 %v6432, %v6605
    %v6610 = vmul.f32 %v6572, %v6606
    %v6611 = vmul.f32 %v6574, %v6607
    %v6613 = vsel %vm4298, %v5822, 0
    %6615 = vmatprep.subr.mxu0 %v4307
    %6616 = vmatpush1.msra.mxu0 %v4304
    %6617 = vmatprep.subr.mxu0 0.0
    %6618 = vmatpush1.msra.mxu0 0.0
    %6619 = vmatprep.subr.mxu0 0.0
    %6620 = vmatpush1.msra.mxu0 0.0
    %6621 = vmatprep.subr.mxu0 0.0
    %6622 = vmatpush1.msra.mxu0 0.0
    %6623 = vmatprep.subr.mxu0 0.0
    %6624 = vmatpush1.msra.mxu0 0.0
    %6625 = vmatprep.subr.mxu0 0.0
    %6626 = vmatpush1.msra.mxu0 0.0
    %6627 = vmatprep.subr.mxu0 0.0
    %6628 = vmatpush1.msra.mxu0 0.0
    %6629 = vmatprep.subr.mxu0 0.0
    %6630 = vmatpush1.msra.mxu0 0.0
    %6631 = vmatprep.subr.mxu0 0.0
    %6632 = vmatpush1.msra.mxu0 0.0
    %6633 = vmatprep.subr.mxu0 0.0
    %6634 = vmatpush1.msra.mxu0 0.0
    %6635 = vmatprep.subr.mxu0 0.0
    %6636 = vmatpush1.msra.mxu0 0.0
    %6637 = vmatprep.subr.mxu0 0.0
    %6638 = vmatpush1.msra.mxu0 0.0
    %6639 = vmatprep.subr.mxu0 0.0
    %6640 = vmatpush1.msra.mxu0 0.0
    %6641 = vmatprep.subr.mxu0 0.0
    %6642 = vmatpush1.msra.mxu0 0.0
    %6643 = vmatprep.subr.mxu0 0.0
    %6644 = vmatpush1.msra.mxu0 0.0
    %6645 = vmatprep.subr.mxu0 0.0
    %6646 = vmatpush1.msra.mxu0 0.0
    %6647 = vmatprep.subr.mxu0 0.0
    %6648 = vmatpush1.msra.mxu0 0.0
    %6649 = vmatprep.subr.mxu0 0.0
    %6650 = vmatpush1.msra.mxu0 0.0
    %6651 = vmatprep.subr.mxu0 0.0
    %6652 = vmatpush1.msra.mxu0 0.0
    %6653 = vmatprep.subr.mxu0 0.0
    %6654 = vmatpush1.msra.mxu0 0.0
    %6655 = vmatprep.subr.mxu0 0.0
    %6656 = vmatpush1.msra.mxu0 0.0
    %6657 = vmatprep.subr.mxu0 0.0
    %6658 = vmatpush1.msra.mxu0 0.0
    %6659 = vmatprep.subr.mxu0 0.0
    %6660 = vmatpush1.msra.mxu0 0.0
    %6661 = vmatprep.subr.mxu0 0.0
    %6662 = vmatpush1.msra.mxu0 0.0
    %6663 = vmatprep.subr.mxu0 0.0
    %6664 = vmatpush1.msra.mxu0 0.0
    %6665 = vmatprep.subr.mxu0 0.0
    %6666 = vmatpush1.msra.mxu0 0.0
    %6667 = vmatprep.subr.mxu0 0.0
    %6668 = vmatpush1.msra.mxu0 0.0
    %6669 = vmatprep.subr.mxu0 0.0
    %6670 = vmatpush1.msra.mxu0 0.0
    %6671 = vmatprep.subr.mxu0 0.0
    %6672 = vmatpush1.msra.mxu0 0.0
    %6673 = vmatprep.subr.mxu0 0.0
    %6674 = vmatpush1.msra.mxu0 0.0
    %6675 = vmatprep.subr.mxu0 0.0
    %6676 = vmatpush1.msra.mxu0 0.0
    %6677 = vmatprep.subr.mxu0 0.0
    %6678 = vmatpush1.msra.mxu0 0.0
    %6679 = vmatprep.mubr.f32.mxu0 0.0
    %6680 = vmatmul.mubr.f32.gmra.mrb[0].mxu0 %v6613
    %v6681 = vpop.f32.mrb[0].mxu0
    %v6682 = vadd.f32 0.0, %v6681
    %v6683 = vpop.f32.mrb[0].mxu0
    %v6684 = vadd.f32 0.0, %v6683
    %6685 = vdwg.mxu0
    %6686 = vmatprep.subr.mxu0 %v4313
    %6687 = vmatpush1.msra.mxu0 %v4310
    %6688 = vmatprep.subr.mxu0 0.0
    %6689 = vmatpush1.msra.mxu0 0.0
    %6690 = vmatprep.subr.mxu0 0.0
    %6691 = vmatpush1.msra.mxu0 0.0
    %6692 = vmatprep.subr.mxu0 0.0
    %6693 = vmatpush1.msra.mxu0 0.0
    %6694 = vmatprep.subr.mxu0 0.0
    %6695 = vmatpush1.msra.mxu0 0.0
    %6696 = vmatprep.subr.mxu0 0.0
    %6697 = vmatpush1.msra.mxu0 0.0
    %6698 = vmatprep.subr.mxu0 0.0
    %6699 = vmatpush1.msra.mxu0 0.0
    %6700 = vmatprep.subr.mxu0 0.0
    %6701 = vmatpush1.msra.mxu0 0.0
    %6702 = vmatprep.subr.mxu0 0.0
    %6703 = vmatpush1.msra.mxu0 0.0
    %6704 = vmatprep.subr.mxu0 0.0
    %6705 = vmatpush1.msra.mxu0 0.0
    %6706 = vmatprep.subr.mxu0 0.0
    %6707 = vmatpush1.msra.mxu0 0.0
    %6708 = vmatprep.subr.mxu0 0.0
    %6709 = vmatpush1.msra.mxu0 0.0
    %6710 = vmatprep.subr.mxu0 0.0
    %6711 = vmatpush1.msra.mxu0 0.0
    %6712 = vmatprep.subr.mxu0 0.0
    %6713 = vmatpush1.msra.mxu0 0.0
    %6714 = vmatprep.subr.mxu0 0.0
    %6715 = vmatpush1.msra.mxu0 0.0
    %6716 = vmatprep.subr.mxu0 0.0
    %6717 = vmatpush1.msra.mxu0 0.0
    %6718 = vmatprep.subr.mxu0 0.0
    %6719 = vmatpush1.msra.mxu0 0.0
    %6720 = vmatprep.subr.mxu0 0.0
    %6721 = vmatpush1.msra.mxu0 0.0
    %6722 = vmatprep.subr.mxu0 0.0
    %6723 = vmatpush1.msra.mxu0 0.0
    %6724 = vmatprep.subr.mxu0 0.0
    %6725 = vmatpush1.msra.mxu0 0.0
    %6726 = vmatprep.subr.mxu0 0.0
    %6727 = vmatpush1.msra.mxu0 0.0
    %6728 = vmatprep.subr.mxu0 0.0
    %6729 = vmatpush1.msra.mxu0 0.0
    %6730 = vmatprep.subr.mxu0 0.0
    %6731 = vmatpush1.msra.mxu0 0.0
    %6732 = vmatprep.subr.mxu0 0.0
    %6733 = vmatpush1.msra.mxu0 0.0
    %6734 = vmatprep.subr.mxu0 0.0
    %6735 = vmatpush1.msra.mxu0 0.0
    %6736 = vmatprep.subr.mxu0 0.0
    %6737 = vmatpush1.msra.mxu0 0.0
    %6738 = vmatprep.subr.mxu0 0.0
    %6739 = vmatpush1.msra.mxu0 0.0
    %6740 = vmatprep.subr.mxu0 0.0
    %6741 = vmatpush1.msra.mxu0 0.0
    %6742 = vmatprep.subr.mxu0 0.0
    %6743 = vmatpush1.msra.mxu0 0.0
    %6744 = vmatprep.subr.mxu0 0.0
    %6745 = vmatpush1.msra.mxu0 0.0
    %6746 = vmatprep.subr.mxu0 0.0
    %6747 = vmatpush1.msra.mxu0 0.0
    %6748 = vmatprep.subr.mxu0 0.0
    %6749 = vmatpush1.msra.mxu0 0.0
    %6750 = vmatprep.mubr.f32.mxu0 0.0
    %6751 = vmatmul.mubr.f32.gmra.mrb[0].mxu0 %v6613
    %v6752 = vpop.f32.mrb[0].mxu0
    %v6753 = vadd.f32 0.0, %v6752
    %v6754 = vpop.f32.mrb[0].mxu0
    %v6755 = vadd.f32 0.0, %v6754
    %6756 = vdwg.mxu0
    %v6757 = vmul.f32 %v6608, %v6682
    %v6758 = vmul.f32 %v6609, %v6684
    %v6759 = vmul.f32 %v6610, %v6753
    %v6760 = vmul.f32 %v6611, %v6755
    %s6761 = scalar_lea.vmem %s71, 448
    %v6762 = vld [vmem:[%s6761] sm:$0xff]
    %v6763 = vld [vmem:[%s6761 + $0x8] sm:$0xff]
    %v6764 = vld [vmem:[%s6761 + $0x10] sm:$0xff]
    %v6765 = vld [vmem:[%s6761 + $0x18] sm:$0xff]
    %v6766 = vld [vmem:[%s6761 + $0x20] sm:$0xff]
    %v6767 = vld [vmem:[%s6761 + $0x28] sm:$0xff]
    %v6768 = vld [vmem:[%s6761 + $0x30] sm:$0xff]
    %v6769 = vld [vmem:[%s6761 + $0x38] sm:$0xff]
    %v6770 = vld [vmem:[%s6761 + $0x40] sm:$0xff]
    %v6771 = vld [vmem:[%s6761 + $0x48] sm:$0xff]
    %v6772 = vld [vmem:[%s6761 + $0x50] sm:$0xff]
    %v6773 = vld [vmem:[%s6761 + $0x58] sm:$0xff]
    %v6774 = vld [vmem:[%s6761 + $0x60] sm:$0xff]
    %v6775 = vld [vmem:[%s6761 + $0x68] sm:$0xff]
    %v6776 = vld [vmem:[%s6761 + $0x70] sm:$0xff]
    %v6777 = vld [vmem:[%s6761 + $0x78] sm:$0xff]
    %v6778 = vld [vmem:[%s6761 + $0x80] sm:$0xff]
    %v6779 = vld [vmem:[%s6761 + $0x88] sm:$0xff]
    %v6780 = vld [vmem:[%s6761 + $0x90] sm:$0xff]
    %v6781 = vld [vmem:[%s6761 + $0x98] sm:$0xff]
    %v6782 = vld [vmem:[%s6761 + $0xa0] sm:$0xff]
    %v6783 = vld [vmem:[%s6761 + $0xa8] sm:$0xff]
    %v6784 = vld [vmem:[%s6761 + $0xb0] sm:$0xff]
    %v6785 = vld [vmem:[%s6761 + $0xb8] sm:$0xff]
    %v6786 = vld [vmem:[%s6761 + $0xc0] sm:$0xff]
    %v6787 = vld [vmem:[%s6761 + $0xc8] sm:$0xff]
    %v6788 = vld [vmem:[%s6761 + $0xd0] sm:$0xff]
    %v6789 = vld [vmem:[%s6761 + $0xd8] sm:$0xff]
    %v6790 = vld [vmem:[%s6761 + $0xe0] sm:$0xff]
    %v6791 = vld [vmem:[%s6761 + $0xe8] sm:$0xff]
    %v6792 = vld [vmem:[%s6761 + $0xf0] sm:$0xff]
    %v6793 = vld [vmem:[%s6761 + $0xf8] sm:$0xff]
    %v6794 = vld [vmem:[%s6761 + $0x100] sm:$0xff]
    %v6795 = vld [vmem:[%s6761 + $0x108] sm:$0xff]
    %v6796 = vld [vmem:[%s6761 + $0x110] sm:$0xff]
    %v6797 = vld [vmem:[%s6761 + $0x118] sm:$0xff]
    %v6798 = vld [vmem:[%s6761 + $0x120] sm:$0xff]
    %v6799 = vld [vmem:[%s6761 + $0x128] sm:$0xff]
    %v6800 = vld [vmem:[%s6761 + $0x130] sm:$0xff]
    %v6801 = vld [vmem:[%s6761 + $0x138] sm:$0xff]
    %v6802 = vld [vmem:[%s6761 + $0x140] sm:$0xff]
    %v6803 = vld [vmem:[%s6761 + $0x148] sm:$0xff]
    %v6804 = vld [vmem:[%s6761 + $0x150] sm:$0xff]
    %v6805 = vld [vmem:[%s6761 + $0x158] sm:$0xff]
    %v6806 = vld [vmem:[%s6761 + $0x160] sm:$0xff]
    %v6807 = vld [vmem:[%s6761 + $0x168] sm:$0xff]
    %v6808 = vld [vmem:[%s6761 + $0x170] sm:$0xff]
    %v6809 = vld [vmem:[%s6761 + $0x178] sm:$0xff]
    %v6810 = vld [vmem:[%s6761 + $0x180] sm:$0xff]
    %v6811 = vld [vmem:[%s6761 + $0x188] sm:$0xff]
    %v6812 = vld [vmem:[%s6761 + $0x190] sm:$0xff]
    %v6813 = vld [vmem:[%s6761 + $0x198] sm:$0xff]
    %v6814 = vld [vmem:[%s6761 + $0x1a0] sm:$0xff]
    %v6815 = vld [vmem:[%s6761 + $0x1a8] sm:$0xff]
    %v6816 = vld [vmem:[%s6761 + $0x1b0] sm:$0xff]
    %v6817 = vld [vmem:[%s6761 + $0x1b8] sm:$0xff]
    %v6819 = vsel %vm942, %v6760, 0
    %6821 = vmatprep.subr.mxu0 0.0
    %6822 = vmatpush1.msra.mxu0 %v6762
    %6823 = vmatprep.subr.mxu0 0.0
    %6824 = vmatpush1.msra.mxu0 %v6763
    %6825 = vmatprep.subr.mxu0 0.0
    %6826 = vmatpush1.msra.mxu0 %v6764
    %6827 = vmatprep.subr.mxu0 0.0
    %6828 = vmatpush1.msra.mxu0 %v6765
    %6829 = vmatprep.subr.mxu0 0.0
    %6830 = vmatpush1.msra.mxu0 %v6766
    %6831 = vmatprep.subr.mxu0 0.0
    %6832 = vmatpush1.msra.mxu0 %v6767
    %6833 = vmatprep.subr.mxu0 0.0
    %6834 = vmatpush1.msra.mxu0 %v6768
    %6835 = vmatprep.subr.mxu0 0.0
    %6836 = vmatpush1.msra.mxu0 %v6769
    %6837 = vmatprep.subr.mxu0 0.0
    %6838 = vmatpush1.msra.mxu0 %v6770
    %6839 = vmatprep.subr.mxu0 0.0
    %6840 = vmatpush1.msra.mxu0 %v6771
    %6841 = vmatprep.subr.mxu0 0.0
    %6842 = vmatpush1.msra.mxu0 %v6772
    %6843 = vmatprep.subr.mxu0 0.0
    %6844 = vmatpush1.msra.mxu0 %v6773
    %6845 = vmatprep.subr.mxu0 0.0
    %6846 = vmatpush1.msra.mxu0 %v6774
    %6847 = vmatprep.subr.mxu0 0.0
    %6848 = vmatpush1.msra.mxu0 %v6775
    %6849 = vmatprep.subr.mxu0 0.0
    %6850 = vmatpush1.msra.mxu0 %v6776
    %6851 = vmatprep.subr.mxu0 0.0
    %6852 = vmatpush1.msra.mxu0 %v6777
    %6853 = vmatprep.subr.mxu0 0.0
    %6854 = vmatpush1.msra.mxu0 %v6778
    %6855 = vmatprep.subr.mxu0 0.0
    %6856 = vmatpush1.msra.mxu0 %v6779
    %6857 = vmatprep.subr.mxu0 0.0
    %6858 = vmatpush1.msra.mxu0 %v6780
    %6859 = vmatprep.subr.mxu0 0.0
    %6860 = vmatpush1.msra.mxu0 %v6781
    %6861 = vmatprep.subr.mxu0 0.0
    %6862 = vmatpush1.msra.mxu0 %v6782
    %6863 = vmatprep.subr.mxu0 0.0
    %6864 = vmatpush1.msra.mxu0 %v6783
    %6865 = vmatprep.subr.mxu0 0.0
    %6866 = vmatpush1.msra.mxu0 %v6784
    %6867 = vmatprep.subr.mxu0 0.0
    %6868 = vmatpush1.msra.mxu0 %v6785
    %6869 = vmatprep.subr.mxu0 0.0
    %6870 = vmatpush1.msra.mxu0 %v6786
    %6871 = vmatprep.subr.mxu0 0.0
    %6872 = vmatpush1.msra.mxu0 %v6787
    %6873 = vmatprep.subr.mxu0 0.0
    %6874 = vmatpush1.msra.mxu0 %v6788
    %6875 = vmatprep.subr.mxu0 0.0
    %6876 = vmatpush1.msra.mxu0 %v6789
    %6877 = vmatprep.subr.mxu0 0.0
    %6878 = vmatpush1.msra.mxu0 %v6790
    %6879 = vmatprep.subr.mxu0 0.0
    %6880 = vmatpush1.msra.mxu0 %v6791
    %6881 = vmatprep.subr.mxu0 0.0
    %6882 = vmatpush1.msra.mxu0 %v6792
    %6883 = vmatprep.subr.mxu0 0.0
    %6884 = vmatpush1.msra.mxu0 %v6793
    %6885 = vmatprep.mubr.f32.mxu0 %v6758
    %6886 = vmatmul.mubr.f32.gmra.mrb[0].mxu0 %v6757
    %v6887 = vpop.f32.mrb[0].mxu0
    %v6888 = vadd.f32 0.0, %v6887
    %v6889 = vpop.f32.mrb[0].mxu0
    %6890 = vdwg.mxu0
    %6891 = vmatprep.subr.mxu0 0.0
    %6892 = vmatpush1.msra.mxu0 %v6794
    %6893 = vmatprep.subr.mxu0 0.0
    %6894 = vmatpush1.msra.mxu0 %v6795
    %6895 = vmatprep.subr.mxu0 0.0
    %6896 = vmatpush1.msra.mxu0 %v6796
    %6897 = vmatprep.subr.mxu0 0.0
    %6898 = vmatpush1.msra.mxu0 %v6797
    %6899 = vmatprep.subr.mxu0 0.0
    %6900 = vmatpush1.msra.mxu0 %v6798
    %6901 = vmatprep.subr.mxu0 0.0
    %6902 = vmatpush1.msra.mxu0 %v6799
    %6903 = vmatprep.subr.mxu0 0.0
    %6904 = vmatpush1.msra.mxu0 %v6800
    %6905 = vmatprep.subr.mxu0 0.0
    %6906 = vmatpush1.msra.mxu0 %v6801
    %6907 = vmatprep.subr.mxu0 0.0
    %6908 = vmatpush1.msra.mxu0 %v6802
    %6909 = vmatprep.subr.mxu0 0.0
    %6910 = vmatpush1.msra.mxu0 %v6803
    %6911 = vmatprep.subr.mxu0 0.0
    %6912 = vmatpush1.msra.mxu0 %v6804
    %6913 = vmatprep.subr.mxu0 0.0
    %6914 = vmatpush1.msra.mxu0 %v6805
    %6915 = vmatprep.subr.mxu0 0.0
    %6916 = vmatpush1.msra.mxu0 %v6806
    %6917 = vmatprep.subr.mxu0 0.0
    %6918 = vmatpush1.msra.mxu0 %v6807
    %6919 = vmatprep.subr.mxu0 0.0
    %6920 = vmatpush1.msra.mxu0 %v6808
    %6921 = vmatprep.subr.mxu0 0.0
    %6922 = vmatpush1.msra.mxu0 %v6809
    %6923 = vmatprep.subr.mxu0 0.0
    %6924 = vmatpush1.msra.mxu0 %v6810
    %6925 = vmatprep.subr.mxu0 0.0
    %6926 = vmatpush1.msra.mxu0 %v6811
    %6927 = vmatprep.subr.mxu0 0.0
    %6928 = vmatpush1.msra.mxu0 %v6812
    %6929 = vmatprep.subr.mxu0 0.0
    %6930 = vmatpush1.msra.mxu0 %v6813
    %6931 = vmatprep.subr.mxu0 0.0
    %6932 = vmatpush1.msra.mxu0 %v6814
    %6933 = vmatprep.subr.mxu0 0.0
    %6934 = vmatpush1.msra.mxu0 %v6815
    %6935 = vmatprep.subr.mxu0 0.0
    %6936 = vmatpush1.msra.mxu0 %v6816
    %6937 = vmatprep.subr.mxu0 0.0
    %6938 = vmatpush1.msra.mxu0 %v6817
    %6939 = vmatprep.subr.mxu0 0.0
    %6940 = vmatpush1.msra.mxu0 0.0
    %6941 = vmatprep.subr.mxu0 0.0
    %6942 = vmatpush1.msra.mxu0 0.0
    %6943 = vmatprep.subr.mxu0 0.0
    %6944 = vmatpush1.msra.mxu0 0.0
    %6945 = vmatprep.subr.mxu0 0.0
    %6946 = vmatpush1.msra.mxu0 0.0
    %6947 = vmatprep.subr.mxu0 0.0
    %6948 = vmatpush1.msra.mxu0 0.0
    %6949 = vmatprep.subr.mxu0 0.0
    %6950 = vmatpush1.msra.mxu0 0.0
    %6951 = vmatprep.subr.mxu0 0.0
    %6952 = vmatpush1.msra.mxu0 0.0
    %6953 = vmatprep.subr.mxu0 0.0
    %6954 = vmatpush1.msra.mxu0 0.0
    %6955 = vmatprep.mubr.f32.mxu0 %v6819
    %6956 = vmatmul.mubr.f32.gmra.mrb[0].mxu0 %v6759
    %v6957 = vpop.f32.mrb[0].mxu0
    %v6958 = vadd.f32 %v6888, %v6957
    %v6959 = vpop.f32.mrb[0].mxu0
    %6960 = vdwg.mxu0
    %v6961 = vadd.f32 %v5688, %v6958
    %s6962 = scalar_lea.vmem %s73, 8
    %v6963 = vld [vmem:[%s6962] sm:$0x7f]
    %v6965 = vsel %vm4302, %v6963, 0
    %6967 = vmatprep.subr.mxu0 0.0
    %6968 = vmatpush1.msra.mxu0 %v6965
    %6969 = vmatprep.subr.mxu0 0.0
    %6970 = vmatpush1.msra.mxu0 0.0
    %6971 = vmatprep.subr.mxu0 0.0
    %6972 = vmatpush1.msra.mxu0 0.0
    %6973 = vmatprep.subr.mxu0 0.0
    %6974 = vmatpush1.msra.mxu0 0.0
    %6975 = vmatprep.subr.mxu0 0.0
    %6976 = vmatpush1.msra.mxu0 0.0
    %6977 = vmatprep.subr.mxu0 0.0
    %6978 = vmatpush1.msra.mxu0 0.0
    %6979 = vmatprep.subr.mxu0 0.0
    %6980 = vmatpush1.msra.mxu0 0.0
    %6981 = vmatprep.subr.mxu0 0.0
    %6982 = vmatpush1.msra.mxu0 0.0
    %6983 = vmatprep.subr.mxu0 0.0
    %6984 = vmatpush1.msra.mxu0 0.0
    %6985 = vmatprep.subr.mxu0 0.0
    %6986 = vmatpush1.msra.mxu0 0.0
    %6987 = vmatprep.subr.mxu0 0.0
    %6988 = vmatpush1.msra.mxu0 0.0
    %6989 = vmatprep.subr.mxu0 0.0
    %6990 = vmatpush1.msra.mxu0 0.0
    %6991 = vmatprep.subr.mxu0 0.0
    %6992 = vmatpush1.msra.mxu0 0.0
    %6993 = vmatprep.subr.mxu0 0.0
    %6994 = vmatpush1.msra.mxu0 0.0
    %6995 = vmatprep.subr.mxu0 0.0
    %6996 = vmatpush1.msra.mxu0 0.0
    %6997 = vmatprep.subr.mxu0 0.0
    %6998 = vmatpush1.msra.mxu0 0.0
    %6999 = vmatprep.subr.mxu0 0.0
    %7000 = vmatpush1.msra.mxu0 0.0
    %7001 = vmatprep.subr.mxu0 0.0
    %7002 = vmatpush1.msra.mxu0 0.0
    %7003 = vmatprep.subr.mxu0 0.0
    %7004 = vmatpush1.msra.mxu0 0.0
    %7005 = vmatprep.subr.mxu0 0.0
    %7006 = vmatpush1.msra.mxu0 0.0
    %7007 = vmatprep.subr.mxu0 0.0
    %7008 = vmatpush1.msra.mxu0 0.0
    %7009 = vmatprep.subr.mxu0 0.0
    %7010 = vmatpush1.msra.mxu0 0.0
    %7011 = vmatprep.subr.mxu0 0.0
    %7012 = vmatpush1.msra.mxu0 0.0
    %7013 = vmatprep.subr.mxu0 0.0
    %7014 = vmatpush1.msra.mxu0 0.0
    %7015 = vmatprep.subr.mxu0 0.0
    %7016 = vmatpush1.msra.mxu0 0.0
    %7017 = vmatprep.subr.mxu0 0.0
    %7018 = vmatpush1.msra.mxu0 0.0
    %7019 = vmatprep.subr.mxu0 0.0
    %7020 = vmatpush1.msra.mxu0 0.0
    %7021 = vmatprep.subr.mxu0 0.0
    %7022 = vmatpush1.msra.mxu0 0.0
    %7023 = vmatprep.subr.mxu0 0.0
    %7024 = vmatpush1.msra.mxu0 0.0
    %7025 = vmatprep.subr.mxu0 0.0
    %7026 = vmatpush1.msra.mxu0 0.0
    %7027 = vmatprep.subr.mxu0 0.0
    %7028 = vmatpush1.msra.mxu0 0.0
    %7029 = vmatprep.subr.mxu0 0.0
    %7030 = vmatpush1.msra.mxu0 0.0
    %7031 = vmatprep.mubr.f32.mxu0 0.0
    %7032 = vmatmul.mubr.f32.gmra.mrb[0].mxu0 %v6613
    %v7033 = vpop.f32.mrb[0].mxu0
    %v7034 = vadd.f32 0.0, %v7033
    %v7035 = vpop.f32.mrb[0].mxu0
    %7036 = vdwg.mxu0
    %v7037 = vadd.f32 %v6961, %v7034
    %v7038 = vld [vmem:[%s77] sm:$0xff]
    %v7039 = vld [vmem:[%s77 + $0x8] sm:$0xff]
    %v7040 = vld [vmem:[%s77 + $0x10] sm:$0xff]
    %v7041 = vld [vmem:[%s77 + $0x18] sm:$0xff]
    %v7042 = vld [vmem:[#allocation47] sm:$0x1]
    %v7044 = vlaneseq
    %v7045 = vshrl.u32 %v7044, 7
    %v7046 = vsub.s32 0, %v7045
    %v7047 = vrot.slane %v7042, %v7046
    %v7050 = vsel %vm1107, %v7037, 0
    %7052 = vmatprep.subr.mxu0 0.0
    %7053 = vmatpush1.msra.mxu0 %v7038
    %7054 = vmatprep.subr.mxu0 0.0
    %7055 = vmatpush1.msra.mxu0 %v7039
    %7056 = vmatprep.subr.mxu0 0.0
    %7057 = vmatpush1.msra.mxu0 %v7040
    %7058 = vmatprep.subr.mxu0 0.0
    %7059 = vmatpush1.msra.mxu0 %v7041
    %7060 = vmatprep.subr.mxu0 0.0
    %7061 = vmatpush1.msra.mxu0 0.0
    %7062 = vmatprep.subr.mxu0 0.0
    %7063 = vmatpush1.msra.mxu0 0.0
    %7064 = vmatprep.subr.mxu0 0.0
    %7065 = vmatpush1.msra.mxu0 0.0
    %7066 = vmatprep.subr.mxu0 0.0
    %7067 = vmatpush1.msra.mxu0 0.0
    %7068 = vmatprep.subr.mxu0 0.0
    %7069 = vmatpush1.msra.mxu0 0.0
    %7070 = vmatprep.subr.mxu0 0.0
    %7071 = vmatpush1.msra.mxu0 0.0
    %7072 = vmatprep.subr.mxu0 0.0
    %7073 = vmatpush1.msra.mxu0 0.0
    %7074 = vmatprep.subr.mxu0 0.0
    %7075 = vmatpush1.msra.mxu0 0.0
    %7076 = vmatprep.subr.mxu0 0.0
    %7077 = vmatpush1.msra.mxu0 0.0
    %7078 = vmatprep.subr.mxu0 0.0
    %7079 = vmatpush1.msra.mxu0 0.0
    %7080 = vmatprep.subr.mxu0 0.0
    %7081 = vmatpush1.msra.mxu0 0.0
    %7082 = vmatprep.subr.mxu0 0.0
    %7083 = vmatpush1.msra.mxu0 0.0
    %7084 = vmatprep.subr.mxu0 0.0
    %7085 = vmatpush1.msra.mxu0 0.0
    %7086 = vmatprep.subr.mxu0 0.0
    %7087 = vmatpush1.msra.mxu0 0.0
    %7088 = vmatprep.subr.mxu0 0.0
    %7089 = vmatpush1.msra.mxu0 0.0
    %7090 = vmatprep.subr.mxu0 0.0
    %7091 = vmatpush1.msra.mxu0 0.0
    %7092 = vmatprep.subr.mxu0 0.0
    %7093 = vmatpush1.msra.mxu0 0.0
    %7094 = vmatprep.subr.mxu0 0.0
    %7095 = vmatpush1.msra.mxu0 0.0
    %7096 = vmatprep.subr.mxu0 0.0
    %7097 = vmatpush1.msra.mxu0 0.0
    %7098 = vmatprep.subr.mxu0 0.0
    %7099 = vmatpush1.msra.mxu0 0.0
    %7100 = vmatprep.subr.mxu0 0.0
    %7101 = vmatpush1.msra.mxu0 0.0
    %7102 = vmatprep.subr.mxu0 0.0
    %7103 = vmatpush1.msra.mxu0 0.0
    %7104 = vmatprep.subr.mxu0 0.0
    %7105 = vmatpush1.msra.mxu0 0.0
    %7106 = vmatprep.subr.mxu0 0.0
    %7107 = vmatpush1.msra.mxu0 0.0
    %7108 = vmatprep.subr.mxu0 0.0
    %7109 = vmatpush1.msra.mxu0 0.0
    %7110 = vmatprep.subr.mxu0 0.0
    %7111 = vmatpush1.msra.mxu0 0.0
    %7112 = vmatprep.subr.mxu0 0.0
    %7113 = vmatpush1.msra.mxu0 0.0
    %7114 = vmatprep.subr.mxu0 0.0
    %7115 = vmatpush1.msra.mxu0 0.0
    %7116 = vmatprep.mubr.f32.mxu0 0.0
    %7117 = vmatmul.mubr.f32.gmra.mrb[0].mxu0 %v7050
    %v7118 = vpop.f32.mrb[0].mxu0
    %v7119 = vadd.f32 %v7047, %v7118
    %v7120 = vpop.f32.mrb[0].mxu0
    %7121 = vdwg.mxu0
    %7122 = vst.msk [vmem:[#allocation49] sm:$0x3] %vm1362, %v7119
    // Predicated region
    $region282: #{mm_disentangled_forward.3} parent=1 // pred_check
      _
    $region283: #{mm_disentangled_forward.3} parent=1 // pred_check_branch
      %7124 = sbr.rel (0) target = $region285
    $region284: #{mm_disentangled_forward.3} parent=1 // pred_region
      _
    $region285: #{mm_disentangled_forward.3} parent=1 // pred_fallthru
      _
    // Predicated region
    $region286: #{mm_disentangled_forward.3} parent=1 // pred_check
      _
    $region287: #{mm_disentangled_forward.3} parent=1 // pred_check_branch
      %7126 = sbr.rel (0) target = $region289
    $region288: #{mm_disentangled_forward.3} parent=1 // pred_region
      _
    $region289: #{mm_disentangled_forward.3} parent=1 // pred_fallthru
      _
    // Predicated region
    $region290: #{mm_disentangled_forward.3} parent=1 // pred_check
      _
    $region291: #{mm_disentangled_forward.3} parent=1 // pred_check_branch
      %7128 = sbr.rel (0) target = $region293
    $region292: #{mm_disentangled_forward.3} parent=1 // pred_region
      _
    $region293: #{mm_disentangled_forward.3} parent=1 // pred_fallthru
      _
    // Predicated region
    $region294: #{mm_disentangled_forward.3} parent=1 // pred_check
      _
    $region295: #{mm_disentangled_forward.3} parent=1 // pred_check_branch
      %7130 = sbr.rel (0) target = $region297
    $region296: #{mm_disentangled_forward.3} parent=1 // pred_region
      %s7132 = ssub.s32 32, 32
      %7133 = vsyncadd [#allocation4], %s7132
      %s7135 = sshll.u32 [#allocation49], 4
      %s7136 = int_to_ptr.vmem [resolvable:$true] %s7135
      %7138 = dma.vmem_to_hbm [thread:$0]  %s7136, 32, %s87, [#allocation4]
    $region297: #{mm_disentangled_forward.3} parent=1 // pred_fallthru
      _
    // Predicated region
    $region298: #{mm_disentangled_forward.3} parent=1 // pred_check
      _
    $region299: #{mm_disentangled_forward.3} parent=1 // pred_check_branch
      %7140 = sbr.rel (0) target = $region301
    $region300: #{mm_disentangled_forward.3} parent=1 // pred_region
      _
    $region301: #{mm_disentangled_forward.3} parent=1 // pred_fallthru
      _
    // Predicated region
    $region302: #{mm_disentangled_forward.3} parent=1 // pred_check
      _
    $region303: #{mm_disentangled_forward.3} parent=1 // pred_check_branch
      %7142 = sbr.rel (0) target = $region305
    $region304: #{mm_disentangled_forward.3} parent=1 // pred_region
      _
    $region305: #{mm_disentangled_forward.3} parent=1 // pred_fallthru
      _
    // Predicated region
    $region306: #{mm_disentangled_forward.3} parent=1 // pred_check
      _
    $region307: #{mm_disentangled_forward.3} parent=1 // pred_check_branch
      %7144 = sbr.rel (0) target = $region309
    $region308: #{mm_disentangled_forward.3} parent=1 // pred_region
      _
    $region309: #{mm_disentangled_forward.3} parent=1 // pred_fallthru
      _
    // Predicated region
    $region310: #{mm_disentangled_forward.3} parent=1 // pred_check
      _
    $region311: #{mm_disentangled_forward.3} parent=1 // pred_check_branch
      %7146 = sbr.rel (0) target = $region313
    $region312: #{mm_disentangled_forward.3} parent=1 // pred_region
      %7147 = dma.done [#allocation4], 32
    $region313: #{mm_disentangled_forward.3} parent=1 // pred_fallthru
      _
    %7148 = vsyncpa [#allocation3], 1
    %7149 = vsyncpa [#allocation6], 1
    %7150 = vsyncpa [#allocation9], 1
    %7151 = vsyncpa [#allocation12], 1
    %7152 = vsyncpa [#allocation15], 1
    %7153 = vsyncpa [#allocation18], 1
    %7154 = vsyncpa [#allocation21], 1
    %7155 = vsyncpa [#allocation24], 1
    %7156 = vsyncpa [#allocation27], 1
    %7157 = vsyncpa [#allocation30], 1
    %7158 = vsyncpa [#allocation33], 1
    %7159 = vsyncpa [#allocation36], 1
    %7160 = vsyncpa [#allocation39], 1
    %7161 = vsyncpa [#allocation42], 1
    %7162 = vsyncpa [#allocation45], 1
    %7163 = vsyncpa [#allocation48], 1
    %7164 = vsyncpa [#allocation4], 1

</llo_original>
